<compile_context>
chip_gen: v5e
topology: v5e:2x2
jax: 0.10.0
libtpu: 0.0.40
codegen_flags: <defaults>
</compile_context>

<pallas_src>
import math
import jax
import jax.numpy as jnp
from jax.experimental import pallas as pl
from jax.experimental.pallas import tpu as pltpu

# ----------------------------------------------------------------------------
# Config (small shapes consistent with the module's forward signature)
# ----------------------------------------------------------------------------
B = 2            # batch
T = 8            # seqlen (module default 16; small variant)
J_IN = 18        # joints in the incoming 2D pose
NUM_JOINTS = 19  # after add_joint
EMBED = 256      # lifter / linker embed_dim
HDIM = 512       # temporal encoder / text encoder embed_dim
TEXT_LEN = 36
TEXT_DIM = 768
DEPTH = 3
N_KP = 49        # regressed keypoints (SMPL 49-joint convention)
N_ROT = 24       # SMPL joint rotations
N_VERTS = 108    # TODO(synk): real SMPL mesh has 6890 verts; LBS skinning not reproduced.
THETA_DIM = 85   # 3 cam + 72 pose + 10 shape

LIFT_OUT_DIM = NUM_JOINTS * 3     # 57
LIFT_OUT_PAD = 128                # lane-dense output slab
HEAD_DIMS = (THETA_DIM, N_KP * 3, N_KP * 2, N_ROT * 9, N_VERTS * 3)  # 85,147,98,216,324
HEAD_TOTAL = sum(HEAD_DIMS)       # 870
HEAD_PAD = 896                    # 7 * 128 lane-dense slab
COORD_PAD = 8                     # 3D coords zero-padded to 8 for the link_q MXU matmul
TJ = T * NUM_JOINTS               # 152 query rows for linking

_VMEM_LIMIT = 32 * 1024 * 1024    # safe on v5e/v6e (128 MiB) and v7x (64 MiB)


def _full_spec(arr):
    """Whole-array block with a constant index map (resident across grid steps)."""
    nd = arr.ndim
    return pl.BlockSpec(arr.shape, lambda b, _nd=nd: (0,) * _nd)


# ----------------------------------------------------------------------------
# Kernel A: fused pose lifter + temporal encoder + mid-frame HMR heads
# ----------------------------------------------------------------------------
def _pose_hmr_kernel(x_ref, f_ref,
                     wi_ref, bi_ref, wf_ref, bf_ref,
                     wblk_ref, bblk_ref, wo_ref, bo_ref,
                     wt_ref, bt_ref, wh_ref, bh_ref,
                     pose_ref, head_ref):
    x = x_ref[0].astype(jnp.bfloat16)              # [T, 38]
    f32 = f_ref[0]                                 # [T, 512] f32
    fb = f32.astype(jnp.bfloat16)

    # ---- pose lifter: lift_in + lift_img + relu + DEPTH residual blocks ----
    h = jnp.dot(x, wi_ref[...], preferred_element_type=jnp.float32) + bi_ref[...]
    h = h + (jnp.dot(fb, wf_ref[...], preferred_element_type=jnp.float32)
             + bf_ref[...])
    h = jnp.maximum(h, 0.0)
    for d in range(DEPTH):  # static unroll (DEPTH=3)
        r = jnp.dot(h.astype(jnp.bfloat16), wblk_ref[d],
                    preferred_element_type=jnp.float32) + bblk_ref[d]
        h = h + jnp.maximum(r, 0.0)
    # lane-padded 3D pose head (57 -> 128 lanes)
    pose_ref[0] = (jnp.dot(h.astype(jnp.bfloat16), wo_ref[...],
                           preferred_element_type=jnp.float32)
                   + bo_ref[...]).astype(pose_ref.dtype)

    # ---- temporal encoder (per-row residual MLP) ---------------------------
    # TODO(synk): real temporal transformer + pretrained SPIN regressor not
    # reproduced; blocks are per-row so the mid-frame-only head below is exact.
    g = f32
    for d in range(DEPTH):  # static unroll
        r = jnp.dot(g.astype(jnp.bfloat16), wt_ref[d],
                    preferred_element_type=jnp.float32) + bt_ref[d]
        g = g + jnp.maximum(r, 0.0)

    # ---- all 5 HMR heads as ONE matmul on the MID FRAME only ---------------
    # TODO(synk): verify mid-frame convention (T//2 vs (T-1)//2) vs reference.
    g_mid = g[T // 2:T // 2 + 1, :].astype(jnp.bfloat16)       # [1, 512]
    head_ref[0] = (jnp.dot(g_mid, wh_ref[...],
                           preferred_element_type=jnp.float32)
                   + bh_ref[...]).astype(head_ref.dtype)


def pose_hmr_call(x2d, img_feat, p):
    Bsz = x2d.shape[0]
    weights = (p["lift_in_w"], p["lift_in_b"], p["lift_img_w"], p["lift_img_b"],
               p["lift_blk_w"], p["lift_blk_b"], p["lift_out_w"], p["lift_out_b"],
               p["temp_blk_w"], p["temp_blk_b"], p["head_w"], p["head_b"])
    return pl.pallas_call(
        _pose_hmr_kernel,
        out_shape=(jax.ShapeDtypeStruct((Bsz, T, LIFT_OUT_PAD), jnp.float32),
                   jax.ShapeDtypeStruct((Bsz, 1, HEAD_PAD), jnp.float32)),
        grid=(Bsz,),
        in_specs=[pl.BlockSpec((1, T, NUM_JOINTS * 2), lambda b: (b, 0, 0)),
                  pl.BlockSpec((1, T, HDIM), lambda b: (b, 0, 0))]
                 + [_full_spec(w) for w in weights],
        out_specs=(pl.BlockSpec((1, T, LIFT_OUT_PAD), lambda b: (b, 0, 0)),
                   pl.BlockSpec((1, 1, HEAD_PAD), lambda b: (b, 0, 0))),
        compiler_params=pltpu.CompilerParams(
            dimension_semantics=("parallel",),   # v7x: 2 TCs split the batch
            vmem_limit_bytes=_VMEM_LIMIT),
    )(x2d, img_feat, *weights)


# ----------------------------------------------------------------------------
# Kernel B: fused text encoder + proj_text + link_q + cross-attention
# ----------------------------------------------------------------------------
def _text_link_kernel(txt_ref, p_ref,
                      w1_ref, b1_ref, w2_ref, b2_ref,
                      wq_ref, bq_ref, o_ref):
    # text encoder: 768 -> 512, relu; proj_text: 512 -> 256
    t = txt_ref[0].astype(jnp.bfloat16)                       # [L, 768]
    h = jnp.dot(t, w1_ref[...], preferred_element_type=jnp.float32) + b1_ref[...]
    h = jnp.maximum(h, 0.0)
    kv = jnp.dot(h.astype(jnp.bfloat16), w2_ref[...],
                 preferred_element_type=jnp.float32) + b2_ref[...]   # [L, 256] f32

    # link_q: coordinate dim zero-padded 3 -> 8, projection on the MXU
    q = jnp.dot(p_ref[0].astype(jnp.bfloat16), wq_ref[...],
                preferred_element_type=jnp.float32) + bq_ref[...]    # [TJ, 256]

    # cross-attention (q from pose3d, k = v = projected text embeddings)
    # TODO(synk): linker internals unknown; single-head dot-product attention.
    scale = 1.0 / math.sqrt(EMBED)
    kvb = kv.astype(jnp.bfloat16)
    s = jax.lax.dot_general(q.astype(jnp.bfloat16), kvb,
                            (((1,), (1,)), ((), ())),
                            preferred_element_type=jnp.float32) * scale  # [TJ, L]
    s = s - jnp.max(s, axis=-1, keepdims=True)
    e = jnp.exp(s)
    attn = e / jnp.sum(e, axis=-1, keepdims=True)              # exact softmax
    o_ref[0] = jnp.dot(attn.astype(jnp.bfloat16), kvb,
                       preferred_element_type=jnp.float32).astype(o_ref.dtype)


def text_link_call(input_text, pose_flat_pad, p):
    Bsz = input_text.shape[0]
    weights = (p["text1_w"], p["text1_b"], p["text2_w"], p["text2_b"],
               p["link_q_w"], p["link_q_b"])
    return pl.pallas_call(
        _text_link_kernel,
        out_shape=jax.ShapeDtypeStruct((Bsz, TJ, EMBED), jnp.float32),
        grid=(Bsz,),
        in_specs=[pl.BlockSpec((1, TEXT_LEN, TEXT_DIM), lambda b: (b, 0, 0)),
                  pl.BlockSpec((1, TJ, COORD_PAD), lambda b: (b, 0, 0))]
                 + [_full_spec(w) for w in weights],
        out_specs=pl.BlockSpec((1, TJ, EMBED), lambda b: (b, 0, 0)),
        compiler_params=pltpu.CompilerParams(
            dimension_semantics=("parallel",),
            vmem_limit_bytes=_VMEM_LIMIT),
    )(input_text, pose_flat_pad, *weights)


# ----------------------------------------------------------------------------
# Deterministic parameter initialization (big matmul weights in bf16)
# ----------------------------------------------------------------------------
def _init_params():
    key = jax.random.PRNGKey(0)

    def nxt():
        nonlocal key
        key, sub = jax.random.split(key)
        return sub

    def w(shape, dtype=jnp.bfloat16):
        return (jax.random.normal(nxt(), shape, jnp.float32) * 0.02).astype(dtype)

    def bias(n):
        return jnp.zeros((1, n), jnp.float32)

    p = {}
    # pose lifter
    p["lift_in_w"] = w((NUM_JOINTS * 2, EMBED))                # bf16 (K=38)
    p["lift_in_b"] = bias(EMBED)
    p["lift_img_w"] = w((HDIM, EMBED))
    p["lift_img_b"] = bias(EMBED)
    p["lift_blk_w"] = w((DEPTH, EMBED, EMBED))
    p["lift_blk_b"] = jnp.zeros((DEPTH, 1, EMBED), jnp.float32)
    p["lift_out_w"] = w((EMBED, LIFT_OUT_PAD))                 # 57 -> 128 lane-padded
    p["lift_out_b"] = bias(LIFT_OUT_PAD)
    # temporal encoder + fused HMR heads (theta|kp3d|kp2d|rotmat|verts, padded)
    p["temp_blk_w"] = w((DEPTH, HDIM, HDIM))
    p["temp_blk_b"] = jnp.zeros((DEPTH, 1, HDIM), jnp.float32)
    p["head_w"] = w((HDIM, HEAD_PAD))                          # 870 -> 896 lane-padded
    p["head_b"] = bias(HEAD_PAD)
    # text encoder + proj_text
    p["text1_w"] = w((TEXT_DIM, HDIM))
    p["text1_b"] = bias(HDIM)
    p["text2_w"] = w((HDIM, EMBED))
    p["text2_b"] = bias(EMBED)
    # linker query projection: K padded 3 -> 8 (rows 3..7 zero), MXU-friendly
    wq3 = jax.random.normal(nxt(), (3, EMBED), jnp.float32) * 0.02
    p["link_q_w"] = jnp.concatenate(
        [wq3, jnp.zeros((COORD_PAD - 3, EMBED), jnp.float32)], axis=0
    ).astype(jnp.bfloat16)
    p["link_q_b"] = bias(EMBED)
    return p


# ----------------------------------------------------------------------------
# Forward pass (jitted; is_train static)
# ----------------------------------------------------------------------------
def add_joint(pose2d_xy):
    """pose2d_xy: [B, T, J_IN, 2] -> [B, T, J_IN+1, 2].
    TODO(synk): original add_joint() adds a specific skeleton joint; a mean
    (pelvis-like) joint is appended here."""
    extra = jnp.mean(pose2d_xy, axis=-2, keepdims=True)
    return jnp.concatenate([pose2d_xy, extra], axis=-2)


def _forward_impl(params, input_text, img_feat, pose2d, is_train=False):
    Bsz = input_text.shape[0]

    # --- add_joint(pose2d[..., :2]) (cheap jitted glue) -----------------------
    p2d = add_joint(pose2d[..., :2])                        # [B, T, 19, 2]
    x2d = p2d.reshape(Bsz, T, NUM_JOINTS * 2)               # [B, T, 38]

    # --- Kernel A: lifter + temporal encoder + mid-frame HMR heads ------------
    pose_pad, heads = pose_hmr_call(x2d, img_feat, params)
    pose3d = pose_pad[:, :, :LIFT_OUT_DIM].reshape(Bsz, T, NUM_JOINTS, 3)

    heads_mid = heads.reshape(Bsz, HEAD_PAD)                # mid-frame, all 5 heads
    o0 = 0
    o1 = o0 + THETA_DIM
    o2 = o1 + N_KP * 3
    o3 = o2 + N_KP * 2
    o4 = o3 + N_ROT * 9
    o5 = o4 + N_VERTS * 3
    stage = {
        "theta": heads_mid[:, o0:o1],
        "kp_3d": heads_mid[:, o1:o2],
        "kp_2d": heads_mid[:, o2:o3],
        "rotmat": heads_mid[:, o3:o4],   # TODO(synk): no Rodrigues orthogonalization
        "verts": heads_mid[:, o4:o5],
    }
    init_theta = [stage]

    # --- Kernel B: text encoder + proj_text + linking -------------------------
    pose_flat = pose3d.reshape(Bsz, TJ, 3)
    pose_flat_pad = jnp.pad(pose_flat, ((0, 0), (0, 0), (0, COORD_PAD - 3)))
    joint_guide = text_link_call(input_text, pose_flat_pad, params)
    joint_guide = joint_guide.reshape(Bsz, T, NUM_JOINTS, EMBED)
    # semantic_guide is not computed: Model.forward discards it (dead work).

    # --- reshape SMPL stage outputs (matches module's is_train branch) --------
    if is_train:
        size = 1
        for s in init_theta:
            s["theta"] = s["theta"].reshape(Bsz, size, -1)
            s["verts"] = s["verts"].reshape(Bsz, size, -1, 3)
            s["kp_2d"] = s["kp_2d"].reshape(Bsz, size, -1, 2)
            s["kp_3d"] = s["kp_3d"].reshape(Bsz, size, -1, 3)
            s["rotmat"] = s["rotmat"].reshape(Bsz, size, -1, 3, 3)
    else:
        for s in init_theta:
            s["theta"] = s["theta"].reshape(Bsz, -1)
            s["verts"] = s["verts"].reshape(Bsz, -1, 3)
            s["kp_2d"] = s["kp_2d"].reshape(Bsz, -1, 2)
            s["kp_3d"] = s["kp_3d"].reshape(Bsz, -1, 3)
            s["rotmat"] = s["rotmat"].reshape(Bsz, -1, 3, 3)

    return pose3d, init_theta, joint_guide


# Single compiled executable for the whole forward (is_train static).
forward = jax.jit(_forward_impl, static_argnames=("is_train",))


# ----------------------------------------------------------------------------
# Main
# ----------------------------------------------------------------------------
if __name__ == "__main__":
    params = _init_params()
    key = jax.random.PRNGKey(0)
    k1, k2, k3 = jax.random.split(key, 3)
    input_text = jax.random.normal(k1, (B, TEXT_LEN, TEXT_DIM), jnp.float32)
    img_feat = jax.random.normal(k2, (B, T, HDIM), jnp.float32)
    pose2d = jax.random.normal(k3, (B, T, J_IN, 3), jnp.float32)

    pose3d, init_theta, joint_guide = forward(params, input_text, img_feat,
                                              pose2d, is_train=False)
    jax.block_until_ready(pose3d)
    jax.block_until_ready(joint_guide)
    for s in init_theta:
        for v in s.values():
            jax.block_until_ready(v)

    assert pose3d.shape == (B, T, NUM_JOINTS, 3)
    assert joint_guide.shape == (B, T, NUM_JOINTS, EMBED)
    assert init_theta[0]["theta"].shape == (B, THETA_DIM)
    assert init_theta[0]["kp_3d"].shape == (B, N_KP, 3)
    assert init_theta[0]["kp_2d"].shape == (B, N_KP, 2)
    assert init_theta[0]["rotmat"].shape == (B, N_ROT, 3, 3)
    assert init_theta[0]["verts"].shape == (B, N_VERTS, 3)
    print("KERNEL_OK")
</pallas_src>

<mosaic_0001>
module attributes {stable_mosaic.version = 11 : i64} {
  func.func @_pose_hmr_kernel(%arg0: i32, %arg1: memref<1x8x38xf32, #tpu.memory_space<vmem>>, %arg2: memref<1x8x512xf32, #tpu.memory_space<vmem>>, %arg3: memref<38x256xbf16, #tpu.memory_space<vmem>>, %arg4: memref<1x256xf32, #tpu.memory_space<vmem>>, %arg5: memref<512x256xbf16, #tpu.memory_space<vmem>>, %arg6: memref<1x256xf32, #tpu.memory_space<vmem>>, %arg7: memref<3x256x256xbf16, #tpu.memory_space<vmem>>, %arg8: memref<3x1x256xf32, #tpu.memory_space<vmem>>, %arg9: memref<256x128xbf16, #tpu.memory_space<vmem>>, %arg10: memref<1x128xf32, #tpu.memory_space<vmem>>, %arg11: memref<3x512x512xbf16, #tpu.memory_space<vmem>>, %arg12: memref<3x1x512xf32, #tpu.memory_space<vmem>>, %arg13: memref<512x896xbf16, #tpu.memory_space<vmem>>, %arg14: memref<1x896xf32, #tpu.memory_space<vmem>>, %arg15: memref<1x8x128xf32, #tpu.memory_space<vmem>>, %arg16: memref<1x1x896xf32, #tpu.memory_space<vmem>>) attributes {dimension_semantics = [#tpu.dimension_semantics<parallel>], iteration_bounds = array<i64: 2>, scalar_prefetch = 0 : i64, scratch_operands = 0 : i64, tpu.core_type = #tpu.core_type<tc>, window_params = [{transform_indices = @transform_0, window_bounds = array<i64: 1, 8, 38>}, {transform_indices = @transform_1, window_bounds = array<i64: 1, 8, 512>}, {pipeline_mode = #tpu.pipeline_mode<synchronous>, transform_indices = @transform_2, window_bounds = array<i64: 38, 256>}, {pipeline_mode = #tpu.pipeline_mode<synchronous>, transform_indices = @transform_3, window_bounds = array<i64: 1, 256>}, {pipeline_mode = #tpu.pipeline_mode<synchronous>, transform_indices = @transform_4, window_bounds = array<i64: 512, 256>}, {pipeline_mode = #tpu.pipeline_mode<synchronous>, transform_indices = @transform_5, window_bounds = array<i64: 1, 256>}, {pipeline_mode = #tpu.pipeline_mode<synchronous>, transform_indices = @transform_6, window_bounds = array<i64: 3, 256, 256>}, {pipeline_mode = #tpu.pipeline_mode<synchronous>, transform_indices = @transform_7, window_bounds = array<i64: 3, 1, 256>}, {pipeline_mode = #tpu.pipeline_mode<synchronous>, transform_indices = @transform_8, window_bounds = array<i64: 256, 128>}, {pipeline_mode = #tpu.pipeline_mode<synchronous>, transform_indices = @transform_9, window_bounds = array<i64: 1, 128>}, {pipeline_mode = #tpu.pipeline_mode<synchronous>, transform_indices = @transform_10, window_bounds = array<i64: 3, 512, 512>}, {pipeline_mode = #tpu.pipeline_mode<synchronous>, transform_indices = @transform_11, window_bounds = array<i64: 3, 1, 512>}, {pipeline_mode = #tpu.pipeline_mode<synchronous>, transform_indices = @transform_12, window_bounds = array<i64: 512, 896>}, {pipeline_mode = #tpu.pipeline_mode<synchronous>, transform_indices = @transform_13, window_bounds = array<i64: 1, 896>}, {transform_indices = @transform_14, window_bounds = array<i64: 1, 8, 128>}, {transform_indices = @transform_15, window_bounds = array<i64: 1, 1, 896>}]} {
    %c0 = arith.constant 0 : index
    %c0_0 = arith.constant 0 : index
    %c0_1 = arith.constant 0 : index
    %0 = vector.load %arg1[%c0, %c0_0, %c0_1] : memref<1x8x38xf32, #tpu.memory_space<vmem>>, vector<1x8x38xf32>
    %1 = vector.shape_cast %0 : vector<1x8x38xf32> to vector<8x38xf32>
    %2 = arith.truncf %1 : vector<8x38xf32> to vector<8x38xbf16>
    %c0_2 = arith.constant 0 : index
    %c0_3 = arith.constant 0 : index
    %c0_4 = arith.constant 0 : index
    %3 = vector.load %arg2[%c0_2, %c0_3, %c0_4] : memref<1x8x512xf32, #tpu.memory_space<vmem>>, vector<1x8x512xf32>
    %4 = vector.shape_cast %3 : vector<1x8x512xf32> to vector<8x512xf32>
    %5 = arith.truncf %4 : vector<8x512xf32> to vector<8x512xbf16>
    %c0_5 = arith.constant 0 : index
    %c0_6 = arith.constant 0 : index
    %6 = vector.load %arg3[%c0_5, %c0_6] : memref<38x256xbf16, #tpu.memory_space<vmem>>, vector<38x256xbf16>
    %cst = arith.constant dense<0.000000e+00> : vector<8x256xf32>
    %7 = tpu.matmul %2, %6, %cst {dimension_numbers = #tpu.dot_dimension_numbers<[1], [0], [0], [1], [0, 0, 1, 1], [], []>} : vector<8x38xbf16>, vector<38x256xbf16>, vector<8x256xf32> -> vector<8x256xf32>
    %c0_7 = arith.constant 0 : index
    %c0_8 = arith.constant 0 : index
    %8 = vector.load %arg4[%c0_7, %c0_8] : memref<1x256xf32, #tpu.memory_space<vmem>>, vector<1x256xf32>
    %9 = vector.broadcast %8 : vector<1x256xf32> to vector<8x256xf32>
    %10 = arith.addf %7, %9 : vector<8x256xf32>
    %c0_9 = arith.constant 0 : index
    %c0_10 = arith.constant 0 : index
    %11 = vector.load %arg5[%c0_9, %c0_10] : memref<512x256xbf16, #tpu.memory_space<vmem>>, vector<512x256xbf16>
    %cst_11 = arith.constant dense<0.000000e+00> : vector<8x256xf32>
    %12 = tpu.matmul %5, %11, %cst_11 {dimension_numbers = #tpu.dot_dimension_numbers<[1], [0], [0], [1], [0, 0, 1, 1], [], []>} : vector<8x512xbf16>, vector<512x256xbf16>, vector<8x256xf32> -> vector<8x256xf32>
    %c0_12 = arith.constant 0 : index
    %c0_13 = arith.constant 0 : index
    %13 = vector.load %arg6[%c0_12, %c0_13] : memref<1x256xf32, #tpu.memory_space<vmem>>, vector<1x256xf32>
    %14 = vector.broadcast %13 : vector<1x256xf32> to vector<8x256xf32>
    %15 = arith.addf %12, %14 : vector<8x256xf32>
    %16 = arith.addf %10, %15 : vector<8x256xf32>
    %cst_14 = arith.constant 0.000000e+00 : f32
    %17 = vector.broadcast %cst_14 : f32 to vector<8x256xf32>
    %18 = arith.maximumf %16, %17 : vector<8x256xf32>
    %19 = arith.truncf %18 : vector<8x256xf32> to vector<8x256xbf16>
    %c0_15 = arith.constant 0 : index
    %c0_16 = arith.constant 0 : index
    %c0_17 = arith.constant 0 : index
    %20 = vector.load %arg7[%c0_15, %c0_16, %c0_17] : memref<3x256x256xbf16, #tpu.memory_space<vmem>>, vector<1x256x256xbf16>
    %21 = vector.shape_cast %20 : vector<1x256x256xbf16> to vector<256x256xbf16>
    %cst_18 = arith.constant dense<0.000000e+00> : vector<8x256xf32>
    %22 = tpu.matmul %19, %21, %cst_18 {dimension_numbers = #tpu.dot_dimension_numbers<[1], [0], [0], [1], [0, 0, 1, 1], [], []>} : vector<8x256xbf16>, vector<256x256xbf16>, vector<8x256xf32> -> vector<8x256xf32>
    %c0_19 = arith.constant 0 : index
    %c0_20 = arith.constant 0 : index
    %c0_21 = arith.constant 0 : index
    %23 = vector.load %arg8[%c0_19, %c0_20, %c0_21] : memref<3x1x256xf32, #tpu.memory_space<vmem>>, vector<1x1x256xf32>
    %24 = vector.shape_cast %23 : vector<1x1x256xf32> to vector<1x256xf32>
    %25 = vector.broadcast %24 : vector<1x256xf32> to vector<8x256xf32>
    %26 = arith.addf %22, %25 : vector<8x256xf32>
    %cst_22 = arith.constant 0.000000e+00 : f32
    %27 = vector.broadcast %cst_22 : f32 to vector<8x256xf32>
    %28 = arith.maximumf %26, %27 : vector<8x256xf32>
    %29 = arith.addf %18, %28 : vector<8x256xf32>
    %30 = arith.truncf %29 : vector<8x256xf32> to vector<8x256xbf16>
    %c1 = arith.constant 1 : index
    %c0_23 = arith.constant 0 : index
    %c0_24 = arith.constant 0 : index
    %31 = vector.load %arg7[%c1, %c0_23, %c0_24] : memref<3x256x256xbf16, #tpu.memory_space<vmem>>, vector<1x256x256xbf16>
    %32 = vector.shape_cast %31 : vector<1x256x256xbf16> to vector<256x256xbf16>
    %cst_25 = arith.constant dense<0.000000e+00> : vector<8x256xf32>
    %33 = tpu.matmul %30, %32, %cst_25 {dimension_numbers = #tpu.dot_dimension_numbers<[1], [0], [0], [1], [0, 0, 1, 1], [], []>} : vector<8x256xbf16>, vector<256x256xbf16>, vector<8x256xf32> -> vector<8x256xf32>
    %c1_26 = arith.constant 1 : index
    %c0_27 = arith.constant 0 : index
    %c0_28 = arith.constant 0 : index
    %34 = vector.load %arg8[%c1_26, %c0_27, %c0_28] : memref<3x1x256xf32, #tpu.memory_space<vmem>>, vector<1x1x256xf32>
    %35 = vector.shape_cast %34 : vector<1x1x256xf32> to vector<1x256xf32>
    %36 = vector.broadcast %35 : vector<1x256xf32> to vector<8x256xf32>
    %37 = arith.addf %33, %36 : vector<8x256xf32>
    %cst_29 = arith.constant 0.000000e+00 : f32
    %38 = vector.broadcast %cst_29 : f32 to vector<8x256xf32>
    %39 = arith.maximumf %37, %38 : vector<8x256xf32>
    %40 = arith.addf %29, %39 : vector<8x256xf32>
    %41 = arith.truncf %40 : vector<8x256xf32> to vector<8x256xbf16>
    %c2 = arith.constant 2 : index
    %c0_30 = arith.constant 0 : index
    %c0_31 = arith.constant 0 : index
    %42 = vector.load %arg7[%c2, %c0_30, %c0_31] : memref<3x256x256xbf16, #tpu.memory_space<vmem>>, vector<1x256x256xbf16>
    %43 = vector.shape_cast %42 : vector<1x256x256xbf16> to vector<256x256xbf16>
    %cst_32 = arith.constant dense<0.000000e+00> : vector<8x256xf32>
    %44 = tpu.matmul %41, %43, %cst_32 {dimension_numbers = #tpu.dot_dimension_numbers<[1], [0], [0], [1], [0, 0, 1, 1], [], []>} : vector<8x256xbf16>, vector<256x256xbf16>, vector<8x256xf32> -> vector<8x256xf32>
    %c2_33 = arith.constant 2 : index
    %c0_34 = arith.constant 0 : index
    %c0_35 = arith.constant 0 : index
    %45 = vector.load %arg8[%c2_33, %c0_34, %c0_35] : memref<3x1x256xf32, #tpu.memory_space<vmem>>, vector<1x1x256xf32>
    %46 = vector.shape_cast %45 : vector<1x1x256xf32> to vector<1x256xf32>
    %47 = vector.broadcast %46 : vector<1x256xf32> to vector<8x256xf32>
    %48 = arith.addf %44, %47 : vector<8x256xf32>
    %cst_36 = arith.constant 0.000000e+00 : f32
    %49 = vector.broadcast %cst_36 : f32 to vector<8x256xf32>
    %50 = arith.maximumf %48, %49 : vector<8x256xf32>
    %51 = arith.addf %40, %50 : vector<8x256xf32>
    %52 = arith.truncf %51 : vector<8x256xf32> to vector<8x256xbf16>
    %c0_37 = arith.constant 0 : index
    %c0_38 = arith.constant 0 : index
    %53 = vector.load %arg9[%c0_37, %c0_38] : memref<256x128xbf16, #tpu.memory_space<vmem>>, vector<256x128xbf16>
    %cst_39 = arith.constant dense<0.000000e+00> : vector<8x128xf32>
    %54 = tpu.matmul %52, %53, %cst_39 {dimension_numbers = #tpu.dot_dimension_numbers<[1], [0], [0], [1], [0, 0, 1, 1], [], []>} : vector<8x256xbf16>, vector<256x128xbf16>, vector<8x128xf32> -> vector<8x128xf32>
    %c0_40 = arith.constant 0 : index
    %c0_41 = arith.constant 0 : index
    %55 = vector.load %arg10[%c0_40, %c0_41] : memref<1x128xf32, #tpu.memory_space<vmem>>, vector<1x128xf32>
    %56 = vector.broadcast %55 : vector<1x128xf32> to vector<8x128xf32>
    %57 = arith.addf %54, %56 : vector<8x128xf32>
    %c0_42 = arith.constant 0 : index
    %c0_43 = arith.constant 0 : index
    %c0_44 = arith.constant 0 : index
    %58 = vector.load %arg15[%c0_42, %c0_43, %c0_44] : memref<1x8x128xf32, #tpu.memory_space<vmem>>, vector<1x8x128xf32>
    %59 = vector.shape_cast %58 : vector<1x8x128xf32> to vector<8x128xf32>
    %60 = vector.shape_cast %57 : vector<8x128xf32> to vector<1x8x128xf32>
    tpu.vector_store %arg15[%c0_42, %c0_43, %c0_44], %60 {strides = array<i32>} : memref<1x8x128xf32, #tpu.memory_space<vmem>>, vector<1x8x128xf32>,
    %61 = arith.truncf %4 : vector<8x512xf32> to vector<8x512xbf16>
    %c0_45 = arith.constant 0 : index
    %c0_46 = arith.constant 0 : index
    %c0_47 = arith.constant 0 : index
    %62 = vector.load %arg11[%c0_45, %c0_46, %c0_47] : memref<3x512x512xbf16, #tpu.memory_space<vmem>>, vector<1x512x512xbf16>
    %63 = vector.shape_cast %62 : vector<1x512x512xbf16> to vector<512x512xbf16>
    %cst_48 = arith.constant dense<0.000000e+00> : vector<8x512xf32>
    %64 = tpu.matmul %61, %63, %cst_48 {dimension_numbers = #tpu.dot_dimension_numbers<[1], [0], [0], [1], [0, 0, 1, 1], [], []>} : vector<8x512xbf16>, vector<512x512xbf16>, vector<8x512xf32> -> vector<8x512xf32>
    %c0_49 = arith.constant 0 : index
    %c0_50 = arith.constant 0 : index
    %c0_51 = arith.constant 0 : index
    %65 = vector.load %arg12[%c0_49, %c0_50, %c0_51] : memref<3x1x512xf32, #tpu.memory_space<vmem>>, vector<1x1x512xf32>
    %66 = vector.shape_cast %65 : vector<1x1x512xf32> to vector<1x512xf32>
    %67 = vector.broadcast %66 : vector<1x512xf32> to vector<8x512xf32>
    %68 = arith.addf %64, %67 : vector<8x512xf32>
    %cst_52 = arith.constant 0.000000e+00 : f32
    %69 = vector.broadcast %cst_52 : f32 to vector<8x512xf32>
    %70 = arith.maximumf %68, %69 : vector<8x512xf32>
    %71 = arith.addf %4, %70 : vector<8x512xf32>
    %72 = arith.truncf %71 : vector<8x512xf32> to vector<8x512xbf16>
    %c1_53 = arith.constant 1 : index
    %c0_54 = arith.constant 0 : index
    %c0_55 = arith.constant 0 : index
    %73 = vector.load %arg11[%c1_53, %c0_54, %c0_55] : memref<3x512x512xbf16, #tpu.memory_space<vmem>>, vector<1x512x512xbf16>
    %74 = vector.shape_cast %73 : vector<1x512x512xbf16> to vector<512x512xbf16>
    %cst_56 = arith.constant dense<0.000000e+00> : vector<8x512xf32>
    %75 = tpu.matmul %72, %74, %cst_56 {dimension_numbers = #tpu.dot_dimension_numbers<[1], [0], [0], [1], [0, 0, 1, 1], [], []>} : vector<8x512xbf16>, vector<512x512xbf16>, vector<8x512xf32> -> vector<8x512xf32>
    %c1_57 = arith.constant 1 : index
    %c0_58 = arith.constant 0 : index
    %c0_59 = arith.constant 0 : index
    %76 = vector.load %arg12[%c1_57, %c0_58, %c0_59] : memref<3x1x512xf32, #tpu.memory_space<vmem>>, vector<1x1x512xf32>
    %77 = vector.shape_cast %76 : vector<1x1x512xf32> to vector<1x512xf32>
    %78 = vector.broadcast %77 : vector<1x512xf32> to vector<8x512xf32>
    %79 = arith.addf %75, %78 : vector<8x512xf32>
    %cst_60 = arith.constant 0.000000e+00 : f32
    %80 = vector.broadcast %cst_60 : f32 to vector<8x512xf32>
    %81 = arith.maximumf %79, %80 : vector<8x512xf32>
    %82 = arith.addf %71, %81 : vector<8x512xf32>
    %83 = arith.truncf %82 : vector<8x512xf32> to vector<8x512xbf16>
    %c2_61 = arith.constant 2 : index
    %c0_62 = arith.constant 0 : index
    %c0_63 = arith.constant 0 : index
    %84 = vector.load %arg11[%c2_61, %c0_62, %c0_63] : memref<3x512x512xbf16, #tpu.memory_space<vmem>>, vector<1x512x512xbf16>
    %85 = vector.shape_cast %84 : vector<1x512x512xbf16> to vector<512x512xbf16>
    %cst_64 = arith.constant dense<0.000000e+00> : vector<8x512xf32>
    %86 = tpu.matmul %83, %85, %cst_64 {dimension_numbers = #tpu.dot_dimension_numbers<[1], [0], [0], [1], [0, 0, 1, 1], [], []>} : vector<8x512xbf16>, vector<512x512xbf16>, vector<8x512xf32> -> vector<8x512xf32>
    %c2_65 = arith.constant 2 : index
    %c0_66 = arith.constant 0 : index
    %c0_67 = arith.constant 0 : index
    %87 = vector.load %arg12[%c2_65, %c0_66, %c0_67] : memref<3x1x512xf32, #tpu.memory_space<vmem>>, vector<1x1x512xf32>
    %88 = vector.shape_cast %87 : vector<1x1x512xf32> to vector<1x512xf32>
    %89 = vector.broadcast %88 : vector<1x512xf32> to vector<8x512xf32>
    %90 = arith.addf %86, %89 : vector<8x512xf32>
    %cst_68 = arith.constant 0.000000e+00 : f32
    %91 = vector.broadcast %cst_68 : f32 to vector<8x512xf32>
    %92 = arith.maximumf %90, %91 : vector<8x512xf32>
    %93 = arith.addf %82, %92 : vector<8x512xf32>
    %94 = vector.extract_strided_slice %93 {offsets = [4, 0], sizes = [1, 512], strides = [1, 1]} : vector<8x512xf32> to vector<1x512xf32>
    %95 = arith.truncf %94 : vector<1x512xf32> to vector<1x512xbf16>
    %c0_69 = arith.constant 0 : index
    %c0_70 = arith.constant 0 : index
    %96 = vector.load %arg13[%c0_69, %c0_70] : memref<512x896xbf16, #tpu.memory_space<vmem>>, vector<512x896xbf16>
    %cst_71 = arith.constant dense<0.000000e+00> : vector<1x896xf32>
    %97 = tpu.matmul %95, %96, %cst_71 {dimension_numbers = #tpu.dot_dimension_numbers<[1], [0], [0], [1], [0, 0, 1, 1], [], []>} : vector<1x512xbf16>, vector<512x896xbf16>, vector<1x896xf32> -> vector<1x896xf32>
    %c0_72 = arith.constant 0 : index
    %c0_73 = arith.constant 0 : index
    %98 = vector.load %arg14[%c0_72, %c0_73] : memref<1x896xf32, #tpu.memory_space<vmem>>, vector<1x896xf32>
    %99 = arith.addf %97, %98 : vector<1x896xf32>
    %c0_74 = arith.constant 0 : index
    %c0_75 = arith.constant 0 : index
    %c0_76 = arith.constant 0 : index
    %100 = vector.load %arg16[%c0_74, %c0_75, %c0_76] : memref<1x1x896xf32, #tpu.memory_space<vmem>>, vector<1x1x896xf32>
    %101 = vector.shape_cast %100 : vector<1x1x896xf32> to vector<1x896xf32>
    %102 = vector.shape_cast %99 : vector<1x896xf32> to vector<1x1x896xf32>
    tpu.vector_store %arg16[%c0_74, %c0_75, %c0_76], %102 {strides = array<i32>} : memref<1x1x896xf32, #tpu.memory_space<vmem>>, vector<1x1x896xf32>,
    return
  }
  func.func @transform_0(%arg0: i32) -> (i32, i32, i32) {
    %c0_i32 = arith.constant 0 : i32
    %c0_i32_0 = arith.constant 0 : i32
    %c0_i32_1 = arith.constant 0 : i32
    return %arg0, %c0_i32, %c0_i32_0 : i32, i32, i32
  }
  func.func @transform_1(%arg0: i32) -> (i32, i32, i32) {
    %c0_i32 = arith.constant 0 : i32
    %c0_i32_0 = arith.constant 0 : i32
    %c0_i32_1 = arith.constant 0 : i32
    return %arg0, %c0_i32, %c0_i32_0 : i32, i32, i32
  }
  func.func @transform_2(%arg0: i32) -> (i32, i32) {
    %c0_i32 = arith.constant 0 : i32
    %c0_i32_0 = arith.constant 0 : i32
    %c0_i32_1 = arith.constant 0 : i32
    return %c0_i32, %c0_i32_0 : i32, i32
  }
  func.func @transform_3(%arg0: i32) -> (i32, i32) {
    %c0_i32 = arith.constant 0 : i32
    %c0_i32_0 = arith.constant 0 : i32
    %c0_i32_1 = arith.constant 0 : i32
    return %c0_i32, %c0_i32_0 : i32, i32
  }
  func.func @transform_4(%arg0: i32) -> (i32, i32) {
    %c0_i32 = arith.constant 0 : i32
    %c0_i32_0 = arith.constant 0 : i32
    %c0_i32_1 = arith.constant 0 : i32
    return %c0_i32, %c0_i32_0 : i32, i32
  }
  func.func @transform_5(%arg0: i32) -> (i32, i32) {
    %c0_i32 = arith.constant 0 : i32
    %c0_i32_0 = arith.constant 0 : i32
    %c0_i32_1 = arith.constant 0 : i32
    return %c0_i32, %c0_i32_0 : i32, i32
  }
  func.func @transform_6(%arg0: i32) -> (i32, i32, i32) {
    %c0_i32 = arith.constant 0 : i32
    %c0_i32_0 = arith.constant 0 : i32
    %c0_i32_1 = arith.constant 0 : i32
    %c0_i32_2 = arith.constant 0 : i32
    return %c0_i32, %c0_i32_0, %c0_i32_1 : i32, i32, i32
  }
  func.func @transform_7(%arg0: i32) -> (i32, i32, i32) {
    %c0_i32 = arith.constant 0 : i32
    %c0_i32_0 = arith.constant 0 : i32
    %c0_i32_1 = arith.constant 0 : i32
    %c0_i32_2 = arith.constant 0 : i32
    return %c0_i32, %c0_i32_0, %c0_i32_1 : i32, i32, i32
  }
  func.func @transform_8(%arg0: i32) -> (i32, i32) {
    %c0_i32 = arith.constant 0 : i32
    %c0_i32_0 = arith.constant 0 : i32
    %c0_i32_1 = arith.constant 0 : i32
    return %c0_i32, %c0_i32_0 : i32, i32
  }
  func.func @transform_9(%arg0: i32) -> (i32, i32) {
    %c0_i32 = arith.constant 0 : i32
    %c0_i32_0 = arith.constant 0 : i32
    %c0_i32_1 = arith.constant 0 : i32
    return %c0_i32, %c0_i32_0 : i32, i32
  }
  func.func @transform_10(%arg0: i32) -> (i32, i32, i32) {
    %c0_i32 = arith.constant 0 : i32
    %c0_i32_0 = arith.constant 0 : i32
    %c0_i32_1 = arith.constant 0 : i32
    %c0_i32_2 = arith.constant 0 : i32
    return %c0_i32, %c0_i32_0, %c0_i32_1 : i32, i32, i32
  }
  func.func @transform_11(%arg0: i32) -> (i32, i32, i32) {
    %c0_i32 = arith.constant 0 : i32
    %c0_i32_0 = arith.constant 0 : i32
    %c0_i32_1 = arith.constant 0 : i32
    %c0_i32_2 = arith.constant 0 : i32
    return %c0_i32, %c0_i32_0, %c0_i32_1 : i32, i32, i32
  }
  func.func @transform_12(%arg0: i32) -> (i32, i32) {
    %c0_i32 = arith.constant 0 : i32
    %c0_i32_0 = arith.constant 0 : i32
    %c0_i32_1 = arith.constant 0 : i32
    return %c0_i32, %c0_i32_0 : i32, i32
  }
  func.func @transform_13(%arg0: i32) -> (i32, i32) {
    %c0_i32 = arith.constant 0 : i32
    %c0_i32_0 = arith.constant 0 : i32
    %c0_i32_1 = arith.constant 0 : i32
    return %c0_i32, %c0_i32_0 : i32, i32
  }
  func.func @transform_14(%arg0: i32) -> (i32, i32, i32) {
    %c0_i32 = arith.constant 0 : i32
    %c0_i32_0 = arith.constant 0 : i32
    %c0_i32_1 = arith.constant 0 : i32
    return %arg0, %c0_i32, %c0_i32_0 : i32, i32, i32
  }
  func.func @transform_15(%arg0: i32) -> (i32, i32, i32) {
    %c0_i32 = arith.constant 0 : i32
    %c0_i32_0 = arith.constant 0 : i32
    %c0_i32_1 = arith.constant 0 : i32
    return %arg0, %c0_i32, %c0_i32_0 : i32, i32, i32
  }
}

module attributes {stable_mosaic.version = 11 : i64} {
  func.func @_text_link_kernel(%arg0: i32, %arg1: memref<1x36x768xf32, #tpu.memory_space<vmem>>, %arg2: memref<1x152x8xf32, #tpu.memory_space<vmem>>, %arg3: memref<768x512xbf16, #tpu.memory_space<vmem>>, %arg4: memref<1x512xf32, #tpu.memory_space<vmem>>, %arg5: memref<512x256xbf16, #tpu.memory_space<vmem>>, %arg6: memref<1x256xf32, #tpu.memory_space<vmem>>, %arg7: memref<8x256xbf16, #tpu.memory_space<vmem>>, %arg8: memref<1x256xf32, #tpu.memory_space<vmem>>, %arg9: memref<1x152x256xf32, #tpu.memory_space<vmem>>) attributes {dimension_semantics = [#tpu.dimension_semantics<parallel>], iteration_bounds = array<i64: 2>, scalar_prefetch = 0 : i64, scratch_operands = 0 : i64, tpu.core_type = #tpu.core_type<tc>, window_params = [{transform_indices = @transform_0, window_bounds = array<i64: 1, 36, 768>}, {transform_indices = @transform_1, window_bounds = array<i64: 1, 152, 8>}, {pipeline_mode = #tpu.pipeline_mode<synchronous>, transform_indices = @transform_2, window_bounds = array<i64: 768, 512>}, {pipeline_mode = #tpu.pipeline_mode<synchronous>, transform_indices = @transform_3, window_bounds = array<i64: 1, 512>}, {pipeline_mode = #tpu.pipeline_mode<synchronous>, transform_indices = @transform_4, window_bounds = array<i64: 512, 256>}, {pipeline_mode = #tpu.pipeline_mode<synchronous>, transform_indices = @transform_5, window_bounds = array<i64: 1, 256>}, {pipeline_mode = #tpu.pipeline_mode<synchronous>, transform_indices = @transform_6, window_bounds = array<i64: 8, 256>}, {pipeline_mode = #tpu.pipeline_mode<synchronous>, transform_indices = @transform_7, window_bounds = array<i64: 1, 256>}, {transform_indices = @transform_8, window_bounds = array<i64: 1, 152, 256>}]} {
    %c0 = arith.constant 0 : index
    %c0_0 = arith.constant 0 : index
    %c0_1 = arith.constant 0 : index
    %0 = vector.load %arg1[%c0, %c0_0, %c0_1] : memref<1x36x768xf32, #tpu.memory_space<vmem>>, vector<1x36x768xf32>
    %1 = vector.shape_cast %0 : vector<1x36x768xf32> to vector<36x768xf32>
    %2 = arith.truncf %1 : vector<36x768xf32> to vector<36x768xbf16>
    %c0_2 = arith.constant 0 : index
    %c0_3 = arith.constant 0 : index
    %3 = vector.load %arg3[%c0_2, %c0_3] : memref<768x512xbf16, #tpu.memory_space<vmem>>, vector<768x512xbf16>
    %cst = arith.constant dense<0.000000e+00> : vector<36x512xf32>
    %4 = tpu.matmul %2, %3, %cst {dimension_numbers = #tpu.dot_dimension_numbers<[1], [0], [0], [1], [0, 0, 1, 1], [], []>} : vector<36x768xbf16>, vector<768x512xbf16>, vector<36x512xf32> -> vector<36x512xf32>
    %c0_4 = arith.constant 0 : index
    %c0_5 = arith.constant 0 : index
    %5 = vector.load %arg4[%c0_4, %c0_5] : memref<1x512xf32, #tpu.memory_space<vmem>>, vector<1x512xf32>
    %6 = vector.broadcast %5 : vector<1x512xf32> to vector<36x512xf32>
    %7 = arith.addf %4, %6 : vector<36x512xf32>
    %cst_6 = arith.constant 0.000000e+00 : f32
    %8 = vector.broadcast %cst_6 : f32 to vector<36x512xf32>
    %9 = arith.maximumf %7, %8 : vector<36x512xf32>
    %10 = arith.truncf %9 : vector<36x512xf32> to vector<36x512xbf16>
    %c0_7 = arith.constant 0 : index
    %c0_8 = arith.constant 0 : index
    %11 = vector.load %arg5[%c0_7, %c0_8] : memref<512x256xbf16, #tpu.memory_space<vmem>>, vector<512x256xbf16>
    %cst_9 = arith.constant dense<0.000000e+00> : vector<36x256xf32>
    %12 = tpu.matmul %10, %11, %cst_9 {dimension_numbers = #tpu.dot_dimension_numbers<[1], [0], [0], [1], [0, 0, 1, 1], [], []>} : vector<36x512xbf16>, vector<512x256xbf16>, vector<36x256xf32> -> vector<36x256xf32>
    %c0_10 = arith.constant 0 : index
    %c0_11 = arith.constant 0 : index
    %13 = vector.load %arg6[%c0_10, %c0_11] : memref<1x256xf32, #tpu.memory_space<vmem>>, vector<1x256xf32>
    %14 = vector.broadcast %13 : vector<1x256xf32> to vector<36x256xf32>
    %15 = arith.addf %12, %14 : vector<36x256xf32>
    %c0_12 = arith.constant 0 : index
    %c0_13 = arith.constant 0 : index
    %c0_14 = arith.constant 0 : index
    %16 = vector.load %arg2[%c0_12, %c0_13, %c0_14] : memref<1x152x8xf32, #tpu.memory_space<vmem>>, vector<1x152x8xf32>
    %17 = vector.shape_cast %16 : vector<1x152x8xf32> to vector<152x8xf32>
    %18 = arith.truncf %17 : vector<152x8xf32> to vector<152x8xbf16>
    %c0_15 = arith.constant 0 : index
    %c0_16 = arith.constant 0 : index
    %19 = vector.load %arg7[%c0_15, %c0_16] : memref<8x256xbf16, #tpu.memory_space<vmem>>, vector<8x256xbf16>
    %cst_17 = arith.constant dense<0.000000e+00> : vector<152x256xf32>
    %20 = tpu.matmul %18, %19, %cst_17 {dimension_numbers = #tpu.dot_dimension_numbers<[1], [0], [0], [1], [0, 0, 1, 1], [], []>} : vector<152x8xbf16>, vector<8x256xbf16>, vector<152x256xf32> -> vector<152x256xf32>
    %c0_18 = arith.constant 0 : index
    %c0_19 = arith.constant 0 : index
    %21 = vector.load %arg8[%c0_18, %c0_19] : memref<1x256xf32, #tpu.memory_space<vmem>>, vector<1x256xf32>
    %22 = vector.broadcast %21 : vector<1x256xf32> to vector<152x256xf32>
    %23 = arith.addf %20, %22 : vector<152x256xf32>
    %24 = arith.truncf %15 : vector<36x256xf32> to vector<36x256xbf16>
    %25 = arith.truncf %23 : vector<152x256xf32> to vector<152x256xbf16>
    %cst_20 = arith.constant dense<0.000000e+00> : vector<152x36xf32>
    %26 = tpu.matmul %25, %24, %cst_20 {dimension_numbers = #tpu.dot_dimension_numbers<[1], [1], [0], [0], [0, 0, 1, 0], [], []>} : vector<152x256xbf16>, vector<36x256xbf16>, vector<152x36xf32> -> vector<152x36xf32>
    %cst_21 = arith.constant 6.250000e-02 : f32
    %27 = vector.broadcast %cst_21 : f32 to vector<152x36xf32>
    %28 = arith.mulf %26, %27 : vector<152x36xf32>
    %cst_22 = arith.constant dense<0xFF800000> : vector<152xf32>
    %29 = vector.multi_reduction <maximumf>, %28, %cst_22 [1] : vector<152x36xf32> to vector<152xf32>
    %30 = vector.shape_cast %29 : vector<152xf32> to vector<152x1xf32>
    %31 = vector.broadcast %30 : vector<152x1xf32> to vector<152x36xf32>
    %32 = arith.subf %28, %31 : vector<152x36xf32>
    %33 = math.exp %32 : vector<152x36xf32>
    %cst_23 = arith.constant dense<0.000000e+00> : vector<152xf32>
    %34 = vector.multi_reduction <add>, %33, %cst_23 [1] : vector<152x36xf32> to vector<152xf32>
    %35 = vector.shape_cast %34 : vector<152xf32> to vector<152x1xf32>
    %36 = vector.broadcast %35 : vector<152x1xf32> to vector<152x36xf32>
    %37 = arith.divf %33, %36 : vector<152x36xf32>
    %38 = arith.truncf %37 : vector<152x36xf32> to vector<152x36xbf16>
    %cst_24 = arith.constant dense<0.000000e+00> : vector<152x256xf32>
    %39 = tpu.matmul %38, %24, %cst_24 {dimension_numbers = #tpu.dot_dimension_numbers<[1], [0], [0], [1], [0, 0, 1, 1], [], []>} : vector<152x36xbf16>, vector<36x256xbf16>, vector<152x256xf32> -> vector<152x256xf32>
    %c0_25 = arith.constant 0 : index
    %c0_26 = arith.constant 0 : index
    %c0_27 = arith.constant 0 : index
    %40 = vector.load %arg9[%c0_25, %c0_26, %c0_27] : memref<1x152x256xf32, #tpu.memory_space<vmem>>, vector<1x152x256xf32>
    %41 = vector.shape_cast %40 : vector<1x152x256xf32> to vector<152x256xf32>
    %42 = vector.shape_cast %39 : vector<152x256xf32> to vector<1x152x256xf32>
    tpu.vector_store %arg9[%c0_25, %c0_26, %c0_27], %42 {strides = array<i32>} : memref<1x152x256xf32, #tpu.memory_space<vmem>>, vector<1x152x256xf32>,
    return
  }
  func.func @transform_0(%arg0: i32) -> (i32, i32, i32) {
    %c0_i32 = arith.constant 0 : i32
    %c0_i32_0 = arith.constant 0 : i32
    %c0_i32_1 = arith.constant 0 : i32
    return %arg0, %c0_i32, %c0_i32_0 : i32, i32, i32
  }
  func.func @transform_1(%arg0: i32) -> (i32, i32, i32) {
    %c0_i32 = arith.constant 0 : i32
    %c0_i32_0 = arith.constant 0 : i32
    %c0_i32_1 = arith.constant 0 : i32
    return %arg0, %c0_i32, %c0_i32_0 : i32, i32, i32
  }
  func.func @transform_2(%arg0: i32) -> (i32, i32) {
    %c0_i32 = arith.constant 0 : i32
    %c0_i32_0 = arith.constant 0 : i32
    %c0_i32_1 = arith.constant 0 : i32
    return %c0_i32, %c0_i32_0 : i32, i32
  }
  func.func @transform_3(%arg0: i32) -> (i32, i32) {
    %c0_i32 = arith.constant 0 : i32
    %c0_i32_0 = arith.constant 0 : i32
    %c0_i32_1 = arith.constant 0 : i32
    return %c0_i32, %c0_i32_0 : i32, i32
  }
  func.func @transform_4(%arg0: i32) -> (i32, i32) {
    %c0_i32 = arith.constant 0 : i32
    %c0_i32_0 = arith.constant 0 : i32
    %c0_i32_1 = arith.constant 0 : i32
    return %c0_i32, %c0_i32_0 : i32, i32
  }
  func.func @transform_5(%arg0: i32) -> (i32, i32) {
    %c0_i32 = arith.constant 0 : i32
    %c0_i32_0 = arith.constant 0 : i32
    %c0_i32_1 = arith.constant 0 : i32
    return %c0_i32, %c0_i32_0 : i32, i32
  }
  func.func @transform_6(%arg0: i32) -> (i32, i32) {
    %c0_i32 = arith.constant 0 : i32
    %c0_i32_0 = arith.constant 0 : i32
    %c0_i32_1 = arith.constant 0 : i32
    return %c0_i32, %c0_i32_0 : i32, i32
  }
  func.func @transform_7(%arg0: i32) -> (i32, i32) {
    %c0_i32 = arith.constant 0 : i32
    %c0_i32_0 = arith.constant 0 : i32
    %c0_i32_1 = arith.constant 0 : i32
    return %c0_i32, %c0_i32_0 : i32, i32
  }
  func.func @transform_8(%arg0: i32) -> (i32, i32, i32) {
    %c0_i32 = arith.constant 0 : i32
    %c0_i32_0 = arith.constant 0 : i32
    %c0_i32_1 = arith.constant 0 : i32
    return %arg0, %c0_i32, %c0_i32_0 : i32, i32, i32
  }
}

</mosaic_0001>

<llo_original>
// kernel: _forward_impl.3
$region0: #{_forward_impl.3}
  #allocation0 [shape = 'u32[]', space=smem, size = 0x4, offset = 0x4, fixed_abs, tag = 'smem constant byte address 0x4 - core index']
  #allocation1 [shape = 'u32[72,128]{1,0:T(1,128)}', space=vmem, size = 0x9000, scoped, tag = 'internal scratch']
  %s0 = inlined_call_operand.vmem [shape: f32[2,36,768], index: 0, kind: input, shape index: {}]
  %s1 = inlined_call_operand.vmem [shape: f32[2,152,8], index: 1, kind: input, shape index: {}]
  %s2 = inlined_call_operand.vmem [shape: bf16[768,512], index: 2, kind: input, shape index: {}]
  %s3 = inlined_call_operand.vmem [shape: f32[1,512], index: 3, kind: input, shape index: {}]
  %s4 = inlined_call_operand.vmem [shape: bf16[512,256], index: 4, kind: input, shape index: {}]
  %s5 = inlined_call_operand.vmem [shape: f32[1,256], index: 5, kind: input, shape index: {}]
  %s6 = inlined_call_operand.vmem [shape: bf16[8,256], index: 6, kind: input, shape index: {}]
  %s7 = inlined_call_operand.vmem [shape: f32[1,256], index: 7, kind: input, shape index: {}]
  %s8 = inlined_call_operand.vmem [shape: f32[2,152,256], index: 8, kind: output, shape index: {}]
  %s9 = sld [smem:[#allocation0]]
  $region65: #{_forward_impl.3} parent=0
    _
  %s11 = ssub.s32 1, %s9
  %s12 = scalar_select 0, %s11, %s9
  loop: start=0, step=1, limit=4
  $region2: #{_forward_impl.3} parent=0 // loop_pre_header
    _
  $region3: #{_forward_impl.3} parent=0 // loop_header
    %s14 = sphi 0, %s18
    %p15 = scmp.ge.s32.totalorder %s14, 4
    %s24 = sphi 0, %s26
    %s27 = sphi 0, %s24
    %s28 = sphi 0, %s27
    %s44 = sphi 0, %s28
    %s50 = sphi 0, %s52
    %s53 = sphi 0, %s50
    %s54 = sphi 0, %s53
    %s70 = sphi 0, %s54
    %s74 = sphi 0, %s74
    %s76 = sphi 0, %s74
    %s77 = sphi 0, %s76
    %s91 = sphi 0, %s77
    %s95 = sphi 0, %s95
    %s97 = sphi 0, %s95
    %s98 = sphi 0, %s97
    %s112 = sphi 0, %s98
    %s116 = sphi 0, %s116
    %s118 = sphi 0, %s116
    %s119 = sphi 0, %s118
    %s133 = sphi 0, %s119
    %s137 = sphi 0, %s137
    %s139 = sphi 0, %s137
    %s140 = sphi 0, %s139
    %s154 = sphi 0, %s140
    %s158 = sphi 0, %s158
    %s160 = sphi 0, %s158
    %s161 = sphi 0, %s160
    %s175 = sphi 0, %s161
    %s179 = sphi 0, %s179
    %s181 = sphi 0, %s179
    %s182 = sphi 0, %s181
    %s196 = sphi 0, %s182
    %s202 = sphi 0, %s204
    %s205 = sphi 0, %s202
    %s206 = sphi 0, %s205
    %s222 = sphi 0, %s206
  $region4: #{_forward_impl.3} parent=0 // loop_header_branch
    %17 = sbr.rel (%p15) target = $region8
  $region5: #{_forward_impl.3} parent=0 // loop_body
    %s19 = ssub.s32 %s14, 1
    %s20 = ssub.s32 %s14, 2
    %s21 = sadd.s32 %s14, 1
    %s22 = ssub.s32 %s14, %s21
    %p23 = scmp.eq.s32.totalorder %s22, 0
    %s25 = sadd.s32 %s24, 1
    %s26 = scalar_select %p23, %s24, %s25
    %p29 = pneg %p23
    %p30 = scmp.eq.s32.totalorder %s14, 1
    %p31 = por %p29, %p30
    %p32 = scmp.ne.s32.totalorder %s24, %s27
    %p33 = scmp.eq.s32.totalorder %s14, 0
    %p34 = por %p32, %p33
    %p35 = scmp.ne.s32.totalorder %s24, %s27
    %p36 = scmp.eq.s32.totalorder %s19, 1
    %p37 = por %p35, %p36
    %p38 = scmp.ne.s32.totalorder %s27, %s28
    %p39 = scmp.eq.s32.totalorder %s19, 0
    %p40 = por %p38, %p39
    %p41 = scmp.ne.s32.totalorder %s27, %s28
    %p42 = scmp.eq.s32.totalorder %s20, 1
    %p43 = por %p41, %p42
    %p45 = scmp.ne.s32.totalorder %s28, %s44
    %p46 = scmp.eq.s32.totalorder %s20, 0
    %p47 = por %p45, %p46
    %s48 = ssub.s32 %s14, %s21
    %p49 = scmp.eq.s32.totalorder %s48, 0
    %s51 = sadd.s32 %s50, 1
    %s52 = scalar_select %p49, %s50, %s51
    %p55 = pneg %p49
    %p56 = scmp.eq.s32.totalorder %s14, 1
    %p57 = por %p55, %p56
    %p58 = scmp.ne.s32.totalorder %s50, %s53
    %p59 = scmp.eq.s32.totalorder %s14, 0
    %p60 = por %p58, %p59
    %p61 = scmp.ne.s32.totalorder %s50, %s53
    %p62 = scmp.eq.s32.totalorder %s19, 1
    %p63 = por %p61, %p62
    %p64 = scmp.ne.s32.totalorder %s53, %s54
    %p65 = scmp.eq.s32.totalorder %s19, 0
    %p66 = por %p64, %p65
    %p67 = scmp.ne.s32.totalorder %s53, %s54
    %p68 = scmp.eq.s32.totalorder %s20, 1
    %p69 = por %p67, %p68
    %p71 = scmp.ne.s32.totalorder %s54, %s70
    %p72 = scmp.eq.s32.totalorder %s20, 0
    %p73 = por %p71, %p72
    %s75 = sadd.s32 %s74, 1
    %p78 = scmp.eq.s32.totalorder %s14, 1
    %p79 = scmp.ne.s32.totalorder %s74, %s76
    %p80 = scmp.eq.s32.totalorder %s14, 0
    %p81 = por %p79, %p80
    %p82 = scmp.ne.s32.totalorder %s74, %s76
    %p83 = scmp.eq.s32.totalorder %s19, 1
    %p84 = por %p82, %p83
    %p85 = scmp.ne.s32.totalorder %s76, %s77
    %p86 = scmp.eq.s32.totalorder %s19, 0
    %p87 = por %p85, %p86
    %p88 = scmp.ne.s32.totalorder %s76, %s77
    %p89 = scmp.eq.s32.totalorder %s20, 1
    %p90 = por %p88, %p89
    %p92 = scmp.ne.s32.totalorder %s77, %s91
    %p93 = scmp.eq.s32.totalorder %s20, 0
    %p94 = por %p92, %p93
    %s96 = sadd.s32 %s95, 1
    %p99 = scmp.eq.s32.totalorder %s14, 1
    %p100 = scmp.ne.s32.totalorder %s95, %s97
    %p101 = scmp.eq.s32.totalorder %s14, 0
    %p102 = por %p100, %p101
    %p103 = scmp.ne.s32.totalorder %s95, %s97
    %p104 = scmp.eq.s32.totalorder %s19, 1
    %p105 = por %p103, %p104
    %p106 = scmp.ne.s32.totalorder %s97, %s98
    %p107 = scmp.eq.s32.totalorder %s19, 0
    %p108 = por %p106, %p107
    %p109 = scmp.ne.s32.totalorder %s97, %s98
    %p110 = scmp.eq.s32.totalorder %s20, 1
    %p111 = por %p109, %p110
    %p113 = scmp.ne.s32.totalorder %s98, %s112
    %p114 = scmp.eq.s32.totalorder %s20, 0
    %p115 = por %p113, %p114
    %s117 = sadd.s32 %s116, 1
    %p120 = scmp.eq.s32.totalorder %s14, 1
    %p121 = scmp.ne.s32.totalorder %s116, %s118
    %p122 = scmp.eq.s32.totalorder %s14, 0
    %p123 = por %p121, %p122
    %p124 = scmp.ne.s32.totalorder %s116, %s118
    %p125 = scmp.eq.s32.totalorder %s19, 1
    %p126 = por %p124, %p125
    %p127 = scmp.ne.s32.totalorder %s118, %s119
    %p128 = scmp.eq.s32.totalorder %s19, 0
    %p129 = por %p127, %p128
    %p130 = scmp.ne.s32.totalorder %s118, %s119
    %p131 = scmp.eq.s32.totalorder %s20, 1
    %p132 = por %p130, %p131
    %p134 = scmp.ne.s32.totalorder %s119, %s133
    %p135 = scmp.eq.s32.totalorder %s20, 0
    %p136 = por %p134, %p135
    %s138 = sadd.s32 %s137, 1
    %p141 = scmp.eq.s32.totalorder %s14, 1
    %p142 = scmp.ne.s32.totalorder %s137, %s139
    %p143 = scmp.eq.s32.totalorder %s14, 0
    %p144 = por %p142, %p143
    %p145 = scmp.ne.s32.totalorder %s137, %s139
    %p146 = scmp.eq.s32.totalorder %s19, 1
    %p147 = por %p145, %p146
    %p148 = scmp.ne.s32.totalorder %s139, %s140
    %p149 = scmp.eq.s32.totalorder %s19, 0
    %p150 = por %p148, %p149
    %p151 = scmp.ne.s32.totalorder %s139, %s140
    %p152 = scmp.eq.s32.totalorder %s20, 1
    %p153 = por %p151, %p152
    %p155 = scmp.ne.s32.totalorder %s140, %s154
    %p156 = scmp.eq.s32.totalorder %s20, 0
    %p157 = por %p155, %p156
    %s159 = sadd.s32 %s158, 1
    %p162 = scmp.eq.s32.totalorder %s14, 1
    %p163 = scmp.ne.s32.totalorder %s158, %s160
    %p164 = scmp.eq.s32.totalorder %s14, 0
    %p165 = por %p163, %p164
    %p166 = scmp.ne.s32.totalorder %s158, %s160
    %p167 = scmp.eq.s32.totalorder %s19, 1
    %p168 = por %p166, %p167
    %p169 = scmp.ne.s32.totalorder %s160, %s161
    %p170 = scmp.eq.s32.totalorder %s19, 0
    %p171 = por %p169, %p170
    %p172 = scmp.ne.s32.totalorder %s160, %s161
    %p173 = scmp.eq.s32.totalorder %s20, 1
    %p174 = por %p172, %p173
    %p176 = scmp.ne.s32.totalorder %s161, %s175
    %p177 = scmp.eq.s32.totalorder %s20, 0
    %p178 = por %p176, %p177
    %s180 = sadd.s32 %s179, 1
    %p183 = scmp.eq.s32.totalorder %s14, 1
    %p184 = scmp.ne.s32.totalorder %s179, %s181
    %p185 = scmp.eq.s32.totalorder %s14, 0
    %p186 = por %p184, %p185
    %p187 = scmp.ne.s32.totalorder %s179, %s181
    %p188 = scmp.eq.s32.totalorder %s19, 1
    %p189 = por %p187, %p188
    %p190 = scmp.ne.s32.totalorder %s181, %s182
    %p191 = scmp.eq.s32.totalorder %s19, 0
    %p192 = por %p190, %p191
    %p193 = scmp.ne.s32.totalorder %s181, %s182
    %p194 = scmp.eq.s32.totalorder %s20, 1
    %p195 = por %p193, %p194
    %p197 = scmp.ne.s32.totalorder %s182, %s196
    %p198 = scmp.eq.s32.totalorder %s20, 0
    %p199 = por %p197, %p198
    %s200 = ssub.s32 %s14, %s21
    %p201 = scmp.eq.s32.totalorder %s200, 0
    %s203 = sadd.s32 %s202, 1
    %s204 = scalar_select %p201, %s202, %s203
    %p207 = pneg %p201
    %p208 = scmp.eq.s32.totalorder %s14, 1
    %p209 = por %p207, %p208
    %p210 = scmp.ne.s32.totalorder %s202, %s205
    %p211 = scmp.eq.s32.totalorder %s14, 0
    %p212 = por %p210, %p211
    %p213 = scmp.ne.s32.totalorder %s202, %s205
    %p214 = scmp.eq.s32.totalorder %s19, 1
    %p215 = por %p213, %p214
    %p216 = scmp.ne.s32.totalorder %s205, %s206
    %p217 = scmp.eq.s32.totalorder %s19, 0
    %p218 = por %p216, %p217
    %p219 = scmp.ne.s32.totalorder %s205, %s206
    %p220 = scmp.eq.s32.totalorder %s20, 1
    %p221 = por %p219, %p220
    %p223 = scmp.ne.s32.totalorder %s206, %s222
    %p224 = scmp.eq.s32.totalorder %s20, 0
    %p225 = por %p223, %p224
    %p226 = scmp.le.s32.totalorder 1, %s14
    %p227 = scmp.lt.s32.totalorder %s14, 3
    %p228 = pnand %p226, %p227
    %p229 = pneg %p228
    // Predicated region
    $region9: #{_forward_impl.3} parent=5 // pred_check
      _
    $region10: #{_forward_impl.3} parent=5 // pred_check_branch
      %231 = sbr.rel (%p228) target = $region12
    $region11: #{_forward_impl.3} parent=5 // pred_region
      %s232 = ssub.s32 %s14, 1
      // Predicated region
      $region13: #{_forward_impl.3} parent=11 // pred_check
        %p233 = pneg %p87
      $region14: #{_forward_impl.3} parent=11 // pred_check_branch
        %235 = sbr.rel (%p233) target = $region16
      $region15: #{_forward_impl.3} parent=11 // pred_region
        _
      $region16: #{_forward_impl.3} parent=11 // pred_fallthru
        _
      // Predicated region
      $region17: #{_forward_impl.3} parent=11 // pred_check
        %p236 = pneg %p108
      $region18: #{_forward_impl.3} parent=11 // pred_check_branch
        %238 = sbr.rel (%p236) target = $region20
      $region19: #{_forward_impl.3} parent=11 // pred_region
        _
      $region20: #{_forward_impl.3} parent=11 // pred_fallthru
        _
      // Predicated region
      $region21: #{_forward_impl.3} parent=11 // pred_check
        %p239 = pneg %p129
      $region22: #{_forward_impl.3} parent=11 // pred_check_branch
        %241 = sbr.rel (%p239) target = $region24
      $region23: #{_forward_impl.3} parent=11 // pred_region
        _
      $region24: #{_forward_impl.3} parent=11 // pred_fallthru
        _
      // Predicated region
      $region25: #{_forward_impl.3} parent=11 // pred_check
        %p242 = pneg %p150
      $region26: #{_forward_impl.3} parent=11 // pred_check_branch
        %244 = sbr.rel (%p242) target = $region28
      $region27: #{_forward_impl.3} parent=11 // pred_region
        _
      $region28: #{_forward_impl.3} parent=11 // pred_fallthru
        _
      // Predicated region
      $region29: #{_forward_impl.3} parent=11 // pred_check
        %p245 = pneg %p171
      $region30: #{_forward_impl.3} parent=11 // pred_check_branch
        %247 = sbr.rel (%p245) target = $region32
      $region31: #{_forward_impl.3} parent=11 // pred_region
        _
      $region32: #{_forward_impl.3} parent=11 // pred_fallthru
        _
      // Predicated region
      $region33: #{_forward_impl.3} parent=11 // pred_check
        %p248 = pneg %p192
      $region34: #{_forward_impl.3} parent=11 // pred_check_branch
        %250 = sbr.rel (%p248) target = $region36
      $region35: #{_forward_impl.3} parent=11 // pred_region
        _
      $region36: #{_forward_impl.3} parent=11 // pred_fallthru
        _
    $region12: #{_forward_impl.3} parent=5 // pred_fallthru
      _
    %p251 = scmp.lt.s32.totalorder %s14, 2
    // Predicated region
    $region37: #{_forward_impl.3} parent=5 // pred_check
      %p252 = pneg %p251
    $region38: #{_forward_impl.3} parent=5 // pred_check_branch
      %254 = sbr.rel (%p252) target = $region40
    $region39: #{_forward_impl.3} parent=5 // pred_region
      // Predicated region
      $region41: #{_forward_impl.3} parent=39 // pred_check
        %p255 = pneg %p34
      $region42: #{_forward_impl.3} parent=39 // pred_check_branch
        %257 = sbr.rel (%p255) target = $region44
      $region43: #{_forward_impl.3} parent=39 // pred_region
        %p258 = scmp.lt.s32.totalorder %s14, 1
        %s259 = scalar_select %p258, %s14, 1
        %s260 = smul.addr %s259, 30
        %s261 = smul.addr %s260, 8
        %s262 = scalar_lea.vmem %s0, %s261
      $region44: #{_forward_impl.3} parent=39 // pred_fallthru
        _
      // Predicated region
      $region45: #{_forward_impl.3} parent=39 // pred_check
        %p263 = pneg %p60
      $region46: #{_forward_impl.3} parent=39 // pred_check_branch
        %265 = sbr.rel (%p263) target = $region48
      $region47: #{_forward_impl.3} parent=39 // pred_region
        %p266 = scmp.lt.s32.totalorder %s14, 1
        %s267 = scalar_select %p266, %s14, 1
        %s268 = smul.addr %s267, 19
        %s269 = smul.addr %s268, 8
        %s270 = scalar_lea.vmem %s1, %s269
      $region48: #{_forward_impl.3} parent=39 // pred_fallthru
        _
    $region40: #{_forward_impl.3} parent=5 // pred_fallthru
      _
    %p271 = scmp.le.s32.totalorder 1, %s14
    %p272 = scmp.lt.s32.totalorder %s14, 3
    %p273 = pnand %p271, %p272
    %p274 = pneg %p273
    // Predicated region
    $region49: #{_forward_impl.3} parent=5 // pred_check
      _
    $region50: #{_forward_impl.3} parent=5 // pred_check_branch
      %276 = sbr.rel (%p273) target = $region52
    $region51: #{_forward_impl.3} parent=5 // pred_region
      %s277 = ssub.s32 %s14, 1
      %p278 = scmp.lt.s32.totalorder %s19, 1
      %s279 = scalar_select %p278, %s19, 1
      %s280 = smul.addr %s279, 30
      %s281 = smul.addr %s280, 8
      %s282 = scalar_lea.vmem %s0, %s281
      %p283 = pneg %p40
      %p284 = pneg %p37
      %p285 = scmp.lt.s32.totalorder %s19, 1
      %s286 = scalar_select %p285, %s19, 1
      %s287 = smul.addr %s286, 19
      %s288 = smul.addr %s287, 8
      %s289 = scalar_lea.vmem %s1, %s288
      %p290 = pneg %p66
      %p291 = pneg %p63
      %p292 = pneg %p87
      %p293 = pneg %p84
      %p294 = pneg %p108
      %p295 = pneg %p105
      %p296 = pneg %p129
      %p297 = pneg %p126
      %p298 = pneg %p150
      %p299 = pneg %p147
      %p300 = pneg %p171
      %p301 = pneg %p168
      %p302 = pneg %p192
      %p303 = pneg %p189
      %p304 = pneg %p218
      %p305 = pneg %p215
      %p306 = scmp.lt.s32.totalorder %s19, 1
      %s307 = scalar_select %p306, %s19, 1
      %s308 = smul.addr %s307, 38
      %s309 = smul.addr %s308, 8
      %s310 = scalar_lea.vmem %s8, %s309
      %p311 = scmp.lt.s32.totalorder %s19, 1
      %s312 = scalar_select %p311, %s19, 1
      %s313 = smul.addr %s312, 30
      %s314 = smul.addr %s313, 8
      %s315 = scalar_lea.vmem %s0, %s314
      %p316 = scmp.lt.s32.totalorder %s19, 1
      %s317 = scalar_select %p316, %s19, 1
      %s318 = smul.addr %s317, 19
      %s319 = smul.addr %s318, 8
      %s320 = scalar_lea.vmem %s1, %s319
      %p321 = scmp.lt.s32.totalorder %s19, 1
      %s322 = scalar_select %p321, %s19, 1
      %s323 = smul.addr %s322, 38
      %s324 = smul.addr %s323, 8
      %s325 = scalar_lea.vmem %s8, %s324
      %v327 = vld [vmem:[%s315] sm:$0xff]
      %v328 = vld [vmem:[%s315 + $0x8] sm:$0xff]
      %v329 = vld [vmem:[%s315 + $0x10] sm:$0xff]
      %v330 = vld [vmem:[%s315 + $0x18] sm:$0xff]
      %v331 = vld [vmem:[%s315 + $0x20] sm:$0xff]
      %v332 = vld [vmem:[%s315 + $0x28] sm:$0xff]
      %v333 = vld [vmem:[%s315 + $0x30] sm:$0xff]
      %v334 = vld [vmem:[%s315 + $0x38] sm:$0xff]
      %v335 = vld [vmem:[%s315 + $0x40] sm:$0xff]
      %v336 = vld [vmem:[%s315 + $0x48] sm:$0xff]
      %v337 = vld [vmem:[%s315 + $0x50] sm:$0xff]
      %v338 = vld [vmem:[%s315 + $0x58] sm:$0xff]
      %v339 = vld [vmem:[%s315 + $0x60] sm:$0xff]
      %v340 = vld [vmem:[%s315 + $0x68] sm:$0xff]
      %v341 = vld [vmem:[%s315 + $0x70] sm:$0xff]
      %v342 = vld [vmem:[%s315 + $0x78] sm:$0xff]
      %v343 = vld [vmem:[%s315 + $0x80] sm:$0xff]
      %v344 = vld [vmem:[%s315 + $0x88] sm:$0xff]
      %v345 = vld [vmem:[%s315 + $0x90] sm:$0xff]
      %v346 = vld [vmem:[%s315 + $0x98] sm:$0xff]
      %v347 = vld [vmem:[%s315 + $0xa0] sm:$0xff]
      %v348 = vld [vmem:[%s315 + $0xa8] sm:$0xff]
      %v349 = vld [vmem:[%s315 + $0xb0] sm:$0xff]
      %v350 = vld [vmem:[%s315 + $0xb8] sm:$0xff]
      %v351 = vld [vmem:[%s315 + $0xc0] sm:$0xf]
      %v352 = vld [vmem:[%s315 + $0xc8] sm:$0xf]
      %v353 = vld [vmem:[%s315 + $0xd0] sm:$0xf]
      %v354 = vld [vmem:[%s315 + $0xd8] sm:$0xf]
      %v355 = vld [vmem:[%s315 + $0xe0] sm:$0xf]
      %v356 = vld [vmem:[%s315 + $0xe8] sm:$0xf]
      %v357 = vpack.c.bf16 %v333, %v327
      %v358 = vpack.c.bf16 %v334, %v328
      %v359 = vpack.c.bf16 %v335, %v329
      %v360 = vpack.c.bf16 %v336, %v330
      %v361 = vpack.c.bf16 %v337, %v331
      %v362 = vpack.c.bf16 %v338, %v332
      %v363 = vpack.c.bf16 %v345, %v339
      %v364 = vpack.c.bf16 %v346, %v340
      %v365 = vpack.c.bf16 %v347, %v341
      %v366 = vpack.c.bf16 %v348, %v342
      %v367 = vpack.c.bf16 %v349, %v343
      %v368 = vpack.c.bf16 %v350, %v344
      %v369 = vpack.c.bf16 %v351, %v351
      %v370 = vpack.c.bf16 %v352, %v352
      %v371 = vpack.c.bf16 %v353, %v353
      %v372 = vpack.c.bf16 %v354, %v354
      %v373 = vpack.c.bf16 %v355, %v355
      %v374 = vpack.c.bf16 %v356, %v356
      %v375 = vld [vmem:[%s2] sm:$0xff]
      %v376 = vld [vmem:[%s2 + $0x8] sm:$0xff]
      %v377 = vld [vmem:[%s2 + $0x10] sm:$0xff]
      %v378 = vld [vmem:[%s2 + $0x18] sm:$0xff]
      %v379 = vld [vmem:[%s2 + $0x20] sm:$0xff]
      %v380 = vld [vmem:[%s2 + $0x28] sm:$0xff]
      %v381 = vld [vmem:[%s2 + $0x30] sm:$0xff]
      %v382 = vld [vmem:[%s2 + $0x38] sm:$0xff]
      %v383 = vld [vmem:[%s2 + $0x40] sm:$0xff]
      %v384 = vld [vmem:[%s2 + $0x48] sm:$0xff]
      %v385 = vld [vmem:[%s2 + $0x50] sm:$0xff]
      %v386 = vld [vmem:[%s2 + $0x58] sm:$0xff]
      %v387 = vld [vmem:[%s2 + $0x60] sm:$0xff]
      %v388 = vld [vmem:[%s2 + $0x68] sm:$0xff]
      %v389 = vld [vmem:[%s2 + $0x70] sm:$0xff]
      %v390 = vld [vmem:[%s2 + $0x78] sm:$0xff]
      %v391 = vld [vmem:[%s2 + $0x80] sm:$0xff]
      %v392 = vld [vmem:[%s2 + $0x88] sm:$0xff]
      %v393 = vld [vmem:[%s2 + $0x90] sm:$0xff]
      %v394 = vld [vmem:[%s2 + $0x98] sm:$0xff]
      %v395 = vld [vmem:[%s2 + $0xa0] sm:$0xff]
      %v396 = vld [vmem:[%s2 + $0xa8] sm:$0xff]
      %v397 = vld [vmem:[%s2 + $0xb0] sm:$0xff]
      %v398 = vld [vmem:[%s2 + $0xb8] sm:$0xff]
      %v399 = vld [vmem:[%s2 + $0xc0] sm:$0xff]
      %v400 = vld [vmem:[%s2 + $0xc8] sm:$0xff]
      %v401 = vld [vmem:[%s2 + $0xd0] sm:$0xff]
      %v402 = vld [vmem:[%s2 + $0xd8] sm:$0xff]
      %v403 = vld [vmem:[%s2 + $0xe0] sm:$0xff]
      %v404 = vld [vmem:[%s2 + $0xe8] sm:$0xff]
      %v405 = vld [vmem:[%s2 + $0xf0] sm:$0xff]
      %v406 = vld [vmem:[%s2 + $0xf8] sm:$0xff]
      %v407 = vld [vmem:[%s2 + $0x100] sm:$0xff]
      %v408 = vld [vmem:[%s2 + $0x108] sm:$0xff]
      %v409 = vld [vmem:[%s2 + $0x110] sm:$0xff]
      %v410 = vld [vmem:[%s2 + $0x118] sm:$0xff]
      %v411 = vld [vmem:[%s2 + $0x120] sm:$0xff]
      %v412 = vld [vmem:[%s2 + $0x128] sm:$0xff]
      %v413 = vld [vmem:[%s2 + $0x130] sm:$0xff]
      %v414 = vld [vmem:[%s2 + $0x138] sm:$0xff]
      %v415 = vld [vmem:[%s2 + $0x140] sm:$0xff]
      %v416 = vld [vmem:[%s2 + $0x148] sm:$0xff]
      %v417 = vld [vmem:[%s2 + $0x150] sm:$0xff]
      %v418 = vld [vmem:[%s2 + $0x158] sm:$0xff]
      %v419 = vld [vmem:[%s2 + $0x160] sm:$0xff]
      %v420 = vld [vmem:[%s2 + $0x168] sm:$0xff]
      %v421 = vld [vmem:[%s2 + $0x170] sm:$0xff]
      %v422 = vld [vmem:[%s2 + $0x178] sm:$0xff]
      %v423 = vld [vmem:[%s2 + $0x180] sm:$0xff]
      %v424 = vld [vmem:[%s2 + $0x188] sm:$0xff]
      %v425 = vld [vmem:[%s2 + $0x190] sm:$0xff]
      %v426 = vld [vmem:[%s2 + $0x198] sm:$0xff]
      %v427 = vld [vmem:[%s2 + $0x1a0] sm:$0xff]
      %v428 = vld [vmem:[%s2 + $0x1a8] sm:$0xff]
      %v429 = vld [vmem:[%s2 + $0x1b0] sm:$0xff]
      %v430 = vld [vmem:[%s2 + $0x1b8] sm:$0xff]
      %v431 = vld [vmem:[%s2 + $0x1c0] sm:$0xff]
      %v432 = vld [vmem:[%s2 + $0x1c8] sm:$0xff]
      %v433 = vld [vmem:[%s2 + $0x1d0] sm:$0xff]
      %v434 = vld [vmem:[%s2 + $0x1d8] sm:$0xff]
      %v435 = vld [vmem:[%s2 + $0x1e0] sm:$0xff]
      %v436 = vld [vmem:[%s2 + $0x1e8] sm:$0xff]
      %v437 = vld [vmem:[%s2 + $0x1f0] sm:$0xff]
      %v438 = vld [vmem:[%s2 + $0x1f8] sm:$0xff]
      %v439 = vld [vmem:[%s2 + $0x200] sm:$0xff]
      %v440 = vld [vmem:[%s2 + $0x208] sm:$0xff]
      %v441 = vld [vmem:[%s2 + $0x210] sm:$0xff]
      %v442 = vld [vmem:[%s2 + $0x218] sm:$0xff]
      %v443 = vld [vmem:[%s2 + $0x220] sm:$0xff]
      %v444 = vld [vmem:[%s2 + $0x228] sm:$0xff]
      %v445 = vld [vmem:[%s2 + $0x230] sm:$0xff]
      %v446 = vld [vmem:[%s2 + $0x238] sm:$0xff]
      %v447 = vld [vmem:[%s2 + $0x240] sm:$0xff]
      %v448 = vld [vmem:[%s2 + $0x248] sm:$0xff]
      %v449 = vld [vmem:[%s2 + $0x250] sm:$0xff]
      %v450 = vld [vmem:[%s2 + $0x258] sm:$0xff]
      %v451 = vld [vmem:[%s2 + $0x260] sm:$0xff]
      %v452 = vld [vmem:[%s2 + $0x268] sm:$0xff]
      %v453 = vld [vmem:[%s2 + $0x270] sm:$0xff]
      %v454 = vld [vmem:[%s2 + $0x278] sm:$0xff]
      %v455 = vld [vmem:[%s2 + $0x280] sm:$0xff]
      %v456 = vld [vmem:[%s2 + $0x288] sm:$0xff]
      %v457 = vld [vmem:[%s2 + $0x290] sm:$0xff]
      %v458 = vld [vmem:[%s2 + $0x298] sm:$0xff]
      %v459 = vld [vmem:[%s2 + $0x2a0] sm:$0xff]
      %v460 = vld [vmem:[%s2 + $0x2a8] sm:$0xff]
      %v461 = vld [vmem:[%s2 + $0x2b0] sm:$0xff]
      %v462 = vld [vmem:[%s2 + $0x2b8] sm:$0xff]
      %v463 = vld [vmem:[%s2 + $0x2c0] sm:$0xff]
      %v464 = vld [vmem:[%s2 + $0x2c8] sm:$0xff]
      %v465 = vld [vmem:[%s2 + $0x2d0] sm:$0xff]
      %v466 = vld [vmem:[%s2 + $0x2d8] sm:$0xff]
      %v467 = vld [vmem:[%s2 + $0x2e0] sm:$0xff]
      %v468 = vld [vmem:[%s2 + $0x2e8] sm:$0xff]
      %v469 = vld [vmem:[%s2 + $0x2f0] sm:$0xff]
      %v470 = vld [vmem:[%s2 + $0x2f8] sm:$0xff]
      %v471 = vld [vmem:[%s2 + $0x300] sm:$0xff]
      %v472 = vld [vmem:[%s2 + $0x308] sm:$0xff]
      %v473 = vld [vmem:[%s2 + $0x310] sm:$0xff]
      %v474 = vld [vmem:[%s2 + $0x318] sm:$0xff]
      %v475 = vld [vmem:[%s2 + $0x320] sm:$0xff]
      %v476 = vld [vmem:[%s2 + $0x328] sm:$0xff]
      %v477 = vld [vmem:[%s2 + $0x330] sm:$0xff]
      %v478 = vld [vmem:[%s2 + $0x338] sm:$0xff]
      %v479 = vld [vmem:[%s2 + $0x340] sm:$0xff]
      %v480 = vld [vmem:[%s2 + $0x348] sm:$0xff]
      %v481 = vld [vmem:[%s2 + $0x350] sm:$0xff]
      %v482 = vld [vmem:[%s2 + $0x358] sm:$0xff]
      %v483 = vld [vmem:[%s2 + $0x360] sm:$0xff]
      %v484 = vld [vmem:[%s2 + $0x368] sm:$0xff]
      %v485 = vld [vmem:[%s2 + $0x370] sm:$0xff]
      %v486 = vld [vmem:[%s2 + $0x378] sm:$0xff]
      %v487 = vld [vmem:[%s2 + $0x380] sm:$0xff]
      %v488 = vld [vmem:[%s2 + $0x388] sm:$0xff]
      %v489 = vld [vmem:[%s2 + $0x390] sm:$0xff]
      %v490 = vld [vmem:[%s2 + $0x398] sm:$0xff]
      %v491 = vld [vmem:[%s2 + $0x3a0] sm:$0xff]
      %v492 = vld [vmem:[%s2 + $0x3a8] sm:$0xff]
      %v493 = vld [vmem:[%s2 + $0x3b0] sm:$0xff]
      %v494 = vld [vmem:[%s2 + $0x3b8] sm:$0xff]
      %v495 = vld [vmem:[%s2 + $0x3c0] sm:$0xff]
      %v496 = vld [vmem:[%s2 + $0x3c8] sm:$0xff]
      %v497 = vld [vmem:[%s2 + $0x3d0] sm:$0xff]
      %v498 = vld [vmem:[%s2 + $0x3d8] sm:$0xff]
      %v499 = vld [vmem:[%s2 + $0x3e0] sm:$0xff]
      %v500 = vld [vmem:[%s2 + $0x3e8] sm:$0xff]
      %v501 = vld [vmem:[%s2 + $0x3f0] sm:$0xff]
      %v502 = vld [vmem:[%s2 + $0x3f8] sm:$0xff]
      %v503 = vld [vmem:[%s2 + $0x400] sm:$0xff]
      %v504 = vld [vmem:[%s2 + $0x408] sm:$0xff]
      %v505 = vld [vmem:[%s2 + $0x410] sm:$0xff]
      %v506 = vld [vmem:[%s2 + $0x418] sm:$0xff]
      %v507 = vld [vmem:[%s2 + $0x420] sm:$0xff]
      %v508 = vld [vmem:[%s2 + $0x428] sm:$0xff]
      %v509 = vld [vmem:[%s2 + $0x430] sm:$0xff]
      %v510 = vld [vmem:[%s2 + $0x438] sm:$0xff]
      %v511 = vld [vmem:[%s2 + $0x440] sm:$0xff]
      %v512 = vld [vmem:[%s2 + $0x448] sm:$0xff]
      %v513 = vld [vmem:[%s2 + $0x450] sm:$0xff]
      %v514 = vld [vmem:[%s2 + $0x458] sm:$0xff]
      %v515 = vld [vmem:[%s2 + $0x460] sm:$0xff]
      %v516 = vld [vmem:[%s2 + $0x468] sm:$0xff]
      %v517 = vld [vmem:[%s2 + $0x470] sm:$0xff]
      %v518 = vld [vmem:[%s2 + $0x478] sm:$0xff]
      %v519 = vld [vmem:[%s2 + $0x480] sm:$0xff]
      %v520 = vld [vmem:[%s2 + $0x488] sm:$0xff]
      %v521 = vld [vmem:[%s2 + $0x490] sm:$0xff]
      %v522 = vld [vmem:[%s2 + $0x498] sm:$0xff]
      %v523 = vld [vmem:[%s2 + $0x4a0] sm:$0xff]
      %v524 = vld [vmem:[%s2 + $0x4a8] sm:$0xff]
      %v525 = vld [vmem:[%s2 + $0x4b0] sm:$0xff]
      %v526 = vld [vmem:[%s2 + $0x4b8] sm:$0xff]
      %v527 = vld [vmem:[%s2 + $0x4c0] sm:$0xff]
      %v528 = vld [vmem:[%s2 + $0x4c8] sm:$0xff]
      %v529 = vld [vmem:[%s2 + $0x4d0] sm:$0xff]
      %v530 = vld [vmem:[%s2 + $0x4d8] sm:$0xff]
      %v531 = vld [vmem:[%s2 + $0x4e0] sm:$0xff]
      %v532 = vld [vmem:[%s2 + $0x4e8] sm:$0xff]
      %v533 = vld [vmem:[%s2 + $0x4f0] sm:$0xff]
      %v534 = vld [vmem:[%s2 + $0x4f8] sm:$0xff]
      %v535 = vld [vmem:[%s2 + $0x500] sm:$0xff]
      %v536 = vld [vmem:[%s2 + $0x508] sm:$0xff]
      %v537 = vld [vmem:[%s2 + $0x510] sm:$0xff]
      %v538 = vld [vmem:[%s2 + $0x518] sm:$0xff]
      %v539 = vld [vmem:[%s2 + $0x520] sm:$0xff]
      %v540 = vld [vmem:[%s2 + $0x528] sm:$0xff]
      %v541 = vld [vmem:[%s2 + $0x530] sm:$0xff]
      %v542 = vld [vmem:[%s2 + $0x538] sm:$0xff]
      %v543 = vld [vmem:[%s2 + $0x540] sm:$0xff]
      %v544 = vld [vmem:[%s2 + $0x548] sm:$0xff]
      %v545 = vld [vmem:[%s2 + $0x550] sm:$0xff]
      %v546 = vld [vmem:[%s2 + $0x558] sm:$0xff]
      %v547 = vld [vmem:[%s2 + $0x560] sm:$0xff]
      %v548 = vld [vmem:[%s2 + $0x568] sm:$0xff]
      %v549 = vld [vmem:[%s2 + $0x570] sm:$0xff]
      %v550 = vld [vmem:[%s2 + $0x578] sm:$0xff]
      %v551 = vld [vmem:[%s2 + $0x580] sm:$0xff]
      %v552 = vld [vmem:[%s2 + $0x588] sm:$0xff]
      %v553 = vld [vmem:[%s2 + $0x590] sm:$0xff]
      %v554 = vld [vmem:[%s2 + $0x598] sm:$0xff]
      %v555 = vld [vmem:[%s2 + $0x5a0] sm:$0xff]
      %v556 = vld [vmem:[%s2 + $0x5a8] sm:$0xff]
      %v557 = vld [vmem:[%s2 + $0x5b0] sm:$0xff]
      %v558 = vld [vmem:[%s2 + $0x5b8] sm:$0xff]
      %v559 = vld [vmem:[%s2 + $0x5c0] sm:$0xff]
      %v560 = vld [vmem:[%s2 + $0x5c8] sm:$0xff]
      %v561 = vld [vmem:[%s2 + $0x5d0] sm:$0xff]
      %v562 = vld [vmem:[%s2 + $0x5d8] sm:$0xff]
      %v563 = vld [vmem:[%s2 + $0x5e0] sm:$0xff]
      %v564 = vld [vmem:[%s2 + $0x5e8] sm:$0xff]
      %v565 = vld [vmem:[%s2 + $0x5f0] sm:$0xff]
      %v566 = vld [vmem:[%s2 + $0x5f8] sm:$0xff]
      %v567 = vld [vmem:[%s3] sm:$0xf]
      %v569 = vperm.slane %v567, 0
      %v570 = vperm.slane %v567, 1
      %v571 = vperm.slane %v567, 2
      %v572 = vperm.slane %v567, 3
      %v769 = vunpack.c.l.b16 %v375
      %v770 = vunpack.c.h.b16 %v375
      %v771 = vunpack.c.l.b16 %v376
      %v772 = vunpack.c.h.b16 %v376
      %v773 = vunpack.c.l.b16 %v377
      %v774 = vunpack.c.h.b16 %v377
      %v775 = vunpack.c.l.b16 %v378
      %v776 = vunpack.c.h.b16 %v378
      %v777 = vunpack.c.l.b16 %v379
      %v778 = vunpack.c.h.b16 %v379
      %v779 = vunpack.c.l.b16 %v380
      %v780 = vunpack.c.h.b16 %v380
      %v781 = vunpack.c.l.b16 %v381
      %v782 = vunpack.c.h.b16 %v381
      %v783 = vunpack.c.l.b16 %v382
      %v784 = vunpack.c.h.b16 %v382
      %v785 = vunpack.c.l.b16 %v383
      %v786 = vunpack.c.h.b16 %v383
      %v787 = vunpack.c.l.b16 %v384
      %v788 = vunpack.c.h.b16 %v384
      %v789 = vunpack.c.l.b16 %v385
      %v790 = vunpack.c.h.b16 %v385
      %v791 = vunpack.c.l.b16 %v386
      %v792 = vunpack.c.h.b16 %v386
      %v793 = vunpack.c.l.b16 %v387
      %v794 = vunpack.c.h.b16 %v387
      %v795 = vunpack.c.l.b16 %v388
      %v796 = vunpack.c.h.b16 %v388
      %v797 = vunpack.c.l.b16 %v389
      %v798 = vunpack.c.h.b16 %v389
      %v799 = vunpack.c.l.b16 %v390
      %v800 = vunpack.c.h.b16 %v390
      %v801 = vunpack.c.l.b16 %v391
      %v802 = vunpack.c.h.b16 %v391
      %v803 = vunpack.c.l.b16 %v392
      %v804 = vunpack.c.h.b16 %v392
      %v805 = vunpack.c.l.b16 %v393
      %v806 = vunpack.c.h.b16 %v393
      %v807 = vunpack.c.l.b16 %v394
      %v808 = vunpack.c.h.b16 %v394
      %v809 = vunpack.c.l.b16 %v395
      %v810 = vunpack.c.h.b16 %v395
      %v811 = vunpack.c.l.b16 %v396
      %v812 = vunpack.c.h.b16 %v396
      %v813 = vunpack.c.l.b16 %v397
      %v814 = vunpack.c.h.b16 %v397
      %v815 = vunpack.c.l.b16 %v398
      %v816 = vunpack.c.h.b16 %v398
      %v817 = vunpack.c.l.b16 %v399
      %v818 = vunpack.c.h.b16 %v399
      %v819 = vunpack.c.l.b16 %v400
      %v820 = vunpack.c.h.b16 %v400
      %v821 = vunpack.c.l.b16 %v401
      %v822 = vunpack.c.h.b16 %v401
      %v823 = vunpack.c.l.b16 %v402
      %v824 = vunpack.c.h.b16 %v402
      %v825 = vunpack.c.l.b16 %v403
      %v826 = vunpack.c.h.b16 %v403
      %v827 = vunpack.c.l.b16 %v404
      %v828 = vunpack.c.h.b16 %v404
      %v829 = vunpack.c.l.b16 %v405
      %v830 = vunpack.c.h.b16 %v405
      %v831 = vunpack.c.l.b16 %v406
      %v832 = vunpack.c.h.b16 %v406
      %v833 = vunpack.c.l.b16 %v407
      %v834 = vunpack.c.h.b16 %v407
      %v835 = vunpack.c.l.b16 %v408
      %v836 = vunpack.c.h.b16 %v408
      %v837 = vunpack.c.l.b16 %v409
      %v838 = vunpack.c.h.b16 %v409
      %v839 = vunpack.c.l.b16 %v410
      %v840 = vunpack.c.h.b16 %v410
      %v841 = vunpack.c.l.b16 %v411
      %v842 = vunpack.c.h.b16 %v411
      %v843 = vunpack.c.l.b16 %v412
      %v844 = vunpack.c.h.b16 %v412
      %v845 = vunpack.c.l.b16 %v413
      %v846 = vunpack.c.h.b16 %v413
      %v847 = vunpack.c.l.b16 %v414
      %v848 = vunpack.c.h.b16 %v414
      %v849 = vunpack.c.l.b16 %v415
      %v850 = vunpack.c.h.b16 %v415
      %v851 = vunpack.c.l.b16 %v416
      %v852 = vunpack.c.h.b16 %v416
      %v853 = vunpack.c.l.b16 %v417
      %v854 = vunpack.c.h.b16 %v417
      %v855 = vunpack.c.l.b16 %v418
      %v856 = vunpack.c.h.b16 %v418
      %v857 = vunpack.c.l.b16 %v419
      %v858 = vunpack.c.h.b16 %v419
      %v859 = vunpack.c.l.b16 %v420
      %v860 = vunpack.c.h.b16 %v420
      %v861 = vunpack.c.l.b16 %v421
      %v862 = vunpack.c.h.b16 %v421
      %v863 = vunpack.c.l.b16 %v422
      %v864 = vunpack.c.h.b16 %v422
      %v865 = vunpack.c.l.b16 %v423
      %v866 = vunpack.c.h.b16 %v423
      %v867 = vunpack.c.l.b16 %v424
      %v868 = vunpack.c.h.b16 %v424
      %v869 = vunpack.c.l.b16 %v425
      %v870 = vunpack.c.h.b16 %v425
      %v871 = vunpack.c.l.b16 %v426
      %v872 = vunpack.c.h.b16 %v426
      %v873 = vunpack.c.l.b16 %v427
      %v874 = vunpack.c.h.b16 %v427
      %v875 = vunpack.c.l.b16 %v428
      %v876 = vunpack.c.h.b16 %v428
      %v877 = vunpack.c.l.b16 %v429
      %v878 = vunpack.c.h.b16 %v429
      %v879 = vunpack.c.l.b16 %v430
      %v880 = vunpack.c.h.b16 %v430
      %v881 = vunpack.c.l.b16 %v431
      %v882 = vunpack.c.h.b16 %v431
      %v883 = vunpack.c.l.b16 %v432
      %v884 = vunpack.c.h.b16 %v432
      %v885 = vunpack.c.l.b16 %v433
      %v886 = vunpack.c.h.b16 %v433
      %v887 = vunpack.c.l.b16 %v434
      %v888 = vunpack.c.h.b16 %v434
      %v889 = vunpack.c.l.b16 %v435
      %v890 = vunpack.c.h.b16 %v435
      %v891 = vunpack.c.l.b16 %v436
      %v892 = vunpack.c.h.b16 %v436
      %v893 = vunpack.c.l.b16 %v437
      %v894 = vunpack.c.h.b16 %v437
      %v895 = vunpack.c.l.b16 %v438
      %v896 = vunpack.c.h.b16 %v438
      %v897 = vunpack.c.l.b16 %v439
      %v898 = vunpack.c.h.b16 %v439
      %v899 = vunpack.c.l.b16 %v440
      %v900 = vunpack.c.h.b16 %v440
      %v901 = vunpack.c.l.b16 %v441
      %v902 = vunpack.c.h.b16 %v441
      %v903 = vunpack.c.l.b16 %v442
      %v904 = vunpack.c.h.b16 %v442
      %v905 = vunpack.c.l.b16 %v443
      %v906 = vunpack.c.h.b16 %v443
      %v907 = vunpack.c.l.b16 %v444
      %v908 = vunpack.c.h.b16 %v444
      %v909 = vunpack.c.l.b16 %v445
      %v910 = vunpack.c.h.b16 %v445
      %v911 = vunpack.c.l.b16 %v446
      %v912 = vunpack.c.h.b16 %v446
      %v913 = vunpack.c.l.b16 %v447
      %v914 = vunpack.c.h.b16 %v447
      %v915 = vunpack.c.l.b16 %v448
      %v916 = vunpack.c.h.b16 %v448
      %v917 = vunpack.c.l.b16 %v449
      %v918 = vunpack.c.h.b16 %v449
      %v919 = vunpack.c.l.b16 %v450
      %v920 = vunpack.c.h.b16 %v450
      %v921 = vunpack.c.l.b16 %v451
      %v922 = vunpack.c.h.b16 %v451
      %v923 = vunpack.c.l.b16 %v452
      %v924 = vunpack.c.h.b16 %v452
      %v925 = vunpack.c.l.b16 %v453
      %v926 = vunpack.c.h.b16 %v453
      %v927 = vunpack.c.l.b16 %v454
      %v928 = vunpack.c.h.b16 %v454
      %v929 = vunpack.c.l.b16 %v455
      %v930 = vunpack.c.h.b16 %v455
      %v931 = vunpack.c.l.b16 %v456
      %v932 = vunpack.c.h.b16 %v456
      %v933 = vunpack.c.l.b16 %v457
      %v934 = vunpack.c.h.b16 %v457
      %v935 = vunpack.c.l.b16 %v458
      %v936 = vunpack.c.h.b16 %v458
      %v937 = vunpack.c.l.b16 %v459
      %v938 = vunpack.c.h.b16 %v459
      %v939 = vunpack.c.l.b16 %v460
      %v940 = vunpack.c.h.b16 %v460
      %v941 = vunpack.c.l.b16 %v461
      %v942 = vunpack.c.h.b16 %v461
      %v943 = vunpack.c.l.b16 %v462
      %v944 = vunpack.c.h.b16 %v462
      %v945 = vunpack.c.l.b16 %v463
      %v946 = vunpack.c.h.b16 %v463
      %v947 = vunpack.c.l.b16 %v464
      %v948 = vunpack.c.h.b16 %v464
      %v949 = vunpack.c.l.b16 %v465
      %v950 = vunpack.c.h.b16 %v465
      %v951 = vunpack.c.l.b16 %v466
      %v952 = vunpack.c.h.b16 %v466
      %v953 = vunpack.c.l.b16 %v467
      %v954 = vunpack.c.h.b16 %v467
      %v955 = vunpack.c.l.b16 %v468
      %v956 = vunpack.c.h.b16 %v468
      %v957 = vunpack.c.l.b16 %v469
      %v958 = vunpack.c.h.b16 %v469
      %v959 = vunpack.c.l.b16 %v470
      %v960 = vunpack.c.h.b16 %v470
      %v961 = vunpack.c.l.b16 %v471
      %v962 = vunpack.c.h.b16 %v471
      %v963 = vunpack.c.l.b16 %v472
      %v964 = vunpack.c.h.b16 %v472
      %v965 = vunpack.c.l.b16 %v473
      %v966 = vunpack.c.h.b16 %v473
      %v967 = vunpack.c.l.b16 %v474
      %v968 = vunpack.c.h.b16 %v474
      %v969 = vunpack.c.l.b16 %v475
      %v970 = vunpack.c.h.b16 %v475
      %v971 = vunpack.c.l.b16 %v476
      %v972 = vunpack.c.h.b16 %v476
      %v973 = vunpack.c.l.b16 %v477
      %v974 = vunpack.c.h.b16 %v477
      %v975 = vunpack.c.l.b16 %v478
      %v976 = vunpack.c.h.b16 %v478
      %v977 = vunpack.c.l.b16 %v479
      %v978 = vunpack.c.h.b16 %v479
      %v979 = vunpack.c.l.b16 %v480
      %v980 = vunpack.c.h.b16 %v480
      %v981 = vunpack.c.l.b16 %v481
      %v982 = vunpack.c.h.b16 %v481
      %v983 = vunpack.c.l.b16 %v482
      %v984 = vunpack.c.h.b16 %v482
      %v985 = vunpack.c.l.b16 %v483
      %v986 = vunpack.c.h.b16 %v483
      %v987 = vunpack.c.l.b16 %v484
      %v988 = vunpack.c.h.b16 %v484
      %v989 = vunpack.c.l.b16 %v485
      %v990 = vunpack.c.h.b16 %v485
      %v991 = vunpack.c.l.b16 %v486
      %v992 = vunpack.c.h.b16 %v486
      %v993 = vunpack.c.l.b16 %v487
      %v994 = vunpack.c.h.b16 %v487
      %v995 = vunpack.c.l.b16 %v488
      %v996 = vunpack.c.h.b16 %v488
      %v997 = vunpack.c.l.b16 %v489
      %v998 = vunpack.c.h.b16 %v489
      %v999 = vunpack.c.l.b16 %v490
      %v1000 = vunpack.c.h.b16 %v490
      %v1001 = vunpack.c.l.b16 %v491
      %v1002 = vunpack.c.h.b16 %v491
      %v1003 = vunpack.c.l.b16 %v492
      %v1004 = vunpack.c.h.b16 %v492
      %v1005 = vunpack.c.l.b16 %v493
      %v1006 = vunpack.c.h.b16 %v493
      %v1007 = vunpack.c.l.b16 %v494
      %v1008 = vunpack.c.h.b16 %v494
      %v1009 = vunpack.c.l.b16 %v495
      %v1010 = vunpack.c.h.b16 %v495
      %v1011 = vunpack.c.l.b16 %v496
      %v1012 = vunpack.c.h.b16 %v496
      %v1013 = vunpack.c.l.b16 %v497
      %v1014 = vunpack.c.h.b16 %v497
      %v1015 = vunpack.c.l.b16 %v498
      %v1016 = vunpack.c.h.b16 %v498
      %v1017 = vunpack.c.l.b16 %v499
      %v1018 = vunpack.c.h.b16 %v499
      %v1019 = vunpack.c.l.b16 %v500
      %v1020 = vunpack.c.h.b16 %v500
      %v1021 = vunpack.c.l.b16 %v501
      %v1022 = vunpack.c.h.b16 %v501
      %v1023 = vunpack.c.l.b16 %v502
      %v1024 = vunpack.c.h.b16 %v502
      %v1025 = vunpack.c.l.b16 %v503
      %v1026 = vunpack.c.h.b16 %v503
      %v1027 = vunpack.c.l.b16 %v504
      %v1028 = vunpack.c.h.b16 %v504
      %v1029 = vunpack.c.l.b16 %v505
      %v1030 = vunpack.c.h.b16 %v505
      %v1031 = vunpack.c.l.b16 %v506
      %v1032 = vunpack.c.h.b16 %v506
      %v1033 = vunpack.c.l.b16 %v507
      %v1034 = vunpack.c.h.b16 %v507
      %v1035 = vunpack.c.l.b16 %v508
      %v1036 = vunpack.c.h.b16 %v508
      %v1037 = vunpack.c.l.b16 %v509
      %v1038 = vunpack.c.h.b16 %v509
      %v1039 = vunpack.c.l.b16 %v510
      %v1040 = vunpack.c.h.b16 %v510
      %v1041 = vunpack.c.l.b16 %v511
      %v1042 = vunpack.c.h.b16 %v511
      %v1043 = vunpack.c.l.b16 %v512
      %v1044 = vunpack.c.h.b16 %v512
      %v1045 = vunpack.c.l.b16 %v513
      %v1046 = vunpack.c.h.b16 %v513
      %v1047 = vunpack.c.l.b16 %v514
      %v1048 = vunpack.c.h.b16 %v514
      %v1049 = vunpack.c.l.b16 %v515
      %v1050 = vunpack.c.h.b16 %v515
      %v1051 = vunpack.c.l.b16 %v516
      %v1052 = vunpack.c.h.b16 %v516
      %v1053 = vunpack.c.l.b16 %v517
      %v1054 = vunpack.c.h.b16 %v517
      %v1055 = vunpack.c.l.b16 %v518
      %v1056 = vunpack.c.h.b16 %v518
      %v1057 = vunpack.c.l.b16 %v519
      %v1058 = vunpack.c.h.b16 %v519
      %v1059 = vunpack.c.l.b16 %v520
      %v1060 = vunpack.c.h.b16 %v520
      %v1061 = vunpack.c.l.b16 %v521
      %v1062 = vunpack.c.h.b16 %v521
      %v1063 = vunpack.c.l.b16 %v522
      %v1064 = vunpack.c.h.b16 %v522
      %v1065 = vunpack.c.l.b16 %v523
      %v1066 = vunpack.c.h.b16 %v523
      %v1067 = vunpack.c.l.b16 %v524
      %v1068 = vunpack.c.h.b16 %v524
      %v1069 = vunpack.c.l.b16 %v525
      %v1070 = vunpack.c.h.b16 %v525
      %v1071 = vunpack.c.l.b16 %v526
      %v1072 = vunpack.c.h.b16 %v526
      %v1073 = vunpack.c.l.b16 %v527
      %v1074 = vunpack.c.h.b16 %v527
      %v1075 = vunpack.c.l.b16 %v528
      %v1076 = vunpack.c.h.b16 %v528
      %v1077 = vunpack.c.l.b16 %v529
      %v1078 = vunpack.c.h.b16 %v529
      %v1079 = vunpack.c.l.b16 %v530
      %v1080 = vunpack.c.h.b16 %v530
      %v1081 = vunpack.c.l.b16 %v531
      %v1082 = vunpack.c.h.b16 %v531
      %v1083 = vunpack.c.l.b16 %v532
      %v1084 = vunpack.c.h.b16 %v532
      %v1085 = vunpack.c.l.b16 %v533
      %v1086 = vunpack.c.h.b16 %v533
      %v1087 = vunpack.c.l.b16 %v534
      %v1088 = vunpack.c.h.b16 %v534
      %v1089 = vunpack.c.l.b16 %v535
      %v1090 = vunpack.c.h.b16 %v535
      %v1091 = vunpack.c.l.b16 %v536
      %v1092 = vunpack.c.h.b16 %v536
      %v1093 = vunpack.c.l.b16 %v537
      %v1094 = vunpack.c.h.b16 %v537
      %v1095 = vunpack.c.l.b16 %v538
      %v1096 = vunpack.c.h.b16 %v538
      %v1097 = vunpack.c.l.b16 %v539
      %v1098 = vunpack.c.h.b16 %v539
      %v1099 = vunpack.c.l.b16 %v540
      %v1100 = vunpack.c.h.b16 %v540
      %v1101 = vunpack.c.l.b16 %v541
      %v1102 = vunpack.c.h.b16 %v541
      %v1103 = vunpack.c.l.b16 %v542
      %v1104 = vunpack.c.h.b16 %v542
      %v1105 = vunpack.c.l.b16 %v543
      %v1106 = vunpack.c.h.b16 %v543
      %v1107 = vunpack.c.l.b16 %v544
      %v1108 = vunpack.c.h.b16 %v544
      %v1109 = vunpack.c.l.b16 %v545
      %v1110 = vunpack.c.h.b16 %v545
      %v1111 = vunpack.c.l.b16 %v546
      %v1112 = vunpack.c.h.b16 %v546
      %v1113 = vunpack.c.l.b16 %v547
      %v1114 = vunpack.c.h.b16 %v547
      %v1115 = vunpack.c.l.b16 %v548
      %v1116 = vunpack.c.h.b16 %v548
      %v1117 = vunpack.c.l.b16 %v549
      %v1118 = vunpack.c.h.b16 %v549
      %v1119 = vunpack.c.l.b16 %v550
      %v1120 = vunpack.c.h.b16 %v550
      %v1121 = vunpack.c.l.b16 %v551
      %v1122 = vunpack.c.h.b16 %v551
      %v1123 = vunpack.c.l.b16 %v552
      %v1124 = vunpack.c.h.b16 %v552
      %v1125 = vunpack.c.l.b16 %v553
      %v1126 = vunpack.c.h.b16 %v553
      %v1127 = vunpack.c.l.b16 %v554
      %v1128 = vunpack.c.h.b16 %v554
      %v1129 = vunpack.c.l.b16 %v555
      %v1130 = vunpack.c.h.b16 %v555
      %v1131 = vunpack.c.l.b16 %v556
      %v1132 = vunpack.c.h.b16 %v556
      %v1133 = vunpack.c.l.b16 %v557
      %v1134 = vunpack.c.h.b16 %v557
      %v1135 = vunpack.c.l.b16 %v558
      %v1136 = vunpack.c.h.b16 %v558
      %v1137 = vunpack.c.l.b16 %v559
      %v1138 = vunpack.c.h.b16 %v559
      %v1139 = vunpack.c.l.b16 %v560
      %v1140 = vunpack.c.h.b16 %v560
      %v1141 = vunpack.c.l.b16 %v561
      %v1142 = vunpack.c.h.b16 %v561
      %v1143 = vunpack.c.l.b16 %v562
      %v1144 = vunpack.c.h.b16 %v562
      %v1145 = vunpack.c.l.b16 %v563
      %v1146 = vunpack.c.h.b16 %v563
      %v1147 = vunpack.c.l.b16 %v564
      %v1148 = vunpack.c.h.b16 %v564
      %v1149 = vunpack.c.l.b16 %v565
      %v1150 = vunpack.c.h.b16 %v565
      %v1151 = vunpack.c.l.b16 %v566
      %v1152 = vunpack.c.h.b16 %v566
      %v1153 = vpack.c.b16 %v773, %v769
      %v1154 = vpack.c.b16 %v774, %v770
      %v1155 = vpack.c.b16 %v775, %v771
      %v1156 = vpack.c.b16 %v776, %v772
      %v1157 = vpack.c.b16 %v781, %v777
      %v1158 = vpack.c.b16 %v782, %v778
      %v1159 = vpack.c.b16 %v783, %v779
      %v1160 = vpack.c.b16 %v784, %v780
      %v1161 = vpack.c.b16 %v789, %v785
      %v1162 = vpack.c.b16 %v790, %v786
      %v1163 = vpack.c.b16 %v791, %v787
      %v1164 = vpack.c.b16 %v792, %v788
      %v1165 = vpack.c.b16 %v797, %v793
      %v1166 = vpack.c.b16 %v798, %v794
      %v1167 = vpack.c.b16 %v799, %v795
      %v1168 = vpack.c.b16 %v800, %v796
      %v1169 = vpack.c.b16 %v805, %v801
      %v1170 = vpack.c.b16 %v806, %v802
      %v1171 = vpack.c.b16 %v807, %v803
      %v1172 = vpack.c.b16 %v808, %v804
      %v1173 = vpack.c.b16 %v813, %v809
      %v1174 = vpack.c.b16 %v814, %v810
      %v1175 = vpack.c.b16 %v815, %v811
      %v1176 = vpack.c.b16 %v816, %v812
      %v1177 = vpack.c.b16 %v821, %v817
      %v1178 = vpack.c.b16 %v822, %v818
      %v1179 = vpack.c.b16 %v823, %v819
      %v1180 = vpack.c.b16 %v824, %v820
      %v1181 = vpack.c.b16 %v829, %v825
      %v1182 = vpack.c.b16 %v830, %v826
      %v1183 = vpack.c.b16 %v831, %v827
      %v1184 = vpack.c.b16 %v832, %v828
      %v1185 = vpack.c.b16 %v837, %v833
      %v1186 = vpack.c.b16 %v838, %v834
      %v1187 = vpack.c.b16 %v839, %v835
      %v1188 = vpack.c.b16 %v840, %v836
      %v1189 = vpack.c.b16 %v845, %v841
      %v1190 = vpack.c.b16 %v846, %v842
      %v1191 = vpack.c.b16 %v847, %v843
      %v1192 = vpack.c.b16 %v848, %v844
      %v1193 = vpack.c.b16 %v853, %v849
      %v1194 = vpack.c.b16 %v854, %v850
      %v1195 = vpack.c.b16 %v855, %v851
      %v1196 = vpack.c.b16 %v856, %v852
      %v1197 = vpack.c.b16 %v861, %v857
      %v1198 = vpack.c.b16 %v862, %v858
      %v1199 = vpack.c.b16 %v863, %v859
      %v1200 = vpack.c.b16 %v864, %v860
      %v1201 = vpack.c.b16 %v869, %v865
      %v1202 = vpack.c.b16 %v870, %v866
      %v1203 = vpack.c.b16 %v871, %v867
      %v1204 = vpack.c.b16 %v872, %v868
      %v1205 = vpack.c.b16 %v877, %v873
      %v1206 = vpack.c.b16 %v878, %v874
      %v1207 = vpack.c.b16 %v879, %v875
      %v1208 = vpack.c.b16 %v880, %v876
      %v1209 = vpack.c.b16 %v885, %v881
      %v1210 = vpack.c.b16 %v886, %v882
      %v1211 = vpack.c.b16 %v887, %v883
      %v1212 = vpack.c.b16 %v888, %v884
      %v1213 = vpack.c.b16 %v893, %v889
      %v1214 = vpack.c.b16 %v894, %v890
      %v1215 = vpack.c.b16 %v895, %v891
      %v1216 = vpack.c.b16 %v896, %v892
      %v1217 = vpack.c.b16 %v901, %v897
      %v1218 = vpack.c.b16 %v902, %v898
      %v1219 = vpack.c.b16 %v903, %v899
      %v1220 = vpack.c.b16 %v904, %v900
      %v1221 = vpack.c.b16 %v909, %v905
      %v1222 = vpack.c.b16 %v910, %v906
      %v1223 = vpack.c.b16 %v911, %v907
      %v1224 = vpack.c.b16 %v912, %v908
      %v1225 = vpack.c.b16 %v917, %v913
      %v1226 = vpack.c.b16 %v918, %v914
      %v1227 = vpack.c.b16 %v919, %v915
      %v1228 = vpack.c.b16 %v920, %v916
      %v1229 = vpack.c.b16 %v925, %v921
      %v1230 = vpack.c.b16 %v926, %v922
      %v1231 = vpack.c.b16 %v927, %v923
      %v1232 = vpack.c.b16 %v928, %v924
      %v1233 = vpack.c.b16 %v933, %v929
      %v1234 = vpack.c.b16 %v934, %v930
      %v1235 = vpack.c.b16 %v935, %v931
      %v1236 = vpack.c.b16 %v936, %v932
      %v1237 = vpack.c.b16 %v941, %v937
      %v1238 = vpack.c.b16 %v942, %v938
      %v1239 = vpack.c.b16 %v943, %v939
      %v1240 = vpack.c.b16 %v944, %v940
      %v1241 = vpack.c.b16 %v949, %v945
      %v1242 = vpack.c.b16 %v950, %v946
      %v1243 = vpack.c.b16 %v951, %v947
      %v1244 = vpack.c.b16 %v952, %v948
      %v1245 = vpack.c.b16 %v957, %v953
      %v1246 = vpack.c.b16 %v958, %v954
      %v1247 = vpack.c.b16 %v959, %v955
      %v1248 = vpack.c.b16 %v960, %v956
      %v1249 = vpack.c.b16 %v965, %v961
      %v1250 = vpack.c.b16 %v966, %v962
      %v1251 = vpack.c.b16 %v967, %v963
      %v1252 = vpack.c.b16 %v968, %v964
      %v1253 = vpack.c.b16 %v973, %v969
      %v1254 = vpack.c.b16 %v974, %v970
      %v1255 = vpack.c.b16 %v975, %v971
      %v1256 = vpack.c.b16 %v976, %v972
      %v1257 = vpack.c.b16 %v981, %v977
      %v1258 = vpack.c.b16 %v982, %v978
      %v1259 = vpack.c.b16 %v983, %v979
      %v1260 = vpack.c.b16 %v984, %v980
      %v1261 = vpack.c.b16 %v989, %v985
      %v1262 = vpack.c.b16 %v990, %v986
      %v1263 = vpack.c.b16 %v991, %v987
      %v1264 = vpack.c.b16 %v992, %v988
      %v1265 = vpack.c.b16 %v997, %v993
      %v1266 = vpack.c.b16 %v998, %v994
      %v1267 = vpack.c.b16 %v999, %v995
      %v1268 = vpack.c.b16 %v1000, %v996
      %v1269 = vpack.c.b16 %v1005, %v1001
      %v1270 = vpack.c.b16 %v1006, %v1002
      %v1271 = vpack.c.b16 %v1007, %v1003
      %v1272 = vpack.c.b16 %v1008, %v1004
      %v1273 = vpack.c.b16 %v1013, %v1009
      %v1274 = vpack.c.b16 %v1014, %v1010
      %v1275 = vpack.c.b16 %v1015, %v1011
      %v1276 = vpack.c.b16 %v1016, %v1012
      %v1277 = vpack.c.b16 %v1021, %v1017
      %v1278 = vpack.c.b16 %v1022, %v1018
      %v1279 = vpack.c.b16 %v1023, %v1019
      %v1280 = vpack.c.b16 %v1024, %v1020
      %v1281 = vpack.c.b16 %v1029, %v1025
      %v1282 = vpack.c.b16 %v1030, %v1026
      %v1283 = vpack.c.b16 %v1031, %v1027
      %v1284 = vpack.c.b16 %v1032, %v1028
      %v1285 = vpack.c.b16 %v1037, %v1033
      %v1286 = vpack.c.b16 %v1038, %v1034
      %v1287 = vpack.c.b16 %v1039, %v1035
      %v1288 = vpack.c.b16 %v1040, %v1036
      %v1289 = vpack.c.b16 %v1045, %v1041
      %v1290 = vpack.c.b16 %v1046, %v1042
      %v1291 = vpack.c.b16 %v1047, %v1043
      %v1292 = vpack.c.b16 %v1048, %v1044
      %v1293 = vpack.c.b16 %v1053, %v1049
      %v1294 = vpack.c.b16 %v1054, %v1050
      %v1295 = vpack.c.b16 %v1055, %v1051
      %v1296 = vpack.c.b16 %v1056, %v1052
      %v1297 = vpack.c.b16 %v1061, %v1057
      %v1298 = vpack.c.b16 %v1062, %v1058
      %v1299 = vpack.c.b16 %v1063, %v1059
      %v1300 = vpack.c.b16 %v1064, %v1060
      %v1301 = vpack.c.b16 %v1069, %v1065
      %v1302 = vpack.c.b16 %v1070, %v1066
      %v1303 = vpack.c.b16 %v1071, %v1067
      %v1304 = vpack.c.b16 %v1072, %v1068
      %v1305 = vpack.c.b16 %v1077, %v1073
      %v1306 = vpack.c.b16 %v1078, %v1074
      %v1307 = vpack.c.b16 %v1079, %v1075
      %v1308 = vpack.c.b16 %v1080, %v1076
      %v1309 = vpack.c.b16 %v1085, %v1081
      %v1310 = vpack.c.b16 %v1086, %v1082
      %v1311 = vpack.c.b16 %v1087, %v1083
      %v1312 = vpack.c.b16 %v1088, %v1084
      %v1313 = vpack.c.b16 %v1093, %v1089
      %v1314 = vpack.c.b16 %v1094, %v1090
      %v1315 = vpack.c.b16 %v1095, %v1091
      %v1316 = vpack.c.b16 %v1096, %v1092
      %v1317 = vpack.c.b16 %v1101, %v1097
      %v1318 = vpack.c.b16 %v1102, %v1098
      %v1319 = vpack.c.b16 %v1103, %v1099
      %v1320 = vpack.c.b16 %v1104, %v1100
      %v1321 = vpack.c.b16 %v1109, %v1105
      %v1322 = vpack.c.b16 %v1110, %v1106
      %v1323 = vpack.c.b16 %v1111, %v1107
      %v1324 = vpack.c.b16 %v1112, %v1108
      %v1325 = vpack.c.b16 %v1117, %v1113
      %v1326 = vpack.c.b16 %v1118, %v1114
      %v1327 = vpack.c.b16 %v1119, %v1115
      %v1328 = vpack.c.b16 %v1120, %v1116
      %v1329 = vpack.c.b16 %v1125, %v1121
      %v1330 = vpack.c.b16 %v1126, %v1122
      %v1331 = vpack.c.b16 %v1127, %v1123
      %v1332 = vpack.c.b16 %v1128, %v1124
      %v1333 = vpack.c.b16 %v1133, %v1129
      %v1334 = vpack.c.b16 %v1134, %v1130
      %v1335 = vpack.c.b16 %v1135, %v1131
      %v1336 = vpack.c.b16 %v1136, %v1132
      %v1337 = vpack.c.b16 %v1141, %v1137
      %v1338 = vpack.c.b16 %v1142, %v1138
      %v1339 = vpack.c.b16 %v1143, %v1139
      %v1340 = vpack.c.b16 %v1144, %v1140
      %v1341 = vpack.c.b16 %v1149, %v1145
      %v1342 = vpack.c.b16 %v1150, %v1146
      %v1343 = vpack.c.b16 %v1151, %v1147
      %v1344 = vpack.c.b16 %v1152, %v1148
      %1537 = vmatpush.bf16.msra.mxu0 %v1181
      %1538 = vmatpush.bf16.msra.mxu0 %v1177
      %1539 = vmatpush.bf16.msra.mxu0 %v1173
      %1540 = vmatpush.bf16.msra.mxu0 %v1169
      %1541 = vmatpush.bf16.msra.mxu0 %v1165
      %1542 = vmatpush.bf16.msra.mxu0 %v1161
      %1543 = vmatpush.bf16.msra.mxu0 %v1157
      %1544 = vmatpush.bf16.msra.mxu0 %v1153
      %1545 = vmatmul.bf16.gmra.mxu0 %v357
      %v1546 = vpop.f32.mrf.mxu0
      %v1547 = vadd.f32 %v569, %v1546
      %v1548 = vpop.f32.mrf.mxu0
      %v1549 = vadd.f32 %v569, %v1548
      %1550 = vmatmul.bf16.gmra.mxu0 %v363
      %v1551 = vpop.f32.mrf.mxu0
      %v1552 = vadd.f32 %v569, %v1551
      %v1553 = vpop.f32.mrf.mxu0
      %v1554 = vadd.f32 %v569, %v1553
      %1555 = vmatmul.bf16.gmra.mxu0 %v369
      %v1556 = vpop.f32.mrf.mxu0
      %v1557 = vadd.f32 %v569, %v1556
      %v1558 = vpop.f32.mrf.mxu0
      %1559 = vdwg.mxu0
      %1560 = vmatpush.bf16.msra.mxu0 %v1213
      %1561 = vmatpush.bf16.msra.mxu0 %v1209
      %1562 = vmatpush.bf16.msra.mxu0 %v1205
      %1563 = vmatpush.bf16.msra.mxu0 %v1201
      %1564 = vmatpush.bf16.msra.mxu0 %v1197
      %1565 = vmatpush.bf16.msra.mxu0 %v1193
      %1566 = vmatpush.bf16.msra.mxu0 %v1189
      %1567 = vmatpush.bf16.msra.mxu0 %v1185
      %1568 = vmatmul.bf16.gmra.mxu0 %v358
      %v1569 = vpop.f32.mrf.mxu0
      %v1570 = vadd.f32 %v1547, %v1569
      %v1571 = vpop.f32.mrf.mxu0
      %v1572 = vadd.f32 %v1549, %v1571
      %1573 = vmatmul.bf16.gmra.mxu0 %v364
      %v1574 = vpop.f32.mrf.mxu0
      %v1575 = vadd.f32 %v1552, %v1574
      %v1576 = vpop.f32.mrf.mxu0
      %v1577 = vadd.f32 %v1554, %v1576
      %1578 = vmatmul.bf16.gmra.mxu0 %v370
      %v1579 = vpop.f32.mrf.mxu0
      %v1580 = vadd.f32 %v1557, %v1579
      %v1581 = vpop.f32.mrf.mxu0
      %1582 = vdwg.mxu0
      %1583 = vmatpush.bf16.msra.mxu0 %v1245
      %1584 = vmatpush.bf16.msra.mxu0 %v1241
      %1585 = vmatpush.bf16.msra.mxu0 %v1237
      %1586 = vmatpush.bf16.msra.mxu0 %v1233
      %1587 = vmatpush.bf16.msra.mxu0 %v1229
      %1588 = vmatpush.bf16.msra.mxu0 %v1225
      %1589 = vmatpush.bf16.msra.mxu0 %v1221
      %1590 = vmatpush.bf16.msra.mxu0 %v1217
      %1591 = vmatmul.bf16.gmra.mxu0 %v359
      %v1592 = vpop.f32.mrf.mxu0
      %v1593 = vadd.f32 %v1570, %v1592
      %v1594 = vpop.f32.mrf.mxu0
      %v1595 = vadd.f32 %v1572, %v1594
      %1596 = vmatmul.bf16.gmra.mxu0 %v365
      %v1597 = vpop.f32.mrf.mxu0
      %v1598 = vadd.f32 %v1575, %v1597
      %v1599 = vpop.f32.mrf.mxu0
      %v1600 = vadd.f32 %v1577, %v1599
      %1601 = vmatmul.bf16.gmra.mxu0 %v371
      %v1602 = vpop.f32.mrf.mxu0
      %v1603 = vadd.f32 %v1580, %v1602
      %v1604 = vpop.f32.mrf.mxu0
      %1605 = vdwg.mxu0
      %1606 = vmatpush.bf16.msra.mxu0 %v1277
      %1607 = vmatpush.bf16.msra.mxu0 %v1273
      %1608 = vmatpush.bf16.msra.mxu0 %v1269
      %1609 = vmatpush.bf16.msra.mxu0 %v1265
      %1610 = vmatpush.bf16.msra.mxu0 %v1261
      %1611 = vmatpush.bf16.msra.mxu0 %v1257
      %1612 = vmatpush.bf16.msra.mxu0 %v1253
      %1613 = vmatpush.bf16.msra.mxu0 %v1249
      %1614 = vmatmul.bf16.gmra.mxu0 %v360
      %v1615 = vpop.f32.mrf.mxu0
      %v1616 = vadd.f32 %v1593, %v1615
      %v1617 = vpop.f32.mrf.mxu0
      %v1618 = vadd.f32 %v1595, %v1617
      %1619 = vmatmul.bf16.gmra.mxu0 %v366
      %v1620 = vpop.f32.mrf.mxu0
      %v1621 = vadd.f32 %v1598, %v1620
      %v1622 = vpop.f32.mrf.mxu0
      %v1623 = vadd.f32 %v1600, %v1622
      %1624 = vmatmul.bf16.gmra.mxu0 %v372
      %v1625 = vpop.f32.mrf.mxu0
      %v1626 = vadd.f32 %v1603, %v1625
      %v1627 = vpop.f32.mrf.mxu0
      %1628 = vdwg.mxu0
      %1629 = vmatpush.bf16.msra.mxu0 %v1309
      %1630 = vmatpush.bf16.msra.mxu0 %v1305
      %1631 = vmatpush.bf16.msra.mxu0 %v1301
      %1632 = vmatpush.bf16.msra.mxu0 %v1297
      %1633 = vmatpush.bf16.msra.mxu0 %v1293
      %1634 = vmatpush.bf16.msra.mxu0 %v1289
      %1635 = vmatpush.bf16.msra.mxu0 %v1285
      %1636 = vmatpush.bf16.msra.mxu0 %v1281
      %1637 = vmatmul.bf16.gmra.mxu0 %v361
      %v1638 = vpop.f32.mrf.mxu0
      %v1639 = vadd.f32 %v1616, %v1638
      %v1640 = vpop.f32.mrf.mxu0
      %v1641 = vadd.f32 %v1618, %v1640
      %1642 = vmatmul.bf16.gmra.mxu0 %v367
      %v1643 = vpop.f32.mrf.mxu0
      %v1644 = vadd.f32 %v1621, %v1643
      %v1645 = vpop.f32.mrf.mxu0
      %v1646 = vadd.f32 %v1623, %v1645
      %1647 = vmatmul.bf16.gmra.mxu0 %v373
      %v1648 = vpop.f32.mrf.mxu0
      %v1649 = vadd.f32 %v1626, %v1648
      %v1650 = vpop.f32.mrf.mxu0
      %1651 = vdwg.mxu0
      %1652 = vmatpush.bf16.msra.mxu0 %v1341
      %1653 = vmatpush.bf16.msra.mxu0 %v1337
      %1654 = vmatpush.bf16.msra.mxu0 %v1333
      %1655 = vmatpush.bf16.msra.mxu0 %v1329
      %1656 = vmatpush.bf16.msra.mxu0 %v1325
      %1657 = vmatpush.bf16.msra.mxu0 %v1321
      %1658 = vmatpush.bf16.msra.mxu0 %v1317
      %1659 = vmatpush.bf16.msra.mxu0 %v1313
      %1660 = vmatmul.bf16.gmra.mxu0 %v362
      %v1661 = vpop.f32.mrf.mxu0
      %v1662 = vadd.f32 %v1639, %v1661
      %v1663 = vpop.f32.mrf.mxu0
      %v1664 = vadd.f32 %v1641, %v1663
      %1665 = vmatmul.bf16.gmra.mxu0 %v368
      %v1666 = vpop.f32.mrf.mxu0
      %v1667 = vadd.f32 %v1644, %v1666
      %v1668 = vpop.f32.mrf.mxu0
      %v1669 = vadd.f32 %v1646, %v1668
      %1670 = vmatmul.bf16.gmra.mxu0 %v374
      %v1671 = vpop.f32.mrf.mxu0
      %v1672 = vadd.f32 %v1649, %v1671
      %v1673 = vpop.f32.mrf.mxu0
      %1674 = vdwg.mxu0
      %1675 = vmatpush.bf16.msra.mxu0 %v1182
      %1676 = vmatpush.bf16.msra.mxu0 %v1178
      %1677 = vmatpush.bf16.msra.mxu0 %v1174
      %1678 = vmatpush.bf16.msra.mxu0 %v1170
      %1679 = vmatpush.bf16.msra.mxu0 %v1166
      %1680 = vmatpush.bf16.msra.mxu0 %v1162
      %1681 = vmatpush.bf16.msra.mxu0 %v1158
      %1682 = vmatpush.bf16.msra.mxu0 %v1154
      %1683 = vmatmul.bf16.gmra.mxu0 %v357
      %v1684 = vpop.f32.mrf.mxu0
      %v1685 = vadd.f32 %v570, %v1684
      %v1686 = vpop.f32.mrf.mxu0
      %v1687 = vadd.f32 %v570, %v1686
      %1688 = vmatmul.bf16.gmra.mxu0 %v363
      %v1689 = vpop.f32.mrf.mxu0
      %v1690 = vadd.f32 %v570, %v1689
      %v1691 = vpop.f32.mrf.mxu0
      %v1692 = vadd.f32 %v570, %v1691
      %1693 = vmatmul.bf16.gmra.mxu0 %v369
      %v1694 = vpop.f32.mrf.mxu0
      %v1695 = vadd.f32 %v570, %v1694
      %v1696 = vpop.f32.mrf.mxu0
      %1697 = vdwg.mxu0
      %1698 = vmatpush.bf16.msra.mxu0 %v1214
      %1699 = vmatpush.bf16.msra.mxu0 %v1210
      %1700 = vmatpush.bf16.msra.mxu0 %v1206
      %1701 = vmatpush.bf16.msra.mxu0 %v1202
      %1702 = vmatpush.bf16.msra.mxu0 %v1198
      %1703 = vmatpush.bf16.msra.mxu0 %v1194
      %1704 = vmatpush.bf16.msra.mxu0 %v1190
      %1705 = vmatpush.bf16.msra.mxu0 %v1186
      %1706 = vmatmul.bf16.gmra.mxu0 %v358
      %v1707 = vpop.f32.mrf.mxu0
      %v1708 = vadd.f32 %v1685, %v1707
      %v1709 = vpop.f32.mrf.mxu0
      %v1710 = vadd.f32 %v1687, %v1709
      %1711 = vmatmul.bf16.gmra.mxu0 %v364
      %v1712 = vpop.f32.mrf.mxu0
      %v1713 = vadd.f32 %v1690, %v1712
      %v1714 = vpop.f32.mrf.mxu0
      %v1715 = vadd.f32 %v1692, %v1714
      %1716 = vmatmul.bf16.gmra.mxu0 %v370
      %v1717 = vpop.f32.mrf.mxu0
      %v1718 = vadd.f32 %v1695, %v1717
      %v1719 = vpop.f32.mrf.mxu0
      %1720 = vdwg.mxu0
      %1721 = vmatpush.bf16.msra.mxu0 %v1246
      %1722 = vmatpush.bf16.msra.mxu0 %v1242
      %1723 = vmatpush.bf16.msra.mxu0 %v1238
      %1724 = vmatpush.bf16.msra.mxu0 %v1234
      %1725 = vmatpush.bf16.msra.mxu0 %v1230
      %1726 = vmatpush.bf16.msra.mxu0 %v1226
      %1727 = vmatpush.bf16.msra.mxu0 %v1222
      %1728 = vmatpush.bf16.msra.mxu0 %v1218
      %1729 = vmatmul.bf16.gmra.mxu0 %v359
      %v1730 = vpop.f32.mrf.mxu0
      %v1731 = vadd.f32 %v1708, %v1730
      %v1732 = vpop.f32.mrf.mxu0
      %v1733 = vadd.f32 %v1710, %v1732
      %1734 = vmatmul.bf16.gmra.mxu0 %v365
      %v1735 = vpop.f32.mrf.mxu0
      %v1736 = vadd.f32 %v1713, %v1735
      %v1737 = vpop.f32.mrf.mxu0
      %v1738 = vadd.f32 %v1715, %v1737
      %1739 = vmatmul.bf16.gmra.mxu0 %v371
      %v1740 = vpop.f32.mrf.mxu0
      %v1741 = vadd.f32 %v1718, %v1740
      %v1742 = vpop.f32.mrf.mxu0
      %1743 = vdwg.mxu0
      %1744 = vmatpush.bf16.msra.mxu0 %v1278
      %1745 = vmatpush.bf16.msra.mxu0 %v1274
      %1746 = vmatpush.bf16.msra.mxu0 %v1270
      %1747 = vmatpush.bf16.msra.mxu0 %v1266
      %1748 = vmatpush.bf16.msra.mxu0 %v1262
      %1749 = vmatpush.bf16.msra.mxu0 %v1258
      %1750 = vmatpush.bf16.msra.mxu0 %v1254
      %1751 = vmatpush.bf16.msra.mxu0 %v1250
      %1752 = vmatmul.bf16.gmra.mxu0 %v360
      %v1753 = vpop.f32.mrf.mxu0
      %v1754 = vadd.f32 %v1731, %v1753
      %v1755 = vpop.f32.mrf.mxu0
      %v1756 = vadd.f32 %v1733, %v1755
      %1757 = vmatmul.bf16.gmra.mxu0 %v366
      %v1758 = vpop.f32.mrf.mxu0
      %v1759 = vadd.f32 %v1736, %v1758
      %v1760 = vpop.f32.mrf.mxu0
      %v1761 = vadd.f32 %v1738, %v1760
      %1762 = vmatmul.bf16.gmra.mxu0 %v372
      %v1763 = vpop.f32.mrf.mxu0
      %v1764 = vadd.f32 %v1741, %v1763
      %v1765 = vpop.f32.mrf.mxu0
      %1766 = vdwg.mxu0
      %1767 = vmatpush.bf16.msra.mxu0 %v1310
      %1768 = vmatpush.bf16.msra.mxu0 %v1306
      %1769 = vmatpush.bf16.msra.mxu0 %v1302
      %1770 = vmatpush.bf16.msra.mxu0 %v1298
      %1771 = vmatpush.bf16.msra.mxu0 %v1294
      %1772 = vmatpush.bf16.msra.mxu0 %v1290
      %1773 = vmatpush.bf16.msra.mxu0 %v1286
      %1774 = vmatpush.bf16.msra.mxu0 %v1282
      %1775 = vmatmul.bf16.gmra.mxu0 %v361
      %v1776 = vpop.f32.mrf.mxu0
      %v1777 = vadd.f32 %v1754, %v1776
      %v1778 = vpop.f32.mrf.mxu0
      %v1779 = vadd.f32 %v1756, %v1778
      %1780 = vmatmul.bf16.gmra.mxu0 %v367
      %v1781 = vpop.f32.mrf.mxu0
      %v1782 = vadd.f32 %v1759, %v1781
      %v1783 = vpop.f32.mrf.mxu0
      %v1784 = vadd.f32 %v1761, %v1783
      %1785 = vmatmul.bf16.gmra.mxu0 %v373
      %v1786 = vpop.f32.mrf.mxu0
      %v1787 = vadd.f32 %v1764, %v1786
      %v1788 = vpop.f32.mrf.mxu0
      %1789 = vdwg.mxu0
      %1790 = vmatpush.bf16.msra.mxu0 %v1342
      %1791 = vmatpush.bf16.msra.mxu0 %v1338
      %1792 = vmatpush.bf16.msra.mxu0 %v1334
      %1793 = vmatpush.bf16.msra.mxu0 %v1330
      %1794 = vmatpush.bf16.msra.mxu0 %v1326
      %1795 = vmatpush.bf16.msra.mxu0 %v1322
      %1796 = vmatpush.bf16.msra.mxu0 %v1318
      %1797 = vmatpush.bf16.msra.mxu0 %v1314
      %1798 = vmatmul.bf16.gmra.mxu0 %v362
      %v1799 = vpop.f32.mrf.mxu0
      %v1800 = vadd.f32 %v1777, %v1799
      %v1801 = vpop.f32.mrf.mxu0
      %v1802 = vadd.f32 %v1779, %v1801
      %1803 = vmatmul.bf16.gmra.mxu0 %v368
      %v1804 = vpop.f32.mrf.mxu0
      %v1805 = vadd.f32 %v1782, %v1804
      %v1806 = vpop.f32.mrf.mxu0
      %v1807 = vadd.f32 %v1784, %v1806
      %1808 = vmatmul.bf16.gmra.mxu0 %v374
      %v1809 = vpop.f32.mrf.mxu0
      %v1810 = vadd.f32 %v1787, %v1809
      %v1811 = vpop.f32.mrf.mxu0
      %1812 = vdwg.mxu0
      %1813 = vmatpush.bf16.msra.mxu0 %v1183
      %1814 = vmatpush.bf16.msra.mxu0 %v1179
      %1815 = vmatpush.bf16.msra.mxu0 %v1175
      %1816 = vmatpush.bf16.msra.mxu0 %v1171
      %1817 = vmatpush.bf16.msra.mxu0 %v1167
      %1818 = vmatpush.bf16.msra.mxu0 %v1163
      %1819 = vmatpush.bf16.msra.mxu0 %v1159
      %1820 = vmatpush.bf16.msra.mxu0 %v1155
      %1821 = vmatmul.bf16.gmra.mxu0 %v357
      %v1822 = vpop.f32.mrf.mxu0
      %v1823 = vadd.f32 %v571, %v1822
      %v1824 = vpop.f32.mrf.mxu0
      %v1825 = vadd.f32 %v571, %v1824
      %1826 = vmatmul.bf16.gmra.mxu0 %v363
      %v1827 = vpop.f32.mrf.mxu0
      %v1828 = vadd.f32 %v571, %v1827
      %v1829 = vpop.f32.mrf.mxu0
      %v1830 = vadd.f32 %v571, %v1829
      %1831 = vmatmul.bf16.gmra.mxu0 %v369
      %v1832 = vpop.f32.mrf.mxu0
      %v1833 = vadd.f32 %v571, %v1832
      %v1834 = vpop.f32.mrf.mxu0
      %1835 = vdwg.mxu0
      %1836 = vmatpush.bf16.msra.mxu0 %v1215
      %1837 = vmatpush.bf16.msra.mxu0 %v1211
      %1838 = vmatpush.bf16.msra.mxu0 %v1207
      %1839 = vmatpush.bf16.msra.mxu0 %v1203
      %1840 = vmatpush.bf16.msra.mxu0 %v1199
      %1841 = vmatpush.bf16.msra.mxu0 %v1195
      %1842 = vmatpush.bf16.msra.mxu0 %v1191
      %1843 = vmatpush.bf16.msra.mxu0 %v1187
      %1844 = vmatmul.bf16.gmra.mxu0 %v358
      %v1845 = vpop.f32.mrf.mxu0
      %v1846 = vadd.f32 %v1823, %v1845
      %v1847 = vpop.f32.mrf.mxu0
      %v1848 = vadd.f32 %v1825, %v1847
      %1849 = vmatmul.bf16.gmra.mxu0 %v364
      %v1850 = vpop.f32.mrf.mxu0
      %v1851 = vadd.f32 %v1828, %v1850
      %v1852 = vpop.f32.mrf.mxu0
      %v1853 = vadd.f32 %v1830, %v1852
      %1854 = vmatmul.bf16.gmra.mxu0 %v370
      %v1855 = vpop.f32.mrf.mxu0
      %v1856 = vadd.f32 %v1833, %v1855
      %v1857 = vpop.f32.mrf.mxu0
      %1858 = vdwg.mxu0
      %1859 = vmatpush.bf16.msra.mxu0 %v1247
      %1860 = vmatpush.bf16.msra.mxu0 %v1243
      %1861 = vmatpush.bf16.msra.mxu0 %v1239
      %1862 = vmatpush.bf16.msra.mxu0 %v1235
      %1863 = vmatpush.bf16.msra.mxu0 %v1231
      %1864 = vmatpush.bf16.msra.mxu0 %v1227
      %1865 = vmatpush.bf16.msra.mxu0 %v1223
      %1866 = vmatpush.bf16.msra.mxu0 %v1219
      %1867 = vmatmul.bf16.gmra.mxu0 %v359
      %v1868 = vpop.f32.mrf.mxu0
      %v1869 = vadd.f32 %v1846, %v1868
      %v1870 = vpop.f32.mrf.mxu0
      %v1871 = vadd.f32 %v1848, %v1870
      %1872 = vmatmul.bf16.gmra.mxu0 %v365
      %v1873 = vpop.f32.mrf.mxu0
      %v1874 = vadd.f32 %v1851, %v1873
      %v1875 = vpop.f32.mrf.mxu0
      %v1876 = vadd.f32 %v1853, %v1875
      %1877 = vmatmul.bf16.gmra.mxu0 %v371
      %v1878 = vpop.f32.mrf.mxu0
      %v1879 = vadd.f32 %v1856, %v1878
      %v1880 = vpop.f32.mrf.mxu0
      %1881 = vdwg.mxu0
      %1882 = vmatpush.bf16.msra.mxu0 %v1279
      %1883 = vmatpush.bf16.msra.mxu0 %v1275
      %1884 = vmatpush.bf16.msra.mxu0 %v1271
      %1885 = vmatpush.bf16.msra.mxu0 %v1267
      %1886 = vmatpush.bf16.msra.mxu0 %v1263
      %1887 = vmatpush.bf16.msra.mxu0 %v1259
      %1888 = vmatpush.bf16.msra.mxu0 %v1255
      %1889 = vmatpush.bf16.msra.mxu0 %v1251
      %1890 = vmatmul.bf16.gmra.mxu0 %v360
      %v1891 = vpop.f32.mrf.mxu0
      %v1892 = vadd.f32 %v1869, %v1891
      %v1893 = vpop.f32.mrf.mxu0
      %v1894 = vadd.f32 %v1871, %v1893
      %1895 = vmatmul.bf16.gmra.mxu0 %v366
      %v1896 = vpop.f32.mrf.mxu0
      %v1897 = vadd.f32 %v1874, %v1896
      %v1898 = vpop.f32.mrf.mxu0
      %v1899 = vadd.f32 %v1876, %v1898
      %1900 = vmatmul.bf16.gmra.mxu0 %v372
      %v1901 = vpop.f32.mrf.mxu0
      %v1902 = vadd.f32 %v1879, %v1901
      %v1903 = vpop.f32.mrf.mxu0
      %1904 = vdwg.mxu0
      %1905 = vmatpush.bf16.msra.mxu0 %v1311
      %1906 = vmatpush.bf16.msra.mxu0 %v1307
      %1907 = vmatpush.bf16.msra.mxu0 %v1303
      %1908 = vmatpush.bf16.msra.mxu0 %v1299
      %1909 = vmatpush.bf16.msra.mxu0 %v1295
      %1910 = vmatpush.bf16.msra.mxu0 %v1291
      %1911 = vmatpush.bf16.msra.mxu0 %v1287
      %1912 = vmatpush.bf16.msra.mxu0 %v1283
      %1913 = vmatmul.bf16.gmra.mxu0 %v361
      %v1914 = vpop.f32.mrf.mxu0
      %v1915 = vadd.f32 %v1892, %v1914
      %v1916 = vpop.f32.mrf.mxu0
      %v1917 = vadd.f32 %v1894, %v1916
      %1918 = vmatmul.bf16.gmra.mxu0 %v367
      %v1919 = vpop.f32.mrf.mxu0
      %v1920 = vadd.f32 %v1897, %v1919
      %v1921 = vpop.f32.mrf.mxu0
      %v1922 = vadd.f32 %v1899, %v1921
      %1923 = vmatmul.bf16.gmra.mxu0 %v373
      %v1924 = vpop.f32.mrf.mxu0
      %v1925 = vadd.f32 %v1902, %v1924
      %v1926 = vpop.f32.mrf.mxu0
      %1927 = vdwg.mxu0
      %1928 = vmatpush.bf16.msra.mxu0 %v1343
      %1929 = vmatpush.bf16.msra.mxu0 %v1339
      %1930 = vmatpush.bf16.msra.mxu0 %v1335
      %1931 = vmatpush.bf16.msra.mxu0 %v1331
      %1932 = vmatpush.bf16.msra.mxu0 %v1327
      %1933 = vmatpush.bf16.msra.mxu0 %v1323
      %1934 = vmatpush.bf16.msra.mxu0 %v1319
      %1935 = vmatpush.bf16.msra.mxu0 %v1315
      %1936 = vmatmul.bf16.gmra.mxu0 %v362
      %v1937 = vpop.f32.mrf.mxu0
      %v1938 = vadd.f32 %v1915, %v1937
      %v1939 = vpop.f32.mrf.mxu0
      %v1940 = vadd.f32 %v1917, %v1939
      %1941 = vmatmul.bf16.gmra.mxu0 %v368
      %v1942 = vpop.f32.mrf.mxu0
      %v1943 = vadd.f32 %v1920, %v1942
      %v1944 = vpop.f32.mrf.mxu0
      %v1945 = vadd.f32 %v1922, %v1944
      %1946 = vmatmul.bf16.gmra.mxu0 %v374
      %v1947 = vpop.f32.mrf.mxu0
      %v1948 = vadd.f32 %v1925, %v1947
      %v1949 = vpop.f32.mrf.mxu0
      %1950 = vdwg.mxu0
      %1951 = vmatpush.bf16.msra.mxu0 %v1184
      %1952 = vmatpush.bf16.msra.mxu0 %v1180
      %1953 = vmatpush.bf16.msra.mxu0 %v1176
      %1954 = vmatpush.bf16.msra.mxu0 %v1172
      %1955 = vmatpush.bf16.msra.mxu0 %v1168
      %1956 = vmatpush.bf16.msra.mxu0 %v1164
      %1957 = vmatpush.bf16.msra.mxu0 %v1160
      %1958 = vmatpush.bf16.msra.mxu0 %v1156
      %1959 = vmatmul.bf16.gmra.mxu0 %v357
      %v1960 = vpop.f32.mrf.mxu0
      %v1961 = vadd.f32 %v572, %v1960
      %v1962 = vpop.f32.mrf.mxu0
      %v1963 = vadd.f32 %v572, %v1962
      %1964 = vmatmul.bf16.gmra.mxu0 %v363
      %v1965 = vpop.f32.mrf.mxu0
      %v1966 = vadd.f32 %v572, %v1965
      %v1967 = vpop.f32.mrf.mxu0
      %v1968 = vadd.f32 %v572, %v1967
      %1969 = vmatmul.bf16.gmra.mxu0 %v369
      %v1970 = vpop.f32.mrf.mxu0
      %v1971 = vadd.f32 %v572, %v1970
      %v1972 = vpop.f32.mrf.mxu0
      %1973 = vdwg.mxu0
      %1974 = vmatpush.bf16.msra.mxu0 %v1216
      %1975 = vmatpush.bf16.msra.mxu0 %v1212
      %1976 = vmatpush.bf16.msra.mxu0 %v1208
      %1977 = vmatpush.bf16.msra.mxu0 %v1204
      %1978 = vmatpush.bf16.msra.mxu0 %v1200
      %1979 = vmatpush.bf16.msra.mxu0 %v1196
      %1980 = vmatpush.bf16.msra.mxu0 %v1192
      %1981 = vmatpush.bf16.msra.mxu0 %v1188
      %1982 = vmatmul.bf16.gmra.mxu0 %v358
      %v1983 = vpop.f32.mrf.mxu0
      %v1984 = vadd.f32 %v1961, %v1983
      %v1985 = vpop.f32.mrf.mxu0
      %v1986 = vadd.f32 %v1963, %v1985
      %1987 = vmatmul.bf16.gmra.mxu0 %v364
      %v1988 = vpop.f32.mrf.mxu0
      %v1989 = vadd.f32 %v1966, %v1988
      %v1990 = vpop.f32.mrf.mxu0
      %v1991 = vadd.f32 %v1968, %v1990
      %1992 = vmatmul.bf16.gmra.mxu0 %v370
      %v1993 = vpop.f32.mrf.mxu0
      %v1994 = vadd.f32 %v1971, %v1993
      %v1995 = vpop.f32.mrf.mxu0
      %1996 = vdwg.mxu0
      %1997 = vmatpush.bf16.msra.mxu0 %v1248
      %1998 = vmatpush.bf16.msra.mxu0 %v1244
      %1999 = vmatpush.bf16.msra.mxu0 %v1240
      %2000 = vmatpush.bf16.msra.mxu0 %v1236
      %2001 = vmatpush.bf16.msra.mxu0 %v1232
      %2002 = vmatpush.bf16.msra.mxu0 %v1228
      %2003 = vmatpush.bf16.msra.mxu0 %v1224
      %2004 = vmatpush.bf16.msra.mxu0 %v1220
      %2005 = vmatmul.bf16.gmra.mxu0 %v359
      %v2006 = vpop.f32.mrf.mxu0
      %v2007 = vadd.f32 %v1984, %v2006
      %v2008 = vpop.f32.mrf.mxu0
      %v2009 = vadd.f32 %v1986, %v2008
      %2010 = vmatmul.bf16.gmra.mxu0 %v365
      %v2011 = vpop.f32.mrf.mxu0
      %v2012 = vadd.f32 %v1989, %v2011
      %v2013 = vpop.f32.mrf.mxu0
      %v2014 = vadd.f32 %v1991, %v2013
      %2015 = vmatmul.bf16.gmra.mxu0 %v371
      %v2016 = vpop.f32.mrf.mxu0
      %v2017 = vadd.f32 %v1994, %v2016
      %v2018 = vpop.f32.mrf.mxu0
      %2019 = vdwg.mxu0
      %2020 = vmatpush.bf16.msra.mxu0 %v1280
      %2021 = vmatpush.bf16.msra.mxu0 %v1276
      %2022 = vmatpush.bf16.msra.mxu0 %v1272
      %2023 = vmatpush.bf16.msra.mxu0 %v1268
      %2024 = vmatpush.bf16.msra.mxu0 %v1264
      %2025 = vmatpush.bf16.msra.mxu0 %v1260
      %2026 = vmatpush.bf16.msra.mxu0 %v1256
      %2027 = vmatpush.bf16.msra.mxu0 %v1252
      %2028 = vmatmul.bf16.gmra.mxu0 %v360
      %v2029 = vpop.f32.mrf.mxu0
      %v2030 = vadd.f32 %v2007, %v2029
      %v2031 = vpop.f32.mrf.mxu0
      %v2032 = vadd.f32 %v2009, %v2031
      %2033 = vmatmul.bf16.gmra.mxu0 %v366
      %v2034 = vpop.f32.mrf.mxu0
      %v2035 = vadd.f32 %v2012, %v2034
      %v2036 = vpop.f32.mrf.mxu0
      %v2037 = vadd.f32 %v2014, %v2036
      %2038 = vmatmul.bf16.gmra.mxu0 %v372
      %v2039 = vpop.f32.mrf.mxu0
      %v2040 = vadd.f32 %v2017, %v2039
      %v2041 = vpop.f32.mrf.mxu0
      %2042 = vdwg.mxu0
      %2043 = vmatpush.bf16.msra.mxu0 %v1312
      %2044 = vmatpush.bf16.msra.mxu0 %v1308
      %2045 = vmatpush.bf16.msra.mxu0 %v1304
      %2046 = vmatpush.bf16.msra.mxu0 %v1300
      %2047 = vmatpush.bf16.msra.mxu0 %v1296
      %2048 = vmatpush.bf16.msra.mxu0 %v1292
      %2049 = vmatpush.bf16.msra.mxu0 %v1288
      %2050 = vmatpush.bf16.msra.mxu0 %v1284
      %2051 = vmatmul.bf16.gmra.mxu0 %v361
      %v2052 = vpop.f32.mrf.mxu0
      %v2053 = vadd.f32 %v2030, %v2052
      %v2054 = vpop.f32.mrf.mxu0
      %v2055 = vadd.f32 %v2032, %v2054
      %2056 = vmatmul.bf16.gmra.mxu0 %v367
      %v2057 = vpop.f32.mrf.mxu0
      %v2058 = vadd.f32 %v2035, %v2057
      %v2059 = vpop.f32.mrf.mxu0
      %v2060 = vadd.f32 %v2037, %v2059
      %2061 = vmatmul.bf16.gmra.mxu0 %v373
      %v2062 = vpop.f32.mrf.mxu0
      %v2063 = vadd.f32 %v2040, %v2062
      %v2064 = vpop.f32.mrf.mxu0
      %2065 = vdwg.mxu0
      %2066 = vmatpush.bf16.msra.mxu0 %v1344
      %2067 = vmatpush.bf16.msra.mxu0 %v1340
      %2068 = vmatpush.bf16.msra.mxu0 %v1336
      %2069 = vmatpush.bf16.msra.mxu0 %v1332
      %2070 = vmatpush.bf16.msra.mxu0 %v1328
      %2071 = vmatpush.bf16.msra.mxu0 %v1324
      %2072 = vmatpush.bf16.msra.mxu0 %v1320
      %2073 = vmatpush.bf16.msra.mxu0 %v1316
      %2074 = vmatmul.bf16.gmra.mxu0 %v362
      %v2075 = vpop.f32.mrf.mxu0
      %v2076 = vadd.f32 %v2053, %v2075
      %v2077 = vpop.f32.mrf.mxu0
      %v2078 = vadd.f32 %v2055, %v2077
      %2079 = vmatmul.bf16.gmra.mxu0 %v368
      %v2080 = vpop.f32.mrf.mxu0
      %v2081 = vadd.f32 %v2058, %v2080
      %v2082 = vpop.f32.mrf.mxu0
      %v2083 = vadd.f32 %v2060, %v2082
      %2084 = vmatmul.bf16.gmra.mxu0 %v374
      %v2085 = vpop.f32.mrf.mxu0
      %v2086 = vadd.f32 %v2063, %v2085
      %v2087 = vpop.f32.mrf.mxu0
      %2088 = vdwg.mxu0
      %v2089 = vmax.f32 %v1662, 0.0
      %v2090 = vmax.f32 %v1800, 0.0
      %v2091 = vmax.f32 %v1938, 0.0
      %v2092 = vmax.f32 %v2076, 0.0
      %v2093 = vmax.f32 %v1664, 0.0
      %v2094 = vmax.f32 %v1802, 0.0
      %v2095 = vmax.f32 %v1940, 0.0
      %v2096 = vmax.f32 %v2078, 0.0
      %v2097 = vmax.f32 %v1667, 0.0
      %v2098 = vmax.f32 %v1805, 0.0
      %v2099 = vmax.f32 %v1943, 0.0
      %v2100 = vmax.f32 %v2081, 0.0
      %v2101 = vmax.f32 %v1669, 0.0
      %v2102 = vmax.f32 %v1807, 0.0
      %v2103 = vmax.f32 %v1945, 0.0
      %v2104 = vmax.f32 %v2083, 0.0
      %v2105 = vmax.f32 %v1672, 0.0
      %v2106 = vmax.f32 %v1810, 0.0
      %v2107 = vmax.f32 %v1948, 0.0
      %v2108 = vmax.f32 %v2086, 0.0
      %v2109 = vpack.c.bf16 %v2093, %v2089
      %v2110 = vpack.c.bf16 %v2094, %v2090
      %v2111 = vpack.c.bf16 %v2095, %v2091
      %v2112 = vpack.c.bf16 %v2096, %v2092
      %v2113 = vpack.c.bf16 %v2101, %v2097
      %v2114 = vpack.c.bf16 %v2102, %v2098
      %v2115 = vpack.c.bf16 %v2103, %v2099
      %v2116 = vpack.c.bf16 %v2104, %v2100
      %v2117 = vpack.c.bf16 %v2105, %v2105
      %v2118 = vpack.c.bf16 %v2106, %v2106
      %v2119 = vpack.c.bf16 %v2107, %v2107
      %v2120 = vpack.c.bf16 %v2108, %v2108
      %v2121 = vld [vmem:[%s4] sm:$0xff]
      %v2122 = vld [vmem:[%s4 + $0x8] sm:$0xff]
      %v2123 = vld [vmem:[%s4 + $0x10] sm:$0xff]
      %v2124 = vld [vmem:[%s4 + $0x18] sm:$0xff]
      %v2125 = vld [vmem:[%s4 + $0x20] sm:$0xff]
      %v2126 = vld [vmem:[%s4 + $0x28] sm:$0xff]
      %v2127 = vld [vmem:[%s4 + $0x30] sm:$0xff]
      %v2128 = vld [vmem:[%s4 + $0x38] sm:$0xff]
      %v2129 = vld [vmem:[%s4 + $0x40] sm:$0xff]
      %v2130 = vld [vmem:[%s4 + $0x48] sm:$0xff]
      %v2131 = vld [vmem:[%s4 + $0x50] sm:$0xff]
      %v2132 = vld [vmem:[%s4 + $0x58] sm:$0xff]
      %v2133 = vld [vmem:[%s4 + $0x60] sm:$0xff]
      %v2134 = vld [vmem:[%s4 + $0x68] sm:$0xff]
      %v2135 = vld [vmem:[%s4 + $0x70] sm:$0xff]
      %v2136 = vld [vmem:[%s4 + $0x78] sm:$0xff]
      %v2137 = vld [vmem:[%s4 + $0x80] sm:$0xff]
      %v2138 = vld [vmem:[%s4 + $0x88] sm:$0xff]
      %v2139 = vld [vmem:[%s4 + $0x90] sm:$0xff]
      %v2140 = vld [vmem:[%s4 + $0x98] sm:$0xff]
      %v2141 = vld [vmem:[%s4 + $0xa0] sm:$0xff]
      %v2142 = vld [vmem:[%s4 + $0xa8] sm:$0xff]
      %v2143 = vld [vmem:[%s4 + $0xb0] sm:$0xff]
      %v2144 = vld [vmem:[%s4 + $0xb8] sm:$0xff]
      %v2145 = vld [vmem:[%s4 + $0xc0] sm:$0xff]
      %v2146 = vld [vmem:[%s4 + $0xc8] sm:$0xff]
      %v2147 = vld [vmem:[%s4 + $0xd0] sm:$0xff]
      %v2148 = vld [vmem:[%s4 + $0xd8] sm:$0xff]
      %v2149 = vld [vmem:[%s4 + $0xe0] sm:$0xff]
      %v2150 = vld [vmem:[%s4 + $0xe8] sm:$0xff]
      %v2151 = vld [vmem:[%s4 + $0xf0] sm:$0xff]
      %v2152 = vld [vmem:[%s4 + $0xf8] sm:$0xff]
      %v2153 = vld [vmem:[%s4 + $0x100] sm:$0xff]
      %v2154 = vld [vmem:[%s4 + $0x108] sm:$0xff]
      %v2155 = vld [vmem:[%s4 + $0x110] sm:$0xff]
      %v2156 = vld [vmem:[%s4 + $0x118] sm:$0xff]
      %v2157 = vld [vmem:[%s4 + $0x120] sm:$0xff]
      %v2158 = vld [vmem:[%s4 + $0x128] sm:$0xff]
      %v2159 = vld [vmem:[%s4 + $0x130] sm:$0xff]
      %v2160 = vld [vmem:[%s4 + $0x138] sm:$0xff]
      %v2161 = vld [vmem:[%s4 + $0x140] sm:$0xff]
      %v2162 = vld [vmem:[%s4 + $0x148] sm:$0xff]
      %v2163 = vld [vmem:[%s4 + $0x150] sm:$0xff]
      %v2164 = vld [vmem:[%s4 + $0x158] sm:$0xff]
      %v2165 = vld [vmem:[%s4 + $0x160] sm:$0xff]
      %v2166 = vld [vmem:[%s4 + $0x168] sm:$0xff]
      %v2167 = vld [vmem:[%s4 + $0x170] sm:$0xff]
      %v2168 = vld [vmem:[%s4 + $0x178] sm:$0xff]
      %v2169 = vld [vmem:[%s4 + $0x180] sm:$0xff]
      %v2170 = vld [vmem:[%s4 + $0x188] sm:$0xff]
      %v2171 = vld [vmem:[%s4 + $0x190] sm:$0xff]
      %v2172 = vld [vmem:[%s4 + $0x198] sm:$0xff]
      %v2173 = vld [vmem:[%s4 + $0x1a0] sm:$0xff]
      %v2174 = vld [vmem:[%s4 + $0x1a8] sm:$0xff]
      %v2175 = vld [vmem:[%s4 + $0x1b0] sm:$0xff]
      %v2176 = vld [vmem:[%s4 + $0x1b8] sm:$0xff]
      %v2177 = vld [vmem:[%s4 + $0x1c0] sm:$0xff]
      %v2178 = vld [vmem:[%s4 + $0x1c8] sm:$0xff]
      %v2179 = vld [vmem:[%s4 + $0x1d0] sm:$0xff]
      %v2180 = vld [vmem:[%s4 + $0x1d8] sm:$0xff]
      %v2181 = vld [vmem:[%s4 + $0x1e0] sm:$0xff]
      %v2182 = vld [vmem:[%s4 + $0x1e8] sm:$0xff]
      %v2183 = vld [vmem:[%s4 + $0x1f0] sm:$0xff]
      %v2184 = vld [vmem:[%s4 + $0x1f8] sm:$0xff]
      %v2185 = vld [vmem:[%s5] sm:$0x3]
      %v2187 = vperm.slane %v2185, 0
      %v2188 = vperm.slane %v2185, 1
      %v2255 = vunpack.c.l.b16 %v2121
      %v2256 = vunpack.c.h.b16 %v2121
      %v2257 = vunpack.c.l.b16 %v2122
      %v2258 = vunpack.c.h.b16 %v2122
      %v2259 = vunpack.c.l.b16 %v2123
      %v2260 = vunpack.c.h.b16 %v2123
      %v2261 = vunpack.c.l.b16 %v2124
      %v2262 = vunpack.c.h.b16 %v2124
      %v2263 = vunpack.c.l.b16 %v2125
      %v2264 = vunpack.c.h.b16 %v2125
      %v2265 = vunpack.c.l.b16 %v2126
      %v2266 = vunpack.c.h.b16 %v2126
      %v2267 = vunpack.c.l.b16 %v2127
      %v2268 = vunpack.c.h.b16 %v2127
      %v2269 = vunpack.c.l.b16 %v2128
      %v2270 = vunpack.c.h.b16 %v2128
      %v2271 = vunpack.c.l.b16 %v2129
      %v2272 = vunpack.c.h.b16 %v2129
      %v2273 = vunpack.c.l.b16 %v2130
      %v2274 = vunpack.c.h.b16 %v2130
      %v2275 = vunpack.c.l.b16 %v2131
      %v2276 = vunpack.c.h.b16 %v2131
      %v2277 = vunpack.c.l.b16 %v2132
      %v2278 = vunpack.c.h.b16 %v2132
      %v2279 = vunpack.c.l.b16 %v2133
      %v2280 = vunpack.c.h.b16 %v2133
      %v2281 = vunpack.c.l.b16 %v2134
      %v2282 = vunpack.c.h.b16 %v2134
      %v2283 = vunpack.c.l.b16 %v2135
      %v2284 = vunpack.c.h.b16 %v2135
      %v2285 = vunpack.c.l.b16 %v2136
      %v2286 = vunpack.c.h.b16 %v2136
      %v2287 = vunpack.c.l.b16 %v2137
      %v2288 = vunpack.c.h.b16 %v2137
      %v2289 = vunpack.c.l.b16 %v2138
      %v2290 = vunpack.c.h.b16 %v2138
      %v2291 = vunpack.c.l.b16 %v2139
      %v2292 = vunpack.c.h.b16 %v2139
      %v2293 = vunpack.c.l.b16 %v2140
      %v2294 = vunpack.c.h.b16 %v2140
      %v2295 = vunpack.c.l.b16 %v2141
      %v2296 = vunpack.c.h.b16 %v2141
      %v2297 = vunpack.c.l.b16 %v2142
      %v2298 = vunpack.c.h.b16 %v2142
      %v2299 = vunpack.c.l.b16 %v2143
      %v2300 = vunpack.c.h.b16 %v2143
      %v2301 = vunpack.c.l.b16 %v2144
      %v2302 = vunpack.c.h.b16 %v2144
      %v2303 = vunpack.c.l.b16 %v2145
      %v2304 = vunpack.c.h.b16 %v2145
      %v2305 = vunpack.c.l.b16 %v2146
      %v2306 = vunpack.c.h.b16 %v2146
      %v2307 = vunpack.c.l.b16 %v2147
      %v2308 = vunpack.c.h.b16 %v2147
      %v2309 = vunpack.c.l.b16 %v2148
      %v2310 = vunpack.c.h.b16 %v2148
      %v2311 = vunpack.c.l.b16 %v2149
      %v2312 = vunpack.c.h.b16 %v2149
      %v2313 = vunpack.c.l.b16 %v2150
      %v2314 = vunpack.c.h.b16 %v2150
      %v2315 = vunpack.c.l.b16 %v2151
      %v2316 = vunpack.c.h.b16 %v2151
      %v2317 = vunpack.c.l.b16 %v2152
      %v2318 = vunpack.c.h.b16 %v2152
      %v2319 = vunpack.c.l.b16 %v2153
      %v2320 = vunpack.c.h.b16 %v2153
      %v2321 = vunpack.c.l.b16 %v2154
      %v2322 = vunpack.c.h.b16 %v2154
      %v2323 = vunpack.c.l.b16 %v2155
      %v2324 = vunpack.c.h.b16 %v2155
      %v2325 = vunpack.c.l.b16 %v2156
      %v2326 = vunpack.c.h.b16 %v2156
      %v2327 = vunpack.c.l.b16 %v2157
      %v2328 = vunpack.c.h.b16 %v2157
      %v2329 = vunpack.c.l.b16 %v2158
      %v2330 = vunpack.c.h.b16 %v2158
      %v2331 = vunpack.c.l.b16 %v2159
      %v2332 = vunpack.c.h.b16 %v2159
      %v2333 = vunpack.c.l.b16 %v2160
      %v2334 = vunpack.c.h.b16 %v2160
      %v2335 = vunpack.c.l.b16 %v2161
      %v2336 = vunpack.c.h.b16 %v2161
      %v2337 = vunpack.c.l.b16 %v2162
      %v2338 = vunpack.c.h.b16 %v2162
      %v2339 = vunpack.c.l.b16 %v2163
      %v2340 = vunpack.c.h.b16 %v2163
      %v2341 = vunpack.c.l.b16 %v2164
      %v2342 = vunpack.c.h.b16 %v2164
      %v2343 = vunpack.c.l.b16 %v2165
      %v2344 = vunpack.c.h.b16 %v2165
      %v2345 = vunpack.c.l.b16 %v2166
      %v2346 = vunpack.c.h.b16 %v2166
      %v2347 = vunpack.c.l.b16 %v2167
      %v2348 = vunpack.c.h.b16 %v2167
      %v2349 = vunpack.c.l.b16 %v2168
      %v2350 = vunpack.c.h.b16 %v2168
      %v2351 = vunpack.c.l.b16 %v2169
      %v2352 = vunpack.c.h.b16 %v2169
      %v2353 = vunpack.c.l.b16 %v2170
      %v2354 = vunpack.c.h.b16 %v2170
      %v2355 = vunpack.c.l.b16 %v2171
      %v2356 = vunpack.c.h.b16 %v2171
      %v2357 = vunpack.c.l.b16 %v2172
      %v2358 = vunpack.c.h.b16 %v2172
      %v2359 = vunpack.c.l.b16 %v2173
      %v2360 = vunpack.c.h.b16 %v2173
      %v2361 = vunpack.c.l.b16 %v2174
      %v2362 = vunpack.c.h.b16 %v2174
      %v2363 = vunpack.c.l.b16 %v2175
      %v2364 = vunpack.c.h.b16 %v2175
      %v2365 = vunpack.c.l.b16 %v2176
      %v2366 = vunpack.c.h.b16 %v2176
      %v2367 = vunpack.c.l.b16 %v2177
      %v2368 = vunpack.c.h.b16 %v2177
      %v2369 = vunpack.c.l.b16 %v2178
      %v2370 = vunpack.c.h.b16 %v2178
      %v2371 = vunpack.c.l.b16 %v2179
      %v2372 = vunpack.c.h.b16 %v2179
      %v2373 = vunpack.c.l.b16 %v2180
      %v2374 = vunpack.c.h.b16 %v2180
      %v2375 = vunpack.c.l.b16 %v2181
      %v2376 = vunpack.c.h.b16 %v2181
      %v2377 = vunpack.c.l.b16 %v2182
      %v2378 = vunpack.c.h.b16 %v2182
      %v2379 = vunpack.c.l.b16 %v2183
      %v2380 = vunpack.c.h.b16 %v2183
      %v2381 = vunpack.c.l.b16 %v2184
      %v2382 = vunpack.c.h.b16 %v2184
      %v2383 = vpack.c.b16 %v2257, %v2255
      %v2384 = vpack.c.b16 %v2258, %v2256
      %v2385 = vpack.c.b16 %v2261, %v2259
      %v2386 = vpack.c.b16 %v2262, %v2260
      %v2387 = vpack.c.b16 %v2265, %v2263
      %v2388 = vpack.c.b16 %v2266, %v2264
      %v2389 = vpack.c.b16 %v2269, %v2267
      %v2390 = vpack.c.b16 %v2270, %v2268
      %v2391 = vpack.c.b16 %v2273, %v2271
      %v2392 = vpack.c.b16 %v2274, %v2272
      %v2393 = vpack.c.b16 %v2277, %v2275
      %v2394 = vpack.c.b16 %v2278, %v2276
      %v2395 = vpack.c.b16 %v2281, %v2279
      %v2396 = vpack.c.b16 %v2282, %v2280
      %v2397 = vpack.c.b16 %v2285, %v2283
      %v2398 = vpack.c.b16 %v2286, %v2284
      %v2399 = vpack.c.b16 %v2289, %v2287
      %v2400 = vpack.c.b16 %v2290, %v2288
      %v2401 = vpack.c.b16 %v2293, %v2291
      %v2402 = vpack.c.b16 %v2294, %v2292
      %v2403 = vpack.c.b16 %v2297, %v2295
      %v2404 = vpack.c.b16 %v2298, %v2296
      %v2405 = vpack.c.b16 %v2301, %v2299
      %v2406 = vpack.c.b16 %v2302, %v2300
      %v2407 = vpack.c.b16 %v2305, %v2303
      %v2408 = vpack.c.b16 %v2306, %v2304
      %v2409 = vpack.c.b16 %v2309, %v2307
      %v2410 = vpack.c.b16 %v2310, %v2308
      %v2411 = vpack.c.b16 %v2313, %v2311
      %v2412 = vpack.c.b16 %v2314, %v2312
      %v2413 = vpack.c.b16 %v2317, %v2315
      %v2414 = vpack.c.b16 %v2318, %v2316
      %v2415 = vpack.c.b16 %v2321, %v2319
      %v2416 = vpack.c.b16 %v2322, %v2320
      %v2417 = vpack.c.b16 %v2325, %v2323
      %v2418 = vpack.c.b16 %v2326, %v2324
      %v2419 = vpack.c.b16 %v2329, %v2327
      %v2420 = vpack.c.b16 %v2330, %v2328
      %v2421 = vpack.c.b16 %v2333, %v2331
      %v2422 = vpack.c.b16 %v2334, %v2332
      %v2423 = vpack.c.b16 %v2337, %v2335
      %v2424 = vpack.c.b16 %v2338, %v2336
      %v2425 = vpack.c.b16 %v2341, %v2339
      %v2426 = vpack.c.b16 %v2342, %v2340
      %v2427 = vpack.c.b16 %v2345, %v2343
      %v2428 = vpack.c.b16 %v2346, %v2344
      %v2429 = vpack.c.b16 %v2349, %v2347
      %v2430 = vpack.c.b16 %v2350, %v2348
      %v2431 = vpack.c.b16 %v2353, %v2351
      %v2432 = vpack.c.b16 %v2354, %v2352
      %v2433 = vpack.c.b16 %v2357, %v2355
      %v2434 = vpack.c.b16 %v2358, %v2356
      %v2435 = vpack.c.b16 %v2361, %v2359
      %v2436 = vpack.c.b16 %v2362, %v2360
      %v2437 = vpack.c.b16 %v2365, %v2363
      %v2438 = vpack.c.b16 %v2366, %v2364
      %v2439 = vpack.c.b16 %v2369, %v2367
      %v2440 = vpack.c.b16 %v2370, %v2368
      %v2441 = vpack.c.b16 %v2373, %v2371
      %v2442 = vpack.c.b16 %v2374, %v2372
      %v2443 = vpack.c.b16 %v2377, %v2375
      %v2444 = vpack.c.b16 %v2378, %v2376
      %v2445 = vpack.c.b16 %v2381, %v2379
      %v2446 = vpack.c.b16 %v2382, %v2380
      %2511 = vmatpush.bf16.msra.mxu0 %v2397
      %2512 = vmatpush.bf16.msra.mxu0 %v2395
      %2513 = vmatpush.bf16.msra.mxu0 %v2393
      %2514 = vmatpush.bf16.msra.mxu0 %v2391
      %2515 = vmatpush.bf16.msra.mxu0 %v2389
      %2516 = vmatpush.bf16.msra.mxu0 %v2387
      %2517 = vmatpush.bf16.msra.mxu0 %v2385
      %2518 = vmatpush.bf16.msra.mxu0 %v2383
      %2519 = vmatmul.bf16.gmra.mxu0 %v2109
      %v2520 = vpop.f32.mrf.mxu0
      %v2521 = vadd.f32 %v2187, %v2520
      %v2522 = vpop.f32.mrf.mxu0
      %v2523 = vadd.f32 %v2187, %v2522
      %2524 = vmatmul.bf16.gmra.mxu0 %v2113
      %v2525 = vpop.f32.mrf.mxu0
      %v2526 = vadd.f32 %v2187, %v2525
      %v2527 = vpop.f32.mrf.mxu0
      %v2528 = vadd.f32 %v2187, %v2527
      %2529 = vmatmul.bf16.gmra.mxu0 %v2117
      %v2530 = vpop.f32.mrf.mxu0
      %v2531 = vadd.f32 %v2187, %v2530
      %v2532 = vpop.f32.mrf.mxu0
      %2533 = vdwg.mxu0
      %2534 = vmatpush.bf16.msra.mxu0 %v2413
      %2535 = vmatpush.bf16.msra.mxu0 %v2411
      %2536 = vmatpush.bf16.msra.mxu0 %v2409
      %2537 = vmatpush.bf16.msra.mxu0 %v2407
      %2538 = vmatpush.bf16.msra.mxu0 %v2405
      %2539 = vmatpush.bf16.msra.mxu0 %v2403
      %2540 = vmatpush.bf16.msra.mxu0 %v2401
      %2541 = vmatpush.bf16.msra.mxu0 %v2399
      %2542 = vmatmul.bf16.gmra.mxu0 %v2110
      %v2543 = vpop.f32.mrf.mxu0
      %v2544 = vadd.f32 %v2521, %v2543
      %v2545 = vpop.f32.mrf.mxu0
      %v2546 = vadd.f32 %v2523, %v2545
      %2547 = vmatmul.bf16.gmra.mxu0 %v2114
      %v2548 = vpop.f32.mrf.mxu0
      %v2549 = vadd.f32 %v2526, %v2548
      %v2550 = vpop.f32.mrf.mxu0
      %v2551 = vadd.f32 %v2528, %v2550
      %2552 = vmatmul.bf16.gmra.mxu0 %v2118
      %v2553 = vpop.f32.mrf.mxu0
      %v2554 = vadd.f32 %v2531, %v2553
      %v2555 = vpop.f32.mrf.mxu0
      %2556 = vdwg.mxu0
      %2557 = vmatpush.bf16.msra.mxu0 %v2429
      %2558 = vmatpush.bf16.msra.mxu0 %v2427
      %2559 = vmatpush.bf16.msra.mxu0 %v2425
      %2560 = vmatpush.bf16.msra.mxu0 %v2423
      %2561 = vmatpush.bf16.msra.mxu0 %v2421
      %2562 = vmatpush.bf16.msra.mxu0 %v2419
      %2563 = vmatpush.bf16.msra.mxu0 %v2417
      %2564 = vmatpush.bf16.msra.mxu0 %v2415
      %2565 = vmatmul.bf16.gmra.mxu0 %v2111
      %v2566 = vpop.f32.mrf.mxu0
      %v2567 = vadd.f32 %v2544, %v2566
      %v2568 = vpop.f32.mrf.mxu0
      %v2569 = vadd.f32 %v2546, %v2568
      %2570 = vmatmul.bf16.gmra.mxu0 %v2115
      %v2571 = vpop.f32.mrf.mxu0
      %v2572 = vadd.f32 %v2549, %v2571
      %v2573 = vpop.f32.mrf.mxu0
      %v2574 = vadd.f32 %v2551, %v2573
      %2575 = vmatmul.bf16.gmra.mxu0 %v2119
      %v2576 = vpop.f32.mrf.mxu0
      %v2577 = vadd.f32 %v2554, %v2576
      %v2578 = vpop.f32.mrf.mxu0
      %2579 = vdwg.mxu0
      %2580 = vmatpush.bf16.msra.mxu0 %v2445
      %2581 = vmatpush.bf16.msra.mxu0 %v2443
      %2582 = vmatpush.bf16.msra.mxu0 %v2441
      %2583 = vmatpush.bf16.msra.mxu0 %v2439
      %2584 = vmatpush.bf16.msra.mxu0 %v2437
      %2585 = vmatpush.bf16.msra.mxu0 %v2435
      %2586 = vmatpush.bf16.msra.mxu0 %v2433
      %2587 = vmatpush.bf16.msra.mxu0 %v2431
      %2588 = vmatmul.bf16.gmra.mxu0 %v2112
      %v2589 = vpop.f32.mrf.mxu0
      %v2590 = vadd.f32 %v2567, %v2589
      %v2591 = vpop.f32.mrf.mxu0
      %v2592 = vadd.f32 %v2569, %v2591
      %2593 = vmatmul.bf16.gmra.mxu0 %v2116
      %v2594 = vpop.f32.mrf.mxu0
      %v2595 = vadd.f32 %v2572, %v2594
      %v2596 = vpop.f32.mrf.mxu0
      %v2597 = vadd.f32 %v2574, %v2596
      %2598 = vmatmul.bf16.gmra.mxu0 %v2120
      %v2599 = vpop.f32.mrf.mxu0
      %v2600 = vadd.f32 %v2577, %v2599
      %v2601 = vpop.f32.mrf.mxu0
      %2602 = vdwg.mxu0
      %2603 = vmatpush.bf16.msra.mxu0 %v2398
      %2604 = vmatpush.bf16.msra.mxu0 %v2396
      %2605 = vmatpush.bf16.msra.mxu0 %v2394
      %2606 = vmatpush.bf16.msra.mxu0 %v2392
      %2607 = vmatpush.bf16.msra.mxu0 %v2390
      %2608 = vmatpush.bf16.msra.mxu0 %v2388
      %2609 = vmatpush.bf16.msra.mxu0 %v2386
      %2610 = vmatpush.bf16.msra.mxu0 %v2384
      %2611 = vmatmul.bf16.gmra.mxu0 %v2109
      %v2612 = vpop.f32.mrf.mxu0
      %v2613 = vadd.f32 %v2188, %v2612
      %v2614 = vpop.f32.mrf.mxu0
      %v2615 = vadd.f32 %v2188, %v2614
      %2616 = vmatmul.bf16.gmra.mxu0 %v2113
      %v2617 = vpop.f32.mrf.mxu0
      %v2618 = vadd.f32 %v2188, %v2617
      %v2619 = vpop.f32.mrf.mxu0
      %v2620 = vadd.f32 %v2188, %v2619
      %2621 = vmatmul.bf16.gmra.mxu0 %v2117
      %v2622 = vpop.f32.mrf.mxu0
      %v2623 = vadd.f32 %v2188, %v2622
      %v2624 = vpop.f32.mrf.mxu0
      %2625 = vdwg.mxu0
      %2626 = vmatpush.bf16.msra.mxu0 %v2414
      %2627 = vmatpush.bf16.msra.mxu0 %v2412
      %2628 = vmatpush.bf16.msra.mxu0 %v2410
      %2629 = vmatpush.bf16.msra.mxu0 %v2408
      %2630 = vmatpush.bf16.msra.mxu0 %v2406
      %2631 = vmatpush.bf16.msra.mxu0 %v2404
      %2632 = vmatpush.bf16.msra.mxu0 %v2402
      %2633 = vmatpush.bf16.msra.mxu0 %v2400
      %2634 = vmatmul.bf16.gmra.mxu0 %v2110
      %v2635 = vpop.f32.mrf.mxu0
      %v2636 = vadd.f32 %v2613, %v2635
      %v2637 = vpop.f32.mrf.mxu0
      %v2638 = vadd.f32 %v2615, %v2637
      %2639 = vmatmul.bf16.gmra.mxu0 %v2114
      %v2640 = vpop.f32.mrf.mxu0
      %v2641 = vadd.f32 %v2618, %v2640
      %v2642 = vpop.f32.mrf.mxu0
      %v2643 = vadd.f32 %v2620, %v2642
      %2644 = vmatmul.bf16.gmra.mxu0 %v2118
      %v2645 = vpop.f32.mrf.mxu0
      %v2646 = vadd.f32 %v2623, %v2645
      %v2647 = vpop.f32.mrf.mxu0
      %2648 = vdwg.mxu0
      %2649 = vmatpush.bf16.msra.mxu0 %v2430
      %2650 = vmatpush.bf16.msra.mxu0 %v2428
      %2651 = vmatpush.bf16.msra.mxu0 %v2426
      %2652 = vmatpush.bf16.msra.mxu0 %v2424
      %2653 = vmatpush.bf16.msra.mxu0 %v2422
      %2654 = vmatpush.bf16.msra.mxu0 %v2420
      %2655 = vmatpush.bf16.msra.mxu0 %v2418
      %2656 = vmatpush.bf16.msra.mxu0 %v2416
      %2657 = vmatmul.bf16.gmra.mxu0 %v2111
      %v2658 = vpop.f32.mrf.mxu0
      %v2659 = vadd.f32 %v2636, %v2658
      %v2660 = vpop.f32.mrf.mxu0
      %v2661 = vadd.f32 %v2638, %v2660
      %2662 = vmatmul.bf16.gmra.mxu0 %v2115
      %v2663 = vpop.f32.mrf.mxu0
      %v2664 = vadd.f32 %v2641, %v2663
      %v2665 = vpop.f32.mrf.mxu0
      %v2666 = vadd.f32 %v2643, %v2665
      %2667 = vmatmul.bf16.gmra.mxu0 %v2119
      %v2668 = vpop.f32.mrf.mxu0
      %v2669 = vadd.f32 %v2646, %v2668
      %v2670 = vpop.f32.mrf.mxu0
      %2671 = vdwg.mxu0
      %2672 = vmatpush.bf16.msra.mxu0 %v2446
      %2673 = vmatpush.bf16.msra.mxu0 %v2444
      %2674 = vmatpush.bf16.msra.mxu0 %v2442
      %2675 = vmatpush.bf16.msra.mxu0 %v2440
      %2676 = vmatpush.bf16.msra.mxu0 %v2438
      %2677 = vmatpush.bf16.msra.mxu0 %v2436
      %2678 = vmatpush.bf16.msra.mxu0 %v2434
      %2679 = vmatpush.bf16.msra.mxu0 %v2432
      %2680 = vmatmul.bf16.gmra.mxu0 %v2112
      %v2681 = vpop.f32.mrf.mxu0
      %v2682 = vadd.f32 %v2659, %v2681
      %v2683 = vpop.f32.mrf.mxu0
      %v2684 = vadd.f32 %v2661, %v2683
      %2685 = vmatmul.bf16.gmra.mxu0 %v2116
      %v2686 = vpop.f32.mrf.mxu0
      %v2687 = vadd.f32 %v2664, %v2686
      %v2688 = vpop.f32.mrf.mxu0
      %v2689 = vadd.f32 %v2666, %v2688
      %2690 = vmatmul.bf16.gmra.mxu0 %v2120
      %v2691 = vpop.f32.mrf.mxu0
      %v2692 = vadd.f32 %v2669, %v2691
      %v2693 = vpop.f32.mrf.mxu0
      %2694 = vdwg.mxu0
      %v2695 = vld [vmem:[%s320] sm:$0xff]
      %v2696 = vld [vmem:[%s320 + $0x8] sm:$0xff]
      %v2697 = vld [vmem:[%s320 + $0x10] sm:$0xff]
      %v2698 = vld [vmem:[%s320 + $0x18] sm:$0xff]
      %v2699 = vld [vmem:[%s320 + $0x20] sm:$0xff]
      %v2700 = vld [vmem:[%s320 + $0x28] sm:$0xff]
      %v2701 = vld [vmem:[%s320 + $0x30] sm:$0xff]
      %v2702 = vld [vmem:[%s320 + $0x38] sm:$0xff]
      %v2703 = vld [vmem:[%s320 + $0x40] sm:$0xff]
      %v2704 = vld [vmem:[%s320 + $0x48] sm:$0xff]
      %v2705 = vld [vmem:[%s320 + $0x50] sm:$0xff]
      %v2706 = vld [vmem:[%s320 + $0x58] sm:$0xff]
      %v2707 = vld [vmem:[%s320 + $0x60] sm:$0xff]
      %v2708 = vld [vmem:[%s320 + $0x68] sm:$0xff]
      %v2709 = vld [vmem:[%s320 + $0x70] sm:$0xff]
      %v2710 = vld [vmem:[%s320 + $0x78] sm:$0xff]
      %v2711 = vld [vmem:[%s320 + $0x80] sm:$0xff]
      %v2712 = vld [vmem:[%s320 + $0x88] sm:$0xff]
      %v2713 = vld [vmem:[%s320 + $0x90] sm:$0xff]
      %v2714 = vpack.c.bf16 %v2696, %v2695
      %v2715 = vpack.c.bf16 %v2698, %v2697
      %v2716 = vpack.c.bf16 %v2700, %v2699
      %v2717 = vpack.c.bf16 %v2702, %v2701
      %v2718 = vpack.c.bf16 %v2704, %v2703
      %v2719 = vpack.c.bf16 %v2706, %v2705
      %v2720 = vpack.c.bf16 %v2708, %v2707
      %v2721 = vpack.c.bf16 %v2710, %v2709
      %v2722 = vpack.c.bf16 %v2712, %v2711
      %v2723 = vpack.c.bf16 %v2713, %v2713
      %v2724 = vld [vmem:[%s6] sm:$0xff]
      %v2725 = vld [vmem:[%s7] sm:$0x3]
      %v2727 = vperm.slane %v2725, 0
      %v2728 = vperm.slane %v2725, 1
      %v2732 = vunpack.c.l.b16 %v2724
      %v2733 = vunpack.c.h.b16 %v2724
      %v2734 = vpack.c.b16 %v2732, %v2732
      %v2735 = vpack.c.b16 %v2733, %v2733
      %vm2736 = vcmask 64512
      %v2738 = vsel %vm2736, %v2714, 0
      %v2741 = vsel %vm2736, %v2715, 0
      %v2744 = vsel %vm2736, %v2716, 0
      %v2747 = vsel %vm2736, %v2717, 0
      %v2750 = vsel %vm2736, %v2718, 0
      %v2753 = vsel %vm2736, %v2719, 0
      %v2756 = vsel %vm2736, %v2720, 0
      %v2759 = vsel %vm2736, %v2721, 0
      %v2762 = vsel %vm2736, %v2722, 0
      %v2765 = vsel %vm2736, %v2723, 0
      %vm2767 = vcmask 1043456
      %v2769 = vsel %vm2767, %v2734, 0
      %v2772 = vsel %vm2767, %v2735, 0
      %2774 = vmatpush.bf16.msra.mxu0 0
      %2775 = vmatpush.bf16.msra.mxu0 0
      %2776 = vmatpush.bf16.msra.mxu0 0
      %2777 = vmatpush.bf16.msra.mxu0 0
      %2778 = vmatpush.bf16.msra.mxu0 0
      %2779 = vmatpush.bf16.msra.mxu0 0
      %2780 = vmatpush.bf16.msra.mxu0 0
      %2781 = vmatpush.bf16.msra.mxu0 %v2769
      %2782 = vmatmul.bf16.gmra.mxu0 %v2738
      %v2783 = vpop.f32.mrf.mxu0
      %v2784 = vadd.f32 %v2727, %v2783
      %v2785 = vpop.f32.mrf.mxu0
      %v2786 = vadd.f32 %v2727, %v2785
      %2787 = vmatmul.bf16.gmra.mxu0 %v2741
      %v2788 = vpop.f32.mrf.mxu0
      %v2789 = vadd.f32 %v2727, %v2788
      %v2790 = vpop.f32.mrf.mxu0
      %v2791 = vadd.f32 %v2727, %v2790
      %2792 = vmatmul.bf16.gmra.mxu0 %v2744
      %v2793 = vpop.f32.mrf.mxu0
      %v2794 = vadd.f32 %v2727, %v2793
      %v2795 = vpop.f32.mrf.mxu0
      %v2796 = vadd.f32 %v2727, %v2795
      %2797 = vmatmul.bf16.gmra.mxu0 %v2747
      %v2798 = vpop.f32.mrf.mxu0
      %v2799 = vadd.f32 %v2727, %v2798
      %v2800 = vpop.f32.mrf.mxu0
      %v2801 = vadd.f32 %v2727, %v2800
      %2802 = vmatmul.bf16.gmra.mxu0 %v2750
      %v2803 = vpop.f32.mrf.mxu0
      %v2804 = vadd.f32 %v2727, %v2803
      %v2805 = vpop.f32.mrf.mxu0
      %v2806 = vadd.f32 %v2727, %v2805
      %2807 = vmatmul.bf16.gmra.mxu0 %v2753
      %v2808 = vpop.f32.mrf.mxu0
      %v2809 = vadd.f32 %v2727, %v2808
      %v2810 = vpop.f32.mrf.mxu0
      %v2811 = vadd.f32 %v2727, %v2810
      %2812 = vmatmul.bf16.gmra.mxu0 %v2756
      %v2813 = vpop.f32.mrf.mxu0
      %v2814 = vadd.f32 %v2727, %v2813
      %v2815 = vpop.f32.mrf.mxu0
      %v2816 = vadd.f32 %v2727, %v2815
      %2817 = vmatmul.bf16.gmra.mxu0 %v2759
      %v2818 = vpop.f32.mrf.mxu0
      %v2819 = vadd.f32 %v2727, %v2818
      %v2820 = vpop.f32.mrf.mxu0
      %v2821 = vadd.f32 %v2727, %v2820
      %2822 = vmatmul.bf16.gmra.mxu0 %v2762
      %v2823 = vpop.f32.mrf.mxu0
      %v2824 = vadd.f32 %v2727, %v2823
      %v2825 = vpop.f32.mrf.mxu0
      %v2826 = vadd.f32 %v2727, %v2825
      %2827 = vmatmul.bf16.gmra.mxu0 %v2765
      %v2828 = vpop.f32.mrf.mxu0
      %v2829 = vadd.f32 %v2727, %v2828
      %v2830 = vpop.f32.mrf.mxu0
      %2831 = vdwg.mxu0
      %2832 = vmatpush.bf16.msra.mxu0 0
      %2833 = vmatpush.bf16.msra.mxu0 0
      %2834 = vmatpush.bf16.msra.mxu0 0
      %2835 = vmatpush.bf16.msra.mxu0 0
      %2836 = vmatpush.bf16.msra.mxu0 0
      %2837 = vmatpush.bf16.msra.mxu0 0
      %2838 = vmatpush.bf16.msra.mxu0 0
      %2839 = vmatpush.bf16.msra.mxu0 %v2772
      %2840 = vmatmul.bf16.gmra.mxu0 %v2738
      %v2841 = vpop.f32.mrf.mxu0
      %v2842 = vadd.f32 %v2728, %v2841
      %v2843 = vpop.f32.mrf.mxu0
      %v2844 = vadd.f32 %v2728, %v2843
      %2845 = vmatmul.bf16.gmra.mxu0 %v2741
      %v2846 = vpop.f32.mrf.mxu0
      %v2847 = vadd.f32 %v2728, %v2846
      %v2848 = vpop.f32.mrf.mxu0
      %v2849 = vadd.f32 %v2728, %v2848
      %2850 = vmatmul.bf16.gmra.mxu0 %v2744
      %v2851 = vpop.f32.mrf.mxu0
      %v2852 = vadd.f32 %v2728, %v2851
      %v2853 = vpop.f32.mrf.mxu0
      %v2854 = vadd.f32 %v2728, %v2853
      %2855 = vmatmul.bf16.gmra.mxu0 %v2747
      %v2856 = vpop.f32.mrf.mxu0
      %v2857 = vadd.f32 %v2728, %v2856
      %v2858 = vpop.f32.mrf.mxu0
      %v2859 = vadd.f32 %v2728, %v2858
      %2860 = vmatmul.bf16.gmra.mxu0 %v2750
      %v2861 = vpop.f32.mrf.mxu0
      %v2862 = vadd.f32 %v2728, %v2861
      %v2863 = vpop.f32.mrf.mxu0
      %v2864 = vadd.f32 %v2728, %v2863
      %2865 = vmatmul.bf16.gmra.mxu0 %v2753
      %v2866 = vpop.f32.mrf.mxu0
      %v2867 = vadd.f32 %v2728, %v2866
      %v2868 = vpop.f32.mrf.mxu0
      %v2869 = vadd.f32 %v2728, %v2868
      %2870 = vmatmul.bf16.gmra.mxu0 %v2756
      %v2871 = vpop.f32.mrf.mxu0
      %v2872 = vadd.f32 %v2728, %v2871
      %v2873 = vpop.f32.mrf.mxu0
      %v2874 = vadd.f32 %v2728, %v2873
      %2875 = vmatmul.bf16.gmra.mxu0 %v2759
      %v2876 = vpop.f32.mrf.mxu0
      %v2877 = vadd.f32 %v2728, %v2876
      %v2878 = vpop.f32.mrf.mxu0
      %v2879 = vadd.f32 %v2728, %v2878
      %2880 = vmatmul.bf16.gmra.mxu0 %v2762
      %v2881 = vpop.f32.mrf.mxu0
      %v2882 = vadd.f32 %v2728, %v2881
      %v2883 = vpop.f32.mrf.mxu0
      %v2884 = vadd.f32 %v2728, %v2883
      %2885 = vmatmul.bf16.gmra.mxu0 %v2765
      %v2886 = vpop.f32.mrf.mxu0
      %v2887 = vadd.f32 %v2728, %v2886
      %v2888 = vpop.f32.mrf.mxu0
      %2889 = vdwg.mxu0
      %v2890 = vpack.c.bf16 %v2592, %v2590
      %v2891 = vpack.c.bf16 %v2684, %v2682
      %v2892 = vpack.c.bf16 %v2597, %v2595
      %v2893 = vpack.c.bf16 %v2689, %v2687
      %v2894 = vpack.c.bf16 %v2600, %v2600
      %v2895 = vpack.c.bf16 %v2692, %v2692
      %v2896 = vpack.c.bf16 %v2786, %v2784
      %v2897 = vpack.c.bf16 %v2844, %v2842
      %v2898 = vpack.c.bf16 %v2791, %v2789
      %v2899 = vpack.c.bf16 %v2849, %v2847
      %v2900 = vpack.c.bf16 %v2796, %v2794
      %v2901 = vpack.c.bf16 %v2854, %v2852
      %v2902 = vpack.c.bf16 %v2801, %v2799
      %v2903 = vpack.c.bf16 %v2859, %v2857
      %v2904 = vpack.c.bf16 %v2806, %v2804
      %v2905 = vpack.c.bf16 %v2864, %v2862
      %v2906 = vpack.c.bf16 %v2811, %v2809
      %v2907 = vpack.c.bf16 %v2869, %v2867
      %v2908 = vpack.c.bf16 %v2816, %v2814
      %v2909 = vpack.c.bf16 %v2874, %v2872
      %v2910 = vpack.c.bf16 %v2821, %v2819
      %v2911 = vpack.c.bf16 %v2879, %v2877
      %v2912 = vpack.c.bf16 %v2826, %v2824
      %v2913 = vpack.c.bf16 %v2884, %v2882
      %v2914 = vpack.c.bf16 %v2829, %v2829
      %v2915 = vpack.c.bf16 %v2887, %v2887
      %2916 = vmatpush.bf16.xpose.msra.mxu0 0
      %2917 = vmatpush.bf16.xpose.msra.mxu0 0
      %2918 = vmatpush.bf16.xpose.msra.mxu0 0
      %2919 = vmatpush.bf16.xpose.msra.mxu0 0
      %2920 = vmatpush.bf16.xpose.msra.mxu0 0
      %2921 = vmatpush.bf16.xpose.msra.mxu0 %v2894
      %2922 = vmatpush.bf16.xpose.msra.mxu0 %v2892
      %2923 = vmatpush.bf16.xpose.msra.mxu0 %v2890
      %2924 = vmatmul.bf16.gmra.mxu0 %v2896
      %v2925 = vpop.f32.mrf.mxu0
      %v2926 = vadd.f32 0.0, %v2925
      %v2927 = vpop.f32.mrf.mxu0
      %v2928 = vadd.f32 0.0, %v2927
      %2929 = vmatmul.bf16.gmra.mxu0 %v2898
      %v2930 = vpop.f32.mrf.mxu0
      %v2931 = vadd.f32 0.0, %v2930
      %v2932 = vpop.f32.mrf.mxu0
      %v2933 = vadd.f32 0.0, %v2932
      %2934 = vmatmul.bf16.gmra.mxu0 %v2900
      %v2935 = vpop.f32.mrf.mxu0
      %v2936 = vadd.f32 0.0, %v2935
      %v2937 = vpop.f32.mrf.mxu0
      %v2938 = vadd.f32 0.0, %v2937
      %2939 = vmatmul.bf16.gmra.mxu0 %v2902
      %v2940 = vpop.f32.mrf.mxu0
      %v2941 = vadd.f32 0.0, %v2940
      %v2942 = vpop.f32.mrf.mxu0
      %v2943 = vadd.f32 0.0, %v2942
      %2944 = vmatmul.bf16.gmra.mxu0 %v2904
      %v2945 = vpop.f32.mrf.mxu0
      %v2946 = vadd.f32 0.0, %v2945
      %v2947 = vpop.f32.mrf.mxu0
      %v2948 = vadd.f32 0.0, %v2947
      %2949 = vmatmul.bf16.gmra.mxu0 %v2906
      %v2950 = vpop.f32.mrf.mxu0
      %v2951 = vadd.f32 0.0, %v2950
      %v2952 = vpop.f32.mrf.mxu0
      %v2953 = vadd.f32 0.0, %v2952
      %2954 = vmatmul.bf16.gmra.mxu0 %v2908
      %v2955 = vpop.f32.mrf.mxu0
      %v2956 = vadd.f32 0.0, %v2955
      %v2957 = vpop.f32.mrf.mxu0
      %v2958 = vadd.f32 0.0, %v2957
      %2959 = vmatmul.bf16.gmra.mxu0 %v2910
      %v2960 = vpop.f32.mrf.mxu0
      %v2961 = vadd.f32 0.0, %v2960
      %v2962 = vpop.f32.mrf.mxu0
      %v2963 = vadd.f32 0.0, %v2962
      %2964 = vmatmul.bf16.gmra.mxu0 %v2912
      %v2965 = vpop.f32.mrf.mxu0
      %v2966 = vadd.f32 0.0, %v2965
      %v2967 = vpop.f32.mrf.mxu0
      %v2968 = vadd.f32 0.0, %v2967
      %2969 = vmatmul.bf16.gmra.mxu0 %v2914
      %v2970 = vpop.f32.mrf.mxu0
      %v2971 = vadd.f32 0.0, %v2970
      %v2972 = vpop.f32.mrf.mxu0
      %2973 = vdwg.mxu0
      %2974 = vmatpush.bf16.xpose.msra.mxu0 0
      %2975 = vmatpush.bf16.xpose.msra.mxu0 0
      %2976 = vmatpush.bf16.xpose.msra.mxu0 0
      %2977 = vmatpush.bf16.xpose.msra.mxu0 0
      %2978 = vmatpush.bf16.xpose.msra.mxu0 0
      %2979 = vmatpush.bf16.xpose.msra.mxu0 %v2895
      %2980 = vmatpush.bf16.xpose.msra.mxu0 %v2893
      %2981 = vmatpush.bf16.xpose.msra.mxu0 %v2891
      %2982 = vmatmul.bf16.gmra.mxu0 %v2897
      %v2983 = vpop.f32.mrf.mxu0
      %v2984 = vadd.f32 %v2926, %v2983
      %v2985 = vpop.f32.mrf.mxu0
      %v2986 = vadd.f32 %v2928, %v2985
      %2987 = vmatmul.bf16.gmra.mxu0 %v2899
      %v2988 = vpop.f32.mrf.mxu0
      %v2989 = vadd.f32 %v2931, %v2988
      %v2990 = vpop.f32.mrf.mxu0
      %v2991 = vadd.f32 %v2933, %v2990
      %2992 = vmatmul.bf16.gmra.mxu0 %v2901
      %v2993 = vpop.f32.mrf.mxu0
      %v2994 = vadd.f32 %v2936, %v2993
      %v2995 = vpop.f32.mrf.mxu0
      %v2996 = vadd.f32 %v2938, %v2995
      %2997 = vmatmul.bf16.gmra.mxu0 %v2903
      %v2998 = vpop.f32.mrf.mxu0
      %v2999 = vadd.f32 %v2941, %v2998
      %v3000 = vpop.f32.mrf.mxu0
      %v3001 = vadd.f32 %v2943, %v3000
      %3002 = vmatmul.bf16.gmra.mxu0 %v2905
      %v3003 = vpop.f32.mrf.mxu0
      %v3004 = vadd.f32 %v2946, %v3003
      %v3005 = vpop.f32.mrf.mxu0
      %v3006 = vadd.f32 %v2948, %v3005
      %3007 = vmatmul.bf16.gmra.mxu0 %v2907
      %v3008 = vpop.f32.mrf.mxu0
      %v3009 = vadd.f32 %v2951, %v3008
      %v3010 = vpop.f32.mrf.mxu0
      %v3011 = vadd.f32 %v2953, %v3010
      %3012 = vmatmul.bf16.gmra.mxu0 %v2909
      %v3013 = vpop.f32.mrf.mxu0
      %v3014 = vadd.f32 %v2956, %v3013
      %v3015 = vpop.f32.mrf.mxu0
      %v3016 = vadd.f32 %v2958, %v3015
      %3017 = vmatmul.bf16.gmra.mxu0 %v2911
      %v3018 = vpop.f32.mrf.mxu0
      %v3019 = vadd.f32 %v2961, %v3018
      %v3020 = vpop.f32.mrf.mxu0
      %v3021 = vadd.f32 %v2963, %v3020
      %3022 = vmatmul.bf16.gmra.mxu0 %v2913
      %v3023 = vpop.f32.mrf.mxu0
      %v3024 = vadd.f32 %v2966, %v3023
      %v3025 = vpop.f32.mrf.mxu0
      %v3026 = vadd.f32 %v2968, %v3025
      %3027 = vmatmul.bf16.gmra.mxu0 %v2915
      %v3028 = vpop.f32.mrf.mxu0
      %v3029 = vadd.f32 %v2971, %v3028
      %v3030 = vpop.f32.mrf.mxu0
      %3031 = vdwg.mxu0
      %v3032 = vmul.f32 %v2984, 0.0625
      %v3033 = vmul.f32 %v2986, 0.0625
      %v3034 = vmul.f32 %v2989, 0.0625
      %v3035 = vmul.f32 %v2991, 0.0625
      %v3036 = vmul.f32 %v2994, 0.0625
      %v3037 = vmul.f32 %v2996, 0.0625
      %v3038 = vmul.f32 %v2999, 0.0625
      %v3039 = vmul.f32 %v3001, 0.0625
      %v3040 = vmul.f32 %v3004, 0.0625
      %v3041 = vmul.f32 %v3006, 0.0625
      %v3042 = vmul.f32 %v3009, 0.0625
      %v3043 = vmul.f32 %v3011, 0.0625
      %v3044 = vmul.f32 %v3014, 0.0625
      %v3045 = vmul.f32 %v3016, 0.0625
      %v3046 = vmul.f32 %v3019, 0.0625
      %v3047 = vmul.f32 %v3021, 0.0625
      %v3048 = vmul.f32 %v3024, 0.0625
      %v3049 = vmul.f32 %v3026, 0.0625
      %v3050 = vmul.f32 %v3029, 0.0625
      %vm3051 = vcmask 293888
      %v3052 = vsel %vm3051, %v3032, -inf
      %3053 = vmax.xlane.f32.xlu0 %v3052
      %v3054 = vpop.xlane.xlu0 %3053
      %v3055 = vsel %vm3051, %v3033, -inf
      %3056 = vmax.xlane.f32.xlu0 %v3055
      %v3057 = vpop.xlane.xlu0 %3056
      %v3058 = vsel %vm3051, %v3034, -inf
      %3059 = vmax.xlane.f32.xlu0 %v3058
      %v3060 = vpop.xlane.xlu0 %3059
      %v3061 = vsel %vm3051, %v3035, -inf
      %3062 = vmax.xlane.f32.xlu0 %v3061
      %v3063 = vpop.xlane.xlu0 %3062
      %v3064 = vsel %vm3051, %v3036, -inf
      %3065 = vmax.xlane.f32.xlu0 %v3064
      %v3066 = vpop.xlane.xlu0 %3065
      %v3067 = vsel %vm3051, %v3037, -inf
      %3068 = vmax.xlane.f32.xlu0 %v3067
      %v3069 = vpop.xlane.xlu0 %3068
      %v3070 = vsel %vm3051, %v3038, -inf
      %3071 = vmax.xlane.f32.xlu0 %v3070
      %v3072 = vpop.xlane.xlu0 %3071
      %v3073 = vsel %vm3051, %v3039, -inf
      %3074 = vmax.xlane.f32.xlu0 %v3073
      %v3075 = vpop.xlane.xlu0 %3074
      %v3076 = vsel %vm3051, %v3040, -inf
      %3077 = vmax.xlane.f32.xlu0 %v3076
      %v3078 = vpop.xlane.xlu0 %3077
      %v3079 = vsel %vm3051, %v3041, -inf
      %3080 = vmax.xlane.f32.xlu0 %v3079
      %v3081 = vpop.xlane.xlu0 %3080
      %v3082 = vsel %vm3051, %v3042, -inf
      %3083 = vmax.xlane.f32.xlu0 %v3082
      %v3084 = vpop.xlane.xlu0 %3083
      %v3085 = vsel %vm3051, %v3043, -inf
      %3086 = vmax.xlane.f32.xlu0 %v3085
      %v3087 = vpop.xlane.xlu0 %3086
      %v3088 = vsel %vm3051, %v3044, -inf
      %3089 = vmax.xlane.f32.xlu0 %v3088
      %v3090 = vpop.xlane.xlu0 %3089
      %v3091 = vsel %vm3051, %v3045, -inf
      %3092 = vmax.xlane.f32.xlu0 %v3091
      %v3093 = vpop.xlane.xlu0 %3092
      %v3094 = vsel %vm3051, %v3046, -inf
      %3095 = vmax.xlane.f32.xlu0 %v3094
      %v3096 = vpop.xlane.xlu0 %3095
      %v3097 = vsel %vm3051, %v3047, -inf
      %3098 = vmax.xlane.f32.xlu0 %v3097
      %v3099 = vpop.xlane.xlu0 %3098
      %v3100 = vsel %vm3051, %v3048, -inf
      %3101 = vmax.xlane.f32.xlu0 %v3100
      %v3102 = vpop.xlane.xlu0 %3101
      %v3103 = vsel %vm3051, %v3049, -inf
      %3104 = vmax.xlane.f32.xlu0 %v3103
      %v3105 = vpop.xlane.xlu0 %3104
      %v3106 = vsel %vm3051, %v3050, -inf
      %3107 = vmax.xlane.f32.xlu0 %v3106
      %v3108 = vpop.xlane.xlu0 %3107
      %v3109 = vsub.f32 %v3032, %v3054
      %v3110 = vsub.f32 %v3033, %v3057
      %v3111 = vsub.f32 %v3034, %v3060
      %v3112 = vsub.f32 %v3035, %v3063
      %v3113 = vsub.f32 %v3036, %v3066
      %v3114 = vsub.f32 %v3037, %v3069
      %v3115 = vsub.f32 %v3038, %v3072
      %v3116 = vsub.f32 %v3039, %v3075
      %v3117 = vsub.f32 %v3040, %v3078
      %v3118 = vsub.f32 %v3041, %v3081
      %v3119 = vsub.f32 %v3042, %v3084
      %v3120 = vsub.f32 %v3043, %v3087
      %v3121 = vsub.f32 %v3044, %v3090
      %v3122 = vsub.f32 %v3045, %v3093
      %v3123 = vsub.f32 %v3046, %v3096
      %v3124 = vsub.f32 %v3047, %v3099
      %v3125 = vsub.f32 %v3048, %v3102
      %v3126 = vsub.f32 %v3049, %v3105
      %v3127 = vsub.f32 %v3050, %v3108
      %v3128 = vmul.f32 %v3109, 1.442695
      %v3129 = vpow.pop %v3128
      %v3130 = vmul.f32 %v3110, 1.442695
      %v3131 = vpow.pop %v3130
      %v3132 = vmul.f32 %v3111, 1.442695
      %v3133 = vpow.pop %v3132
      %v3134 = vmul.f32 %v3112, 1.442695
      %v3135 = vpow.pop %v3134
      %v3136 = vmul.f32 %v3113, 1.442695
      %v3137 = vpow.pop %v3136
      %v3138 = vmul.f32 %v3114, 1.442695
      %v3139 = vpow.pop %v3138
      %v3140 = vmul.f32 %v3115, 1.442695
      %v3141 = vpow.pop %v3140
      %v3142 = vmul.f32 %v3116, 1.442695
      %v3143 = vpow.pop %v3142
      %v3144 = vmul.f32 %v3117, 1.442695
      %v3145 = vpow.pop %v3144
      %v3146 = vmul.f32 %v3118, 1.442695
      %v3147 = vpow.pop %v3146
      %v3148 = vmul.f32 %v3119, 1.442695
      %v3149 = vpow.pop %v3148
      %v3150 = vmul.f32 %v3120, 1.442695
      %v3151 = vpow.pop %v3150
      %v3152 = vmul.f32 %v3121, 1.442695
      %v3153 = vpow.pop %v3152
      %v3154 = vmul.f32 %v3122, 1.442695
      %v3155 = vpow.pop %v3154
      %v3156 = vmul.f32 %v3123, 1.442695
      %v3157 = vpow.pop %v3156
      %v3158 = vmul.f32 %v3124, 1.442695
      %v3159 = vpow.pop %v3158
      %v3160 = vmul.f32 %v3125, 1.442695
      %v3161 = vpow.pop %v3160
      %v3162 = vmul.f32 %v3126, 1.442695
      %v3163 = vpow.pop %v3162
      %v3164 = vmul.f32 %v3127, 1.442695
      %v3165 = vpow.pop %v3164
      %v3166 = vsel %vm3051, %v3129, 0.0
      %3167 = vadd.xlane.f32.xlu0 %v3166
      %v3168 = vpop.xlane.xlu0 %3167
      %v3169 = vsel %vm3051, %v3131, 0.0
      %3170 = vadd.xlane.f32.xlu0 %v3169
      %v3171 = vpop.xlane.xlu0 %3170
      %v3172 = vsel %vm3051, %v3133, 0.0
      %3173 = vadd.xlane.f32.xlu0 %v3172
      %v3174 = vpop.xlane.xlu0 %3173
      %v3175 = vsel %vm3051, %v3135, 0.0
      %3176 = vadd.xlane.f32.xlu0 %v3175
      %v3177 = vpop.xlane.xlu0 %3176
      %v3178 = vsel %vm3051, %v3137, 0.0
      %3179 = vadd.xlane.f32.xlu0 %v3178
      %v3180 = vpop.xlane.xlu0 %3179
      %v3181 = vsel %vm3051, %v3139, 0.0
      %3182 = vadd.xlane.f32.xlu0 %v3181
      %v3183 = vpop.xlane.xlu0 %3182
      %v3184 = vsel %vm3051, %v3141, 0.0
      %3185 = vadd.xlane.f32.xlu0 %v3184
      %v3186 = vpop.xlane.xlu0 %3185
      %v3187 = vsel %vm3051, %v3143, 0.0
      %3188 = vadd.xlane.f32.xlu0 %v3187
      %v3189 = vpop.xlane.xlu0 %3188
      %v3190 = vsel %vm3051, %v3145, 0.0
      %3191 = vadd.xlane.f32.xlu0 %v3190
      %v3192 = vpop.xlane.xlu0 %3191
      %v3193 = vsel %vm3051, %v3147, 0.0
      %3194 = vadd.xlane.f32.xlu0 %v3193
      %v3195 = vpop.xlane.xlu0 %3194
      %v3196 = vsel %vm3051, %v3149, 0.0
      %3197 = vadd.xlane.f32.xlu0 %v3196
      %v3198 = vpop.xlane.xlu0 %3197
      %v3199 = vsel %vm3051, %v3151, 0.0
      %3200 = vadd.xlane.f32.xlu0 %v3199
      %v3201 = vpop.xlane.xlu0 %3200
      %v3202 = vsel %vm3051, %v3153, 0.0
      %3203 = vadd.xlane.f32.xlu0 %v3202
      %v3204 = vpop.xlane.xlu0 %3203
      %v3205 = vsel %vm3051, %v3155, 0.0
      %3206 = vadd.xlane.f32.xlu0 %v3205
      %v3207 = vpop.xlane.xlu0 %3206
      %v3208 = vsel %vm3051, %v3157, 0.0
      %3209 = vadd.xlane.f32.xlu0 %v3208
      %v3210 = vpop.xlane.xlu0 %3209
      %v3211 = vsel %vm3051, %v3159, 0.0
      %3212 = vadd.xlane.f32.xlu0 %v3211
      %v3213 = vpop.xlane.xlu0 %3212
      %v3214 = vsel %vm3051, %v3161, 0.0
      %3215 = vadd.xlane.f32.xlu0 %v3214
      %v3216 = vpop.xlane.xlu0 %3215
      %v3217 = vsel %vm3051, %v3163, 0.0
      %3218 = vadd.xlane.f32.xlu0 %v3217
      %v3219 = vpop.xlane.xlu0 %3218
      %v3220 = vsel %vm3051, %v3165, 0.0
      %3221 = vadd.xlane.f32.xlu0 %v3220
      %v3222 = vpop.xlane.xlu0 %3221
      %v3223 = vrcp.pop %v3168
      %v3224 = vmul.f32 %v3168, %v3223
      %v3225 = vsub.f32 1.0, %v3224
      %v3226 = vmul.f32 %v3223, %v3225
      %v3227 = vadd.f32 %v3223, %v3226
      %vm3228 = vweird.f32 %v3168
      %vm3229 = vweird.f32 %v3223
      %vm3230 = vmor %vm3228, %vm3229
      %v3231 = vsel %vm3230, %v3223, %v3227
      %v3232 = vand.u32 2147483647, %v3168
      %vm3233 = vcmp.eq.f32.partialorder %v3232, 8.507059e+37
      %v3234 = vand.u32 %v3168, 2147483648
      %v3235 = vor.u32 1.1754944e-38, %v3234
      %v3236 = vsel %vm3233, %v3235, %v3231
      %v3237 = vmul.f32 %v3129, %v3236
      %v3238 = vrcp.pop %v3171
      %v3239 = vmul.f32 %v3171, %v3238
      %v3240 = vsub.f32 1.0, %v3239
      %v3241 = vmul.f32 %v3238, %v3240
      %v3242 = vadd.f32 %v3238, %v3241
      %vm3243 = vweird.f32 %v3171
      %vm3244 = vweird.f32 %v3238
      %vm3245 = vmor %vm3243, %vm3244
      %v3246 = vsel %vm3245, %v3238, %v3242
      %v3247 = vand.u32 2147483647, %v3171
      %vm3248 = vcmp.eq.f32.partialorder %v3247, 8.507059e+37
      %v3249 = vand.u32 %v3171, 2147483648
      %v3250 = vor.u32 1.1754944e-38, %v3249
      %v3251 = vsel %vm3248, %v3250, %v3246
      %v3252 = vmul.f32 %v3131, %v3251
      %v3253 = vrcp.pop %v3174
      %v3254 = vmul.f32 %v3174, %v3253
      %v3255 = vsub.f32 1.0, %v3254
      %v3256 = vmul.f32 %v3253, %v3255
      %v3257 = vadd.f32 %v3253, %v3256
      %vm3258 = vweird.f32 %v3174
      %vm3259 = vweird.f32 %v3253
      %vm3260 = vmor %vm3258, %vm3259
      %v3261 = vsel %vm3260, %v3253, %v3257
      %v3262 = vand.u32 2147483647, %v3174
      %vm3263 = vcmp.eq.f32.partialorder %v3262, 8.507059e+37
      %v3264 = vand.u32 %v3174, 2147483648
      %v3265 = vor.u32 1.1754944e-38, %v3264
      %v3266 = vsel %vm3263, %v3265, %v3261
      %v3267 = vmul.f32 %v3133, %v3266
      %v3268 = vrcp.pop %v3177
      %v3269 = vmul.f32 %v3177, %v3268
      %v3270 = vsub.f32 1.0, %v3269
      %v3271 = vmul.f32 %v3268, %v3270
      %v3272 = vadd.f32 %v3268, %v3271
      %vm3273 = vweird.f32 %v3177
      %vm3274 = vweird.f32 %v3268
      %vm3275 = vmor %vm3273, %vm3274
      %v3276 = vsel %vm3275, %v3268, %v3272
      %v3277 = vand.u32 2147483647, %v3177
      %vm3278 = vcmp.eq.f32.partialorder %v3277, 8.507059e+37
      %v3279 = vand.u32 %v3177, 2147483648
      %v3280 = vor.u32 1.1754944e-38, %v3279
      %v3281 = vsel %vm3278, %v3280, %v3276
      %v3282 = vmul.f32 %v3135, %v3281
      %v3283 = vrcp.pop %v3180
      %v3284 = vmul.f32 %v3180, %v3283
      %v3285 = vsub.f32 1.0, %v3284
      %v3286 = vmul.f32 %v3283, %v3285
      %v3287 = vadd.f32 %v3283, %v3286
      %vm3288 = vweird.f32 %v3180
      %vm3289 = vweird.f32 %v3283
      %vm3290 = vmor %vm3288, %vm3289
      %v3291 = vsel %vm3290, %v3283, %v3287
      %v3292 = vand.u32 2147483647, %v3180
      %vm3293 = vcmp.eq.f32.partialorder %v3292, 8.507059e+37
      %v3294 = vand.u32 %v3180, 2147483648
      %v3295 = vor.u32 1.1754944e-38, %v3294
      %v3296 = vsel %vm3293, %v3295, %v3291
      %v3297 = vmul.f32 %v3137, %v3296
      %v3298 = vrcp.pop %v3183
      %v3299 = vmul.f32 %v3183, %v3298
      %v3300 = vsub.f32 1.0, %v3299
      %v3301 = vmul.f32 %v3298, %v3300
      %v3302 = vadd.f32 %v3298, %v3301
      %vm3303 = vweird.f32 %v3183
      %vm3304 = vweird.f32 %v3298
      %vm3305 = vmor %vm3303, %vm3304
      %v3306 = vsel %vm3305, %v3298, %v3302
      %v3307 = vand.u32 2147483647, %v3183
      %vm3308 = vcmp.eq.f32.partialorder %v3307, 8.507059e+37
      %v3309 = vand.u32 %v3183, 2147483648
      %v3310 = vor.u32 1.1754944e-38, %v3309
      %v3311 = vsel %vm3308, %v3310, %v3306
      %v3312 = vmul.f32 %v3139, %v3311
      %v3313 = vrcp.pop %v3186
      %v3314 = vmul.f32 %v3186, %v3313
      %v3315 = vsub.f32 1.0, %v3314
      %v3316 = vmul.f32 %v3313, %v3315
      %v3317 = vadd.f32 %v3313, %v3316
      %vm3318 = vweird.f32 %v3186
      %vm3319 = vweird.f32 %v3313
      %vm3320 = vmor %vm3318, %vm3319
      %v3321 = vsel %vm3320, %v3313, %v3317
      %v3322 = vand.u32 2147483647, %v3186
      %vm3323 = vcmp.eq.f32.partialorder %v3322, 8.507059e+37
      %v3324 = vand.u32 %v3186, 2147483648
      %v3325 = vor.u32 1.1754944e-38, %v3324
      %v3326 = vsel %vm3323, %v3325, %v3321
      %v3327 = vmul.f32 %v3141, %v3326
      %v3328 = vrcp.pop %v3189
      %v3329 = vmul.f32 %v3189, %v3328
      %v3330 = vsub.f32 1.0, %v3329
      %v3331 = vmul.f32 %v3328, %v3330
      %v3332 = vadd.f32 %v3328, %v3331
      %vm3333 = vweird.f32 %v3189
      %vm3334 = vweird.f32 %v3328
      %vm3335 = vmor %vm3333, %vm3334
      %v3336 = vsel %vm3335, %v3328, %v3332
      %v3337 = vand.u32 2147483647, %v3189
      %vm3338 = vcmp.eq.f32.partialorder %v3337, 8.507059e+37
      %v3339 = vand.u32 %v3189, 2147483648
      %v3340 = vor.u32 1.1754944e-38, %v3339
      %v3341 = vsel %vm3338, %v3340, %v3336
      %v3342 = vmul.f32 %v3143, %v3341
      %v3343 = vrcp.pop %v3192
      %v3344 = vmul.f32 %v3192, %v3343
      %v3345 = vsub.f32 1.0, %v3344
      %v3346 = vmul.f32 %v3343, %v3345
      %v3347 = vadd.f32 %v3343, %v3346
      %vm3348 = vweird.f32 %v3192
      %vm3349 = vweird.f32 %v3343
      %vm3350 = vmor %vm3348, %vm3349
      %v3351 = vsel %vm3350, %v3343, %v3347
      %v3352 = vand.u32 2147483647, %v3192
      %vm3353 = vcmp.eq.f32.partialorder %v3352, 8.507059e+37
      %v3354 = vand.u32 %v3192, 2147483648
      %v3355 = vor.u32 1.1754944e-38, %v3354
      %v3356 = vsel %vm3353, %v3355, %v3351
      %v3357 = vmul.f32 %v3145, %v3356
      %v3358 = vrcp.pop %v3195
      %v3359 = vmul.f32 %v3195, %v3358
      %v3360 = vsub.f32 1.0, %v3359
      %v3361 = vmul.f32 %v3358, %v3360
      %v3362 = vadd.f32 %v3358, %v3361
      %vm3363 = vweird.f32 %v3195
      %vm3364 = vweird.f32 %v3358
      %vm3365 = vmor %vm3363, %vm3364
      %v3366 = vsel %vm3365, %v3358, %v3362
      %v3367 = vand.u32 2147483647, %v3195
      %vm3368 = vcmp.eq.f32.partialorder %v3367, 8.507059e+37
      %v3369 = vand.u32 %v3195, 2147483648
      %v3370 = vor.u32 1.1754944e-38, %v3369
      %v3371 = vsel %vm3368, %v3370, %v3366
      %v3372 = vmul.f32 %v3147, %v3371
      %v3373 = vrcp.pop %v3198
      %v3374 = vmul.f32 %v3198, %v3373
      %v3375 = vsub.f32 1.0, %v3374
      %v3376 = vmul.f32 %v3373, %v3375
      %v3377 = vadd.f32 %v3373, %v3376
      %vm3378 = vweird.f32 %v3198
      %vm3379 = vweird.f32 %v3373
      %vm3380 = vmor %vm3378, %vm3379
      %v3381 = vsel %vm3380, %v3373, %v3377
      %v3382 = vand.u32 2147483647, %v3198
      %vm3383 = vcmp.eq.f32.partialorder %v3382, 8.507059e+37
      %v3384 = vand.u32 %v3198, 2147483648
      %v3385 = vor.u32 1.1754944e-38, %v3384
      %v3386 = vsel %vm3383, %v3385, %v3381
      %v3387 = vmul.f32 %v3149, %v3386
      %v3388 = vrcp.pop %v3201
      %v3389 = vmul.f32 %v3201, %v3388
      %v3390 = vsub.f32 1.0, %v3389
      %v3391 = vmul.f32 %v3388, %v3390
      %v3392 = vadd.f32 %v3388, %v3391
      %vm3393 = vweird.f32 %v3201
      %vm3394 = vweird.f32 %v3388
      %vm3395 = vmor %vm3393, %vm3394
      %v3396 = vsel %vm3395, %v3388, %v3392
      %v3397 = vand.u32 2147483647, %v3201
      %vm3398 = vcmp.eq.f32.partialorder %v3397, 8.507059e+37
      %v3399 = vand.u32 %v3201, 2147483648
      %v3400 = vor.u32 1.1754944e-38, %v3399
      %v3401 = vsel %vm3398, %v3400, %v3396
      %v3402 = vmul.f32 %v3151, %v3401
      %v3403 = vrcp.pop %v3204
      %v3404 = vmul.f32 %v3204, %v3403
      %v3405 = vsub.f32 1.0, %v3404
      %v3406 = vmul.f32 %v3403, %v3405
      %v3407 = vadd.f32 %v3403, %v3406
      %vm3408 = vweird.f32 %v3204
      %vm3409 = vweird.f32 %v3403
      %vm3410 = vmor %vm3408, %vm3409
      %v3411 = vsel %vm3410, %v3403, %v3407
      %v3412 = vand.u32 2147483647, %v3204
      %vm3413 = vcmp.eq.f32.partialorder %v3412, 8.507059e+37
      %v3414 = vand.u32 %v3204, 2147483648
      %v3415 = vor.u32 1.1754944e-38, %v3414
      %v3416 = vsel %vm3413, %v3415, %v3411
      %v3417 = vmul.f32 %v3153, %v3416
      %v3418 = vrcp.pop %v3207
      %v3419 = vmul.f32 %v3207, %v3418
      %v3420 = vsub.f32 1.0, %v3419
      %v3421 = vmul.f32 %v3418, %v3420
      %v3422 = vadd.f32 %v3418, %v3421
      %vm3423 = vweird.f32 %v3207
      %vm3424 = vweird.f32 %v3418
      %vm3425 = vmor %vm3423, %vm3424
      %v3426 = vsel %vm3425, %v3418, %v3422
      %v3427 = vand.u32 2147483647, %v3207
      %vm3428 = vcmp.eq.f32.partialorder %v3427, 8.507059e+37
      %v3429 = vand.u32 %v3207, 2147483648
      %v3430 = vor.u32 1.1754944e-38, %v3429
      %v3431 = vsel %vm3428, %v3430, %v3426
      %v3432 = vmul.f32 %v3155, %v3431
      %v3433 = vrcp.pop %v3210
      %v3434 = vmul.f32 %v3210, %v3433
      %v3435 = vsub.f32 1.0, %v3434
      %v3436 = vmul.f32 %v3433, %v3435
      %v3437 = vadd.f32 %v3433, %v3436
      %vm3438 = vweird.f32 %v3210
      %vm3439 = vweird.f32 %v3433
      %vm3440 = vmor %vm3438, %vm3439
      %v3441 = vsel %vm3440, %v3433, %v3437
      %v3442 = vand.u32 2147483647, %v3210
      %vm3443 = vcmp.eq.f32.partialorder %v3442, 8.507059e+37
      %v3444 = vand.u32 %v3210, 2147483648
      %v3445 = vor.u32 1.1754944e-38, %v3444
      %v3446 = vsel %vm3443, %v3445, %v3441
      %v3447 = vmul.f32 %v3157, %v3446
      %v3448 = vrcp.pop %v3213
      %v3449 = vmul.f32 %v3213, %v3448
      %v3450 = vsub.f32 1.0, %v3449
      %v3451 = vmul.f32 %v3448, %v3450
      %v3452 = vadd.f32 %v3448, %v3451
      %vm3453 = vweird.f32 %v3213
      %vm3454 = vweird.f32 %v3448
      %vm3455 = vmor %vm3453, %vm3454
      %v3456 = vsel %vm3455, %v3448, %v3452
      %v3457 = vand.u32 2147483647, %v3213
      %vm3458 = vcmp.eq.f32.partialorder %v3457, 8.507059e+37
      %v3459 = vand.u32 %v3213, 2147483648
      %v3460 = vor.u32 1.1754944e-38, %v3459
      %v3461 = vsel %vm3458, %v3460, %v3456
      %v3462 = vmul.f32 %v3159, %v3461
      %v3463 = vrcp.pop %v3216
      %v3464 = vmul.f32 %v3216, %v3463
      %v3465 = vsub.f32 1.0, %v3464
      %v3466 = vmul.f32 %v3463, %v3465
      %v3467 = vadd.f32 %v3463, %v3466
      %vm3468 = vweird.f32 %v3216
      %vm3469 = vweird.f32 %v3463
      %vm3470 = vmor %vm3468, %vm3469
      %v3471 = vsel %vm3470, %v3463, %v3467
      %v3472 = vand.u32 2147483647, %v3216
      %vm3473 = vcmp.eq.f32.partialorder %v3472, 8.507059e+37
      %v3474 = vand.u32 %v3216, 2147483648
      %v3475 = vor.u32 1.1754944e-38, %v3474
      %v3476 = vsel %vm3473, %v3475, %v3471
      %v3477 = vmul.f32 %v3161, %v3476
      %v3478 = vrcp.pop %v3219
      %v3479 = vmul.f32 %v3219, %v3478
      %v3480 = vsub.f32 1.0, %v3479
      %v3481 = vmul.f32 %v3478, %v3480
      %v3482 = vadd.f32 %v3478, %v3481
      %vm3483 = vweird.f32 %v3219
      %vm3484 = vweird.f32 %v3478
      %vm3485 = vmor %vm3483, %vm3484
      %v3486 = vsel %vm3485, %v3478, %v3482
      %v3487 = vand.u32 2147483647, %v3219
      %vm3488 = vcmp.eq.f32.partialorder %v3487, 8.507059e+37
      %v3489 = vand.u32 %v3219, 2147483648
      %v3490 = vor.u32 1.1754944e-38, %v3489
      %v3491 = vsel %vm3488, %v3490, %v3486
      %v3492 = vmul.f32 %v3163, %v3491
      %v3493 = vrcp.pop %v3222
      %v3494 = vmul.f32 %v3222, %v3493
      %v3495 = vsub.f32 1.0, %v3494
      %v3496 = vmul.f32 %v3493, %v3495
      %v3497 = vadd.f32 %v3493, %v3496
      %vm3498 = vweird.f32 %v3222
      %vm3499 = vweird.f32 %v3493
      %vm3500 = vmor %vm3498, %vm3499
      %v3501 = vsel %vm3500, %v3493, %v3497
      %v3502 = vand.u32 2147483647, %v3222
      %vm3503 = vcmp.eq.f32.partialorder %v3502, 8.507059e+37
      %v3504 = vand.u32 %v3222, 2147483648
      %v3505 = vor.u32 1.1754944e-38, %v3504
      %v3506 = vsel %vm3503, %v3505, %v3501
      %v3507 = vmul.f32 %v3165, %v3506
      %v3508 = vpack.c.bf16 %v3252, %v3237
      %v3509 = vpack.c.bf16 %v3282, %v3267
      %v3510 = vpack.c.bf16 %v3312, %v3297
      %v3511 = vpack.c.bf16 %v3342, %v3327
      %v3512 = vpack.c.bf16 %v3372, %v3357
      %v3513 = vpack.c.bf16 %v3402, %v3387
      %v3514 = vpack.c.bf16 %v3432, %v3417
      %v3515 = vpack.c.bf16 %v3462, %v3447
      %v3516 = vpack.c.bf16 %v3492, %v3477
      %v3517 = vpack.c.bf16 %v3507, %v3507
      %v3519 = vsel %vm3051, %v3508, 0
      %v3522 = vsel %vm3051, %v3509, 0
      %v3525 = vsel %vm3051, %v3510, 0
      %v3528 = vsel %vm3051, %v3511, 0
      %v3531 = vsel %vm3051, %v3512, 0
      %v3534 = vsel %vm3051, %v3513, 0
      %v3537 = vsel %vm3051, %v3514, 0
      %v3540 = vsel %vm3051, %v3515, 0
      %v3543 = vsel %vm3051, %v3516, 0
      %v3546 = vsel %vm3051, %v3517, 0
      %vm3548 = vcmask 1041408
      %v3550 = vsel %vm3548, %v2894, 0
      %v3553 = vsel %vm3548, %v2895, 0
      %3555 = vmatpush.bf16.msra.mxu0 0
      %3556 = vmatpush.bf16.msra.mxu0 0
      %3557 = vmatpush.bf16.msra.mxu0 0
      %3558 = vmatpush.bf16.msra.mxu0 0
      %3559 = vmatpush.bf16.msra.mxu0 0
      %3560 = vmatpush.bf16.msra.mxu0 %v3550
      %3561 = vmatpush.bf16.msra.mxu0 %v2892
      %3562 = vmatpush.bf16.msra.mxu0 %v2890
      %3563 = vmatmul.bf16.gmra.mxu0 %v3519
      %v3564 = vpop.f32.mrf.mxu0
      %v3565 = vadd.f32 0.0, %v3564
      %v3566 = vpop.f32.mrf.mxu0
      %v3567 = vadd.f32 0.0, %v3566
      %3568 = vmatmul.bf16.gmra.mxu0 %v3522
      %v3569 = vpop.f32.mrf.mxu0
      %v3570 = vadd.f32 0.0, %v3569
      %v3571 = vpop.f32.mrf.mxu0
      %v3572 = vadd.f32 0.0, %v3571
      %3573 = vmatmul.bf16.gmra.mxu0 %v3525
      %v3574 = vpop.f32.mrf.mxu0
      %v3575 = vadd.f32 0.0, %v3574
      %v3576 = vpop.f32.mrf.mxu0
      %v3577 = vadd.f32 0.0, %v3576
      %3578 = vmatmul.bf16.gmra.mxu0 %v3528
      %v3579 = vpop.f32.mrf.mxu0
      %v3580 = vadd.f32 0.0, %v3579
      %v3581 = vpop.f32.mrf.mxu0
      %v3582 = vadd.f32 0.0, %v3581
      %3583 = vmatmul.bf16.gmra.mxu0 %v3531
      %v3584 = vpop.f32.mrf.mxu0
      %v3585 = vadd.f32 0.0, %v3584
      %v3586 = vpop.f32.mrf.mxu0
      %v3587 = vadd.f32 0.0, %v3586
      %3588 = vmatmul.bf16.gmra.mxu0 %v3534
      %v3589 = vpop.f32.mrf.mxu0
      %v3590 = vadd.f32 0.0, %v3589
      %v3591 = vpop.f32.mrf.mxu0
      %v3592 = vadd.f32 0.0, %v3591
      %3593 = vmatmul.bf16.gmra.mxu0 %v3537
      %v3594 = vpop.f32.mrf.mxu0
      %v3595 = vadd.f32 0.0, %v3594
      %v3596 = vpop.f32.mrf.mxu0
      %v3597 = vadd.f32 0.0, %v3596
      %3598 = vmatmul.bf16.gmra.mxu0 %v3540
      %v3599 = vpop.f32.mrf.mxu0
      %v3600 = vadd.f32 0.0, %v3599
      %v3601 = vpop.f32.mrf.mxu0
      %v3602 = vadd.f32 0.0, %v3601
      %3603 = vmatmul.bf16.gmra.mxu0 %v3543
      %v3604 = vpop.f32.mrf.mxu0
      %v3605 = vadd.f32 0.0, %v3604
      %v3606 = vpop.f32.mrf.mxu0
      %v3607 = vadd.f32 0.0, %v3606
      %3608 = vmatmul.bf16.gmra.mxu0 %v3546
      %v3609 = vpop.f32.mrf.mxu0
      %v3610 = vadd.f32 0.0, %v3609
      %v3611 = vpop.f32.mrf.mxu0
      %3612 = vdwg.mxu0
      %3613 = vmatpush.bf16.msra.mxu0 0
      %3614 = vmatpush.bf16.msra.mxu0 0
      %3615 = vmatpush.bf16.msra.mxu0 0
      %3616 = vmatpush.bf16.msra.mxu0 0
      %3617 = vmatpush.bf16.msra.mxu0 0
      %3618 = vmatpush.bf16.msra.mxu0 %v3553
      %3619 = vmatpush.bf16.msra.mxu0 %v2893
      %3620 = vmatpush.bf16.msra.mxu0 %v2891
      %3621 = vmatmul.bf16.gmra.mxu0 %v3519
      %v3622 = vpop.f32.mrf.mxu0
      %v3623 = vadd.f32 0.0, %v3622
      %v3624 = vpop.f32.mrf.mxu0
      %v3625 = vadd.f32 0.0, %v3624
      %3626 = vmatmul.bf16.gmra.mxu0 %v3522
      %v3627 = vpop.f32.mrf.mxu0
      %v3628 = vadd.f32 0.0, %v3627
      %v3629 = vpop.f32.mrf.mxu0
      %v3630 = vadd.f32 0.0, %v3629
      %3631 = vmatmul.bf16.gmra.mxu0 %v3525
      %v3632 = vpop.f32.mrf.mxu0
      %v3633 = vadd.f32 0.0, %v3632
      %v3634 = vpop.f32.mrf.mxu0
      %v3635 = vadd.f32 0.0, %v3634
      %3636 = vmatmul.bf16.gmra.mxu0 %v3528
      %v3637 = vpop.f32.mrf.mxu0
      %v3638 = vadd.f32 0.0, %v3637
      %v3639 = vpop.f32.mrf.mxu0
      %v3640 = vadd.f32 0.0, %v3639
      %3641 = vmatmul.bf16.gmra.mxu0 %v3531
      %v3642 = vpop.f32.mrf.mxu0
      %v3643 = vadd.f32 0.0, %v3642
      %v3644 = vpop.f32.mrf.mxu0
      %v3645 = vadd.f32 0.0, %v3644
      %3646 = vmatmul.bf16.gmra.mxu0 %v3534
      %v3647 = vpop.f32.mrf.mxu0
      %v3648 = vadd.f32 0.0, %v3647
      %v3649 = vpop.f32.mrf.mxu0
      %v3650 = vadd.f32 0.0, %v3649
      %3651 = vmatmul.bf16.gmra.mxu0 %v3537
      %v3652 = vpop.f32.mrf.mxu0
      %v3653 = vadd.f32 0.0, %v3652
      %v3654 = vpop.f32.mrf.mxu0
      %v3655 = vadd.f32 0.0, %v3654
      %3656 = vmatmul.bf16.gmra.mxu0 %v3540
      %v3657 = vpop.f32.mrf.mxu0
      %v3658 = vadd.f32 0.0, %v3657
      %v3659 = vpop.f32.mrf.mxu0
      %v3660 = vadd.f32 0.0, %v3659
      %3661 = vmatmul.bf16.gmra.mxu0 %v3543
      %v3662 = vpop.f32.mrf.mxu0
      %v3663 = vadd.f32 0.0, %v3662
      %v3664 = vpop.f32.mrf.mxu0
      %v3665 = vadd.f32 0.0, %v3664
      %3666 = vmatmul.bf16.gmra.mxu0 %v3546
      %v3667 = vpop.f32.mrf.mxu0
      %v3668 = vadd.f32 0.0, %v3667
      %v3669 = vpop.f32.mrf.mxu0
      %3670 = vdwg.mxu0
      %3671 = vst [vmem:[%s325] sm:$0xff] %v3565
      %3672 = vst [vmem:[%s325 + $0x8] sm:$0xff] %v3623
      %3673 = vst [vmem:[%s325 + $0x10] sm:$0xff] %v3567
      %3674 = vst [vmem:[%s325 + $0x18] sm:$0xff] %v3625
      %3675 = vst [vmem:[%s325 + $0x20] sm:$0xff] %v3570
      %3676 = vst [vmem:[%s325 + $0x28] sm:$0xff] %v3628
      %3677 = vst [vmem:[%s325 + $0x30] sm:$0xff] %v3572
      %3678 = vst [vmem:[%s325 + $0x38] sm:$0xff] %v3630
      %3679 = vst [vmem:[%s325 + $0x40] sm:$0xff] %v3575
      %3680 = vst [vmem:[%s325 + $0x48] sm:$0xff] %v3633
      %3681 = vst [vmem:[%s325 + $0x50] sm:$0xff] %v3577
      %3682 = vst [vmem:[%s325 + $0x58] sm:$0xff] %v3635
      %3683 = vst [vmem:[%s325 + $0x60] sm:$0xff] %v3580
      %3684 = vst [vmem:[%s325 + $0x68] sm:$0xff] %v3638
      %3685 = vst [vmem:[%s325 + $0x70] sm:$0xff] %v3582
      %3686 = vst [vmem:[%s325 + $0x78] sm:$0xff] %v3640
      %3687 = vst [vmem:[%s325 + $0x80] sm:$0xff] %v3585
      %3688 = vst [vmem:[%s325 + $0x88] sm:$0xff] %v3643
      %3689 = vst [vmem:[%s325 + $0x90] sm:$0xff] %v3587
      %3690 = vst [vmem:[%s325 + $0x98] sm:$0xff] %v3645
      %3691 = vst [vmem:[%s325 + $0xa0] sm:$0xff] %v3590
      %3692 = vst [vmem:[%s325 + $0xa8] sm:$0xff] %v3648
      %3693 = vst [vmem:[%s325 + $0xb0] sm:$0xff] %v3592
      %3694 = vst [vmem:[%s325 + $0xb8] sm:$0xff] %v3650
      %3695 = vst [vmem:[%s325 + $0xc0] sm:$0xff] %v3595
      %3696 = vst [vmem:[%s325 + $0xc8] sm:$0xff] %v3653
      %3697 = vst [vmem:[%s325 + $0xd0] sm:$0xff] %v3597
      %3698 = vst [vmem:[%s325 + $0xd8] sm:$0xff] %v3655
      %3699 = vst [vmem:[%s325 + $0xe0] sm:$0xff] %v3600
      %3700 = vst [vmem:[%s325 + $0xe8] sm:$0xff] %v3658
      %3701 = vst [vmem:[%s325 + $0xf0] sm:$0xff] %v3602
      %3702 = vst [vmem:[%s325 + $0xf8] sm:$0xff] %v3660
      %3703 = vst [vmem:[%s325 + $0x100] sm:$0xff] %v3605
      %3704 = vst [vmem:[%s325 + $0x108] sm:$0xff] %v3663
      %3705 = vst [vmem:[%s325 + $0x110] sm:$0xff] %v3607
      %3706 = vst [vmem:[%s325 + $0x118] sm:$0xff] %v3665
      %3707 = vst [vmem:[%s325 + $0x120] sm:$0xff] %v3610
      %3708 = vst [vmem:[%s325 + $0x128] sm:$0xff] %v3668
      %p3709 = scmp.lt.s32.totalorder %s19, 1
      %s3710 = scalar_select %p3709, %s19, 1
      %s3711 = smul.addr %s3710, 38
      %s3712 = smul.addr %s3711, 8
      %s3713 = scalar_lea.vmem %s8, %s3712
      // Predicated region
      $region53: #{_forward_impl.3} parent=51 // pred_check
        %p3714 = pneg %p215
      $region54: #{_forward_impl.3} parent=51 // pred_check_branch
        %3716 = sbr.rel (%p3714) target = $region56
      $region55: #{_forward_impl.3} parent=51 // pred_region
        _
      $region56: #{_forward_impl.3} parent=51 // pred_fallthru
        _
    $region52: #{_forward_impl.3} parent=5 // pred_fallthru
      _
    %p3717 = scmp.le.s32.totalorder 2, %s14
    // Predicated region
    $region57: #{_forward_impl.3} parent=5 // pred_check
      %p3718 = pneg %p3717
    $region58: #{_forward_impl.3} parent=5 // pred_check_branch
      %3720 = sbr.rel (%p3718) target = $region60
    $region59: #{_forward_impl.3} parent=5 // pred_region
      %s3721 = ssub.s32 %s14, 2
      // Predicated region
      $region61: #{_forward_impl.3} parent=59 // pred_check
        %p3722 = pneg %p221
      $region62: #{_forward_impl.3} parent=59 // pred_check_branch
        %3724 = sbr.rel (%p3722) target = $region64
      $region63: #{_forward_impl.3} parent=59 // pred_region
        %p3725 = scmp.lt.s32.totalorder %s20, 1
        %s3726 = scalar_select %p3725, %s20, 1
        %s3727 = smul.addr %s3726, 38
        %s3728 = smul.addr %s3727, 8
        %s3729 = scalar_lea.vmem %s8, %s3728
      $region64: #{_forward_impl.3} parent=59 // pred_fallthru
        _
    $region60: #{_forward_impl.3} parent=5 // pred_fallthru
      _
  $region6: #{_forward_impl.3} parent=0 // loop_footer
    %s18 = sadd.s32 1, %s14
  $region7: #{_forward_impl.3} parent=0 // loop_footer_branch
    %13 = sbr.rel target = $region3
  $region8: #{_forward_impl.3} parent=0 // loop_exit
    _

// kernel: _forward_impl.2
$region0: #{_forward_impl.2}
  #allocation0 [shape = 'u32[]', space=smem, size = 0x4, offset = 0x4, fixed_abs, tag = 'smem constant byte address 0x4 - core index']
  #allocation1 [shape = 'u32[72,128]{1,0:T(1,128)}', space=vmem, size = 0x9000, scoped, tag = 'internal scratch']
  %s0 = inlined_call_operand.vmem [shape: f32[2,8,38], index: 0, kind: input, shape index: {}]
  %s1 = inlined_call_operand.hbm [shape: f32[2,8,512], index: 1, kind: input, shape index: {}]
  %s2 = inlined_call_operand.hbm [shape: bf16[38,256], index: 2, kind: input, shape index: {}]
  %s3 = inlined_call_operand.hbm [shape: f32[1,256], index: 3, kind: input, shape index: {}]
  %s4 = inlined_call_operand.hbm [shape: bf16[512,256], index: 4, kind: input, shape index: {}]
  %s5 = inlined_call_operand.hbm [shape: f32[1,256], index: 5, kind: input, shape index: {}]
  %s6 = inlined_call_operand.hbm [shape: bf16[3,256,256], index: 6, kind: input, shape index: {}]
  %s7 = inlined_call_operand.hbm [shape: f32[3,1,256], index: 7, kind: input, shape index: {}]
  %s8 = inlined_call_operand.hbm [shape: bf16[256,128], index: 8, kind: input, shape index: {}]
  %s9 = inlined_call_operand.hbm [shape: f32[1,128], index: 9, kind: input, shape index: {}]
  %s10 = inlined_call_operand.hbm [shape: bf16[3,512,512], index: 10, kind: input, shape index: {}]
  %s11 = inlined_call_operand.hbm [shape: f32[3,1,512], index: 11, kind: input, shape index: {}]
  %s12 = inlined_call_operand.hbm [shape: bf16[512,896], index: 12, kind: input, shape index: {}]
  %s13 = inlined_call_operand.hbm [shape: f32[1,896], index: 13, kind: input, shape index: {}]
  %s14 = inlined_call_operand.vmem [shape: f32[2,8,128], index: 14, kind: output, shape index: {0}]
  %s15 = inlined_call_operand.vmem [shape: f32[2,1,896], index: 15, kind: output, shape index: {1}]
  %16 = xla_tuple %s14, %s15
  %s17 = sld [smem:[#allocation0]]
  $region149: #{_forward_impl.2} parent=0
    _
  %s19 = ssub.s32 1, %s17
  %s20 = scalar_select 0, %s19, %s17
  $region1: #{_forward_impl.2} parent=0
    #allocation2 [shape = 'u8[32768]{0}', space=vmem, size = 0x8000, scoped, tag = 'input window, operand 1']
    #allocation3 [shape = 's32[2]{0}', space=sflag, size = 0x8, scoped, tag = 'scoped memory for _forward_impl.2']
    #allocation4 [shape = 'u8[20480]{0}', space=vmem, size = 0x5000, scoped, tag = 'input window, operand 2, single buffered']
    #allocation5 [shape = 's32[1]{0}', space=sflag, size = 0x4, scoped, tag = 'scoped memory for _forward_impl.2']
    #allocation6 [shape = 'u8[1024]{0}', space=vmem, size = 0x400, scoped, tag = 'input window, operand 3, single buffered']
    #allocation7 [shape = 'u8[262144]{0}', space=vmem, size = 0x40000, scoped, tag = 'input window, operand 4, single buffered']
    #allocation8 [shape = 's32[1]{0}', space=sflag, size = 0x4, scoped, tag = 'scoped memory for _forward_impl.2']
    #allocation9 [shape = 'u8[1024]{0}', space=vmem, size = 0x400, scoped, tag = 'input window, operand 5, single buffered']
    #allocation10 [shape = 'u8[393216]{0}', space=vmem, size = 0x60000, scoped, tag = 'input window, operand 6, single buffered']
    #allocation11 [shape = 's32[1]{0}', space=sflag, size = 0x4, scoped, tag = 'scoped memory for _forward_impl.2']
    #allocation12 [shape = 'u8[3072]{0}', space=vmem, size = 0xc00, scoped, tag = 'input window, operand 7, single buffered']
    #allocation13 [shape = 'u8[65536]{0}', space=vmem, size = 0x10000, scoped, tag = 'input window, operand 8, single buffered']
    #allocation14 [shape = 's32[1]{0}', space=sflag, size = 0x4, scoped, tag = 'scoped memory for _forward_impl.2']
    #allocation15 [shape = 'u8[512]{0}', space=vmem, size = 0x400, scoped, tag = 'input window, operand 9, single buffered']
    #allocation16 [shape = 'u8[1572864]{0}', space=vmem, size = 0x180000, scoped, tag = 'input window, operand 10, single buffered']
    #allocation17 [shape = 's32[1]{0}', space=sflag, size = 0x4, scoped, tag = 'scoped memory for _forward_impl.2']
    #allocation18 [shape = 'u8[6144]{0}', space=vmem, size = 0x1800, scoped, tag = 'input window, operand 11, single buffered']
    #allocation19 [shape = 'u8[917504]{0}', space=vmem, size = 0xe0000, scoped, tag = 'input window, operand 12, single buffered']
    #allocation20 [shape = 's32[1]{0}', space=sflag, size = 0x4, scoped, tag = 'scoped memory for _forward_impl.2']
    #allocation21 [shape = 'u8[3584]{0}', space=vmem, size = 0x1000, scoped, tag = 'input window, operand 13, single buffered']
    %21 = vsyncpa [#allocation3], 0
    %s22 = scalar_lea.sflag [#allocation3], 1
    %23 = vsyncpa %s22, 0
    %24 = vsyncpa [#allocation5], 0
    %25 = vsyncpa [#allocation8], 0
    %26 = vsyncpa [#allocation11], 0
    %27 = vsyncpa [#allocation14], 0
    %28 = vsyncpa [#allocation17], 0
    %29 = vsyncpa [#allocation20], 0
    loop: start=0, step=1, limit=4
    $region2: #{_forward_impl.2} parent=1 // loop_pre_header
      _
    $region3: #{_forward_impl.2} parent=1 // loop_header
      %s31 = sphi 0, %s35
      %p32 = scmp.ge.s32.totalorder %s31, 4
      %s41 = sphi 0, %s43
      %s44 = sphi 0, %s41
      %s45 = sphi 0, %s44
      %s61 = sphi 0, %s45
      %s67 = sphi 0, %s69
      %s70 = sphi 0, %s67
      %s71 = sphi 0, %s70
      %s87 = sphi 0, %s71
      %s91 = sphi 0, %s91
      %s93 = sphi 0, %s91
      %s94 = sphi 0, %s93
      %s108 = sphi 0, %s94
      %s112 = sphi 0, %s112
      %s114 = sphi 0, %s112
      %s115 = sphi 0, %s114
      %s129 = sphi 0, %s115
      %s133 = sphi 0, %s133
      %s135 = sphi 0, %s133
      %s136 = sphi 0, %s135
      %s150 = sphi 0, %s136
      %s154 = sphi 0, %s154
      %s156 = sphi 0, %s154
      %s157 = sphi 0, %s156
      %s171 = sphi 0, %s157
      %s175 = sphi 0, %s175
      %s177 = sphi 0, %s175
      %s178 = sphi 0, %s177
      %s192 = sphi 0, %s178
      %s196 = sphi 0, %s196
      %s198 = sphi 0, %s196
      %s199 = sphi 0, %s198
      %s213 = sphi 0, %s199
      %s217 = sphi 0, %s217
      %s219 = sphi 0, %s217
      %s220 = sphi 0, %s219
      %s234 = sphi 0, %s220
      %s238 = sphi 0, %s238
      %s240 = sphi 0, %s238
      %s241 = sphi 0, %s240
      %s255 = sphi 0, %s241
      %s259 = sphi 0, %s259
      %s261 = sphi 0, %s259
      %s262 = sphi 0, %s261
      %s276 = sphi 0, %s262
      %s280 = sphi 0, %s280
      %s282 = sphi 0, %s280
      %s283 = sphi 0, %s282
      %s297 = sphi 0, %s283
      %s301 = sphi 0, %s301
      %s303 = sphi 0, %s301
      %s304 = sphi 0, %s303
      %s318 = sphi 0, %s304
      %s322 = sphi 0, %s322
      %s324 = sphi 0, %s322
      %s325 = sphi 0, %s324
      %s339 = sphi 0, %s325
      %s345 = sphi 0, %s347
      %s348 = sphi 0, %s345
      %s349 = sphi 0, %s348
      %s365 = sphi 0, %s349
      %s371 = sphi 0, %s373
      %s374 = sphi 0, %s371
      %s375 = sphi 0, %s374
      %s391 = sphi 0, %s375
    $region4: #{_forward_impl.2} parent=1 // loop_header_branch
      %34 = sbr.rel (%p32) target = $region8
    $region5: #{_forward_impl.2} parent=1 // loop_body
      %s36 = ssub.s32 %s31, 1
      %s37 = ssub.s32 %s31, 2
      %s38 = sadd.s32 %s31, 1
      %s39 = ssub.s32 %s31, %s38
      %p40 = scmp.eq.s32.totalorder %s39, 0
      %s42 = sadd.s32 %s41, 1
      %s43 = scalar_select %p40, %s41, %s42
      %p46 = pneg %p40
      %p47 = scmp.eq.s32.totalorder %s31, 1
      %p48 = por %p46, %p47
      %p49 = scmp.ne.s32.totalorder %s41, %s44
      %p50 = scmp.eq.s32.totalorder %s31, 0
      %p51 = por %p49, %p50
      %p52 = scmp.ne.s32.totalorder %s41, %s44
      %p53 = scmp.eq.s32.totalorder %s36, 1
      %p54 = por %p52, %p53
      %p55 = scmp.ne.s32.totalorder %s44, %s45
      %p56 = scmp.eq.s32.totalorder %s36, 0
      %p57 = por %p55, %p56
      %p58 = scmp.ne.s32.totalorder %s44, %s45
      %p59 = scmp.eq.s32.totalorder %s37, 1
      %p60 = por %p58, %p59
      %p62 = scmp.ne.s32.totalorder %s45, %s61
      %p63 = scmp.eq.s32.totalorder %s37, 0
      %p64 = por %p62, %p63
      %s65 = ssub.s32 %s31, %s38
      %p66 = scmp.eq.s32.totalorder %s65, 0
      %s68 = sadd.s32 %s67, 1
      %s69 = scalar_select %p66, %s67, %s68
      %p72 = pneg %p66
      %p73 = scmp.eq.s32.totalorder %s31, 1
      %p74 = por %p72, %p73
      %p75 = scmp.ne.s32.totalorder %s67, %s70
      %p76 = scmp.eq.s32.totalorder %s31, 0
      %p77 = por %p75, %p76
      %p78 = scmp.ne.s32.totalorder %s67, %s70
      %p79 = scmp.eq.s32.totalorder %s36, 1
      %p80 = por %p78, %p79
      %p81 = scmp.ne.s32.totalorder %s70, %s71
      %p82 = scmp.eq.s32.totalorder %s36, 0
      %p83 = por %p81, %p82
      %p84 = scmp.ne.s32.totalorder %s70, %s71
      %p85 = scmp.eq.s32.totalorder %s37, 1
      %p86 = por %p84, %p85
      %p88 = scmp.ne.s32.totalorder %s71, %s87
      %p89 = scmp.eq.s32.totalorder %s37, 0
      %p90 = por %p88, %p89
      %s92 = sadd.s32 %s91, 1
      %p95 = scmp.eq.s32.totalorder %s31, 1
      %p96 = scmp.ne.s32.totalorder %s91, %s93
      %p97 = scmp.eq.s32.totalorder %s31, 0
      %p98 = por %p96, %p97
      %p99 = scmp.ne.s32.totalorder %s91, %s93
      %p100 = scmp.eq.s32.totalorder %s36, 1
      %p101 = por %p99, %p100
      %p102 = scmp.ne.s32.totalorder %s93, %s94
      %p103 = scmp.eq.s32.totalorder %s36, 0
      %p104 = por %p102, %p103
      %p105 = scmp.ne.s32.totalorder %s93, %s94
      %p106 = scmp.eq.s32.totalorder %s37, 1
      %p107 = por %p105, %p106
      %p109 = scmp.ne.s32.totalorder %s94, %s108
      %p110 = scmp.eq.s32.totalorder %s37, 0
      %p111 = por %p109, %p110
      %s113 = sadd.s32 %s112, 1
      %p116 = scmp.eq.s32.totalorder %s31, 1
      %p117 = scmp.ne.s32.totalorder %s112, %s114
      %p118 = scmp.eq.s32.totalorder %s31, 0
      %p119 = por %p117, %p118
      %p120 = scmp.ne.s32.totalorder %s112, %s114
      %p121 = scmp.eq.s32.totalorder %s36, 1
      %p122 = por %p120, %p121
      %p123 = scmp.ne.s32.totalorder %s114, %s115
      %p124 = scmp.eq.s32.totalorder %s36, 0
      %p125 = por %p123, %p124
      %p126 = scmp.ne.s32.totalorder %s114, %s115
      %p127 = scmp.eq.s32.totalorder %s37, 1
      %p128 = por %p126, %p127
      %p130 = scmp.ne.s32.totalorder %s115, %s129
      %p131 = scmp.eq.s32.totalorder %s37, 0
      %p132 = por %p130, %p131
      %s134 = sadd.s32 %s133, 1
      %p137 = scmp.eq.s32.totalorder %s31, 1
      %p138 = scmp.ne.s32.totalorder %s133, %s135
      %p139 = scmp.eq.s32.totalorder %s31, 0
      %p140 = por %p138, %p139
      %p141 = scmp.ne.s32.totalorder %s133, %s135
      %p142 = scmp.eq.s32.totalorder %s36, 1
      %p143 = por %p141, %p142
      %p144 = scmp.ne.s32.totalorder %s135, %s136
      %p145 = scmp.eq.s32.totalorder %s36, 0
      %p146 = por %p144, %p145
      %p147 = scmp.ne.s32.totalorder %s135, %s136
      %p148 = scmp.eq.s32.totalorder %s37, 1
      %p149 = por %p147, %p148
      %p151 = scmp.ne.s32.totalorder %s136, %s150
      %p152 = scmp.eq.s32.totalorder %s37, 0
      %p153 = por %p151, %p152
      %s155 = sadd.s32 %s154, 1
      %p158 = scmp.eq.s32.totalorder %s31, 1
      %p159 = scmp.ne.s32.totalorder %s154, %s156
      %p160 = scmp.eq.s32.totalorder %s31, 0
      %p161 = por %p159, %p160
      %p162 = scmp.ne.s32.totalorder %s154, %s156
      %p163 = scmp.eq.s32.totalorder %s36, 1
      %p164 = por %p162, %p163
      %p165 = scmp.ne.s32.totalorder %s156, %s157
      %p166 = scmp.eq.s32.totalorder %s36, 0
      %p167 = por %p165, %p166
      %p168 = scmp.ne.s32.totalorder %s156, %s157
      %p169 = scmp.eq.s32.totalorder %s37, 1
      %p170 = por %p168, %p169
      %p172 = scmp.ne.s32.totalorder %s157, %s171
      %p173 = scmp.eq.s32.totalorder %s37, 0
      %p174 = por %p172, %p173
      %s176 = sadd.s32 %s175, 1
      %p179 = scmp.eq.s32.totalorder %s31, 1
      %p180 = scmp.ne.s32.totalorder %s175, %s177
      %p181 = scmp.eq.s32.totalorder %s31, 0
      %p182 = por %p180, %p181
      %p183 = scmp.ne.s32.totalorder %s175, %s177
      %p184 = scmp.eq.s32.totalorder %s36, 1
      %p185 = por %p183, %p184
      %p186 = scmp.ne.s32.totalorder %s177, %s178
      %p187 = scmp.eq.s32.totalorder %s36, 0
      %p188 = por %p186, %p187
      %p189 = scmp.ne.s32.totalorder %s177, %s178
      %p190 = scmp.eq.s32.totalorder %s37, 1
      %p191 = por %p189, %p190
      %p193 = scmp.ne.s32.totalorder %s178, %s192
      %p194 = scmp.eq.s32.totalorder %s37, 0
      %p195 = por %p193, %p194
      %s197 = sadd.s32 %s196, 1
      %p200 = scmp.eq.s32.totalorder %s31, 1
      %p201 = scmp.ne.s32.totalorder %s196, %s198
      %p202 = scmp.eq.s32.totalorder %s31, 0
      %p203 = por %p201, %p202
      %p204 = scmp.ne.s32.totalorder %s196, %s198
      %p205 = scmp.eq.s32.totalorder %s36, 1
      %p206 = por %p204, %p205
      %p207 = scmp.ne.s32.totalorder %s198, %s199
      %p208 = scmp.eq.s32.totalorder %s36, 0
      %p209 = por %p207, %p208
      %p210 = scmp.ne.s32.totalorder %s198, %s199
      %p211 = scmp.eq.s32.totalorder %s37, 1
      %p212 = por %p210, %p211
      %p214 = scmp.ne.s32.totalorder %s199, %s213
      %p215 = scmp.eq.s32.totalorder %s37, 0
      %p216 = por %p214, %p215
      %s218 = sadd.s32 %s217, 1
      %p221 = scmp.eq.s32.totalorder %s31, 1
      %p222 = scmp.ne.s32.totalorder %s217, %s219
      %p223 = scmp.eq.s32.totalorder %s31, 0
      %p224 = por %p222, %p223
      %p225 = scmp.ne.s32.totalorder %s217, %s219
      %p226 = scmp.eq.s32.totalorder %s36, 1
      %p227 = por %p225, %p226
      %p228 = scmp.ne.s32.totalorder %s219, %s220
      %p229 = scmp.eq.s32.totalorder %s36, 0
      %p230 = por %p228, %p229
      %p231 = scmp.ne.s32.totalorder %s219, %s220
      %p232 = scmp.eq.s32.totalorder %s37, 1
      %p233 = por %p231, %p232
      %p235 = scmp.ne.s32.totalorder %s220, %s234
      %p236 = scmp.eq.s32.totalorder %s37, 0
      %p237 = por %p235, %p236
      %s239 = sadd.s32 %s238, 1
      %p242 = scmp.eq.s32.totalorder %s31, 1
      %p243 = scmp.ne.s32.totalorder %s238, %s240
      %p244 = scmp.eq.s32.totalorder %s31, 0
      %p245 = por %p243, %p244
      %p246 = scmp.ne.s32.totalorder %s238, %s240
      %p247 = scmp.eq.s32.totalorder %s36, 1
      %p248 = por %p246, %p247
      %p249 = scmp.ne.s32.totalorder %s240, %s241
      %p250 = scmp.eq.s32.totalorder %s36, 0
      %p251 = por %p249, %p250
      %p252 = scmp.ne.s32.totalorder %s240, %s241
      %p253 = scmp.eq.s32.totalorder %s37, 1
      %p254 = por %p252, %p253
      %p256 = scmp.ne.s32.totalorder %s241, %s255
      %p257 = scmp.eq.s32.totalorder %s37, 0
      %p258 = por %p256, %p257
      %s260 = sadd.s32 %s259, 1
      %p263 = scmp.eq.s32.totalorder %s31, 1
      %p264 = scmp.ne.s32.totalorder %s259, %s261
      %p265 = scmp.eq.s32.totalorder %s31, 0
      %p266 = por %p264, %p265
      %p267 = scmp.ne.s32.totalorder %s259, %s261
      %p268 = scmp.eq.s32.totalorder %s36, 1
      %p269 = por %p267, %p268
      %p270 = scmp.ne.s32.totalorder %s261, %s262
      %p271 = scmp.eq.s32.totalorder %s36, 0
      %p272 = por %p270, %p271
      %p273 = scmp.ne.s32.totalorder %s261, %s262
      %p274 = scmp.eq.s32.totalorder %s37, 1
      %p275 = por %p273, %p274
      %p277 = scmp.ne.s32.totalorder %s262, %s276
      %p278 = scmp.eq.s32.totalorder %s37, 0
      %p279 = por %p277, %p278
      %s281 = sadd.s32 %s280, 1
      %p284 = scmp.eq.s32.totalorder %s31, 1
      %p285 = scmp.ne.s32.totalorder %s280, %s282
      %p286 = scmp.eq.s32.totalorder %s31, 0
      %p287 = por %p285, %p286
      %p288 = scmp.ne.s32.totalorder %s280, %s282
      %p289 = scmp.eq.s32.totalorder %s36, 1
      %p290 = por %p288, %p289
      %p291 = scmp.ne.s32.totalorder %s282, %s283
      %p292 = scmp.eq.s32.totalorder %s36, 0
      %p293 = por %p291, %p292
      %p294 = scmp.ne.s32.totalorder %s282, %s283
      %p295 = scmp.eq.s32.totalorder %s37, 1
      %p296 = por %p294, %p295
      %p298 = scmp.ne.s32.totalorder %s283, %s297
      %p299 = scmp.eq.s32.totalorder %s37, 0
      %p300 = por %p298, %p299
      %s302 = sadd.s32 %s301, 1
      %p305 = scmp.eq.s32.totalorder %s31, 1
      %p306 = scmp.ne.s32.totalorder %s301, %s303
      %p307 = scmp.eq.s32.totalorder %s31, 0
      %p308 = por %p306, %p307
      %p309 = scmp.ne.s32.totalorder %s301, %s303
      %p310 = scmp.eq.s32.totalorder %s36, 1
      %p311 = por %p309, %p310
      %p312 = scmp.ne.s32.totalorder %s303, %s304
      %p313 = scmp.eq.s32.totalorder %s36, 0
      %p314 = por %p312, %p313
      %p315 = scmp.ne.s32.totalorder %s303, %s304
      %p316 = scmp.eq.s32.totalorder %s37, 1
      %p317 = por %p315, %p316
      %p319 = scmp.ne.s32.totalorder %s304, %s318
      %p320 = scmp.eq.s32.totalorder %s37, 0
      %p321 = por %p319, %p320
      %s323 = sadd.s32 %s322, 1
      %p326 = scmp.eq.s32.totalorder %s31, 1
      %p327 = scmp.ne.s32.totalorder %s322, %s324
      %p328 = scmp.eq.s32.totalorder %s31, 0
      %p329 = por %p327, %p328
      %p330 = scmp.ne.s32.totalorder %s322, %s324
      %p331 = scmp.eq.s32.totalorder %s36, 1
      %p332 = por %p330, %p331
      %p333 = scmp.ne.s32.totalorder %s324, %s325
      %p334 = scmp.eq.s32.totalorder %s36, 0
      %p335 = por %p333, %p334
      %p336 = scmp.ne.s32.totalorder %s324, %s325
      %p337 = scmp.eq.s32.totalorder %s37, 1
      %p338 = por %p336, %p337
      %p340 = scmp.ne.s32.totalorder %s325, %s339
      %p341 = scmp.eq.s32.totalorder %s37, 0
      %p342 = por %p340, %p341
      %s343 = ssub.s32 %s31, %s38
      %p344 = scmp.eq.s32.totalorder %s343, 0
      %s346 = sadd.s32 %s345, 1
      %s347 = scalar_select %p344, %s345, %s346
      %p350 = pneg %p344
      %p351 = scmp.eq.s32.totalorder %s31, 1
      %p352 = por %p350, %p351
      %p353 = scmp.ne.s32.totalorder %s345, %s348
      %p354 = scmp.eq.s32.totalorder %s31, 0
      %p355 = por %p353, %p354
      %p356 = scmp.ne.s32.totalorder %s345, %s348
      %p357 = scmp.eq.s32.totalorder %s36, 1
      %p358 = por %p356, %p357
      %p359 = scmp.ne.s32.totalorder %s348, %s349
      %p360 = scmp.eq.s32.totalorder %s36, 0
      %p361 = por %p359, %p360
      %p362 = scmp.ne.s32.totalorder %s348, %s349
      %p363 = scmp.eq.s32.totalorder %s37, 1
      %p364 = por %p362, %p363
      %p366 = scmp.ne.s32.totalorder %s349, %s365
      %p367 = scmp.eq.s32.totalorder %s37, 0
      %p368 = por %p366, %p367
      %s369 = ssub.s32 %s31, %s38
      %p370 = scmp.eq.s32.totalorder %s369, 0
      %s372 = sadd.s32 %s371, 1
      %s373 = scalar_select %p370, %s371, %s372
      %p376 = pneg %p370
      %p377 = scmp.eq.s32.totalorder %s31, 1
      %p378 = por %p376, %p377
      %p379 = scmp.ne.s32.totalorder %s371, %s374
      %p380 = scmp.eq.s32.totalorder %s31, 0
      %p381 = por %p379, %p380
      %p382 = scmp.ne.s32.totalorder %s371, %s374
      %p383 = scmp.eq.s32.totalorder %s36, 1
      %p384 = por %p382, %p383
      %p385 = scmp.ne.s32.totalorder %s374, %s375
      %p386 = scmp.eq.s32.totalorder %s36, 0
      %p387 = por %p385, %p386
      %p388 = scmp.ne.s32.totalorder %s374, %s375
      %p389 = scmp.eq.s32.totalorder %s37, 1
      %p390 = por %p388, %p389
      %p392 = scmp.ne.s32.totalorder %s375, %s391
      %p393 = scmp.eq.s32.totalorder %s37, 0
      %p394 = por %p392, %p393
      %p395 = scmp.le.s32.totalorder 1, %s31
      %p396 = scmp.lt.s32.totalorder %s31, 3
      %p397 = pnand %p395, %p396
      %p398 = pneg %p397
      // Predicated region
      $region9: #{_forward_impl.2} parent=5 // pred_check
        _
      $region10: #{_forward_impl.2} parent=5 // pred_check_branch
        %400 = sbr.rel (%p397) target = $region12
      $region11: #{_forward_impl.2} parent=5 // pred_region
        %s401 = ssub.s32 %s31, 1
        // Predicated region
        $region13: #{_forward_impl.2} parent=11 // pred_check
          %p402 = pneg %p104
        $region14: #{_forward_impl.2} parent=11 // pred_check_branch
          %404 = sbr.rel (%p402) target = $region16
        $region15: #{_forward_impl.2} parent=11 // pred_region
          %406 = vsyncadd [#allocation5], 0
          %s407 = sshll.u32 %s2, 4
          %s408 = int_to_ptr.hbm [resolvable:$true] %s407
          %s409 = sshll.u32 [#allocation4], 4
          %s410 = int_to_ptr.vmem [resolvable:$true] %s409
          %415 = dma.hbm_to_vmem [thread:$0]  %s408, 640, %s410, [#allocation5], 128, 128, 8
        $region16: #{_forward_impl.2} parent=11 // pred_fallthru
          _
        // Predicated region
        $region17: #{_forward_impl.2} parent=11 // pred_check
          %p416 = pneg %p125
        $region18: #{_forward_impl.2} parent=11 // pred_check_branch
          %418 = sbr.rel (%p416) target = $region20
        $region19: #{_forward_impl.2} parent=11 // pred_region
          %420 = vsyncadd [#allocation5], 0
          %s422 = sshll.u32 %s3, 4
          %s423 = int_to_ptr.hbm [resolvable:$true] %s422
          %s424 = sshll.u32 [#allocation6], 4
          %s425 = int_to_ptr.vmem [resolvable:$true] %s424
          %427 = dma.hbm_to_vmem [thread:$0]  %s423, 32, %s425, [#allocation5]
        $region20: #{_forward_impl.2} parent=11 // pred_fallthru
          _
        // Predicated region
        $region21: #{_forward_impl.2} parent=11 // pred_check
          %p428 = pneg %p146
        $region22: #{_forward_impl.2} parent=11 // pred_check_branch
          %430 = sbr.rel (%p428) target = $region24
        $region23: #{_forward_impl.2} parent=11 // pred_region
          %432 = vsyncadd [#allocation8], 0
          %s433 = sshll.u32 %s4, 4
          %s434 = int_to_ptr.hbm [resolvable:$true] %s433
          %s435 = sshll.u32 [#allocation7], 4
          %s436 = int_to_ptr.vmem [resolvable:$true] %s435
          %441 = dma.hbm_to_vmem [thread:$0]  %s434, 8192, %s436, [#allocation8], 128, 128, 8
        $region24: #{_forward_impl.2} parent=11 // pred_fallthru
          _
        // Predicated region
        $region25: #{_forward_impl.2} parent=11 // pred_check
          %p442 = pneg %p167
        $region26: #{_forward_impl.2} parent=11 // pred_check_branch
          %444 = sbr.rel (%p442) target = $region28
        $region27: #{_forward_impl.2} parent=11 // pred_region
          %446 = vsyncadd [#allocation8], 0
          %s448 = sshll.u32 %s5, 4
          %s449 = int_to_ptr.hbm [resolvable:$true] %s448
          %s450 = sshll.u32 [#allocation9], 4
          %s451 = int_to_ptr.vmem [resolvable:$true] %s450
          %453 = dma.hbm_to_vmem [thread:$0]  %s449, 32, %s451, [#allocation8]
        $region28: #{_forward_impl.2} parent=11 // pred_fallthru
          _
        // Predicated region
        $region29: #{_forward_impl.2} parent=11 // pred_check
          %p454 = pneg %p188
        $region30: #{_forward_impl.2} parent=11 // pred_check_branch
          %456 = sbr.rel (%p454) target = $region32
        $region31: #{_forward_impl.2} parent=11 // pred_region
          %458 = vsyncadd [#allocation11], 0
          %s459 = sshll.u32 %s6, 4
          %s460 = int_to_ptr.hbm [resolvable:$true] %s459
          %s461 = sshll.u32 [#allocation10], 4
          %s462 = int_to_ptr.vmem [resolvable:$true] %s461
          %467 = dma.hbm_to_vmem [thread:$0]  %s460, 12288, %s462, [#allocation11], 128, 128, 8
        $region32: #{_forward_impl.2} parent=11 // pred_fallthru
          _
        // Predicated region
        $region33: #{_forward_impl.2} parent=11 // pred_check
          %p468 = pneg %p209
        $region34: #{_forward_impl.2} parent=11 // pred_check_branch
          %470 = sbr.rel (%p468) target = $region36
        $region35: #{_forward_impl.2} parent=11 // pred_region
          %472 = vsyncadd [#allocation11], 0
          %s473 = sshll.u32 %s7, 4
          %s474 = int_to_ptr.hbm [resolvable:$true] %s473
          %s475 = sshll.u32 [#allocation12], 4
          %s476 = int_to_ptr.vmem [resolvable:$true] %s475
          %481 = dma.hbm_to_vmem [thread:$0]  %s474, 96, %s476, [#allocation11], 32, 32, 2
        $region36: #{_forward_impl.2} parent=11 // pred_fallthru
          _
        // Predicated region
        $region37: #{_forward_impl.2} parent=11 // pred_check
          %p482 = pneg %p230
        $region38: #{_forward_impl.2} parent=11 // pred_check_branch
          %484 = sbr.rel (%p482) target = $region40
        $region39: #{_forward_impl.2} parent=11 // pred_region
          %486 = vsyncadd [#allocation14], 0
          %s487 = sshll.u32 %s8, 4
          %s488 = int_to_ptr.hbm [resolvable:$true] %s487
          %s489 = sshll.u32 [#allocation13], 4
          %s490 = int_to_ptr.vmem [resolvable:$true] %s489
          %495 = dma.hbm_to_vmem [thread:$0]  %s488, 2048, %s490, [#allocation14], 64, 64, 4
        $region40: #{_forward_impl.2} parent=11 // pred_fallthru
          _
        // Predicated region
        $region41: #{_forward_impl.2} parent=11 // pred_check
          %p496 = pneg %p251
        $region42: #{_forward_impl.2} parent=11 // pred_check_branch
          %498 = sbr.rel (%p496) target = $region44
        $region43: #{_forward_impl.2} parent=11 // pred_region
          %500 = vsyncadd [#allocation14], 0
          %s502 = sshll.u32 %s9, 4
          %s503 = int_to_ptr.hbm [resolvable:$true] %s502
          %s504 = sshll.u32 [#allocation15], 4
          %s505 = int_to_ptr.vmem [resolvable:$true] %s504
          %507 = dma.hbm_to_vmem [thread:$0]  %s503, 16, %s505, [#allocation14]
        $region44: #{_forward_impl.2} parent=11 // pred_fallthru
          _
        // Predicated region
        $region45: #{_forward_impl.2} parent=11 // pred_check
          %p508 = pneg %p272
        $region46: #{_forward_impl.2} parent=11 // pred_check_branch
          %510 = sbr.rel (%p508) target = $region48
        $region47: #{_forward_impl.2} parent=11 // pred_region
          %512 = vsyncadd [#allocation17], 0
          %s513 = sshll.u32 %s10, 4
          %s514 = int_to_ptr.hbm [resolvable:$true] %s513
          %s515 = sshll.u32 [#allocation16], 4
          %s516 = int_to_ptr.vmem [resolvable:$true] %s515
          %521 = dma.hbm_to_vmem [thread:$0]  %s514, 49152, %s516, [#allocation17], 256, 256, 16
        $region48: #{_forward_impl.2} parent=11 // pred_fallthru
          _
        // Predicated region
        $region49: #{_forward_impl.2} parent=11 // pred_check
          %p522 = pneg %p293
        $region50: #{_forward_impl.2} parent=11 // pred_check_branch
          %524 = sbr.rel (%p522) target = $region52
        $region51: #{_forward_impl.2} parent=11 // pred_region
          %526 = vsyncadd [#allocation17], 0
          %s527 = sshll.u32 %s11, 4
          %s528 = int_to_ptr.hbm [resolvable:$true] %s527
          %s529 = sshll.u32 [#allocation18], 4
          %s530 = int_to_ptr.vmem [resolvable:$true] %s529
          %535 = dma.hbm_to_vmem [thread:$0]  %s528, 192, %s530, [#allocation17], 64, 64, 4
        $region52: #{_forward_impl.2} parent=11 // pred_fallthru
          _
        // Predicated region
        $region53: #{_forward_impl.2} parent=11 // pred_check
          %p536 = pneg %p314
        $region54: #{_forward_impl.2} parent=11 // pred_check_branch
          %538 = sbr.rel (%p536) target = $region56
        $region55: #{_forward_impl.2} parent=11 // pred_region
          %540 = vsyncadd [#allocation20], 0
          %s541 = sshll.u32 %s12, 4
          %s542 = int_to_ptr.hbm [resolvable:$true] %s541
          %s543 = sshll.u32 [#allocation19], 4
          %s544 = int_to_ptr.vmem [resolvable:$true] %s543
          %549 = dma.hbm_to_vmem [thread:$0]  %s542, 28672, %s544, [#allocation20], 448, 448, 28
        $region56: #{_forward_impl.2} parent=11 // pred_fallthru
          _
        // Predicated region
        $region57: #{_forward_impl.2} parent=11 // pred_check
          %p550 = pneg %p335
        $region58: #{_forward_impl.2} parent=11 // pred_check_branch
          %552 = sbr.rel (%p550) target = $region60
        $region59: #{_forward_impl.2} parent=11 // pred_region
          %554 = vsyncadd [#allocation20], 0
          %s556 = sshll.u32 %s13, 4
          %s557 = int_to_ptr.hbm [resolvable:$true] %s556
          %s558 = sshll.u32 [#allocation21], 4
          %s559 = int_to_ptr.vmem [resolvable:$true] %s558
          %561 = dma.hbm_to_vmem [thread:$0]  %s557, 112, %s559, [#allocation20]
        $region60: #{_forward_impl.2} parent=11 // pred_fallthru
          _
      $region12: #{_forward_impl.2} parent=5 // pred_fallthru
        _
      %p562 = scmp.lt.s32.totalorder %s31, 2
      // Predicated region
      $region61: #{_forward_impl.2} parent=5 // pred_check
        %p563 = pneg %p562
      $region62: #{_forward_impl.2} parent=5 // pred_check_branch
        %565 = sbr.rel (%p563) target = $region64
      $region63: #{_forward_impl.2} parent=5 // pred_region
        // Predicated region
        $region65: #{_forward_impl.2} parent=63 // pred_check
          %p566 = pneg %p51
        $region66: #{_forward_impl.2} parent=63 // pred_check_branch
          %568 = sbr.rel (%p566) target = $region68
        $region67: #{_forward_impl.2} parent=63 // pred_region
          %p569 = scmp.lt.s32.totalorder %s31, 1
          %s570 = scalar_select %p569, %s31, 1
          %s571 = smul.addr %s570, 8
          %s572 = scalar_lea.vmem %s0, %s571
        $region68: #{_forward_impl.2} parent=63 // pred_fallthru
          _
        // Predicated region
        $region69: #{_forward_impl.2} parent=63 // pred_check
          %p573 = pneg %p77
        $region70: #{_forward_impl.2} parent=63 // pred_check_branch
          %575 = sbr.rel (%p573) target = $region72
        $region71: #{_forward_impl.2} parent=63 // pred_region
          %s576 = sand.u32 %s67, 1
          %s577 = scalar_lea.sflag [#allocation3], %s576
          %s578 = sand.u32 %s67, 1
          %s579 = smul.addr %s578, 32
          %s580 = scalar_lea.vmem [#allocation2], %s579
          %582 = vsyncadd %s577, 0
          %s583 = smul.addr %s31, 4
          %s584 = smul.addr %s583, 8
          %s585 = scalar_lea.hbm %s1, %s584
          %s587 = sshll.u32 %s585, 4
          %s588 = int_to_ptr.hbm [resolvable:$true] %s587
          %s589 = sshll.u32 %s580, 4
          %s590 = int_to_ptr.vmem [resolvable:$true] %s589
          %592 = dma.hbm_to_vmem [thread:$0]  %s588, 512, %s590, %s577
        $region72: #{_forward_impl.2} parent=63 // pred_fallthru
          _
      $region64: #{_forward_impl.2} parent=5 // pred_fallthru
        _
      %p593 = scmp.le.s32.totalorder 1, %s31
      %p594 = scmp.lt.s32.totalorder %s31, 3
      %p595 = pnand %p593, %p594
      %p596 = pneg %p595
      // Predicated region
      $region73: #{_forward_impl.2} parent=5 // pred_check
        _
      $region74: #{_forward_impl.2} parent=5 // pred_check_branch
        %598 = sbr.rel (%p595) target = $region76
      $region75: #{_forward_impl.2} parent=5 // pred_region
        %s599 = ssub.s32 %s31, 1
        %s600 = sand.u32 %s70, 1
        %s601 = scalar_lea.sflag [#allocation3], %s600
        %s602 = sand.u32 %s70, 1
        %s603 = smul.addr %s602, 32
        %s604 = scalar_lea.vmem [#allocation2], %s603
        // Predicated region
        $region77: #{_forward_impl.2} parent=75 // pred_check
          %p605 = pneg %p83
        $region78: #{_forward_impl.2} parent=75 // pred_check_branch
          %607 = sbr.rel (%p605) target = $region80
        $region79: #{_forward_impl.2} parent=75 // pred_region
          %609 = dma.done %s601, 512
        $region80: #{_forward_impl.2} parent=75 // pred_fallthru
          _
        // Predicated region
        $region81: #{_forward_impl.2} parent=75 // pred_check
          %p610 = pneg %p104
        $region82: #{_forward_impl.2} parent=75 // pred_check_branch
          %612 = sbr.rel (%p610) target = $region84
        $region83: #{_forward_impl.2} parent=75 // pred_region
          %614 = dma.done [#allocation5], 640
        $region84: #{_forward_impl.2} parent=75 // pred_fallthru
          _
        // Predicated region
        $region85: #{_forward_impl.2} parent=75 // pred_check
          %p615 = pneg %p125
        $region86: #{_forward_impl.2} parent=75 // pred_check_branch
          %617 = sbr.rel (%p615) target = $region88
        $region87: #{_forward_impl.2} parent=75 // pred_region
          %619 = dma.done [#allocation5], 32
        $region88: #{_forward_impl.2} parent=75 // pred_fallthru
          _
        // Predicated region
        $region89: #{_forward_impl.2} parent=75 // pred_check
          %p620 = pneg %p146
        $region90: #{_forward_impl.2} parent=75 // pred_check_branch
          %622 = sbr.rel (%p620) target = $region92
        $region91: #{_forward_impl.2} parent=75 // pred_region
          %624 = dma.done [#allocation8], 8192
        $region92: #{_forward_impl.2} parent=75 // pred_fallthru
          _
        // Predicated region
        $region93: #{_forward_impl.2} parent=75 // pred_check
          %p625 = pneg %p167
        $region94: #{_forward_impl.2} parent=75 // pred_check_branch
          %627 = sbr.rel (%p625) target = $region96
        $region95: #{_forward_impl.2} parent=75 // pred_region
          %629 = dma.done [#allocation8], 32
        $region96: #{_forward_impl.2} parent=75 // pred_fallthru
          _
        // Predicated region
        $region97: #{_forward_impl.2} parent=75 // pred_check
          %p630 = pneg %p188
        $region98: #{_forward_impl.2} parent=75 // pred_check_branch
          %632 = sbr.rel (%p630) target = $region100
        $region99: #{_forward_impl.2} parent=75 // pred_region
          %634 = dma.done [#allocation11], 12288
        $region100: #{_forward_impl.2} parent=75 // pred_fallthru
          _
        // Predicated region
        $region101: #{_forward_impl.2} parent=75 // pred_check
          %p635 = pneg %p209
        $region102: #{_forward_impl.2} parent=75 // pred_check_branch
          %637 = sbr.rel (%p635) target = $region104
        $region103: #{_forward_impl.2} parent=75 // pred_region
          %639 = dma.done [#allocation11], 96
        $region104: #{_forward_impl.2} parent=75 // pred_fallthru
          _
        // Predicated region
        $region105: #{_forward_impl.2} parent=75 // pred_check
          %p640 = pneg %p230
        $region106: #{_forward_impl.2} parent=75 // pred_check_branch
          %642 = sbr.rel (%p640) target = $region108
        $region107: #{_forward_impl.2} parent=75 // pred_region
          %644 = dma.done [#allocation14], 2048
        $region108: #{_forward_impl.2} parent=75 // pred_fallthru
          _
        // Predicated region
        $region109: #{_forward_impl.2} parent=75 // pred_check
          %p645 = pneg %p251
        $region110: #{_forward_impl.2} parent=75 // pred_check_branch
          %647 = sbr.rel (%p645) target = $region112
        $region111: #{_forward_impl.2} parent=75 // pred_region
          %649 = dma.done [#allocation14], 16
        $region112: #{_forward_impl.2} parent=75 // pred_fallthru
          _
        // Predicated region
        $region113: #{_forward_impl.2} parent=75 // pred_check
          %p650 = pneg %p272
        $region114: #{_forward_impl.2} parent=75 // pred_check_branch
          %652 = sbr.rel (%p650) target = $region116
        $region115: #{_forward_impl.2} parent=75 // pred_region
          %654 = dma.done [#allocation17], 49152
        $region116: #{_forward_impl.2} parent=75 // pred_fallthru
          _
        // Predicated region
        $region117: #{_forward_impl.2} parent=75 // pred_check
          %p655 = pneg %p293
        $region118: #{_forward_impl.2} parent=75 // pred_check_branch
          %657 = sbr.rel (%p655) target = $region120
        $region119: #{_forward_impl.2} parent=75 // pred_region
          %659 = dma.done [#allocation17], 192
        $region120: #{_forward_impl.2} parent=75 // pred_fallthru
          _
        // Predicated region
        $region121: #{_forward_impl.2} parent=75 // pred_check
          %p660 = pneg %p314
        $region122: #{_forward_impl.2} parent=75 // pred_check_branch
          %662 = sbr.rel (%p660) target = $region124
        $region123: #{_forward_impl.2} parent=75 // pred_region
          %664 = dma.done [#allocation20], 28672
        $region124: #{_forward_impl.2} parent=75 // pred_fallthru
          _
        // Predicated region
        $region125: #{_forward_impl.2} parent=75 // pred_check
          %p665 = pneg %p335
        $region126: #{_forward_impl.2} parent=75 // pred_check_branch
          %667 = sbr.rel (%p665) target = $region128
        $region127: #{_forward_impl.2} parent=75 // pred_region
          %669 = dma.done [#allocation20], 112
        $region128: #{_forward_impl.2} parent=75 // pred_fallthru
          _
        %p670 = scmp.lt.s32.totalorder %s36, 1
        %s671 = scalar_select %p670, %s36, 1
        %s672 = smul.addr %s671, 8
        %s673 = scalar_lea.vmem %s0, %s672
        %p674 = pneg %p57
        %p675 = pneg %p54
        %s676 = sand.u32 %s70, 1
        %s677 = scalar_lea.sflag [#allocation3], %s676
        %s678 = sand.u32 %s70, 1
        %s679 = smul.addr %s678, 32
        %s680 = scalar_lea.vmem [#allocation2], %s679
        %p681 = pneg %p83
        %p682 = pneg %p80
        %p683 = pneg %p104
        %p684 = pneg %p101
        %p685 = pneg %p125
        %p686 = pneg %p122
        %p687 = pneg %p146
        %p688 = pneg %p143
        %p689 = pneg %p167
        %p690 = pneg %p164
        %p691 = pneg %p188
        %p692 = pneg %p185
        %p693 = pneg %p209
        %p694 = pneg %p206
        %p695 = pneg %p230
        %p696 = pneg %p227
        %p697 = pneg %p251
        %p698 = pneg %p248
        %p699 = pneg %p272
        %p700 = pneg %p269
        %p701 = pneg %p293
        %p702 = pneg %p290
        %p703 = pneg %p314
        %p704 = pneg %p311
        %p705 = pneg %p335
        %p706 = pneg %p332
        %p707 = pneg %p361
        %p708 = pneg %p358
        %p709 = scmp.lt.s32.totalorder %s36, 1
        %s710 = scalar_select %p709, %s36, 1
        %s711 = smul.addr %s710, 8
        %s712 = scalar_lea.vmem %s14, %s711
        %p713 = pneg %p387
        %p714 = pneg %p384
        %p715 = scmp.lt.s32.totalorder %s36, 1
        %s716 = scalar_select %p715, %s36, 1
        %s717 = smul.addr %s716, 7
        %s718 = scalar_lea.vmem %s15, %s717
        %p719 = scmp.lt.s32.totalorder %s36, 1
        %s720 = scalar_select %p719, %s36, 1
        %s721 = smul.addr %s720, 8
        %s722 = scalar_lea.vmem %s0, %s721
        %p723 = scmp.lt.s32.totalorder %s36, 1
        %s724 = scalar_select %p723, %s36, 1
        %s725 = smul.addr %s724, 8
        %s726 = scalar_lea.vmem %s14, %s725
        %p727 = scmp.lt.s32.totalorder %s36, 1
        %s728 = scalar_select %p727, %s36, 1
        %s729 = smul.addr %s728, 7
        %s730 = scalar_lea.vmem %s15, %s729
        %v732 = vld [vmem:[%s722] sm:$0xff]
        %v733 = vpack.c.bf16 %v732, %v732
        %v734 = vld [vmem:[%s604] sm:$0xff]
        %v735 = vld [vmem:[%s604 + $0x8] sm:$0xff]
        %v736 = vld [vmem:[%s604 + $0x10] sm:$0xff]
        %v737 = vld [vmem:[%s604 + $0x18] sm:$0xff]
        %v738 = vpack.c.bf16 %v734, %v734
        %v739 = vpack.c.bf16 %v735, %v735
        %v740 = vpack.c.bf16 %v736, %v736
        %v741 = vpack.c.bf16 %v737, %v737
        %v742 = vld [vmem:[#allocation4] sm:$0xff]
        %v743 = vld [vmem:[#allocation4 + $0x8] sm:$0xff]
        %v744 = vld [vmem:[#allocation4 + $0x10] sm:$0xff]
        %v745 = vld [vmem:[#allocation4 + $0x18] sm:$0xff]
        %v746 = vld [vmem:[#allocation4 + $0x20] sm:$0x77]
        %v747 = vld [vmem:[#allocation6] sm:$0x3]
        %v749 = vperm.slane %v747, 0
        %v750 = vperm.slane %v747, 1
        %v758 = vunpack.c.l.b16 %v742
        %v759 = vunpack.c.h.b16 %v742
        %v760 = vunpack.c.l.b16 %v743
        %v761 = vunpack.c.h.b16 %v743
        %v762 = vunpack.c.l.b16 %v744
        %v763 = vunpack.c.h.b16 %v744
        %v764 = vunpack.c.l.b16 %v745
        %v765 = vunpack.c.h.b16 %v745
        %v766 = vunpack.c.l.b16 %v746
        %v767 = vunpack.c.h.b16 %v746
        %v768 = vpack.c.b16 %v760, %v758
        %v769 = vpack.c.b16 %v761, %v759
        %v770 = vpack.c.b16 %v764, %v762
        %v771 = vpack.c.b16 %v765, %v763
        %v772 = vpack.c.b16 %v766, %v766
        %v773 = vpack.c.b16 %v767, %v767
        %vm778 = vcmask 310272
        %v780 = vsel %vm778, %v733, 0
        %vm782 = vcmask 1042432
        %v784 = vsel %vm782, %v772, 0
        %v787 = vsel %vm782, %v773, 0
        %789 = vmatpush.bf16.msra.mxu0 0
        %790 = vmatpush.bf16.msra.mxu0 0
        %791 = vmatpush.bf16.msra.mxu0 0
        %792 = vmatpush.bf16.msra.mxu0 0
        %793 = vmatpush.bf16.msra.mxu0 0
        %794 = vmatpush.bf16.msra.mxu0 %v784
        %795 = vmatpush.bf16.msra.mxu0 %v770
        %796 = vmatpush.bf16.msra.mxu0 %v768
        %797 = vmatmul.bf16.gmra.mxu0 %v780
        %v798 = vpop.f32.mrf.mxu0
        %v799 = vadd.f32 %v749, %v798
        %v800 = vpop.f32.mrf.mxu0
        %801 = vdwg.mxu0
        %802 = vmatpush.bf16.msra.mxu0 0
        %803 = vmatpush.bf16.msra.mxu0 0
        %804 = vmatpush.bf16.msra.mxu0 0
        %805 = vmatpush.bf16.msra.mxu0 0
        %806 = vmatpush.bf16.msra.mxu0 0
        %807 = vmatpush.bf16.msra.mxu0 %v787
        %808 = vmatpush.bf16.msra.mxu0 %v771
        %809 = vmatpush.bf16.msra.mxu0 %v769
        %810 = vmatmul.bf16.gmra.mxu0 %v780
        %v811 = vpop.f32.mrf.mxu0
        %v812 = vadd.f32 %v750, %v811
        %v813 = vpop.f32.mrf.mxu0
        %814 = vdwg.mxu0
        %v815 = vld [vmem:[#allocation7] sm:$0xff]
        %v816 = vld [vmem:[#allocation7 + $0x8] sm:$0xff]
        %v817 = vld [vmem:[#allocation7 + $0x10] sm:$0xff]
        %v818 = vld [vmem:[#allocation7 + $0x18] sm:$0xff]
        %v819 = vld [vmem:[#allocation7 + $0x20] sm:$0xff]
        %v820 = vld [vmem:[#allocation7 + $0x28] sm:$0xff]
        %v821 = vld [vmem:[#allocation7 + $0x30] sm:$0xff]
        %v822 = vld [vmem:[#allocation7 + $0x38] sm:$0xff]
        %v823 = vld [vmem:[#allocation7 + $0x40] sm:$0xff]
        %v824 = vld [vmem:[#allocation7 + $0x48] sm:$0xff]
        %v825 = vld [vmem:[#allocation7 + $0x50] sm:$0xff]
        %v826 = vld [vmem:[#allocation7 + $0x58] sm:$0xff]
        %v827 = vld [vmem:[#allocation7 + $0x60] sm:$0xff]
        %v828 = vld [vmem:[#allocation7 + $0x68] sm:$0xff]
        %v829 = vld [vmem:[#allocation7 + $0x70] sm:$0xff]
        %v830 = vld [vmem:[#allocation7 + $0x78] sm:$0xff]
        %v831 = vld [vmem:[#allocation7 + $0x80] sm:$0xff]
        %v832 = vld [vmem:[#allocation7 + $0x88] sm:$0xff]
        %v833 = vld [vmem:[#allocation7 + $0x90] sm:$0xff]
        %v834 = vld [vmem:[#allocation7 + $0x98] sm:$0xff]
        %v835 = vld [vmem:[#allocation7 + $0xa0] sm:$0xff]
        %v836 = vld [vmem:[#allocation7 + $0xa8] sm:$0xff]
        %v837 = vld [vmem:[#allocation7 + $0xb0] sm:$0xff]
        %v838 = vld [vmem:[#allocation7 + $0xb8] sm:$0xff]
        %v839 = vld [vmem:[#allocation7 + $0xc0] sm:$0xff]
        %v840 = vld [vmem:[#allocation7 + $0xc8] sm:$0xff]
        %v841 = vld [vmem:[#allocation7 + $0xd0] sm:$0xff]
        %v842 = vld [vmem:[#allocation7 + $0xd8] sm:$0xff]
        %v843 = vld [vmem:[#allocation7 + $0xe0] sm:$0xff]
        %v844 = vld [vmem:[#allocation7 + $0xe8] sm:$0xff]
        %v845 = vld [vmem:[#allocation7 + $0xf0] sm:$0xff]
        %v846 = vld [vmem:[#allocation7 + $0xf8] sm:$0xff]
        %v847 = vld [vmem:[#allocation7 + $0x100] sm:$0xff]
        %v848 = vld [vmem:[#allocation7 + $0x108] sm:$0xff]
        %v849 = vld [vmem:[#allocation7 + $0x110] sm:$0xff]
        %v850 = vld [vmem:[#allocation7 + $0x118] sm:$0xff]
        %v851 = vld [vmem:[#allocation7 + $0x120] sm:$0xff]
        %v852 = vld [vmem:[#allocation7 + $0x128] sm:$0xff]
        %v853 = vld [vmem:[#allocation7 + $0x130] sm:$0xff]
        %v854 = vld [vmem:[#allocation7 + $0x138] sm:$0xff]
        %v855 = vld [vmem:[#allocation7 + $0x140] sm:$0xff]
        %v856 = vld [vmem:[#allocation7 + $0x148] sm:$0xff]
        %v857 = vld [vmem:[#allocation7 + $0x150] sm:$0xff]
        %v858 = vld [vmem:[#allocation7 + $0x158] sm:$0xff]
        %v859 = vld [vmem:[#allocation7 + $0x160] sm:$0xff]
        %v860 = vld [vmem:[#allocation7 + $0x168] sm:$0xff]
        %v861 = vld [vmem:[#allocation7 + $0x170] sm:$0xff]
        %v862 = vld [vmem:[#allocation7 + $0x178] sm:$0xff]
        %v863 = vld [vmem:[#allocation7 + $0x180] sm:$0xff]
        %v864 = vld [vmem:[#allocation7 + $0x188] sm:$0xff]
        %v865 = vld [vmem:[#allocation7 + $0x190] sm:$0xff]
        %v866 = vld [vmem:[#allocation7 + $0x198] sm:$0xff]
        %v867 = vld [vmem:[#allocation7 + $0x1a0] sm:$0xff]
        %v868 = vld [vmem:[#allocation7 + $0x1a8] sm:$0xff]
        %v869 = vld [vmem:[#allocation7 + $0x1b0] sm:$0xff]
        %v870 = vld [vmem:[#allocation7 + $0x1b8] sm:$0xff]
        %v871 = vld [vmem:[#allocation7 + $0x1c0] sm:$0xff]
        %v872 = vld [vmem:[#allocation7 + $0x1c8] sm:$0xff]
        %v873 = vld [vmem:[#allocation7 + $0x1d0] sm:$0xff]
        %v874 = vld [vmem:[#allocation7 + $0x1d8] sm:$0xff]
        %v875 = vld [vmem:[#allocation7 + $0x1e0] sm:$0xff]
        %v876 = vld [vmem:[#allocation7 + $0x1e8] sm:$0xff]
        %v877 = vld [vmem:[#allocation7 + $0x1f0] sm:$0xff]
        %v878 = vld [vmem:[#allocation7 + $0x1f8] sm:$0xff]
        %v879 = vld [vmem:[#allocation9] sm:$0x3]
        %v881 = vperm.slane %v879, 0
        %v882 = vperm.slane %v879, 1
        %v949 = vunpack.c.l.b16 %v815
        %v950 = vunpack.c.h.b16 %v815
        %v951 = vunpack.c.l.b16 %v816
        %v952 = vunpack.c.h.b16 %v816
        %v953 = vunpack.c.l.b16 %v817
        %v954 = vunpack.c.h.b16 %v817
        %v955 = vunpack.c.l.b16 %v818
        %v956 = vunpack.c.h.b16 %v818
        %v957 = vunpack.c.l.b16 %v819
        %v958 = vunpack.c.h.b16 %v819
        %v959 = vunpack.c.l.b16 %v820
        %v960 = vunpack.c.h.b16 %v820
        %v961 = vunpack.c.l.b16 %v821
        %v962 = vunpack.c.h.b16 %v821
        %v963 = vunpack.c.l.b16 %v822
        %v964 = vunpack.c.h.b16 %v822
        %v965 = vunpack.c.l.b16 %v823
        %v966 = vunpack.c.h.b16 %v823
        %v967 = vunpack.c.l.b16 %v824
        %v968 = vunpack.c.h.b16 %v824
        %v969 = vunpack.c.l.b16 %v825
        %v970 = vunpack.c.h.b16 %v825
        %v971 = vunpack.c.l.b16 %v826
        %v972 = vunpack.c.h.b16 %v826
        %v973 = vunpack.c.l.b16 %v827
        %v974 = vunpack.c.h.b16 %v827
        %v975 = vunpack.c.l.b16 %v828
        %v976 = vunpack.c.h.b16 %v828
        %v977 = vunpack.c.l.b16 %v829
        %v978 = vunpack.c.h.b16 %v829
        %v979 = vunpack.c.l.b16 %v830
        %v980 = vunpack.c.h.b16 %v830
        %v981 = vunpack.c.l.b16 %v831
        %v982 = vunpack.c.h.b16 %v831
        %v983 = vunpack.c.l.b16 %v832
        %v984 = vunpack.c.h.b16 %v832
        %v985 = vunpack.c.l.b16 %v833
        %v986 = vunpack.c.h.b16 %v833
        %v987 = vunpack.c.l.b16 %v834
        %v988 = vunpack.c.h.b16 %v834
        %v989 = vunpack.c.l.b16 %v835
        %v990 = vunpack.c.h.b16 %v835
        %v991 = vunpack.c.l.b16 %v836
        %v992 = vunpack.c.h.b16 %v836
        %v993 = vunpack.c.l.b16 %v837
        %v994 = vunpack.c.h.b16 %v837
        %v995 = vunpack.c.l.b16 %v838
        %v996 = vunpack.c.h.b16 %v838
        %v997 = vunpack.c.l.b16 %v839
        %v998 = vunpack.c.h.b16 %v839
        %v999 = vunpack.c.l.b16 %v840
        %v1000 = vunpack.c.h.b16 %v840
        %v1001 = vunpack.c.l.b16 %v841
        %v1002 = vunpack.c.h.b16 %v841
        %v1003 = vunpack.c.l.b16 %v842
        %v1004 = vunpack.c.h.b16 %v842
        %v1005 = vunpack.c.l.b16 %v843
        %v1006 = vunpack.c.h.b16 %v843
        %v1007 = vunpack.c.l.b16 %v844
        %v1008 = vunpack.c.h.b16 %v844
        %v1009 = vunpack.c.l.b16 %v845
        %v1010 = vunpack.c.h.b16 %v845
        %v1011 = vunpack.c.l.b16 %v846
        %v1012 = vunpack.c.h.b16 %v846
        %v1013 = vunpack.c.l.b16 %v847
        %v1014 = vunpack.c.h.b16 %v847
        %v1015 = vunpack.c.l.b16 %v848
        %v1016 = vunpack.c.h.b16 %v848
        %v1017 = vunpack.c.l.b16 %v849
        %v1018 = vunpack.c.h.b16 %v849
        %v1019 = vunpack.c.l.b16 %v850
        %v1020 = vunpack.c.h.b16 %v850
        %v1021 = vunpack.c.l.b16 %v851
        %v1022 = vunpack.c.h.b16 %v851
        %v1023 = vunpack.c.l.b16 %v852
        %v1024 = vunpack.c.h.b16 %v852
        %v1025 = vunpack.c.l.b16 %v853
        %v1026 = vunpack.c.h.b16 %v853
        %v1027 = vunpack.c.l.b16 %v854
        %v1028 = vunpack.c.h.b16 %v854
        %v1029 = vunpack.c.l.b16 %v855
        %v1030 = vunpack.c.h.b16 %v855
        %v1031 = vunpack.c.l.b16 %v856
        %v1032 = vunpack.c.h.b16 %v856
        %v1033 = vunpack.c.l.b16 %v857
        %v1034 = vunpack.c.h.b16 %v857
        %v1035 = vunpack.c.l.b16 %v858
        %v1036 = vunpack.c.h.b16 %v858
        %v1037 = vunpack.c.l.b16 %v859
        %v1038 = vunpack.c.h.b16 %v859
        %v1039 = vunpack.c.l.b16 %v860
        %v1040 = vunpack.c.h.b16 %v860
        %v1041 = vunpack.c.l.b16 %v861
        %v1042 = vunpack.c.h.b16 %v861
        %v1043 = vunpack.c.l.b16 %v862
        %v1044 = vunpack.c.h.b16 %v862
        %v1045 = vunpack.c.l.b16 %v863
        %v1046 = vunpack.c.h.b16 %v863
        %v1047 = vunpack.c.l.b16 %v864
        %v1048 = vunpack.c.h.b16 %v864
        %v1049 = vunpack.c.l.b16 %v865
        %v1050 = vunpack.c.h.b16 %v865
        %v1051 = vunpack.c.l.b16 %v866
        %v1052 = vunpack.c.h.b16 %v866
        %v1053 = vunpack.c.l.b16 %v867
        %v1054 = vunpack.c.h.b16 %v867
        %v1055 = vunpack.c.l.b16 %v868
        %v1056 = vunpack.c.h.b16 %v868
        %v1057 = vunpack.c.l.b16 %v869
        %v1058 = vunpack.c.h.b16 %v869
        %v1059 = vunpack.c.l.b16 %v870
        %v1060 = vunpack.c.h.b16 %v870
        %v1061 = vunpack.c.l.b16 %v871
        %v1062 = vunpack.c.h.b16 %v871
        %v1063 = vunpack.c.l.b16 %v872
        %v1064 = vunpack.c.h.b16 %v872
        %v1065 = vunpack.c.l.b16 %v873
        %v1066 = vunpack.c.h.b16 %v873
        %v1067 = vunpack.c.l.b16 %v874
        %v1068 = vunpack.c.h.b16 %v874
        %v1069 = vunpack.c.l.b16 %v875
        %v1070 = vunpack.c.h.b16 %v875
        %v1071 = vunpack.c.l.b16 %v876
        %v1072 = vunpack.c.h.b16 %v876
        %v1073 = vunpack.c.l.b16 %v877
        %v1074 = vunpack.c.h.b16 %v877
        %v1075 = vunpack.c.l.b16 %v878
        %v1076 = vunpack.c.h.b16 %v878
        %v1077 = vpack.c.b16 %v951, %v949
        %v1078 = vpack.c.b16 %v952, %v950
        %v1079 = vpack.c.b16 %v955, %v953
        %v1080 = vpack.c.b16 %v956, %v954
        %v1081 = vpack.c.b16 %v959, %v957
        %v1082 = vpack.c.b16 %v960, %v958
        %v1083 = vpack.c.b16 %v963, %v961
        %v1084 = vpack.c.b16 %v964, %v962
        %v1085 = vpack.c.b16 %v967, %v965
        %v1086 = vpack.c.b16 %v968, %v966
        %v1087 = vpack.c.b16 %v971, %v969
        %v1088 = vpack.c.b16 %v972, %v970
        %v1089 = vpack.c.b16 %v975, %v973
        %v1090 = vpack.c.b16 %v976, %v974
        %v1091 = vpack.c.b16 %v979, %v977
        %v1092 = vpack.c.b16 %v980, %v978
        %v1093 = vpack.c.b16 %v983, %v981
        %v1094 = vpack.c.b16 %v984, %v982
        %v1095 = vpack.c.b16 %v987, %v985
        %v1096 = vpack.c.b16 %v988, %v986
        %v1097 = vpack.c.b16 %v991, %v989
        %v1098 = vpack.c.b16 %v992, %v990
        %v1099 = vpack.c.b16 %v995, %v993
        %v1100 = vpack.c.b16 %v996, %v994
        %v1101 = vpack.c.b16 %v999, %v997
        %v1102 = vpack.c.b16 %v1000, %v998
        %v1103 = vpack.c.b16 %v1003, %v1001
        %v1104 = vpack.c.b16 %v1004, %v1002
        %v1105 = vpack.c.b16 %v1007, %v1005
        %v1106 = vpack.c.b16 %v1008, %v1006
        %v1107 = vpack.c.b16 %v1011, %v1009
        %v1108 = vpack.c.b16 %v1012, %v1010
        %v1109 = vpack.c.b16 %v1015, %v1013
        %v1110 = vpack.c.b16 %v1016, %v1014
        %v1111 = vpack.c.b16 %v1019, %v1017
        %v1112 = vpack.c.b16 %v1020, %v1018
        %v1113 = vpack.c.b16 %v1023, %v1021
        %v1114 = vpack.c.b16 %v1024, %v1022
        %v1115 = vpack.c.b16 %v1027, %v1025
        %v1116 = vpack.c.b16 %v1028, %v1026
        %v1117 = vpack.c.b16 %v1031, %v1029
        %v1118 = vpack.c.b16 %v1032, %v1030
        %v1119 = vpack.c.b16 %v1035, %v1033
        %v1120 = vpack.c.b16 %v1036, %v1034
        %v1121 = vpack.c.b16 %v1039, %v1037
        %v1122 = vpack.c.b16 %v1040, %v1038
        %v1123 = vpack.c.b16 %v1043, %v1041
        %v1124 = vpack.c.b16 %v1044, %v1042
        %v1125 = vpack.c.b16 %v1047, %v1045
        %v1126 = vpack.c.b16 %v1048, %v1046
        %v1127 = vpack.c.b16 %v1051, %v1049
        %v1128 = vpack.c.b16 %v1052, %v1050
        %v1129 = vpack.c.b16 %v1055, %v1053
        %v1130 = vpack.c.b16 %v1056, %v1054
        %v1131 = vpack.c.b16 %v1059, %v1057
        %v1132 = vpack.c.b16 %v1060, %v1058
        %v1133 = vpack.c.b16 %v1063, %v1061
        %v1134 = vpack.c.b16 %v1064, %v1062
        %v1135 = vpack.c.b16 %v1067, %v1065
        %v1136 = vpack.c.b16 %v1068, %v1066
        %v1137 = vpack.c.b16 %v1071, %v1069
        %v1138 = vpack.c.b16 %v1072, %v1070
        %v1139 = vpack.c.b16 %v1075, %v1073
        %v1140 = vpack.c.b16 %v1076, %v1074
        %1205 = vmatpush.bf16.msra.mxu0 %v1091
        %1206 = vmatpush.bf16.msra.mxu0 %v1089
        %1207 = vmatpush.bf16.msra.mxu0 %v1087
        %1208 = vmatpush.bf16.msra.mxu0 %v1085
        %1209 = vmatpush.bf16.msra.mxu0 %v1083
        %1210 = vmatpush.bf16.msra.mxu0 %v1081
        %1211 = vmatpush.bf16.msra.mxu0 %v1079
        %1212 = vmatpush.bf16.msra.mxu0 %v1077
        %1213 = vmatmul.bf16.gmra.mxu0 %v738
        %v1214 = vpop.f32.mrf.mxu0
        %v1215 = vadd.f32 %v881, %v1214
        %v1216 = vpop.f32.mrf.mxu0
        %1217 = vdwg.mxu0
        %1218 = vmatpush.bf16.msra.mxu0 %v1107
        %1219 = vmatpush.bf16.msra.mxu0 %v1105
        %1220 = vmatpush.bf16.msra.mxu0 %v1103
        %1221 = vmatpush.bf16.msra.mxu0 %v1101
        %1222 = vmatpush.bf16.msra.mxu0 %v1099
        %1223 = vmatpush.bf16.msra.mxu0 %v1097
        %1224 = vmatpush.bf16.msra.mxu0 %v1095
        %1225 = vmatpush.bf16.msra.mxu0 %v1093
        %1226 = vmatmul.bf16.gmra.mxu0 %v739
        %v1227 = vpop.f32.mrf.mxu0
        %v1228 = vadd.f32 %v1215, %v1227
        %v1229 = vpop.f32.mrf.mxu0
        %1230 = vdwg.mxu0
        %1231 = vmatpush.bf16.msra.mxu0 %v1123
        %1232 = vmatpush.bf16.msra.mxu0 %v1121
        %1233 = vmatpush.bf16.msra.mxu0 %v1119
        %1234 = vmatpush.bf16.msra.mxu0 %v1117
        %1235 = vmatpush.bf16.msra.mxu0 %v1115
        %1236 = vmatpush.bf16.msra.mxu0 %v1113
        %1237 = vmatpush.bf16.msra.mxu0 %v1111
        %1238 = vmatpush.bf16.msra.mxu0 %v1109
        %1239 = vmatmul.bf16.gmra.mxu0 %v740
        %v1240 = vpop.f32.mrf.mxu0
        %v1241 = vadd.f32 %v1228, %v1240
        %v1242 = vpop.f32.mrf.mxu0
        %1243 = vdwg.mxu0
        %1244 = vmatpush.bf16.msra.mxu0 %v1139
        %1245 = vmatpush.bf16.msra.mxu0 %v1137
        %1246 = vmatpush.bf16.msra.mxu0 %v1135
        %1247 = vmatpush.bf16.msra.mxu0 %v1133
        %1248 = vmatpush.bf16.msra.mxu0 %v1131
        %1249 = vmatpush.bf16.msra.mxu0 %v1129
        %1250 = vmatpush.bf16.msra.mxu0 %v1127
        %1251 = vmatpush.bf16.msra.mxu0 %v1125
        %1252 = vmatmul.bf16.gmra.mxu0 %v741
        %v1253 = vpop.f32.mrf.mxu0
        %v1254 = vadd.f32 %v1241, %v1253
        %v1255 = vpop.f32.mrf.mxu0
        %1256 = vdwg.mxu0
        %1257 = vmatpush.bf16.msra.mxu0 %v1092
        %1258 = vmatpush.bf16.msra.mxu0 %v1090
        %1259 = vmatpush.bf16.msra.mxu0 %v1088
        %1260 = vmatpush.bf16.msra.mxu0 %v1086
        %1261 = vmatpush.bf16.msra.mxu0 %v1084
        %1262 = vmatpush.bf16.msra.mxu0 %v1082
        %1263 = vmatpush.bf16.msra.mxu0 %v1080
        %1264 = vmatpush.bf16.msra.mxu0 %v1078
        %1265 = vmatmul.bf16.gmra.mxu0 %v738
        %v1266 = vpop.f32.mrf.mxu0
        %v1267 = vadd.f32 %v882, %v1266
        %v1268 = vpop.f32.mrf.mxu0
        %1269 = vdwg.mxu0
        %1270 = vmatpush.bf16.msra.mxu0 %v1108
        %1271 = vmatpush.bf16.msra.mxu0 %v1106
        %1272 = vmatpush.bf16.msra.mxu0 %v1104
        %1273 = vmatpush.bf16.msra.mxu0 %v1102
        %1274 = vmatpush.bf16.msra.mxu0 %v1100
        %1275 = vmatpush.bf16.msra.mxu0 %v1098
        %1276 = vmatpush.bf16.msra.mxu0 %v1096
        %1277 = vmatpush.bf16.msra.mxu0 %v1094
        %1278 = vmatmul.bf16.gmra.mxu0 %v739
        %v1279 = vpop.f32.mrf.mxu0
        %v1280 = vadd.f32 %v1267, %v1279
        %v1281 = vpop.f32.mrf.mxu0
        %1282 = vdwg.mxu0
        %1283 = vmatpush.bf16.msra.mxu0 %v1124
        %1284 = vmatpush.bf16.msra.mxu0 %v1122
        %1285 = vmatpush.bf16.msra.mxu0 %v1120
        %1286 = vmatpush.bf16.msra.mxu0 %v1118
        %1287 = vmatpush.bf16.msra.mxu0 %v1116
        %1288 = vmatpush.bf16.msra.mxu0 %v1114
        %1289 = vmatpush.bf16.msra.mxu0 %v1112
        %1290 = vmatpush.bf16.msra.mxu0 %v1110
        %1291 = vmatmul.bf16.gmra.mxu0 %v740
        %v1292 = vpop.f32.mrf.mxu0
        %v1293 = vadd.f32 %v1280, %v1292
        %v1294 = vpop.f32.mrf.mxu0
        %1295 = vdwg.mxu0
        %1296 = vmatpush.bf16.msra.mxu0 %v1140
        %1297 = vmatpush.bf16.msra.mxu0 %v1138
        %1298 = vmatpush.bf16.msra.mxu0 %v1136
        %1299 = vmatpush.bf16.msra.mxu0 %v1134
        %1300 = vmatpush.bf16.msra.mxu0 %v1132
        %1301 = vmatpush.bf16.msra.mxu0 %v1130
        %1302 = vmatpush.bf16.msra.mxu0 %v1128
        %1303 = vmatpush.bf16.msra.mxu0 %v1126
        %1304 = vmatmul.bf16.gmra.mxu0 %v741
        %v1305 = vpop.f32.mrf.mxu0
        %v1306 = vadd.f32 %v1293, %v1305
        %v1307 = vpop.f32.mrf.mxu0
        %1308 = vdwg.mxu0
        %v1309 = vadd.f32 %v799, %v1254
        %v1310 = vadd.f32 %v812, %v1306
        %v1311 = vmax.f32 %v1309, 0.0
        %v1312 = vmax.f32 %v1310, 0.0
        %v1313 = vpack.c.bf16 %v1311, %v1311
        %v1314 = vpack.c.bf16 %v1312, %v1312
        %v1315 = vld [vmem:[#allocation10] sm:$0xff]
        %v1316 = vld [vmem:[#allocation10 + $0x8] sm:$0xff]
        %v1317 = vld [vmem:[#allocation10 + $0x10] sm:$0xff]
        %v1318 = vld [vmem:[#allocation10 + $0x18] sm:$0xff]
        %v1319 = vld [vmem:[#allocation10 + $0x20] sm:$0xff]
        %v1320 = vld [vmem:[#allocation10 + $0x28] sm:$0xff]
        %v1321 = vld [vmem:[#allocation10 + $0x30] sm:$0xff]
        %v1322 = vld [vmem:[#allocation10 + $0x38] sm:$0xff]
        %v1323 = vld [vmem:[#allocation10 + $0x40] sm:$0xff]
        %v1324 = vld [vmem:[#allocation10 + $0x48] sm:$0xff]
        %v1325 = vld [vmem:[#allocation10 + $0x50] sm:$0xff]
        %v1326 = vld [vmem:[#allocation10 + $0x58] sm:$0xff]
        %v1327 = vld [vmem:[#allocation10 + $0x60] sm:$0xff]
        %v1328 = vld [vmem:[#allocation10 + $0x68] sm:$0xff]
        %v1329 = vld [vmem:[#allocation10 + $0x70] sm:$0xff]
        %v1330 = vld [vmem:[#allocation10 + $0x78] sm:$0xff]
        %v1331 = vld [vmem:[#allocation10 + $0x80] sm:$0xff]
        %v1332 = vld [vmem:[#allocation10 + $0x88] sm:$0xff]
        %v1333 = vld [vmem:[#allocation10 + $0x90] sm:$0xff]
        %v1334 = vld [vmem:[#allocation10 + $0x98] sm:$0xff]
        %v1335 = vld [vmem:[#allocation10 + $0xa0] sm:$0xff]
        %v1336 = vld [vmem:[#allocation10 + $0xa8] sm:$0xff]
        %v1337 = vld [vmem:[#allocation10 + $0xb0] sm:$0xff]
        %v1338 = vld [vmem:[#allocation10 + $0xb8] sm:$0xff]
        %v1339 = vld [vmem:[#allocation10 + $0xc0] sm:$0xff]
        %v1340 = vld [vmem:[#allocation10 + $0xc8] sm:$0xff]
        %v1341 = vld [vmem:[#allocation10 + $0xd0] sm:$0xff]
        %v1342 = vld [vmem:[#allocation10 + $0xd8] sm:$0xff]
        %v1343 = vld [vmem:[#allocation10 + $0xe0] sm:$0xff]
        %v1344 = vld [vmem:[#allocation10 + $0xe8] sm:$0xff]
        %v1345 = vld [vmem:[#allocation10 + $0xf0] sm:$0xff]
        %v1346 = vld [vmem:[#allocation10 + $0xf8] sm:$0xff]
        %v1347 = vld [vmem:[#allocation12] sm:$0x3]
        %v1349 = vperm.slane %v1347, 0
        %v1350 = vperm.slane %v1347, 1
        %v1385 = vunpack.c.l.b16 %v1315
        %v1386 = vunpack.c.h.b16 %v1315
        %v1387 = vunpack.c.l.b16 %v1316
        %v1388 = vunpack.c.h.b16 %v1316
        %v1389 = vunpack.c.l.b16 %v1317
        %v1390 = vunpack.c.h.b16 %v1317
        %v1391 = vunpack.c.l.b16 %v1318
        %v1392 = vunpack.c.h.b16 %v1318
        %v1393 = vunpack.c.l.b16 %v1319
        %v1394 = vunpack.c.h.b16 %v1319
        %v1395 = vunpack.c.l.b16 %v1320
        %v1396 = vunpack.c.h.b16 %v1320
        %v1397 = vunpack.c.l.b16 %v1321
        %v1398 = vunpack.c.h.b16 %v1321
        %v1399 = vunpack.c.l.b16 %v1322
        %v1400 = vunpack.c.h.b16 %v1322
        %v1401 = vunpack.c.l.b16 %v1323
        %v1402 = vunpack.c.h.b16 %v1323
        %v1403 = vunpack.c.l.b16 %v1324
        %v1404 = vunpack.c.h.b16 %v1324
        %v1405 = vunpack.c.l.b16 %v1325
        %v1406 = vunpack.c.h.b16 %v1325
        %v1407 = vunpack.c.l.b16 %v1326
        %v1408 = vunpack.c.h.b16 %v1326
        %v1409 = vunpack.c.l.b16 %v1327
        %v1410 = vunpack.c.h.b16 %v1327
        %v1411 = vunpack.c.l.b16 %v1328
        %v1412 = vunpack.c.h.b16 %v1328
        %v1413 = vunpack.c.l.b16 %v1329
        %v1414 = vunpack.c.h.b16 %v1329
        %v1415 = vunpack.c.l.b16 %v1330
        %v1416 = vunpack.c.h.b16 %v1330
        %v1417 = vunpack.c.l.b16 %v1331
        %v1418 = vunpack.c.h.b16 %v1331
        %v1419 = vunpack.c.l.b16 %v1332
        %v1420 = vunpack.c.h.b16 %v1332
        %v1421 = vunpack.c.l.b16 %v1333
        %v1422 = vunpack.c.h.b16 %v1333
        %v1423 = vunpack.c.l.b16 %v1334
        %v1424 = vunpack.c.h.b16 %v1334
        %v1425 = vunpack.c.l.b16 %v1335
        %v1426 = vunpack.c.h.b16 %v1335
        %v1427 = vunpack.c.l.b16 %v1336
        %v1428 = vunpack.c.h.b16 %v1336
        %v1429 = vunpack.c.l.b16 %v1337
        %v1430 = vunpack.c.h.b16 %v1337
        %v1431 = vunpack.c.l.b16 %v1338
        %v1432 = vunpack.c.h.b16 %v1338
        %v1433 = vunpack.c.l.b16 %v1339
        %v1434 = vunpack.c.h.b16 %v1339
        %v1435 = vunpack.c.l.b16 %v1340
        %v1436 = vunpack.c.h.b16 %v1340
        %v1437 = vunpack.c.l.b16 %v1341
        %v1438 = vunpack.c.h.b16 %v1341
        %v1439 = vunpack.c.l.b16 %v1342
        %v1440 = vunpack.c.h.b16 %v1342
        %v1441 = vunpack.c.l.b16 %v1343
        %v1442 = vunpack.c.h.b16 %v1343
        %v1443 = vunpack.c.l.b16 %v1344
        %v1444 = vunpack.c.h.b16 %v1344
        %v1445 = vunpack.c.l.b16 %v1345
        %v1446 = vunpack.c.h.b16 %v1345
        %v1447 = vunpack.c.l.b16 %v1346
        %v1448 = vunpack.c.h.b16 %v1346
        %v1449 = vpack.c.b16 %v1387, %v1385
        %v1450 = vpack.c.b16 %v1388, %v1386
        %v1451 = vpack.c.b16 %v1391, %v1389
        %v1452 = vpack.c.b16 %v1392, %v1390
        %v1453 = vpack.c.b16 %v1395, %v1393
        %v1454 = vpack.c.b16 %v1396, %v1394
        %v1455 = vpack.c.b16 %v1399, %v1397
        %v1456 = vpack.c.b16 %v1400, %v1398
        %v1457 = vpack.c.b16 %v1403, %v1401
        %v1458 = vpack.c.b16 %v1404, %v1402
        %v1459 = vpack.c.b16 %v1407, %v1405
        %v1460 = vpack.c.b16 %v1408, %v1406
        %v1461 = vpack.c.b16 %v1411, %v1409
        %v1462 = vpack.c.b16 %v1412, %v1410
        %v1463 = vpack.c.b16 %v1415, %v1413
        %v1464 = vpack.c.b16 %v1416, %v1414
        %v1465 = vpack.c.b16 %v1419, %v1417
        %v1466 = vpack.c.b16 %v1420, %v1418
        %v1467 = vpack.c.b16 %v1423, %v1421
        %v1468 = vpack.c.b16 %v1424, %v1422
        %v1469 = vpack.c.b16 %v1427, %v1425
        %v1470 = vpack.c.b16 %v1428, %v1426
        %v1471 = vpack.c.b16 %v1431, %v1429
        %v1472 = vpack.c.b16 %v1432, %v1430
        %v1473 = vpack.c.b16 %v1435, %v1433
        %v1474 = vpack.c.b16 %v1436, %v1434
        %v1475 = vpack.c.b16 %v1439, %v1437
        %v1476 = vpack.c.b16 %v1440, %v1438
        %v1477 = vpack.c.b16 %v1443, %v1441
        %v1478 = vpack.c.b16 %v1444, %v1442
        %v1479 = vpack.c.b16 %v1447, %v1445
        %v1480 = vpack.c.b16 %v1448, %v1446
        %1513 = vmatpush.bf16.msra.mxu0 %v1463
        %1514 = vmatpush.bf16.msra.mxu0 %v1461
        %1515 = vmatpush.bf16.msra.mxu0 %v1459
        %1516 = vmatpush.bf16.msra.mxu0 %v1457
        %1517 = vmatpush.bf16.msra.mxu0 %v1455
        %1518 = vmatpush.bf16.msra.mxu0 %v1453
        %1519 = vmatpush.bf16.msra.mxu0 %v1451
        %1520 = vmatpush.bf16.msra.mxu0 %v1449
        %1521 = vmatmul.bf16.gmra.mxu0 %v1313
        %v1522 = vpop.f32.mrf.mxu0
        %v1523 = vadd.f32 %v1349, %v1522
        %v1524 = vpop.f32.mrf.mxu0
        %1525 = vdwg.mxu0
        %1526 = vmatpush.bf16.msra.mxu0 %v1479
        %1527 = vmatpush.bf16.msra.mxu0 %v1477
        %1528 = vmatpush.bf16.msra.mxu0 %v1475
        %1529 = vmatpush.bf16.msra.mxu0 %v1473
        %1530 = vmatpush.bf16.msra.mxu0 %v1471
        %1531 = vmatpush.bf16.msra.mxu0 %v1469
        %1532 = vmatpush.bf16.msra.mxu0 %v1467
        %1533 = vmatpush.bf16.msra.mxu0 %v1465
        %1534 = vmatmul.bf16.gmra.mxu0 %v1314
        %v1535 = vpop.f32.mrf.mxu0
        %v1536 = vadd.f32 %v1523, %v1535
        %v1537 = vpop.f32.mrf.mxu0
        %1538 = vdwg.mxu0
        %1539 = vmatpush.bf16.msra.mxu0 %v1464
        %1540 = vmatpush.bf16.msra.mxu0 %v1462
        %1541 = vmatpush.bf16.msra.mxu0 %v1460
        %1542 = vmatpush.bf16.msra.mxu0 %v1458
        %1543 = vmatpush.bf16.msra.mxu0 %v1456
        %1544 = vmatpush.bf16.msra.mxu0 %v1454
        %1545 = vmatpush.bf16.msra.mxu0 %v1452
        %1546 = vmatpush.bf16.msra.mxu0 %v1450
        %1547 = vmatmul.bf16.gmra.mxu0 %v1313
        %v1548 = vpop.f32.mrf.mxu0
        %v1549 = vadd.f32 %v1350, %v1548
        %v1550 = vpop.f32.mrf.mxu0
        %1551 = vdwg.mxu0
        %1552 = vmatpush.bf16.msra.mxu0 %v1480
        %1553 = vmatpush.bf16.msra.mxu0 %v1478
        %1554 = vmatpush.bf16.msra.mxu0 %v1476
        %1555 = vmatpush.bf16.msra.mxu0 %v1474
        %1556 = vmatpush.bf16.msra.mxu0 %v1472
        %1557 = vmatpush.bf16.msra.mxu0 %v1470
        %1558 = vmatpush.bf16.msra.mxu0 %v1468
        %1559 = vmatpush.bf16.msra.mxu0 %v1466
        %1560 = vmatmul.bf16.gmra.mxu0 %v1314
        %v1561 = vpop.f32.mrf.mxu0
        %v1562 = vadd.f32 %v1549, %v1561
        %v1563 = vpop.f32.mrf.mxu0
        %1564 = vdwg.mxu0
        %v1565 = vmax.f32 %v1536, 0.0
        %v1566 = vmax.f32 %v1562, 0.0
        %v1567 = vadd.f32 %v1311, %v1565
        %v1568 = vadd.f32 %v1312, %v1566
        %v1569 = vpack.c.bf16 %v1567, %v1567
        %v1570 = vpack.c.bf16 %v1568, %v1568
        %s1571 = scalar_lea.vmem [#allocation10], 256
        %v1572 = vld [vmem:[%s1571] sm:$0xff]
        %v1573 = vld [vmem:[%s1571 + $0x8] sm:$0xff]
        %v1574 = vld [vmem:[%s1571 + $0x10] sm:$0xff]
        %v1575 = vld [vmem:[%s1571 + $0x18] sm:$0xff]
        %v1576 = vld [vmem:[%s1571 + $0x20] sm:$0xff]
        %v1577 = vld [vmem:[%s1571 + $0x28] sm:$0xff]
        %v1578 = vld [vmem:[%s1571 + $0x30] sm:$0xff]
        %v1579 = vld [vmem:[%s1571 + $0x38] sm:$0xff]
        %v1580 = vld [vmem:[%s1571 + $0x40] sm:$0xff]
        %v1581 = vld [vmem:[%s1571 + $0x48] sm:$0xff]
        %v1582 = vld [vmem:[%s1571 + $0x50] sm:$0xff]
        %v1583 = vld [vmem:[%s1571 + $0x58] sm:$0xff]
        %v1584 = vld [vmem:[%s1571 + $0x60] sm:$0xff]
        %v1585 = vld [vmem:[%s1571 + $0x68] sm:$0xff]
        %v1586 = vld [vmem:[%s1571 + $0x70] sm:$0xff]
        %v1587 = vld [vmem:[%s1571 + $0x78] sm:$0xff]
        %v1588 = vld [vmem:[%s1571 + $0x80] sm:$0xff]
        %v1589 = vld [vmem:[%s1571 + $0x88] sm:$0xff]
        %v1590 = vld [vmem:[%s1571 + $0x90] sm:$0xff]
        %v1591 = vld [vmem:[%s1571 + $0x98] sm:$0xff]
        %v1592 = vld [vmem:[%s1571 + $0xa0] sm:$0xff]
        %v1593 = vld [vmem:[%s1571 + $0xa8] sm:$0xff]
        %v1594 = vld [vmem:[%s1571 + $0xb0] sm:$0xff]
        %v1595 = vld [vmem:[%s1571 + $0xb8] sm:$0xff]
        %v1596 = vld [vmem:[%s1571 + $0xc0] sm:$0xff]
        %v1597 = vld [vmem:[%s1571 + $0xc8] sm:$0xff]
        %v1598 = vld [vmem:[%s1571 + $0xd0] sm:$0xff]
        %v1599 = vld [vmem:[%s1571 + $0xd8] sm:$0xff]
        %v1600 = vld [vmem:[%s1571 + $0xe0] sm:$0xff]
        %v1601 = vld [vmem:[%s1571 + $0xe8] sm:$0xff]
        %v1602 = vld [vmem:[%s1571 + $0xf0] sm:$0xff]
        %v1603 = vld [vmem:[%s1571 + $0xf8] sm:$0xff]
        %s1604 = scalar_lea.vmem [#allocation12], 2
        %v1605 = vld [vmem:[%s1604] sm:$0x3]
        %v1607 = vperm.slane %v1605, 0
        %v1608 = vperm.slane %v1605, 1
        %v1643 = vunpack.c.l.b16 %v1572
        %v1644 = vunpack.c.h.b16 %v1572
        %v1645 = vunpack.c.l.b16 %v1573
        %v1646 = vunpack.c.h.b16 %v1573
        %v1647 = vunpack.c.l.b16 %v1574
        %v1648 = vunpack.c.h.b16 %v1574
        %v1649 = vunpack.c.l.b16 %v1575
        %v1650 = vunpack.c.h.b16 %v1575
        %v1651 = vunpack.c.l.b16 %v1576
        %v1652 = vunpack.c.h.b16 %v1576
        %v1653 = vunpack.c.l.b16 %v1577
        %v1654 = vunpack.c.h.b16 %v1577
        %v1655 = vunpack.c.l.b16 %v1578
        %v1656 = vunpack.c.h.b16 %v1578
        %v1657 = vunpack.c.l.b16 %v1579
        %v1658 = vunpack.c.h.b16 %v1579
        %v1659 = vunpack.c.l.b16 %v1580
        %v1660 = vunpack.c.h.b16 %v1580
        %v1661 = vunpack.c.l.b16 %v1581
        %v1662 = vunpack.c.h.b16 %v1581
        %v1663 = vunpack.c.l.b16 %v1582
        %v1664 = vunpack.c.h.b16 %v1582
        %v1665 = vunpack.c.l.b16 %v1583
        %v1666 = vunpack.c.h.b16 %v1583
        %v1667 = vunpack.c.l.b16 %v1584
        %v1668 = vunpack.c.h.b16 %v1584
        %v1669 = vunpack.c.l.b16 %v1585
        %v1670 = vunpack.c.h.b16 %v1585
        %v1671 = vunpack.c.l.b16 %v1586
        %v1672 = vunpack.c.h.b16 %v1586
        %v1673 = vunpack.c.l.b16 %v1587
        %v1674 = vunpack.c.h.b16 %v1587
        %v1675 = vunpack.c.l.b16 %v1588
        %v1676 = vunpack.c.h.b16 %v1588
        %v1677 = vunpack.c.l.b16 %v1589
        %v1678 = vunpack.c.h.b16 %v1589
        %v1679 = vunpack.c.l.b16 %v1590
        %v1680 = vunpack.c.h.b16 %v1590
        %v1681 = vunpack.c.l.b16 %v1591
        %v1682 = vunpack.c.h.b16 %v1591
        %v1683 = vunpack.c.l.b16 %v1592
        %v1684 = vunpack.c.h.b16 %v1592
        %v1685 = vunpack.c.l.b16 %v1593
        %v1686 = vunpack.c.h.b16 %v1593
        %v1687 = vunpack.c.l.b16 %v1594
        %v1688 = vunpack.c.h.b16 %v1594
        %v1689 = vunpack.c.l.b16 %v1595
        %v1690 = vunpack.c.h.b16 %v1595
        %v1691 = vunpack.c.l.b16 %v1596
        %v1692 = vunpack.c.h.b16 %v1596
        %v1693 = vunpack.c.l.b16 %v1597
        %v1694 = vunpack.c.h.b16 %v1597
        %v1695 = vunpack.c.l.b16 %v1598
        %v1696 = vunpack.c.h.b16 %v1598
        %v1697 = vunpack.c.l.b16 %v1599
        %v1698 = vunpack.c.h.b16 %v1599
        %v1699 = vunpack.c.l.b16 %v1600
        %v1700 = vunpack.c.h.b16 %v1600
        %v1701 = vunpack.c.l.b16 %v1601
        %v1702 = vunpack.c.h.b16 %v1601
        %v1703 = vunpack.c.l.b16 %v1602
        %v1704 = vunpack.c.h.b16 %v1602
        %v1705 = vunpack.c.l.b16 %v1603
        %v1706 = vunpack.c.h.b16 %v1603
        %v1707 = vpack.c.b16 %v1645, %v1643
        %v1708 = vpack.c.b16 %v1646, %v1644
        %v1709 = vpack.c.b16 %v1649, %v1647
        %v1710 = vpack.c.b16 %v1650, %v1648
        %v1711 = vpack.c.b16 %v1653, %v1651
        %v1712 = vpack.c.b16 %v1654, %v1652
        %v1713 = vpack.c.b16 %v1657, %v1655
        %v1714 = vpack.c.b16 %v1658, %v1656
        %v1715 = vpack.c.b16 %v1661, %v1659
        %v1716 = vpack.c.b16 %v1662, %v1660
        %v1717 = vpack.c.b16 %v1665, %v1663
        %v1718 = vpack.c.b16 %v1666, %v1664
        %v1719 = vpack.c.b16 %v1669, %v1667
        %v1720 = vpack.c.b16 %v1670, %v1668
        %v1721 = vpack.c.b16 %v1673, %v1671
        %v1722 = vpack.c.b16 %v1674, %v1672
        %v1723 = vpack.c.b16 %v1677, %v1675
        %v1724 = vpack.c.b16 %v1678, %v1676
        %v1725 = vpack.c.b16 %v1681, %v1679
        %v1726 = vpack.c.b16 %v1682, %v1680
        %v1727 = vpack.c.b16 %v1685, %v1683
        %v1728 = vpack.c.b16 %v1686, %v1684
        %v1729 = vpack.c.b16 %v1689, %v1687
        %v1730 = vpack.c.b16 %v1690, %v1688
        %v1731 = vpack.c.b16 %v1693, %v1691
        %v1732 = vpack.c.b16 %v1694, %v1692
        %v1733 = vpack.c.b16 %v1697, %v1695
        %v1734 = vpack.c.b16 %v1698, %v1696
        %v1735 = vpack.c.b16 %v1701, %v1699
        %v1736 = vpack.c.b16 %v1702, %v1700
        %v1737 = vpack.c.b16 %v1705, %v1703
        %v1738 = vpack.c.b16 %v1706, %v1704
        %1771 = vmatpush.bf16.msra.mxu0 %v1721
        %1772 = vmatpush.bf16.msra.mxu0 %v1719
        %1773 = vmatpush.bf16.msra.mxu0 %v1717
        %1774 = vmatpush.bf16.msra.mxu0 %v1715
        %1775 = vmatpush.bf16.msra.mxu0 %v1713
        %1776 = vmatpush.bf16.msra.mxu0 %v1711
        %1777 = vmatpush.bf16.msra.mxu0 %v1709
        %1778 = vmatpush.bf16.msra.mxu0 %v1707
        %1779 = vmatmul.bf16.gmra.mxu0 %v1569
        %v1780 = vpop.f32.mrf.mxu0
        %v1781 = vadd.f32 %v1607, %v1780
        %v1782 = vpop.f32.mrf.mxu0
        %1783 = vdwg.mxu0
        %1784 = vmatpush.bf16.msra.mxu0 %v1737
        %1785 = vmatpush.bf16.msra.mxu0 %v1735
        %1786 = vmatpush.bf16.msra.mxu0 %v1733
        %1787 = vmatpush.bf16.msra.mxu0 %v1731
        %1788 = vmatpush.bf16.msra.mxu0 %v1729
        %1789 = vmatpush.bf16.msra.mxu0 %v1727
        %1790 = vmatpush.bf16.msra.mxu0 %v1725
        %1791 = vmatpush.bf16.msra.mxu0 %v1723
        %1792 = vmatmul.bf16.gmra.mxu0 %v1570
        %v1793 = vpop.f32.mrf.mxu0
        %v1794 = vadd.f32 %v1781, %v1793
        %v1795 = vpop.f32.mrf.mxu0
        %1796 = vdwg.mxu0
        %1797 = vmatpush.bf16.msra.mxu0 %v1722
        %1798 = vmatpush.bf16.msra.mxu0 %v1720
        %1799 = vmatpush.bf16.msra.mxu0 %v1718
        %1800 = vmatpush.bf16.msra.mxu0 %v1716
        %1801 = vmatpush.bf16.msra.mxu0 %v1714
        %1802 = vmatpush.bf16.msra.mxu0 %v1712
        %1803 = vmatpush.bf16.msra.mxu0 %v1710
        %1804 = vmatpush.bf16.msra.mxu0 %v1708
        %1805 = vmatmul.bf16.gmra.mxu0 %v1569
        %v1806 = vpop.f32.mrf.mxu0
        %v1807 = vadd.f32 %v1608, %v1806
        %v1808 = vpop.f32.mrf.mxu0
        %1809 = vdwg.mxu0
        %1810 = vmatpush.bf16.msra.mxu0 %v1738
        %1811 = vmatpush.bf16.msra.mxu0 %v1736
        %1812 = vmatpush.bf16.msra.mxu0 %v1734
        %1813 = vmatpush.bf16.msra.mxu0 %v1732
        %1814 = vmatpush.bf16.msra.mxu0 %v1730
        %1815 = vmatpush.bf16.msra.mxu0 %v1728
        %1816 = vmatpush.bf16.msra.mxu0 %v1726
        %1817 = vmatpush.bf16.msra.mxu0 %v1724
        %1818 = vmatmul.bf16.gmra.mxu0 %v1570
        %v1819 = vpop.f32.mrf.mxu0
        %v1820 = vadd.f32 %v1807, %v1819
        %v1821 = vpop.f32.mrf.mxu0
        %1822 = vdwg.mxu0
        %v1823 = vmax.f32 %v1794, 0.0
        %v1824 = vmax.f32 %v1820, 0.0
        %v1825 = vadd.f32 %v1567, %v1823
        %v1826 = vadd.f32 %v1568, %v1824
        %v1827 = vpack.c.bf16 %v1825, %v1825
        %v1828 = vpack.c.bf16 %v1826, %v1826
        %s1829 = scalar_lea.vmem [#allocation10], 512
        %v1830 = vld [vmem:[%s1829] sm:$0xff]
        %v1831 = vld [vmem:[%s1829 + $0x8] sm:$0xff]
        %v1832 = vld [vmem:[%s1829 + $0x10] sm:$0xff]
        %v1833 = vld [vmem:[%s1829 + $0x18] sm:$0xff]
        %v1834 = vld [vmem:[%s1829 + $0x20] sm:$0xff]
        %v1835 = vld [vmem:[%s1829 + $0x28] sm:$0xff]
        %v1836 = vld [vmem:[%s1829 + $0x30] sm:$0xff]
        %v1837 = vld [vmem:[%s1829 + $0x38] sm:$0xff]
        %v1838 = vld [vmem:[%s1829 + $0x40] sm:$0xff]
        %v1839 = vld [vmem:[%s1829 + $0x48] sm:$0xff]
        %v1840 = vld [vmem:[%s1829 + $0x50] sm:$0xff]
        %v1841 = vld [vmem:[%s1829 + $0x58] sm:$0xff]
        %v1842 = vld [vmem:[%s1829 + $0x60] sm:$0xff]
        %v1843 = vld [vmem:[%s1829 + $0x68] sm:$0xff]
        %v1844 = vld [vmem:[%s1829 + $0x70] sm:$0xff]
        %v1845 = vld [vmem:[%s1829 + $0x78] sm:$0xff]
        %v1846 = vld [vmem:[%s1829 + $0x80] sm:$0xff]
        %v1847 = vld [vmem:[%s1829 + $0x88] sm:$0xff]
        %v1848 = vld [vmem:[%s1829 + $0x90] sm:$0xff]
        %v1849 = vld [vmem:[%s1829 + $0x98] sm:$0xff]
        %v1850 = vld [vmem:[%s1829 + $0xa0] sm:$0xff]
        %v1851 = vld [vmem:[%s1829 + $0xa8] sm:$0xff]
        %v1852 = vld [vmem:[%s1829 + $0xb0] sm:$0xff]
        %v1853 = vld [vmem:[%s1829 + $0xb8] sm:$0xff]
        %v1854 = vld [vmem:[%s1829 + $0xc0] sm:$0xff]
        %v1855 = vld [vmem:[%s1829 + $0xc8] sm:$0xff]
        %v1856 = vld [vmem:[%s1829 + $0xd0] sm:$0xff]
        %v1857 = vld [vmem:[%s1829 + $0xd8] sm:$0xff]
        %v1858 = vld [vmem:[%s1829 + $0xe0] sm:$0xff]
        %v1859 = vld [vmem:[%s1829 + $0xe8] sm:$0xff]
        %v1860 = vld [vmem:[%s1829 + $0xf0] sm:$0xff]
        %v1861 = vld [vmem:[%s1829 + $0xf8] sm:$0xff]
        %s1862 = scalar_lea.vmem [#allocation12], 4
        %v1863 = vld [vmem:[%s1862] sm:$0x3]
        %v1865 = vperm.slane %v1863, 0
        %v1866 = vperm.slane %v1863, 1
        %v1901 = vunpack.c.l.b16 %v1830
        %v1902 = vunpack.c.h.b16 %v1830
        %v1903 = vunpack.c.l.b16 %v1831
        %v1904 = vunpack.c.h.b16 %v1831
        %v1905 = vunpack.c.l.b16 %v1832
        %v1906 = vunpack.c.h.b16 %v1832
        %v1907 = vunpack.c.l.b16 %v1833
        %v1908 = vunpack.c.h.b16 %v1833
        %v1909 = vunpack.c.l.b16 %v1834
        %v1910 = vunpack.c.h.b16 %v1834
        %v1911 = vunpack.c.l.b16 %v1835
        %v1912 = vunpack.c.h.b16 %v1835
        %v1913 = vunpack.c.l.b16 %v1836
        %v1914 = vunpack.c.h.b16 %v1836
        %v1915 = vunpack.c.l.b16 %v1837
        %v1916 = vunpack.c.h.b16 %v1837
        %v1917 = vunpack.c.l.b16 %v1838
        %v1918 = vunpack.c.h.b16 %v1838
        %v1919 = vunpack.c.l.b16 %v1839
        %v1920 = vunpack.c.h.b16 %v1839
        %v1921 = vunpack.c.l.b16 %v1840
        %v1922 = vunpack.c.h.b16 %v1840
        %v1923 = vunpack.c.l.b16 %v1841
        %v1924 = vunpack.c.h.b16 %v1841
        %v1925 = vunpack.c.l.b16 %v1842
        %v1926 = vunpack.c.h.b16 %v1842
        %v1927 = vunpack.c.l.b16 %v1843
        %v1928 = vunpack.c.h.b16 %v1843
        %v1929 = vunpack.c.l.b16 %v1844
        %v1930 = vunpack.c.h.b16 %v1844
        %v1931 = vunpack.c.l.b16 %v1845
        %v1932 = vunpack.c.h.b16 %v1845
        %v1933 = vunpack.c.l.b16 %v1846
        %v1934 = vunpack.c.h.b16 %v1846
        %v1935 = vunpack.c.l.b16 %v1847
        %v1936 = vunpack.c.h.b16 %v1847
        %v1937 = vunpack.c.l.b16 %v1848
        %v1938 = vunpack.c.h.b16 %v1848
        %v1939 = vunpack.c.l.b16 %v1849
        %v1940 = vunpack.c.h.b16 %v1849
        %v1941 = vunpack.c.l.b16 %v1850
        %v1942 = vunpack.c.h.b16 %v1850
        %v1943 = vunpack.c.l.b16 %v1851
        %v1944 = vunpack.c.h.b16 %v1851
        %v1945 = vunpack.c.l.b16 %v1852
        %v1946 = vunpack.c.h.b16 %v1852
        %v1947 = vunpack.c.l.b16 %v1853
        %v1948 = vunpack.c.h.b16 %v1853
        %v1949 = vunpack.c.l.b16 %v1854
        %v1950 = vunpack.c.h.b16 %v1854
        %v1951 = vunpack.c.l.b16 %v1855
        %v1952 = vunpack.c.h.b16 %v1855
        %v1953 = vunpack.c.l.b16 %v1856
        %v1954 = vunpack.c.h.b16 %v1856
        %v1955 = vunpack.c.l.b16 %v1857
        %v1956 = vunpack.c.h.b16 %v1857
        %v1957 = vunpack.c.l.b16 %v1858
        %v1958 = vunpack.c.h.b16 %v1858
        %v1959 = vunpack.c.l.b16 %v1859
        %v1960 = vunpack.c.h.b16 %v1859
        %v1961 = vunpack.c.l.b16 %v1860
        %v1962 = vunpack.c.h.b16 %v1860
        %v1963 = vunpack.c.l.b16 %v1861
        %v1964 = vunpack.c.h.b16 %v1861
        %v1965 = vpack.c.b16 %v1903, %v1901
        %v1966 = vpack.c.b16 %v1904, %v1902
        %v1967 = vpack.c.b16 %v1907, %v1905
        %v1968 = vpack.c.b16 %v1908, %v1906
        %v1969 = vpack.c.b16 %v1911, %v1909
        %v1970 = vpack.c.b16 %v1912, %v1910
        %v1971 = vpack.c.b16 %v1915, %v1913
        %v1972 = vpack.c.b16 %v1916, %v1914
        %v1973 = vpack.c.b16 %v1919, %v1917
        %v1974 = vpack.c.b16 %v1920, %v1918
        %v1975 = vpack.c.b16 %v1923, %v1921
        %v1976 = vpack.c.b16 %v1924, %v1922
        %v1977 = vpack.c.b16 %v1927, %v1925
        %v1978 = vpack.c.b16 %v1928, %v1926
        %v1979 = vpack.c.b16 %v1931, %v1929
        %v1980 = vpack.c.b16 %v1932, %v1930
        %v1981 = vpack.c.b16 %v1935, %v1933
        %v1982 = vpack.c.b16 %v1936, %v1934
        %v1983 = vpack.c.b16 %v1939, %v1937
        %v1984 = vpack.c.b16 %v1940, %v1938
        %v1985 = vpack.c.b16 %v1943, %v1941
        %v1986 = vpack.c.b16 %v1944, %v1942
        %v1987 = vpack.c.b16 %v1947, %v1945
        %v1988 = vpack.c.b16 %v1948, %v1946
        %v1989 = vpack.c.b16 %v1951, %v1949
        %v1990 = vpack.c.b16 %v1952, %v1950
        %v1991 = vpack.c.b16 %v1955, %v1953
        %v1992 = vpack.c.b16 %v1956, %v1954
        %v1993 = vpack.c.b16 %v1959, %v1957
        %v1994 = vpack.c.b16 %v1960, %v1958
        %v1995 = vpack.c.b16 %v1963, %v1961
        %v1996 = vpack.c.b16 %v1964, %v1962
        %2029 = vmatpush.bf16.msra.mxu0 %v1979
        %2030 = vmatpush.bf16.msra.mxu0 %v1977
        %2031 = vmatpush.bf16.msra.mxu0 %v1975
        %2032 = vmatpush.bf16.msra.mxu0 %v1973
        %2033 = vmatpush.bf16.msra.mxu0 %v1971
        %2034 = vmatpush.bf16.msra.mxu0 %v1969
        %2035 = vmatpush.bf16.msra.mxu0 %v1967
        %2036 = vmatpush.bf16.msra.mxu0 %v1965
        %2037 = vmatmul.bf16.gmra.mxu0 %v1827
        %v2038 = vpop.f32.mrf.mxu0
        %v2039 = vadd.f32 %v1865, %v2038
        %v2040 = vpop.f32.mrf.mxu0
        %2041 = vdwg.mxu0
        %2042 = vmatpush.bf16.msra.mxu0 %v1995
        %2043 = vmatpush.bf16.msra.mxu0 %v1993
        %2044 = vmatpush.bf16.msra.mxu0 %v1991
        %2045 = vmatpush.bf16.msra.mxu0 %v1989
        %2046 = vmatpush.bf16.msra.mxu0 %v1987
        %2047 = vmatpush.bf16.msra.mxu0 %v1985
        %2048 = vmatpush.bf16.msra.mxu0 %v1983
        %2049 = vmatpush.bf16.msra.mxu0 %v1981
        %2050 = vmatmul.bf16.gmra.mxu0 %v1828
        %v2051 = vpop.f32.mrf.mxu0
        %v2052 = vadd.f32 %v2039, %v2051
        %v2053 = vpop.f32.mrf.mxu0
        %2054 = vdwg.mxu0
        %2055 = vmatpush.bf16.msra.mxu0 %v1980
        %2056 = vmatpush.bf16.msra.mxu0 %v1978
        %2057 = vmatpush.bf16.msra.mxu0 %v1976
        %2058 = vmatpush.bf16.msra.mxu0 %v1974
        %2059 = vmatpush.bf16.msra.mxu0 %v1972
        %2060 = vmatpush.bf16.msra.mxu0 %v1970
        %2061 = vmatpush.bf16.msra.mxu0 %v1968
        %2062 = vmatpush.bf16.msra.mxu0 %v1966
        %2063 = vmatmul.bf16.gmra.mxu0 %v1827
        %v2064 = vpop.f32.mrf.mxu0
        %v2065 = vadd.f32 %v1866, %v2064
        %v2066 = vpop.f32.mrf.mxu0
        %2067 = vdwg.mxu0
        %2068 = vmatpush.bf16.msra.mxu0 %v1996
        %2069 = vmatpush.bf16.msra.mxu0 %v1994
        %2070 = vmatpush.bf16.msra.mxu0 %v1992
        %2071 = vmatpush.bf16.msra.mxu0 %v1990
        %2072 = vmatpush.bf16.msra.mxu0 %v1988
        %2073 = vmatpush.bf16.msra.mxu0 %v1986
        %2074 = vmatpush.bf16.msra.mxu0 %v1984
        %2075 = vmatpush.bf16.msra.mxu0 %v1982
        %2076 = vmatmul.bf16.gmra.mxu0 %v1828
        %v2077 = vpop.f32.mrf.mxu0
        %v2078 = vadd.f32 %v2065, %v2077
        %v2079 = vpop.f32.mrf.mxu0
        %2080 = vdwg.mxu0
        %v2081 = vmax.f32 %v2052, 0.0
        %v2082 = vmax.f32 %v2078, 0.0
        %v2083 = vadd.f32 %v1825, %v2081
        %v2084 = vadd.f32 %v1826, %v2082
        %v2085 = vpack.c.bf16 %v2083, %v2083
        %v2086 = vpack.c.bf16 %v2084, %v2084
        %v2087 = vld [vmem:[#allocation13] sm:$0xf]
        %v2088 = vld [vmem:[#allocation13 + $0x4] sm:$0xf]
        %v2089 = vld [vmem:[#allocation13 + $0x8] sm:$0xf]
        %v2090 = vld [vmem:[#allocation13 + $0xc] sm:$0xf]
        %v2091 = vld [vmem:[#allocation13 + $0x10] sm:$0xf]
        %v2092 = vld [vmem:[#allocation13 + $0x14] sm:$0xf]
        %v2093 = vld [vmem:[#allocation13 + $0x18] sm:$0xf]
        %v2094 = vld [vmem:[#allocation13 + $0x1c] sm:$0xf]
        %v2095 = vld [vmem:[#allocation13 + $0x20] sm:$0xf]
        %v2096 = vld [vmem:[#allocation13 + $0x24] sm:$0xf]
        %v2097 = vld [vmem:[#allocation13 + $0x28] sm:$0xf]
        %v2098 = vld [vmem:[#allocation13 + $0x2c] sm:$0xf]
        %v2099 = vld [vmem:[#allocation13 + $0x30] sm:$0xf]
        %v2100 = vld [vmem:[#allocation13 + $0x34] sm:$0xf]
        %v2101 = vld [vmem:[#allocation13 + $0x38] sm:$0xf]
        %v2102 = vld [vmem:[#allocation13 + $0x3c] sm:$0xf]
        %v2103 = vld [vmem:[#allocation13 + $0x40] sm:$0xf]
        %v2104 = vld [vmem:[#allocation13 + $0x44] sm:$0xf]
        %v2105 = vld [vmem:[#allocation13 + $0x48] sm:$0xf]
        %v2106 = vld [vmem:[#allocation13 + $0x4c] sm:$0xf]
        %v2107 = vld [vmem:[#allocation13 + $0x50] sm:$0xf]
        %v2108 = vld [vmem:[#allocation13 + $0x54] sm:$0xf]
        %v2109 = vld [vmem:[#allocation13 + $0x58] sm:$0xf]
        %v2110 = vld [vmem:[#allocation13 + $0x5c] sm:$0xf]
        %v2111 = vld [vmem:[#allocation13 + $0x60] sm:$0xf]
        %v2112 = vld [vmem:[#allocation13 + $0x64] sm:$0xf]
        %v2113 = vld [vmem:[#allocation13 + $0x68] sm:$0xf]
        %v2114 = vld [vmem:[#allocation13 + $0x6c] sm:$0xf]
        %v2115 = vld [vmem:[#allocation13 + $0x70] sm:$0xf]
        %v2116 = vld [vmem:[#allocation13 + $0x74] sm:$0xf]
        %v2117 = vld [vmem:[#allocation13 + $0x78] sm:$0xf]
        %v2118 = vld [vmem:[#allocation13 + $0x7c] sm:$0xf]
        %v2119 = vld [vmem:[#allocation15] sm:$0x1]
        %v2121 = vperm.slane %v2119, 0
        %v2155 = vunpack.c.l.b16 %v2087
        %v2156 = vunpack.c.l.b16 %v2088
        %v2157 = vunpack.c.l.b16 %v2089
        %v2158 = vunpack.c.l.b16 %v2090
        %v2159 = vunpack.c.l.b16 %v2091
        %v2160 = vunpack.c.l.b16 %v2092
        %v2161 = vunpack.c.l.b16 %v2093
        %v2162 = vunpack.c.l.b16 %v2094
        %v2163 = vunpack.c.l.b16 %v2095
        %v2164 = vunpack.c.l.b16 %v2096
        %v2165 = vunpack.c.l.b16 %v2097
        %v2166 = vunpack.c.l.b16 %v2098
        %v2167 = vunpack.c.l.b16 %v2099
        %v2168 = vunpack.c.l.b16 %v2100
        %v2169 = vunpack.c.l.b16 %v2101
        %v2170 = vunpack.c.l.b16 %v2102
        %v2171 = vunpack.c.l.b16 %v2103
        %v2172 = vunpack.c.l.b16 %v2104
        %v2173 = vunpack.c.l.b16 %v2105
        %v2174 = vunpack.c.l.b16 %v2106
        %v2175 = vunpack.c.l.b16 %v2107
        %v2176 = vunpack.c.l.b16 %v2108
        %v2177 = vunpack.c.l.b16 %v2109
        %v2178 = vunpack.c.l.b16 %v2110
        %v2179 = vunpack.c.l.b16 %v2111
        %v2180 = vunpack.c.l.b16 %v2112
        %v2181 = vunpack.c.l.b16 %v2113
        %v2182 = vunpack.c.l.b16 %v2114
        %v2183 = vunpack.c.l.b16 %v2115
        %v2184 = vunpack.c.l.b16 %v2116
        %v2185 = vunpack.c.l.b16 %v2117
        %v2186 = vunpack.c.l.b16 %v2118
        %v2187 = vpack.c.b16 %v2156, %v2155
        %v2188 = vpack.c.b16 %v2158, %v2157
        %v2189 = vpack.c.b16 %v2160, %v2159
        %v2190 = vpack.c.b16 %v2162, %v2161
        %v2191 = vpack.c.b16 %v2164, %v2163
        %v2192 = vpack.c.b16 %v2166, %v2165
        %v2193 = vpack.c.b16 %v2168, %v2167
        %v2194 = vpack.c.b16 %v2170, %v2169
        %v2195 = vpack.c.b16 %v2172, %v2171
        %v2196 = vpack.c.b16 %v2174, %v2173
        %v2197 = vpack.c.b16 %v2176, %v2175
        %v2198 = vpack.c.b16 %v2178, %v2177
        %v2199 = vpack.c.b16 %v2180, %v2179
        %v2200 = vpack.c.b16 %v2182, %v2181
        %v2201 = vpack.c.b16 %v2184, %v2183
        %v2202 = vpack.c.b16 %v2186, %v2185
        %2219 = vmatpush.bf16.msra.mxu0 %v2194
        %2220 = vmatpush.bf16.msra.mxu0 %v2193
        %2221 = vmatpush.bf16.msra.mxu0 %v2192
        %2222 = vmatpush.bf16.msra.mxu0 %v2191
        %2223 = vmatpush.bf16.msra.mxu0 %v2190
        %2224 = vmatpush.bf16.msra.mxu0 %v2189
        %2225 = vmatpush.bf16.msra.mxu0 %v2188
        %2226 = vmatpush.bf16.msra.mxu0 %v2187
        %2227 = vmatmul.bf16.gmra.mxu0 %v2085
        %v2228 = vpop.f32.mrf.mxu0
        %v2229 = vadd.f32 %v2121, %v2228
        %v2230 = vpop.f32.mrf.mxu0
        %2231 = vdwg.mxu0
        %2232 = vmatpush.bf16.msra.mxu0 %v2202
        %2233 = vmatpush.bf16.msra.mxu0 %v2201
        %2234 = vmatpush.bf16.msra.mxu0 %v2200
        %2235 = vmatpush.bf16.msra.mxu0 %v2199
        %2236 = vmatpush.bf16.msra.mxu0 %v2198
        %2237 = vmatpush.bf16.msra.mxu0 %v2197
        %2238 = vmatpush.bf16.msra.mxu0 %v2196
        %2239 = vmatpush.bf16.msra.mxu0 %v2195
        %2240 = vmatmul.bf16.gmra.mxu0 %v2086
        %v2241 = vpop.f32.mrf.mxu0
        %v2242 = vadd.f32 %v2229, %v2241
        %v2243 = vpop.f32.mrf.mxu0
        %2244 = vdwg.mxu0
        %2245 = vst [vmem:[%s726] sm:$0xff] %v2242
        %v2246 = vld [vmem:[#allocation16] sm:$0xff]
        %v2247 = vld [vmem:[#allocation16 + $0x8] sm:$0xff]
        %v2248 = vld [vmem:[#allocation16 + $0x10] sm:$0xff]
        %v2249 = vld [vmem:[#allocation16 + $0x18] sm:$0xff]
        %v2250 = vld [vmem:[#allocation16 + $0x20] sm:$0xff]
        %v2251 = vld [vmem:[#allocation16 + $0x28] sm:$0xff]
        %v2252 = vld [vmem:[#allocation16 + $0x30] sm:$0xff]
        %v2253 = vld [vmem:[#allocation16 + $0x38] sm:$0xff]
        %v2254 = vld [vmem:[#allocation16 + $0x40] sm:$0xff]
        %v2255 = vld [vmem:[#allocation16 + $0x48] sm:$0xff]
        %v2256 = vld [vmem:[#allocation16 + $0x50] sm:$0xff]
        %v2257 = vld [vmem:[#allocation16 + $0x58] sm:$0xff]
        %v2258 = vld [vmem:[#allocation16 + $0x60] sm:$0xff]
        %v2259 = vld [vmem:[#allocation16 + $0x68] sm:$0xff]
        %v2260 = vld [vmem:[#allocation16 + $0x70] sm:$0xff]
        %v2261 = vld [vmem:[#allocation16 + $0x78] sm:$0xff]
        %v2262 = vld [vmem:[#allocation16 + $0x80] sm:$0xff]
        %v2263 = vld [vmem:[#allocation16 + $0x88] sm:$0xff]
        %v2264 = vld [vmem:[#allocation16 + $0x90] sm:$0xff]
        %v2265 = vld [vmem:[#allocation16 + $0x98] sm:$0xff]
        %v2266 = vld [vmem:[#allocation16 + $0xa0] sm:$0xff]
        %v2267 = vld [vmem:[#allocation16 + $0xa8] sm:$0xff]
        %v2268 = vld [vmem:[#allocation16 + $0xb0] sm:$0xff]
        %v2269 = vld [vmem:[#allocation16 + $0xb8] sm:$0xff]
        %v2270 = vld [vmem:[#allocation16 + $0xc0] sm:$0xff]
        %v2271 = vld [vmem:[#allocation16 + $0xc8] sm:$0xff]
        %v2272 = vld [vmem:[#allocation16 + $0xd0] sm:$0xff]
        %v2273 = vld [vmem:[#allocation16 + $0xd8] sm:$0xff]
        %v2274 = vld [vmem:[#allocation16 + $0xe0] sm:$0xff]
        %v2275 = vld [vmem:[#allocation16 + $0xe8] sm:$0xff]
        %v2276 = vld [vmem:[#allocation16 + $0xf0] sm:$0xff]
        %v2277 = vld [vmem:[#allocation16 + $0xf8] sm:$0xff]
        %v2278 = vld [vmem:[#allocation16 + $0x100] sm:$0xff]
        %v2279 = vld [vmem:[#allocation16 + $0x108] sm:$0xff]
        %v2280 = vld [vmem:[#allocation16 + $0x110] sm:$0xff]
        %v2281 = vld [vmem:[#allocation16 + $0x118] sm:$0xff]
        %v2282 = vld [vmem:[#allocation16 + $0x120] sm:$0xff]
        %v2283 = vld [vmem:[#allocation16 + $0x128] sm:$0xff]
        %v2284 = vld [vmem:[#allocation16 + $0x130] sm:$0xff]
        %v2285 = vld [vmem:[#allocation16 + $0x138] sm:$0xff]
        %v2286 = vld [vmem:[#allocation16 + $0x140] sm:$0xff]
        %v2287 = vld [vmem:[#allocation16 + $0x148] sm:$0xff]
        %v2288 = vld [vmem:[#allocation16 + $0x150] sm:$0xff]
        %v2289 = vld [vmem:[#allocation16 + $0x158] sm:$0xff]
        %v2290 = vld [vmem:[#allocation16 + $0x160] sm:$0xff]
        %v2291 = vld [vmem:[#allocation16 + $0x168] sm:$0xff]
        %v2292 = vld [vmem:[#allocation16 + $0x170] sm:$0xff]
        %v2293 = vld [vmem:[#allocation16 + $0x178] sm:$0xff]
        %v2294 = vld [vmem:[#allocation16 + $0x180] sm:$0xff]
        %v2295 = vld [vmem:[#allocation16 + $0x188] sm:$0xff]
        %v2296 = vld [vmem:[#allocation16 + $0x190] sm:$0xff]
        %v2297 = vld [vmem:[#allocation16 + $0x198] sm:$0xff]
        %v2298 = vld [vmem:[#allocation16 + $0x1a0] sm:$0xff]
        %v2299 = vld [vmem:[#allocation16 + $0x1a8] sm:$0xff]
        %v2300 = vld [vmem:[#allocation16 + $0x1b0] sm:$0xff]
        %v2301 = vld [vmem:[#allocation16 + $0x1b8] sm:$0xff]
        %v2302 = vld [vmem:[#allocation16 + $0x1c0] sm:$0xff]
        %v2303 = vld [vmem:[#allocation16 + $0x1c8] sm:$0xff]
        %v2304 = vld [vmem:[#allocation16 + $0x1d0] sm:$0xff]
        %v2305 = vld [vmem:[#allocation16 + $0x1d8] sm:$0xff]
        %v2306 = vld [vmem:[#allocation16 + $0x1e0] sm:$0xff]
        %v2307 = vld [vmem:[#allocation16 + $0x1e8] sm:$0xff]
        %v2308 = vld [vmem:[#allocation16 + $0x1f0] sm:$0xff]
        %v2309 = vld [vmem:[#allocation16 + $0x1f8] sm:$0xff]
        %v2310 = vld [vmem:[#allocation16 + $0x200] sm:$0xff]
        %v2311 = vld [vmem:[#allocation16 + $0x208] sm:$0xff]
        %v2312 = vld [vmem:[#allocation16 + $0x210] sm:$0xff]
        %v2313 = vld [vmem:[#allocation16 + $0x218] sm:$0xff]
        %v2314 = vld [vmem:[#allocation16 + $0x220] sm:$0xff]
        %v2315 = vld [vmem:[#allocation16 + $0x228] sm:$0xff]
        %v2316 = vld [vmem:[#allocation16 + $0x230] sm:$0xff]
        %v2317 = vld [vmem:[#allocation16 + $0x238] sm:$0xff]
        %v2318 = vld [vmem:[#allocation16 + $0x240] sm:$0xff]
        %v2319 = vld [vmem:[#allocation16 + $0x248] sm:$0xff]
        %v2320 = vld [vmem:[#allocation16 + $0x250] sm:$0xff]
        %v2321 = vld [vmem:[#allocation16 + $0x258] sm:$0xff]
        %v2322 = vld [vmem:[#allocation16 + $0x260] sm:$0xff]
        %v2323 = vld [vmem:[#allocation16 + $0x268] sm:$0xff]
        %v2324 = vld [vmem:[#allocation16 + $0x270] sm:$0xff]
        %v2325 = vld [vmem:[#allocation16 + $0x278] sm:$0xff]
        %v2326 = vld [vmem:[#allocation16 + $0x280] sm:$0xff]
        %v2327 = vld [vmem:[#allocation16 + $0x288] sm:$0xff]
        %v2328 = vld [vmem:[#allocation16 + $0x290] sm:$0xff]
        %v2329 = vld [vmem:[#allocation16 + $0x298] sm:$0xff]
        %v2330 = vld [vmem:[#allocation16 + $0x2a0] sm:$0xff]
        %v2331 = vld [vmem:[#allocation16 + $0x2a8] sm:$0xff]
        %v2332 = vld [vmem:[#allocation16 + $0x2b0] sm:$0xff]
        %v2333 = vld [vmem:[#allocation16 + $0x2b8] sm:$0xff]
        %v2334 = vld [vmem:[#allocation16 + $0x2c0] sm:$0xff]
        %v2335 = vld [vmem:[#allocation16 + $0x2c8] sm:$0xff]
        %v2336 = vld [vmem:[#allocation16 + $0x2d0] sm:$0xff]
        %v2337 = vld [vmem:[#allocation16 + $0x2d8] sm:$0xff]
        %v2338 = vld [vmem:[#allocation16 + $0x2e0] sm:$0xff]
        %v2339 = vld [vmem:[#allocation16 + $0x2e8] sm:$0xff]
        %v2340 = vld [vmem:[#allocation16 + $0x2f0] sm:$0xff]
        %v2341 = vld [vmem:[#allocation16 + $0x2f8] sm:$0xff]
        %v2342 = vld [vmem:[#allocation16 + $0x300] sm:$0xff]
        %v2343 = vld [vmem:[#allocation16 + $0x308] sm:$0xff]
        %v2344 = vld [vmem:[#allocation16 + $0x310] sm:$0xff]
        %v2345 = vld [vmem:[#allocation16 + $0x318] sm:$0xff]
        %v2346 = vld [vmem:[#allocation16 + $0x320] sm:$0xff]
        %v2347 = vld [vmem:[#allocation16 + $0x328] sm:$0xff]
        %v2348 = vld [vmem:[#allocation16 + $0x330] sm:$0xff]
        %v2349 = vld [vmem:[#allocation16 + $0x338] sm:$0xff]
        %v2350 = vld [vmem:[#allocation16 + $0x340] sm:$0xff]
        %v2351 = vld [vmem:[#allocation16 + $0x348] sm:$0xff]
        %v2352 = vld [vmem:[#allocation16 + $0x350] sm:$0xff]
        %v2353 = vld [vmem:[#allocation16 + $0x358] sm:$0xff]
        %v2354 = vld [vmem:[#allocation16 + $0x360] sm:$0xff]
        %v2355 = vld [vmem:[#allocation16 + $0x368] sm:$0xff]
        %v2356 = vld [vmem:[#allocation16 + $0x370] sm:$0xff]
        %v2357 = vld [vmem:[#allocation16 + $0x378] sm:$0xff]
        %v2358 = vld [vmem:[#allocation16 + $0x380] sm:$0xff]
        %v2359 = vld [vmem:[#allocation16 + $0x388] sm:$0xff]
        %v2360 = vld [vmem:[#allocation16 + $0x390] sm:$0xff]
        %v2361 = vld [vmem:[#allocation16 + $0x398] sm:$0xff]
        %v2362 = vld [vmem:[#allocation16 + $0x3a0] sm:$0xff]
        %v2363 = vld [vmem:[#allocation16 + $0x3a8] sm:$0xff]
        %v2364 = vld [vmem:[#allocation16 + $0x3b0] sm:$0xff]
        %v2365 = vld [vmem:[#allocation16 + $0x3b8] sm:$0xff]
        %v2366 = vld [vmem:[#allocation16 + $0x3c0] sm:$0xff]
        %v2367 = vld [vmem:[#allocation16 + $0x3c8] sm:$0xff]
        %v2368 = vld [vmem:[#allocation16 + $0x3d0] sm:$0xff]
        %v2369 = vld [vmem:[#allocation16 + $0x3d8] sm:$0xff]
        %v2370 = vld [vmem:[#allocation16 + $0x3e0] sm:$0xff]
        %v2371 = vld [vmem:[#allocation16 + $0x3e8] sm:$0xff]
        %v2372 = vld [vmem:[#allocation16 + $0x3f0] sm:$0xff]
        %v2373 = vld [vmem:[#allocation16 + $0x3f8] sm:$0xff]
        %v2374 = vld [vmem:[#allocation18] sm:$0xf]
        %v2376 = vperm.slane %v2374, 0
        %v2377 = vperm.slane %v2374, 1
        %v2378 = vperm.slane %v2374, 2
        %v2379 = vperm.slane %v2374, 3
        %v2512 = vunpack.c.l.b16 %v2246
        %v2513 = vunpack.c.h.b16 %v2246
        %v2514 = vunpack.c.l.b16 %v2247
        %v2515 = vunpack.c.h.b16 %v2247
        %v2516 = vunpack.c.l.b16 %v2248
        %v2517 = vunpack.c.h.b16 %v2248
        %v2518 = vunpack.c.l.b16 %v2249
        %v2519 = vunpack.c.h.b16 %v2249
        %v2520 = vunpack.c.l.b16 %v2250
        %v2521 = vunpack.c.h.b16 %v2250
        %v2522 = vunpack.c.l.b16 %v2251
        %v2523 = vunpack.c.h.b16 %v2251
        %v2524 = vunpack.c.l.b16 %v2252
        %v2525 = vunpack.c.h.b16 %v2252
        %v2526 = vunpack.c.l.b16 %v2253
        %v2527 = vunpack.c.h.b16 %v2253
        %v2528 = vunpack.c.l.b16 %v2254
        %v2529 = vunpack.c.h.b16 %v2254
        %v2530 = vunpack.c.l.b16 %v2255
        %v2531 = vunpack.c.h.b16 %v2255
        %v2532 = vunpack.c.l.b16 %v2256
        %v2533 = vunpack.c.h.b16 %v2256
        %v2534 = vunpack.c.l.b16 %v2257
        %v2535 = vunpack.c.h.b16 %v2257
        %v2536 = vunpack.c.l.b16 %v2258
        %v2537 = vunpack.c.h.b16 %v2258
        %v2538 = vunpack.c.l.b16 %v2259
        %v2539 = vunpack.c.h.b16 %v2259
        %v2540 = vunpack.c.l.b16 %v2260
        %v2541 = vunpack.c.h.b16 %v2260
        %v2542 = vunpack.c.l.b16 %v2261
        %v2543 = vunpack.c.h.b16 %v2261
        %v2544 = vunpack.c.l.b16 %v2262
        %v2545 = vunpack.c.h.b16 %v2262
        %v2546 = vunpack.c.l.b16 %v2263
        %v2547 = vunpack.c.h.b16 %v2263
        %v2548 = vunpack.c.l.b16 %v2264
        %v2549 = vunpack.c.h.b16 %v2264
        %v2550 = vunpack.c.l.b16 %v2265
        %v2551 = vunpack.c.h.b16 %v2265
        %v2552 = vunpack.c.l.b16 %v2266
        %v2553 = vunpack.c.h.b16 %v2266
        %v2554 = vunpack.c.l.b16 %v2267
        %v2555 = vunpack.c.h.b16 %v2267
        %v2556 = vunpack.c.l.b16 %v2268
        %v2557 = vunpack.c.h.b16 %v2268
        %v2558 = vunpack.c.l.b16 %v2269
        %v2559 = vunpack.c.h.b16 %v2269
        %v2560 = vunpack.c.l.b16 %v2270
        %v2561 = vunpack.c.h.b16 %v2270
        %v2562 = vunpack.c.l.b16 %v2271
        %v2563 = vunpack.c.h.b16 %v2271
        %v2564 = vunpack.c.l.b16 %v2272
        %v2565 = vunpack.c.h.b16 %v2272
        %v2566 = vunpack.c.l.b16 %v2273
        %v2567 = vunpack.c.h.b16 %v2273
        %v2568 = vunpack.c.l.b16 %v2274
        %v2569 = vunpack.c.h.b16 %v2274
        %v2570 = vunpack.c.l.b16 %v2275
        %v2571 = vunpack.c.h.b16 %v2275
        %v2572 = vunpack.c.l.b16 %v2276
        %v2573 = vunpack.c.h.b16 %v2276
        %v2574 = vunpack.c.l.b16 %v2277
        %v2575 = vunpack.c.h.b16 %v2277
        %v2576 = vunpack.c.l.b16 %v2278
        %v2577 = vunpack.c.h.b16 %v2278
        %v2578 = vunpack.c.l.b16 %v2279
        %v2579 = vunpack.c.h.b16 %v2279
        %v2580 = vunpack.c.l.b16 %v2280
        %v2581 = vunpack.c.h.b16 %v2280
        %v2582 = vunpack.c.l.b16 %v2281
        %v2583 = vunpack.c.h.b16 %v2281
        %v2584 = vunpack.c.l.b16 %v2282
        %v2585 = vunpack.c.h.b16 %v2282
        %v2586 = vunpack.c.l.b16 %v2283
        %v2587 = vunpack.c.h.b16 %v2283
        %v2588 = vunpack.c.l.b16 %v2284
        %v2589 = vunpack.c.h.b16 %v2284
        %v2590 = vunpack.c.l.b16 %v2285
        %v2591 = vunpack.c.h.b16 %v2285
        %v2592 = vunpack.c.l.b16 %v2286
        %v2593 = vunpack.c.h.b16 %v2286
        %v2594 = vunpack.c.l.b16 %v2287
        %v2595 = vunpack.c.h.b16 %v2287
        %v2596 = vunpack.c.l.b16 %v2288
        %v2597 = vunpack.c.h.b16 %v2288
        %v2598 = vunpack.c.l.b16 %v2289
        %v2599 = vunpack.c.h.b16 %v2289
        %v2600 = vunpack.c.l.b16 %v2290
        %v2601 = vunpack.c.h.b16 %v2290
        %v2602 = vunpack.c.l.b16 %v2291
        %v2603 = vunpack.c.h.b16 %v2291
        %v2604 = vunpack.c.l.b16 %v2292
        %v2605 = vunpack.c.h.b16 %v2292
        %v2606 = vunpack.c.l.b16 %v2293
        %v2607 = vunpack.c.h.b16 %v2293
        %v2608 = vunpack.c.l.b16 %v2294
        %v2609 = vunpack.c.h.b16 %v2294
        %v2610 = vunpack.c.l.b16 %v2295
        %v2611 = vunpack.c.h.b16 %v2295
        %v2612 = vunpack.c.l.b16 %v2296
        %v2613 = vunpack.c.h.b16 %v2296
        %v2614 = vunpack.c.l.b16 %v2297
        %v2615 = vunpack.c.h.b16 %v2297
        %v2616 = vunpack.c.l.b16 %v2298
        %v2617 = vunpack.c.h.b16 %v2298
        %v2618 = vunpack.c.l.b16 %v2299
        %v2619 = vunpack.c.h.b16 %v2299
        %v2620 = vunpack.c.l.b16 %v2300
        %v2621 = vunpack.c.h.b16 %v2300
        %v2622 = vunpack.c.l.b16 %v2301
        %v2623 = vunpack.c.h.b16 %v2301
        %v2624 = vunpack.c.l.b16 %v2302
        %v2625 = vunpack.c.h.b16 %v2302
        %v2626 = vunpack.c.l.b16 %v2303
        %v2627 = vunpack.c.h.b16 %v2303
        %v2628 = vunpack.c.l.b16 %v2304
        %v2629 = vunpack.c.h.b16 %v2304
        %v2630 = vunpack.c.l.b16 %v2305
        %v2631 = vunpack.c.h.b16 %v2305
        %v2632 = vunpack.c.l.b16 %v2306
        %v2633 = vunpack.c.h.b16 %v2306
        %v2634 = vunpack.c.l.b16 %v2307
        %v2635 = vunpack.c.h.b16 %v2307
        %v2636 = vunpack.c.l.b16 %v2308
        %v2637 = vunpack.c.h.b16 %v2308
        %v2638 = vunpack.c.l.b16 %v2309
        %v2639 = vunpack.c.h.b16 %v2309
        %v2640 = vunpack.c.l.b16 %v2310
        %v2641 = vunpack.c.h.b16 %v2310
        %v2642 = vunpack.c.l.b16 %v2311
        %v2643 = vunpack.c.h.b16 %v2311
        %v2644 = vunpack.c.l.b16 %v2312
        %v2645 = vunpack.c.h.b16 %v2312
        %v2646 = vunpack.c.l.b16 %v2313
        %v2647 = vunpack.c.h.b16 %v2313
        %v2648 = vunpack.c.l.b16 %v2314
        %v2649 = vunpack.c.h.b16 %v2314
        %v2650 = vunpack.c.l.b16 %v2315
        %v2651 = vunpack.c.h.b16 %v2315
        %v2652 = vunpack.c.l.b16 %v2316
        %v2653 = vunpack.c.h.b16 %v2316
        %v2654 = vunpack.c.l.b16 %v2317
        %v2655 = vunpack.c.h.b16 %v2317
        %v2656 = vunpack.c.l.b16 %v2318
        %v2657 = vunpack.c.h.b16 %v2318
        %v2658 = vunpack.c.l.b16 %v2319
        %v2659 = vunpack.c.h.b16 %v2319
        %v2660 = vunpack.c.l.b16 %v2320
        %v2661 = vunpack.c.h.b16 %v2320
        %v2662 = vunpack.c.l.b16 %v2321
        %v2663 = vunpack.c.h.b16 %v2321
        %v2664 = vunpack.c.l.b16 %v2322
        %v2665 = vunpack.c.h.b16 %v2322
        %v2666 = vunpack.c.l.b16 %v2323
        %v2667 = vunpack.c.h.b16 %v2323
        %v2668 = vunpack.c.l.b16 %v2324
        %v2669 = vunpack.c.h.b16 %v2324
        %v2670 = vunpack.c.l.b16 %v2325
        %v2671 = vunpack.c.h.b16 %v2325
        %v2672 = vunpack.c.l.b16 %v2326
        %v2673 = vunpack.c.h.b16 %v2326
        %v2674 = vunpack.c.l.b16 %v2327
        %v2675 = vunpack.c.h.b16 %v2327
        %v2676 = vunpack.c.l.b16 %v2328
        %v2677 = vunpack.c.h.b16 %v2328
        %v2678 = vunpack.c.l.b16 %v2329
        %v2679 = vunpack.c.h.b16 %v2329
        %v2680 = vunpack.c.l.b16 %v2330
        %v2681 = vunpack.c.h.b16 %v2330
        %v2682 = vunpack.c.l.b16 %v2331
        %v2683 = vunpack.c.h.b16 %v2331
        %v2684 = vunpack.c.l.b16 %v2332
        %v2685 = vunpack.c.h.b16 %v2332
        %v2686 = vunpack.c.l.b16 %v2333
        %v2687 = vunpack.c.h.b16 %v2333
        %v2688 = vunpack.c.l.b16 %v2334
        %v2689 = vunpack.c.h.b16 %v2334
        %v2690 = vunpack.c.l.b16 %v2335
        %v2691 = vunpack.c.h.b16 %v2335
        %v2692 = vunpack.c.l.b16 %v2336
        %v2693 = vunpack.c.h.b16 %v2336
        %v2694 = vunpack.c.l.b16 %v2337
        %v2695 = vunpack.c.h.b16 %v2337
        %v2696 = vunpack.c.l.b16 %v2338
        %v2697 = vunpack.c.h.b16 %v2338
        %v2698 = vunpack.c.l.b16 %v2339
        %v2699 = vunpack.c.h.b16 %v2339
        %v2700 = vunpack.c.l.b16 %v2340
        %v2701 = vunpack.c.h.b16 %v2340
        %v2702 = vunpack.c.l.b16 %v2341
        %v2703 = vunpack.c.h.b16 %v2341
        %v2704 = vunpack.c.l.b16 %v2342
        %v2705 = vunpack.c.h.b16 %v2342
        %v2706 = vunpack.c.l.b16 %v2343
        %v2707 = vunpack.c.h.b16 %v2343
        %v2708 = vunpack.c.l.b16 %v2344
        %v2709 = vunpack.c.h.b16 %v2344
        %v2710 = vunpack.c.l.b16 %v2345
        %v2711 = vunpack.c.h.b16 %v2345
        %v2712 = vunpack.c.l.b16 %v2346
        %v2713 = vunpack.c.h.b16 %v2346
        %v2714 = vunpack.c.l.b16 %v2347
        %v2715 = vunpack.c.h.b16 %v2347
        %v2716 = vunpack.c.l.b16 %v2348
        %v2717 = vunpack.c.h.b16 %v2348
        %v2718 = vunpack.c.l.b16 %v2349
        %v2719 = vunpack.c.h.b16 %v2349
        %v2720 = vunpack.c.l.b16 %v2350
        %v2721 = vunpack.c.h.b16 %v2350
        %v2722 = vunpack.c.l.b16 %v2351
        %v2723 = vunpack.c.h.b16 %v2351
        %v2724 = vunpack.c.l.b16 %v2352
        %v2725 = vunpack.c.h.b16 %v2352
        %v2726 = vunpack.c.l.b16 %v2353
        %v2727 = vunpack.c.h.b16 %v2353
        %v2728 = vunpack.c.l.b16 %v2354
        %v2729 = vunpack.c.h.b16 %v2354
        %v2730 = vunpack.c.l.b16 %v2355
        %v2731 = vunpack.c.h.b16 %v2355
        %v2732 = vunpack.c.l.b16 %v2356
        %v2733 = vunpack.c.h.b16 %v2356
        %v2734 = vunpack.c.l.b16 %v2357
        %v2735 = vunpack.c.h.b16 %v2357
        %v2736 = vunpack.c.l.b16 %v2358
        %v2737 = vunpack.c.h.b16 %v2358
        %v2738 = vunpack.c.l.b16 %v2359
        %v2739 = vunpack.c.h.b16 %v2359
        %v2740 = vunpack.c.l.b16 %v2360
        %v2741 = vunpack.c.h.b16 %v2360
        %v2742 = vunpack.c.l.b16 %v2361
        %v2743 = vunpack.c.h.b16 %v2361
        %v2744 = vunpack.c.l.b16 %v2362
        %v2745 = vunpack.c.h.b16 %v2362
        %v2746 = vunpack.c.l.b16 %v2363
        %v2747 = vunpack.c.h.b16 %v2363
        %v2748 = vunpack.c.l.b16 %v2364
        %v2749 = vunpack.c.h.b16 %v2364
        %v2750 = vunpack.c.l.b16 %v2365
        %v2751 = vunpack.c.h.b16 %v2365
        %v2752 = vunpack.c.l.b16 %v2366
        %v2753 = vunpack.c.h.b16 %v2366
        %v2754 = vunpack.c.l.b16 %v2367
        %v2755 = vunpack.c.h.b16 %v2367
        %v2756 = vunpack.c.l.b16 %v2368
        %v2757 = vunpack.c.h.b16 %v2368
        %v2758 = vunpack.c.l.b16 %v2369
        %v2759 = vunpack.c.h.b16 %v2369
        %v2760 = vunpack.c.l.b16 %v2370
        %v2761 = vunpack.c.h.b16 %v2370
        %v2762 = vunpack.c.l.b16 %v2371
        %v2763 = vunpack.c.h.b16 %v2371
        %v2764 = vunpack.c.l.b16 %v2372
        %v2765 = vunpack.c.h.b16 %v2372
        %v2766 = vunpack.c.l.b16 %v2373
        %v2767 = vunpack.c.h.b16 %v2373
        %v2768 = vpack.c.b16 %v2516, %v2512
        %v2769 = vpack.c.b16 %v2517, %v2513
        %v2770 = vpack.c.b16 %v2518, %v2514
        %v2771 = vpack.c.b16 %v2519, %v2515
        %v2772 = vpack.c.b16 %v2524, %v2520
        %v2773 = vpack.c.b16 %v2525, %v2521
        %v2774 = vpack.c.b16 %v2526, %v2522
        %v2775 = vpack.c.b16 %v2527, %v2523
        %v2776 = vpack.c.b16 %v2532, %v2528
        %v2777 = vpack.c.b16 %v2533, %v2529
        %v2778 = vpack.c.b16 %v2534, %v2530
        %v2779 = vpack.c.b16 %v2535, %v2531
        %v2780 = vpack.c.b16 %v2540, %v2536
        %v2781 = vpack.c.b16 %v2541, %v2537
        %v2782 = vpack.c.b16 %v2542, %v2538
        %v2783 = vpack.c.b16 %v2543, %v2539
        %v2784 = vpack.c.b16 %v2548, %v2544
        %v2785 = vpack.c.b16 %v2549, %v2545
        %v2786 = vpack.c.b16 %v2550, %v2546
        %v2787 = vpack.c.b16 %v2551, %v2547
        %v2788 = vpack.c.b16 %v2556, %v2552
        %v2789 = vpack.c.b16 %v2557, %v2553
        %v2790 = vpack.c.b16 %v2558, %v2554
        %v2791 = vpack.c.b16 %v2559, %v2555
        %v2792 = vpack.c.b16 %v2564, %v2560
        %v2793 = vpack.c.b16 %v2565, %v2561
        %v2794 = vpack.c.b16 %v2566, %v2562
        %v2795 = vpack.c.b16 %v2567, %v2563
        %v2796 = vpack.c.b16 %v2572, %v2568
        %v2797 = vpack.c.b16 %v2573, %v2569
        %v2798 = vpack.c.b16 %v2574, %v2570
        %v2799 = vpack.c.b16 %v2575, %v2571
        %v2800 = vpack.c.b16 %v2580, %v2576
        %v2801 = vpack.c.b16 %v2581, %v2577
        %v2802 = vpack.c.b16 %v2582, %v2578
        %v2803 = vpack.c.b16 %v2583, %v2579
        %v2804 = vpack.c.b16 %v2588, %v2584
        %v2805 = vpack.c.b16 %v2589, %v2585
        %v2806 = vpack.c.b16 %v2590, %v2586
        %v2807 = vpack.c.b16 %v2591, %v2587
        %v2808 = vpack.c.b16 %v2596, %v2592
        %v2809 = vpack.c.b16 %v2597, %v2593
        %v2810 = vpack.c.b16 %v2598, %v2594
        %v2811 = vpack.c.b16 %v2599, %v2595
        %v2812 = vpack.c.b16 %v2604, %v2600
        %v2813 = vpack.c.b16 %v2605, %v2601
        %v2814 = vpack.c.b16 %v2606, %v2602
        %v2815 = vpack.c.b16 %v2607, %v2603
        %v2816 = vpack.c.b16 %v2612, %v2608
        %v2817 = vpack.c.b16 %v2613, %v2609
        %v2818 = vpack.c.b16 %v2614, %v2610
        %v2819 = vpack.c.b16 %v2615, %v2611
        %v2820 = vpack.c.b16 %v2620, %v2616
        %v2821 = vpack.c.b16 %v2621, %v2617
        %v2822 = vpack.c.b16 %v2622, %v2618
        %v2823 = vpack.c.b16 %v2623, %v2619
        %v2824 = vpack.c.b16 %v2628, %v2624
        %v2825 = vpack.c.b16 %v2629, %v2625
        %v2826 = vpack.c.b16 %v2630, %v2626
        %v2827 = vpack.c.b16 %v2631, %v2627
        %v2828 = vpack.c.b16 %v2636, %v2632
        %v2829 = vpack.c.b16 %v2637, %v2633
        %v2830 = vpack.c.b16 %v2638, %v2634
        %v2831 = vpack.c.b16 %v2639, %v2635
        %v2832 = vpack.c.b16 %v2644, %v2640
        %v2833 = vpack.c.b16 %v2645, %v2641
        %v2834 = vpack.c.b16 %v2646, %v2642
        %v2835 = vpack.c.b16 %v2647, %v2643
        %v2836 = vpack.c.b16 %v2652, %v2648
        %v2837 = vpack.c.b16 %v2653, %v2649
        %v2838 = vpack.c.b16 %v2654, %v2650
        %v2839 = vpack.c.b16 %v2655, %v2651
        %v2840 = vpack.c.b16 %v2660, %v2656
        %v2841 = vpack.c.b16 %v2661, %v2657
        %v2842 = vpack.c.b16 %v2662, %v2658
        %v2843 = vpack.c.b16 %v2663, %v2659
        %v2844 = vpack.c.b16 %v2668, %v2664
        %v2845 = vpack.c.b16 %v2669, %v2665
        %v2846 = vpack.c.b16 %v2670, %v2666
        %v2847 = vpack.c.b16 %v2671, %v2667
        %v2848 = vpack.c.b16 %v2676, %v2672
        %v2849 = vpack.c.b16 %v2677, %v2673
        %v2850 = vpack.c.b16 %v2678, %v2674
        %v2851 = vpack.c.b16 %v2679, %v2675
        %v2852 = vpack.c.b16 %v2684, %v2680
        %v2853 = vpack.c.b16 %v2685, %v2681
        %v2854 = vpack.c.b16 %v2686, %v2682
        %v2855 = vpack.c.b16 %v2687, %v2683
        %v2856 = vpack.c.b16 %v2692, %v2688
        %v2857 = vpack.c.b16 %v2693, %v2689
        %v2858 = vpack.c.b16 %v2694, %v2690
        %v2859 = vpack.c.b16 %v2695, %v2691
        %v2860 = vpack.c.b16 %v2700, %v2696
        %v2861 = vpack.c.b16 %v2701, %v2697
        %v2862 = vpack.c.b16 %v2702, %v2698
        %v2863 = vpack.c.b16 %v2703, %v2699
        %v2864 = vpack.c.b16 %v2708, %v2704
        %v2865 = vpack.c.b16 %v2709, %v2705
        %v2866 = vpack.c.b16 %v2710, %v2706
        %v2867 = vpack.c.b16 %v2711, %v2707
        %v2868 = vpack.c.b16 %v2716, %v2712
        %v2869 = vpack.c.b16 %v2717, %v2713
        %v2870 = vpack.c.b16 %v2718, %v2714
        %v2871 = vpack.c.b16 %v2719, %v2715
        %v2872 = vpack.c.b16 %v2724, %v2720
        %v2873 = vpack.c.b16 %v2725, %v2721
        %v2874 = vpack.c.b16 %v2726, %v2722
        %v2875 = vpack.c.b16 %v2727, %v2723
        %v2876 = vpack.c.b16 %v2732, %v2728
        %v2877 = vpack.c.b16 %v2733, %v2729
        %v2878 = vpack.c.b16 %v2734, %v2730
        %v2879 = vpack.c.b16 %v2735, %v2731
        %v2880 = vpack.c.b16 %v2740, %v2736
        %v2881 = vpack.c.b16 %v2741, %v2737
        %v2882 = vpack.c.b16 %v2742, %v2738
        %v2883 = vpack.c.b16 %v2743, %v2739
        %v2884 = vpack.c.b16 %v2748, %v2744
        %v2885 = vpack.c.b16 %v2749, %v2745
        %v2886 = vpack.c.b16 %v2750, %v2746
        %v2887 = vpack.c.b16 %v2751, %v2747
        %v2888 = vpack.c.b16 %v2756, %v2752
        %v2889 = vpack.c.b16 %v2757, %v2753
        %v2890 = vpack.c.b16 %v2758, %v2754
        %v2891 = vpack.c.b16 %v2759, %v2755
        %v2892 = vpack.c.b16 %v2764, %v2760
        %v2893 = vpack.c.b16 %v2765, %v2761
        %v2894 = vpack.c.b16 %v2766, %v2762
        %v2895 = vpack.c.b16 %v2767, %v2763
        %3024 = vmatpush.bf16.msra.mxu0 %v2796
        %3025 = vmatpush.bf16.msra.mxu0 %v2792
        %3026 = vmatpush.bf16.msra.mxu0 %v2788
        %3027 = vmatpush.bf16.msra.mxu0 %v2784
        %3028 = vmatpush.bf16.msra.mxu0 %v2780
        %3029 = vmatpush.bf16.msra.mxu0 %v2776
        %3030 = vmatpush.bf16.msra.mxu0 %v2772
        %3031 = vmatpush.bf16.msra.mxu0 %v2768
        %3032 = vmatmul.bf16.gmra.mxu0 %v738
        %v3033 = vpop.f32.mrf.mxu0
        %v3034 = vadd.f32 %v2376, %v3033
        %v3035 = vpop.f32.mrf.mxu0
        %3036 = vdwg.mxu0
        %3037 = vmatpush.bf16.msra.mxu0 %v2828
        %3038 = vmatpush.bf16.msra.mxu0 %v2824
        %3039 = vmatpush.bf16.msra.mxu0 %v2820
        %3040 = vmatpush.bf16.msra.mxu0 %v2816
        %3041 = vmatpush.bf16.msra.mxu0 %v2812
        %3042 = vmatpush.bf16.msra.mxu0 %v2808
        %3043 = vmatpush.bf16.msra.mxu0 %v2804
        %3044 = vmatpush.bf16.msra.mxu0 %v2800
        %3045 = vmatmul.bf16.gmra.mxu0 %v739
        %v3046 = vpop.f32.mrf.mxu0
        %v3047 = vadd.f32 %v3034, %v3046
        %v3048 = vpop.f32.mrf.mxu0
        %3049 = vdwg.mxu0
        %3050 = vmatpush.bf16.msra.mxu0 %v2860
        %3051 = vmatpush.bf16.msra.mxu0 %v2856
        %3052 = vmatpush.bf16.msra.mxu0 %v2852
        %3053 = vmatpush.bf16.msra.mxu0 %v2848
        %3054 = vmatpush.bf16.msra.mxu0 %v2844
        %3055 = vmatpush.bf16.msra.mxu0 %v2840
        %3056 = vmatpush.bf16.msra.mxu0 %v2836
        %3057 = vmatpush.bf16.msra.mxu0 %v2832
        %3058 = vmatmul.bf16.gmra.mxu0 %v740
        %v3059 = vpop.f32.mrf.mxu0
        %v3060 = vadd.f32 %v3047, %v3059
        %v3061 = vpop.f32.mrf.mxu0
        %3062 = vdwg.mxu0
        %3063 = vmatpush.bf16.msra.mxu0 %v2892
        %3064 = vmatpush.bf16.msra.mxu0 %v2888
        %3065 = vmatpush.bf16.msra.mxu0 %v2884
        %3066 = vmatpush.bf16.msra.mxu0 %v2880
        %3067 = vmatpush.bf16.msra.mxu0 %v2876
        %3068 = vmatpush.bf16.msra.mxu0 %v2872
        %3069 = vmatpush.bf16.msra.mxu0 %v2868
        %3070 = vmatpush.bf16.msra.mxu0 %v2864
        %3071 = vmatmul.bf16.gmra.mxu0 %v741
        %v3072 = vpop.f32.mrf.mxu0
        %v3073 = vadd.f32 %v3060, %v3072
        %v3074 = vpop.f32.mrf.mxu0
        %3075 = vdwg.mxu0
        %3076 = vmatpush.bf16.msra.mxu0 %v2797
        %3077 = vmatpush.bf16.msra.mxu0 %v2793
        %3078 = vmatpush.bf16.msra.mxu0 %v2789
        %3079 = vmatpush.bf16.msra.mxu0 %v2785
        %3080 = vmatpush.bf16.msra.mxu0 %v2781
        %3081 = vmatpush.bf16.msra.mxu0 %v2777
        %3082 = vmatpush.bf16.msra.mxu0 %v2773
        %3083 = vmatpush.bf16.msra.mxu0 %v2769
        %3084 = vmatmul.bf16.gmra.mxu0 %v738
        %v3085 = vpop.f32.mrf.mxu0
        %v3086 = vadd.f32 %v2377, %v3085
        %v3087 = vpop.f32.mrf.mxu0
        %3088 = vdwg.mxu0
        %3089 = vmatpush.bf16.msra.mxu0 %v2829
        %3090 = vmatpush.bf16.msra.mxu0 %v2825
        %3091 = vmatpush.bf16.msra.mxu0 %v2821
        %3092 = vmatpush.bf16.msra.mxu0 %v2817
        %3093 = vmatpush.bf16.msra.mxu0 %v2813
        %3094 = vmatpush.bf16.msra.mxu0 %v2809
        %3095 = vmatpush.bf16.msra.mxu0 %v2805
        %3096 = vmatpush.bf16.msra.mxu0 %v2801
        %3097 = vmatmul.bf16.gmra.mxu0 %v739
        %v3098 = vpop.f32.mrf.mxu0
        %v3099 = vadd.f32 %v3086, %v3098
        %v3100 = vpop.f32.mrf.mxu0
        %3101 = vdwg.mxu0
        %3102 = vmatpush.bf16.msra.mxu0 %v2861
        %3103 = vmatpush.bf16.msra.mxu0 %v2857
        %3104 = vmatpush.bf16.msra.mxu0 %v2853
        %3105 = vmatpush.bf16.msra.mxu0 %v2849
        %3106 = vmatpush.bf16.msra.mxu0 %v2845
        %3107 = vmatpush.bf16.msra.mxu0 %v2841
        %3108 = vmatpush.bf16.msra.mxu0 %v2837
        %3109 = vmatpush.bf16.msra.mxu0 %v2833
        %3110 = vmatmul.bf16.gmra.mxu0 %v740
        %v3111 = vpop.f32.mrf.mxu0
        %v3112 = vadd.f32 %v3099, %v3111
        %v3113 = vpop.f32.mrf.mxu0
        %3114 = vdwg.mxu0
        %3115 = vmatpush.bf16.msra.mxu0 %v2893
        %3116 = vmatpush.bf16.msra.mxu0 %v2889
        %3117 = vmatpush.bf16.msra.mxu0 %v2885
        %3118 = vmatpush.bf16.msra.mxu0 %v2881
        %3119 = vmatpush.bf16.msra.mxu0 %v2877
        %3120 = vmatpush.bf16.msra.mxu0 %v2873
        %3121 = vmatpush.bf16.msra.mxu0 %v2869
        %3122 = vmatpush.bf16.msra.mxu0 %v2865
        %3123 = vmatmul.bf16.gmra.mxu0 %v741
        %v3124 = vpop.f32.mrf.mxu0
        %v3125 = vadd.f32 %v3112, %v3124
        %v3126 = vpop.f32.mrf.mxu0
        %3127 = vdwg.mxu0
        %3128 = vmatpush.bf16.msra.mxu0 %v2798
        %3129 = vmatpush.bf16.msra.mxu0 %v2794
        %3130 = vmatpush.bf16.msra.mxu0 %v2790
        %3131 = vmatpush.bf16.msra.mxu0 %v2786
        %3132 = vmatpush.bf16.msra.mxu0 %v2782
        %3133 = vmatpush.bf16.msra.mxu0 %v2778
        %3134 = vmatpush.bf16.msra.mxu0 %v2774
        %3135 = vmatpush.bf16.msra.mxu0 %v2770
        %3136 = vmatmul.bf16.gmra.mxu0 %v738
        %v3137 = vpop.f32.mrf.mxu0
        %v3138 = vadd.f32 %v2378, %v3137
        %v3139 = vpop.f32.mrf.mxu0
        %3140 = vdwg.mxu0
        %3141 = vmatpush.bf16.msra.mxu0 %v2830
        %3142 = vmatpush.bf16.msra.mxu0 %v2826
        %3143 = vmatpush.bf16.msra.mxu0 %v2822
        %3144 = vmatpush.bf16.msra.mxu0 %v2818
        %3145 = vmatpush.bf16.msra.mxu0 %v2814
        %3146 = vmatpush.bf16.msra.mxu0 %v2810
        %3147 = vmatpush.bf16.msra.mxu0 %v2806
        %3148 = vmatpush.bf16.msra.mxu0 %v2802
        %3149 = vmatmul.bf16.gmra.mxu0 %v739
        %v3150 = vpop.f32.mrf.mxu0
        %v3151 = vadd.f32 %v3138, %v3150
        %v3152 = vpop.f32.mrf.mxu0
        %3153 = vdwg.mxu0
        %3154 = vmatpush.bf16.msra.mxu0 %v2862
        %3155 = vmatpush.bf16.msra.mxu0 %v2858
        %3156 = vmatpush.bf16.msra.mxu0 %v2854
        %3157 = vmatpush.bf16.msra.mxu0 %v2850
        %3158 = vmatpush.bf16.msra.mxu0 %v2846
        %3159 = vmatpush.bf16.msra.mxu0 %v2842
        %3160 = vmatpush.bf16.msra.mxu0 %v2838
        %3161 = vmatpush.bf16.msra.mxu0 %v2834
        %3162 = vmatmul.bf16.gmra.mxu0 %v740
        %v3163 = vpop.f32.mrf.mxu0
        %v3164 = vadd.f32 %v3151, %v3163
        %v3165 = vpop.f32.mrf.mxu0
        %3166 = vdwg.mxu0
        %3167 = vmatpush.bf16.msra.mxu0 %v2894
        %3168 = vmatpush.bf16.msra.mxu0 %v2890
        %3169 = vmatpush.bf16.msra.mxu0 %v2886
        %3170 = vmatpush.bf16.msra.mxu0 %v2882
        %3171 = vmatpush.bf16.msra.mxu0 %v2878
        %3172 = vmatpush.bf16.msra.mxu0 %v2874
        %3173 = vmatpush.bf16.msra.mxu0 %v2870
        %3174 = vmatpush.bf16.msra.mxu0 %v2866
        %3175 = vmatmul.bf16.gmra.mxu0 %v741
        %v3176 = vpop.f32.mrf.mxu0
        %v3177 = vadd.f32 %v3164, %v3176
        %v3178 = vpop.f32.mrf.mxu0
        %3179 = vdwg.mxu0
        %3180 = vmatpush.bf16.msra.mxu0 %v2799
        %3181 = vmatpush.bf16.msra.mxu0 %v2795
        %3182 = vmatpush.bf16.msra.mxu0 %v2791
        %3183 = vmatpush.bf16.msra.mxu0 %v2787
        %3184 = vmatpush.bf16.msra.mxu0 %v2783
        %3185 = vmatpush.bf16.msra.mxu0 %v2779
        %3186 = vmatpush.bf16.msra.mxu0 %v2775
        %3187 = vmatpush.bf16.msra.mxu0 %v2771
        %3188 = vmatmul.bf16.gmra.mxu0 %v738
        %v3189 = vpop.f32.mrf.mxu0
        %v3190 = vadd.f32 %v2379, %v3189
        %v3191 = vpop.f32.mrf.mxu0
        %3192 = vdwg.mxu0
        %3193 = vmatpush.bf16.msra.mxu0 %v2831
        %3194 = vmatpush.bf16.msra.mxu0 %v2827
        %3195 = vmatpush.bf16.msra.mxu0 %v2823
        %3196 = vmatpush.bf16.msra.mxu0 %v2819
        %3197 = vmatpush.bf16.msra.mxu0 %v2815
        %3198 = vmatpush.bf16.msra.mxu0 %v2811
        %3199 = vmatpush.bf16.msra.mxu0 %v2807
        %3200 = vmatpush.bf16.msra.mxu0 %v2803
        %3201 = vmatmul.bf16.gmra.mxu0 %v739
        %v3202 = vpop.f32.mrf.mxu0
        %v3203 = vadd.f32 %v3190, %v3202
        %v3204 = vpop.f32.mrf.mxu0
        %3205 = vdwg.mxu0
        %3206 = vmatpush.bf16.msra.mxu0 %v2863
        %3207 = vmatpush.bf16.msra.mxu0 %v2859
        %3208 = vmatpush.bf16.msra.mxu0 %v2855
        %3209 = vmatpush.bf16.msra.mxu0 %v2851
        %3210 = vmatpush.bf16.msra.mxu0 %v2847
        %3211 = vmatpush.bf16.msra.mxu0 %v2843
        %3212 = vmatpush.bf16.msra.mxu0 %v2839
        %3213 = vmatpush.bf16.msra.mxu0 %v2835
        %3214 = vmatmul.bf16.gmra.mxu0 %v740
        %v3215 = vpop.f32.mrf.mxu0
        %v3216 = vadd.f32 %v3203, %v3215
        %v3217 = vpop.f32.mrf.mxu0
        %3218 = vdwg.mxu0
        %3219 = vmatpush.bf16.msra.mxu0 %v2895
        %3220 = vmatpush.bf16.msra.mxu0 %v2891
        %3221 = vmatpush.bf16.msra.mxu0 %v2887
        %3222 = vmatpush.bf16.msra.mxu0 %v2883
        %3223 = vmatpush.bf16.msra.mxu0 %v2879
        %3224 = vmatpush.bf16.msra.mxu0 %v2875
        %3225 = vmatpush.bf16.msra.mxu0 %v2871
        %3226 = vmatpush.bf16.msra.mxu0 %v2867
        %3227 = vmatmul.bf16.gmra.mxu0 %v741
        %v3228 = vpop.f32.mrf.mxu0
        %v3229 = vadd.f32 %v3216, %v3228
        %v3230 = vpop.f32.mrf.mxu0
        %3231 = vdwg.mxu0
        %v3232 = vmax.f32 %v3073, 0.0
        %v3233 = vmax.f32 %v3125, 0.0
        %v3234 = vmax.f32 %v3177, 0.0
        %v3235 = vmax.f32 %v3229, 0.0
        %v3236 = vadd.f32 %v734, %v3232
        %v3237 = vadd.f32 %v735, %v3233
        %v3238 = vadd.f32 %v736, %v3234
        %v3239 = vadd.f32 %v737, %v3235
        %v3240 = vpack.c.bf16 %v3236, %v3236
        %v3241 = vpack.c.bf16 %v3237, %v3237
        %v3242 = vpack.c.bf16 %v3238, %v3238
        %v3243 = vpack.c.bf16 %v3239, %v3239
        %s3244 = scalar_lea.vmem [#allocation16], 1024
        %v3245 = vld [vmem:[%s3244] sm:$0xff]
        %v3246 = vld [vmem:[%s3244 + $0x8] sm:$0xff]
        %v3247 = vld [vmem:[%s3244 + $0x10] sm:$0xff]
        %v3248 = vld [vmem:[%s3244 + $0x18] sm:$0xff]
        %v3249 = vld [vmem:[%s3244 + $0x20] sm:$0xff]
        %v3250 = vld [vmem:[%s3244 + $0x28] sm:$0xff]
        %v3251 = vld [vmem:[%s3244 + $0x30] sm:$0xff]
        %v3252 = vld [vmem:[%s3244 + $0x38] sm:$0xff]
        %v3253 = vld [vmem:[%s3244 + $0x40] sm:$0xff]
        %v3254 = vld [vmem:[%s3244 + $0x48] sm:$0xff]
        %v3255 = vld [vmem:[%s3244 + $0x50] sm:$0xff]
        %v3256 = vld [vmem:[%s3244 + $0x58] sm:$0xff]
        %v3257 = vld [vmem:[%s3244 + $0x60] sm:$0xff]
        %v3258 = vld [vmem:[%s3244 + $0x68] sm:$0xff]
        %v3259 = vld [vmem:[%s3244 + $0x70] sm:$0xff]
        %v3260 = vld [vmem:[%s3244 + $0x78] sm:$0xff]
        %v3261 = vld [vmem:[%s3244 + $0x80] sm:$0xff]
        %v3262 = vld [vmem:[%s3244 + $0x88] sm:$0xff]
        %v3263 = vld [vmem:[%s3244 + $0x90] sm:$0xff]
        %v3264 = vld [vmem:[%s3244 + $0x98] sm:$0xff]
        %v3265 = vld [vmem:[%s3244 + $0xa0] sm:$0xff]
        %v3266 = vld [vmem:[%s3244 + $0xa8] sm:$0xff]
        %v3267 = vld [vmem:[%s3244 + $0xb0] sm:$0xff]
        %v3268 = vld [vmem:[%s3244 + $0xb8] sm:$0xff]
        %v3269 = vld [vmem:[%s3244 + $0xc0] sm:$0xff]
        %v3270 = vld [vmem:[%s3244 + $0xc8] sm:$0xff]
        %v3271 = vld [vmem:[%s3244 + $0xd0] sm:$0xff]
        %v3272 = vld [vmem:[%s3244 + $0xd8] sm:$0xff]
        %v3273 = vld [vmem:[%s3244 + $0xe0] sm:$0xff]
        %v3274 = vld [vmem:[%s3244 + $0xe8] sm:$0xff]
        %v3275 = vld [vmem:[%s3244 + $0xf0] sm:$0xff]
        %v3276 = vld [vmem:[%s3244 + $0xf8] sm:$0xff]
        %v3277 = vld [vmem:[%s3244 + $0x100] sm:$0xff]
        %v3278 = vld [vmem:[%s3244 + $0x108] sm:$0xff]
        %v3279 = vld [vmem:[%s3244 + $0x110] sm:$0xff]
        %v3280 = vld [vmem:[%s3244 + $0x118] sm:$0xff]
        %v3281 = vld [vmem:[%s3244 + $0x120] sm:$0xff]
        %v3282 = vld [vmem:[%s3244 + $0x128] sm:$0xff]
        %v3283 = vld [vmem:[%s3244 + $0x130] sm:$0xff]
        %v3284 = vld [vmem:[%s3244 + $0x138] sm:$0xff]
        %v3285 = vld [vmem:[%s3244 + $0x140] sm:$0xff]
        %v3286 = vld [vmem:[%s3244 + $0x148] sm:$0xff]
        %v3287 = vld [vmem:[%s3244 + $0x150] sm:$0xff]
        %v3288 = vld [vmem:[%s3244 + $0x158] sm:$0xff]
        %v3289 = vld [vmem:[%s3244 + $0x160] sm:$0xff]
        %v3290 = vld [vmem:[%s3244 + $0x168] sm:$0xff]
        %v3291 = vld [vmem:[%s3244 + $0x170] sm:$0xff]
        %v3292 = vld [vmem:[%s3244 + $0x178] sm:$0xff]
        %v3293 = vld [vmem:[%s3244 + $0x180] sm:$0xff]
        %v3294 = vld [vmem:[%s3244 + $0x188] sm:$0xff]
        %v3295 = vld [vmem:[%s3244 + $0x190] sm:$0xff]
        %v3296 = vld [vmem:[%s3244 + $0x198] sm:$0xff]
        %v3297 = vld [vmem:[%s3244 + $0x1a0] sm:$0xff]
        %v3298 = vld [vmem:[%s3244 + $0x1a8] sm:$0xff]
        %v3299 = vld [vmem:[%s3244 + $0x1b0] sm:$0xff]
        %v3300 = vld [vmem:[%s3244 + $0x1b8] sm:$0xff]
        %v3301 = vld [vmem:[%s3244 + $0x1c0] sm:$0xff]
        %v3302 = vld [vmem:[%s3244 + $0x1c8] sm:$0xff]
        %v3303 = vld [vmem:[%s3244 + $0x1d0] sm:$0xff]
        %v3304 = vld [vmem:[%s3244 + $0x1d8] sm:$0xff]
        %v3305 = vld [vmem:[%s3244 + $0x1e0] sm:$0xff]
        %v3306 = vld [vmem:[%s3244 + $0x1e8] sm:$0xff]
        %v3307 = vld [vmem:[%s3244 + $0x1f0] sm:$0xff]
        %v3308 = vld [vmem:[%s3244 + $0x1f8] sm:$0xff]
        %v3309 = vld [vmem:[%s3244 + $0x200] sm:$0xff]
        %v3310 = vld [vmem:[%s3244 + $0x208] sm:$0xff]
        %v3311 = vld [vmem:[%s3244 + $0x210] sm:$0xff]
        %v3312 = vld [vmem:[%s3244 + $0x218] sm:$0xff]
        %v3313 = vld [vmem:[%s3244 + $0x220] sm:$0xff]
        %v3314 = vld [vmem:[%s3244 + $0x228] sm:$0xff]
        %v3315 = vld [vmem:[%s3244 + $0x230] sm:$0xff]
        %v3316 = vld [vmem:[%s3244 + $0x238] sm:$0xff]
        %v3317 = vld [vmem:[%s3244 + $0x240] sm:$0xff]
        %v3318 = vld [vmem:[%s3244 + $0x248] sm:$0xff]
        %v3319 = vld [vmem:[%s3244 + $0x250] sm:$0xff]
        %v3320 = vld [vmem:[%s3244 + $0x258] sm:$0xff]
        %v3321 = vld [vmem:[%s3244 + $0x260] sm:$0xff]
        %v3322 = vld [vmem:[%s3244 + $0x268] sm:$0xff]
        %v3323 = vld [vmem:[%s3244 + $0x270] sm:$0xff]
        %v3324 = vld [vmem:[%s3244 + $0x278] sm:$0xff]
        %v3325 = vld [vmem:[%s3244 + $0x280] sm:$0xff]
        %v3326 = vld [vmem:[%s3244 + $0x288] sm:$0xff]
        %v3327 = vld [vmem:[%s3244 + $0x290] sm:$0xff]
        %v3328 = vld [vmem:[%s3244 + $0x298] sm:$0xff]
        %v3329 = vld [vmem:[%s3244 + $0x2a0] sm:$0xff]
        %v3330 = vld [vmem:[%s3244 + $0x2a8] sm:$0xff]
        %v3331 = vld [vmem:[%s3244 + $0x2b0] sm:$0xff]
        %v3332 = vld [vmem:[%s3244 + $0x2b8] sm:$0xff]
        %v3333 = vld [vmem:[%s3244 + $0x2c0] sm:$0xff]
        %v3334 = vld [vmem:[%s3244 + $0x2c8] sm:$0xff]
        %v3335 = vld [vmem:[%s3244 + $0x2d0] sm:$0xff]
        %v3336 = vld [vmem:[%s3244 + $0x2d8] sm:$0xff]
        %v3337 = vld [vmem:[%s3244 + $0x2e0] sm:$0xff]
        %v3338 = vld [vmem:[%s3244 + $0x2e8] sm:$0xff]
        %v3339 = vld [vmem:[%s3244 + $0x2f0] sm:$0xff]
        %v3340 = vld [vmem:[%s3244 + $0x2f8] sm:$0xff]
        %v3341 = vld [vmem:[%s3244 + $0x300] sm:$0xff]
        %v3342 = vld [vmem:[%s3244 + $0x308] sm:$0xff]
        %v3343 = vld [vmem:[%s3244 + $0x310] sm:$0xff]
        %v3344 = vld [vmem:[%s3244 + $0x318] sm:$0xff]
        %v3345 = vld [vmem:[%s3244 + $0x320] sm:$0xff]
        %v3346 = vld [vmem:[%s3244 + $0x328] sm:$0xff]
        %v3347 = vld [vmem:[%s3244 + $0x330] sm:$0xff]
        %v3348 = vld [vmem:[%s3244 + $0x338] sm:$0xff]
        %v3349 = vld [vmem:[%s3244 + $0x340] sm:$0xff]
        %v3350 = vld [vmem:[%s3244 + $0x348] sm:$0xff]
        %v3351 = vld [vmem:[%s3244 + $0x350] sm:$0xff]
        %v3352 = vld [vmem:[%s3244 + $0x358] sm:$0xff]
        %v3353 = vld [vmem:[%s3244 + $0x360] sm:$0xff]
        %v3354 = vld [vmem:[%s3244 + $0x368] sm:$0xff]
        %v3355 = vld [vmem:[%s3244 + $0x370] sm:$0xff]
        %v3356 = vld [vmem:[%s3244 + $0x378] sm:$0xff]
        %v3357 = vld [vmem:[%s3244 + $0x380] sm:$0xff]
        %v3358 = vld [vmem:[%s3244 + $0x388] sm:$0xff]
        %v3359 = vld [vmem:[%s3244 + $0x390] sm:$0xff]
        %v3360 = vld [vmem:[%s3244 + $0x398] sm:$0xff]
        %v3361 = vld [vmem:[%s3244 + $0x3a0] sm:$0xff]
        %v3362 = vld [vmem:[%s3244 + $0x3a8] sm:$0xff]
        %v3363 = vld [vmem:[%s3244 + $0x3b0] sm:$0xff]
        %v3364 = vld [vmem:[%s3244 + $0x3b8] sm:$0xff]
        %v3365 = vld [vmem:[%s3244 + $0x3c0] sm:$0xff]
        %v3366 = vld [vmem:[%s3244 + $0x3c8] sm:$0xff]
        %v3367 = vld [vmem:[%s3244 + $0x3d0] sm:$0xff]
        %v3368 = vld [vmem:[%s3244 + $0x3d8] sm:$0xff]
        %v3369 = vld [vmem:[%s3244 + $0x3e0] sm:$0xff]
        %v3370 = vld [vmem:[%s3244 + $0x3e8] sm:$0xff]
        %v3371 = vld [vmem:[%s3244 + $0x3f0] sm:$0xff]
        %v3372 = vld [vmem:[%s3244 + $0x3f8] sm:$0xff]
        %s3373 = scalar_lea.vmem [#allocation18], 4
        %v3374 = vld [vmem:[%s3373] sm:$0xf]
        %v3376 = vperm.slane %v3374, 0
        %v3377 = vperm.slane %v3374, 1
        %v3378 = vperm.slane %v3374, 2
        %v3379 = vperm.slane %v3374, 3
        %v3512 = vunpack.c.l.b16 %v3245
        %v3513 = vunpack.c.h.b16 %v3245
        %v3514 = vunpack.c.l.b16 %v3246
        %v3515 = vunpack.c.h.b16 %v3246
        %v3516 = vunpack.c.l.b16 %v3247
        %v3517 = vunpack.c.h.b16 %v3247
        %v3518 = vunpack.c.l.b16 %v3248
        %v3519 = vunpack.c.h.b16 %v3248
        %v3520 = vunpack.c.l.b16 %v3249
        %v3521 = vunpack.c.h.b16 %v3249
        %v3522 = vunpack.c.l.b16 %v3250
        %v3523 = vunpack.c.h.b16 %v3250
        %v3524 = vunpack.c.l.b16 %v3251
        %v3525 = vunpack.c.h.b16 %v3251
        %v3526 = vunpack.c.l.b16 %v3252
        %v3527 = vunpack.c.h.b16 %v3252
        %v3528 = vunpack.c.l.b16 %v3253
        %v3529 = vunpack.c.h.b16 %v3253
        %v3530 = vunpack.c.l.b16 %v3254
        %v3531 = vunpack.c.h.b16 %v3254
        %v3532 = vunpack.c.l.b16 %v3255
        %v3533 = vunpack.c.h.b16 %v3255
        %v3534 = vunpack.c.l.b16 %v3256
        %v3535 = vunpack.c.h.b16 %v3256
        %v3536 = vunpack.c.l.b16 %v3257
        %v3537 = vunpack.c.h.b16 %v3257
        %v3538 = vunpack.c.l.b16 %v3258
        %v3539 = vunpack.c.h.b16 %v3258
        %v3540 = vunpack.c.l.b16 %v3259
        %v3541 = vunpack.c.h.b16 %v3259
        %v3542 = vunpack.c.l.b16 %v3260
        %v3543 = vunpack.c.h.b16 %v3260
        %v3544 = vunpack.c.l.b16 %v3261
        %v3545 = vunpack.c.h.b16 %v3261
        %v3546 = vunpack.c.l.b16 %v3262
        %v3547 = vunpack.c.h.b16 %v3262
        %v3548 = vunpack.c.l.b16 %v3263
        %v3549 = vunpack.c.h.b16 %v3263
        %v3550 = vunpack.c.l.b16 %v3264
        %v3551 = vunpack.c.h.b16 %v3264
        %v3552 = vunpack.c.l.b16 %v3265
        %v3553 = vunpack.c.h.b16 %v3265
        %v3554 = vunpack.c.l.b16 %v3266
        %v3555 = vunpack.c.h.b16 %v3266
        %v3556 = vunpack.c.l.b16 %v3267
        %v3557 = vunpack.c.h.b16 %v3267
        %v3558 = vunpack.c.l.b16 %v3268
        %v3559 = vunpack.c.h.b16 %v3268
        %v3560 = vunpack.c.l.b16 %v3269
        %v3561 = vunpack.c.h.b16 %v3269
        %v3562 = vunpack.c.l.b16 %v3270
        %v3563 = vunpack.c.h.b16 %v3270
        %v3564 = vunpack.c.l.b16 %v3271
        %v3565 = vunpack.c.h.b16 %v3271
        %v3566 = vunpack.c.l.b16 %v3272
        %v3567 = vunpack.c.h.b16 %v3272
        %v3568 = vunpack.c.l.b16 %v3273
        %v3569 = vunpack.c.h.b16 %v3273
        %v3570 = vunpack.c.l.b16 %v3274
        %v3571 = vunpack.c.h.b16 %v3274
        %v3572 = vunpack.c.l.b16 %v3275
        %v3573 = vunpack.c.h.b16 %v3275
        %v3574 = vunpack.c.l.b16 %v3276
        %v3575 = vunpack.c.h.b16 %v3276
        %v3576 = vunpack.c.l.b16 %v3277
        %v3577 = vunpack.c.h.b16 %v3277
        %v3578 = vunpack.c.l.b16 %v3278
        %v3579 = vunpack.c.h.b16 %v3278
        %v3580 = vunpack.c.l.b16 %v3279
        %v3581 = vunpack.c.h.b16 %v3279
        %v3582 = vunpack.c.l.b16 %v3280
        %v3583 = vunpack.c.h.b16 %v3280
        %v3584 = vunpack.c.l.b16 %v3281
        %v3585 = vunpack.c.h.b16 %v3281
        %v3586 = vunpack.c.l.b16 %v3282
        %v3587 = vunpack.c.h.b16 %v3282
        %v3588 = vunpack.c.l.b16 %v3283
        %v3589 = vunpack.c.h.b16 %v3283
        %v3590 = vunpack.c.l.b16 %v3284
        %v3591 = vunpack.c.h.b16 %v3284
        %v3592 = vunpack.c.l.b16 %v3285
        %v3593 = vunpack.c.h.b16 %v3285
        %v3594 = vunpack.c.l.b16 %v3286
        %v3595 = vunpack.c.h.b16 %v3286
        %v3596 = vunpack.c.l.b16 %v3287
        %v3597 = vunpack.c.h.b16 %v3287
        %v3598 = vunpack.c.l.b16 %v3288
        %v3599 = vunpack.c.h.b16 %v3288
        %v3600 = vunpack.c.l.b16 %v3289
        %v3601 = vunpack.c.h.b16 %v3289
        %v3602 = vunpack.c.l.b16 %v3290
        %v3603 = vunpack.c.h.b16 %v3290
        %v3604 = vunpack.c.l.b16 %v3291
        %v3605 = vunpack.c.h.b16 %v3291
        %v3606 = vunpack.c.l.b16 %v3292
        %v3607 = vunpack.c.h.b16 %v3292
        %v3608 = vunpack.c.l.b16 %v3293
        %v3609 = vunpack.c.h.b16 %v3293
        %v3610 = vunpack.c.l.b16 %v3294
        %v3611 = vunpack.c.h.b16 %v3294
        %v3612 = vunpack.c.l.b16 %v3295
        %v3613 = vunpack.c.h.b16 %v3295
        %v3614 = vunpack.c.l.b16 %v3296
        %v3615 = vunpack.c.h.b16 %v3296
        %v3616 = vunpack.c.l.b16 %v3297
        %v3617 = vunpack.c.h.b16 %v3297
        %v3618 = vunpack.c.l.b16 %v3298
        %v3619 = vunpack.c.h.b16 %v3298
        %v3620 = vunpack.c.l.b16 %v3299
        %v3621 = vunpack.c.h.b16 %v3299
        %v3622 = vunpack.c.l.b16 %v3300
        %v3623 = vunpack.c.h.b16 %v3300
        %v3624 = vunpack.c.l.b16 %v3301
        %v3625 = vunpack.c.h.b16 %v3301
        %v3626 = vunpack.c.l.b16 %v3302
        %v3627 = vunpack.c.h.b16 %v3302
        %v3628 = vunpack.c.l.b16 %v3303
        %v3629 = vunpack.c.h.b16 %v3303
        %v3630 = vunpack.c.l.b16 %v3304
        %v3631 = vunpack.c.h.b16 %v3304
        %v3632 = vunpack.c.l.b16 %v3305
        %v3633 = vunpack.c.h.b16 %v3305
        %v3634 = vunpack.c.l.b16 %v3306
        %v3635 = vunpack.c.h.b16 %v3306
        %v3636 = vunpack.c.l.b16 %v3307
        %v3637 = vunpack.c.h.b16 %v3307
        %v3638 = vunpack.c.l.b16 %v3308
        %v3639 = vunpack.c.h.b16 %v3308
        %v3640 = vunpack.c.l.b16 %v3309
        %v3641 = vunpack.c.h.b16 %v3309
        %v3642 = vunpack.c.l.b16 %v3310
        %v3643 = vunpack.c.h.b16 %v3310
        %v3644 = vunpack.c.l.b16 %v3311
        %v3645 = vunpack.c.h.b16 %v3311
        %v3646 = vunpack.c.l.b16 %v3312
        %v3647 = vunpack.c.h.b16 %v3312
        %v3648 = vunpack.c.l.b16 %v3313
        %v3649 = vunpack.c.h.b16 %v3313
        %v3650 = vunpack.c.l.b16 %v3314
        %v3651 = vunpack.c.h.b16 %v3314
        %v3652 = vunpack.c.l.b16 %v3315
        %v3653 = vunpack.c.h.b16 %v3315
        %v3654 = vunpack.c.l.b16 %v3316
        %v3655 = vunpack.c.h.b16 %v3316
        %v3656 = vunpack.c.l.b16 %v3317
        %v3657 = vunpack.c.h.b16 %v3317
        %v3658 = vunpack.c.l.b16 %v3318
        %v3659 = vunpack.c.h.b16 %v3318
        %v3660 = vunpack.c.l.b16 %v3319
        %v3661 = vunpack.c.h.b16 %v3319
        %v3662 = vunpack.c.l.b16 %v3320
        %v3663 = vunpack.c.h.b16 %v3320
        %v3664 = vunpack.c.l.b16 %v3321
        %v3665 = vunpack.c.h.b16 %v3321
        %v3666 = vunpack.c.l.b16 %v3322
        %v3667 = vunpack.c.h.b16 %v3322
        %v3668 = vunpack.c.l.b16 %v3323
        %v3669 = vunpack.c.h.b16 %v3323
        %v3670 = vunpack.c.l.b16 %v3324
        %v3671 = vunpack.c.h.b16 %v3324
        %v3672 = vunpack.c.l.b16 %v3325
        %v3673 = vunpack.c.h.b16 %v3325
        %v3674 = vunpack.c.l.b16 %v3326
        %v3675 = vunpack.c.h.b16 %v3326
        %v3676 = vunpack.c.l.b16 %v3327
        %v3677 = vunpack.c.h.b16 %v3327
        %v3678 = vunpack.c.l.b16 %v3328
        %v3679 = vunpack.c.h.b16 %v3328
        %v3680 = vunpack.c.l.b16 %v3329
        %v3681 = vunpack.c.h.b16 %v3329
        %v3682 = vunpack.c.l.b16 %v3330
        %v3683 = vunpack.c.h.b16 %v3330
        %v3684 = vunpack.c.l.b16 %v3331
        %v3685 = vunpack.c.h.b16 %v3331
        %v3686 = vunpack.c.l.b16 %v3332
        %v3687 = vunpack.c.h.b16 %v3332
        %v3688 = vunpack.c.l.b16 %v3333
        %v3689 = vunpack.c.h.b16 %v3333
        %v3690 = vunpack.c.l.b16 %v3334
        %v3691 = vunpack.c.h.b16 %v3334
        %v3692 = vunpack.c.l.b16 %v3335
        %v3693 = vunpack.c.h.b16 %v3335
        %v3694 = vunpack.c.l.b16 %v3336
        %v3695 = vunpack.c.h.b16 %v3336
        %v3696 = vunpack.c.l.b16 %v3337
        %v3697 = vunpack.c.h.b16 %v3337
        %v3698 = vunpack.c.l.b16 %v3338
        %v3699 = vunpack.c.h.b16 %v3338
        %v3700 = vunpack.c.l.b16 %v3339
        %v3701 = vunpack.c.h.b16 %v3339
        %v3702 = vunpack.c.l.b16 %v3340
        %v3703 = vunpack.c.h.b16 %v3340
        %v3704 = vunpack.c.l.b16 %v3341
        %v3705 = vunpack.c.h.b16 %v3341
        %v3706 = vunpack.c.l.b16 %v3342
        %v3707 = vunpack.c.h.b16 %v3342
        %v3708 = vunpack.c.l.b16 %v3343
        %v3709 = vunpack.c.h.b16 %v3343
        %v3710 = vunpack.c.l.b16 %v3344
        %v3711 = vunpack.c.h.b16 %v3344
        %v3712 = vunpack.c.l.b16 %v3345
        %v3713 = vunpack.c.h.b16 %v3345
        %v3714 = vunpack.c.l.b16 %v3346
        %v3715 = vunpack.c.h.b16 %v3346
        %v3716 = vunpack.c.l.b16 %v3347
        %v3717 = vunpack.c.h.b16 %v3347
        %v3718 = vunpack.c.l.b16 %v3348
        %v3719 = vunpack.c.h.b16 %v3348
        %v3720 = vunpack.c.l.b16 %v3349
        %v3721 = vunpack.c.h.b16 %v3349
        %v3722 = vunpack.c.l.b16 %v3350
        %v3723 = vunpack.c.h.b16 %v3350
        %v3724 = vunpack.c.l.b16 %v3351
        %v3725 = vunpack.c.h.b16 %v3351
        %v3726 = vunpack.c.l.b16 %v3352
        %v3727 = vunpack.c.h.b16 %v3352
        %v3728 = vunpack.c.l.b16 %v3353
        %v3729 = vunpack.c.h.b16 %v3353
        %v3730 = vunpack.c.l.b16 %v3354
        %v3731 = vunpack.c.h.b16 %v3354
        %v3732 = vunpack.c.l.b16 %v3355
        %v3733 = vunpack.c.h.b16 %v3355
        %v3734 = vunpack.c.l.b16 %v3356
        %v3735 = vunpack.c.h.b16 %v3356
        %v3736 = vunpack.c.l.b16 %v3357
        %v3737 = vunpack.c.h.b16 %v3357
        %v3738 = vunpack.c.l.b16 %v3358
        %v3739 = vunpack.c.h.b16 %v3358
        %v3740 = vunpack.c.l.b16 %v3359
        %v3741 = vunpack.c.h.b16 %v3359
        %v3742 = vunpack.c.l.b16 %v3360
        %v3743 = vunpack.c.h.b16 %v3360
        %v3744 = vunpack.c.l.b16 %v3361
        %v3745 = vunpack.c.h.b16 %v3361
        %v3746 = vunpack.c.l.b16 %v3362
        %v3747 = vunpack.c.h.b16 %v3362
        %v3748 = vunpack.c.l.b16 %v3363
        %v3749 = vunpack.c.h.b16 %v3363
        %v3750 = vunpack.c.l.b16 %v3364
        %v3751 = vunpack.c.h.b16 %v3364
        %v3752 = vunpack.c.l.b16 %v3365
        %v3753 = vunpack.c.h.b16 %v3365
        %v3754 = vunpack.c.l.b16 %v3366
        %v3755 = vunpack.c.h.b16 %v3366
        %v3756 = vunpack.c.l.b16 %v3367
        %v3757 = vunpack.c.h.b16 %v3367
        %v3758 = vunpack.c.l.b16 %v3368
        %v3759 = vunpack.c.h.b16 %v3368
        %v3760 = vunpack.c.l.b16 %v3369
        %v3761 = vunpack.c.h.b16 %v3369
        %v3762 = vunpack.c.l.b16 %v3370
        %v3763 = vunpack.c.h.b16 %v3370
        %v3764 = vunpack.c.l.b16 %v3371
        %v3765 = vunpack.c.h.b16 %v3371
        %v3766 = vunpack.c.l.b16 %v3372
        %v3767 = vunpack.c.h.b16 %v3372
        %v3768 = vpack.c.b16 %v3516, %v3512
        %v3769 = vpack.c.b16 %v3517, %v3513
        %v3770 = vpack.c.b16 %v3518, %v3514
        %v3771 = vpack.c.b16 %v3519, %v3515
        %v3772 = vpack.c.b16 %v3524, %v3520
        %v3773 = vpack.c.b16 %v3525, %v3521
        %v3774 = vpack.c.b16 %v3526, %v3522
        %v3775 = vpack.c.b16 %v3527, %v3523
        %v3776 = vpack.c.b16 %v3532, %v3528
        %v3777 = vpack.c.b16 %v3533, %v3529
        %v3778 = vpack.c.b16 %v3534, %v3530
        %v3779 = vpack.c.b16 %v3535, %v3531
        %v3780 = vpack.c.b16 %v3540, %v3536
        %v3781 = vpack.c.b16 %v3541, %v3537
        %v3782 = vpack.c.b16 %v3542, %v3538
        %v3783 = vpack.c.b16 %v3543, %v3539
        %v3784 = vpack.c.b16 %v3548, %v3544
        %v3785 = vpack.c.b16 %v3549, %v3545
        %v3786 = vpack.c.b16 %v3550, %v3546
        %v3787 = vpack.c.b16 %v3551, %v3547
        %v3788 = vpack.c.b16 %v3556, %v3552
        %v3789 = vpack.c.b16 %v3557, %v3553
        %v3790 = vpack.c.b16 %v3558, %v3554
        %v3791 = vpack.c.b16 %v3559, %v3555
        %v3792 = vpack.c.b16 %v3564, %v3560
        %v3793 = vpack.c.b16 %v3565, %v3561
        %v3794 = vpack.c.b16 %v3566, %v3562
        %v3795 = vpack.c.b16 %v3567, %v3563
        %v3796 = vpack.c.b16 %v3572, %v3568
        %v3797 = vpack.c.b16 %v3573, %v3569
        %v3798 = vpack.c.b16 %v3574, %v3570
        %v3799 = vpack.c.b16 %v3575, %v3571
        %v3800 = vpack.c.b16 %v3580, %v3576
        %v3801 = vpack.c.b16 %v3581, %v3577
        %v3802 = vpack.c.b16 %v3582, %v3578
        %v3803 = vpack.c.b16 %v3583, %v3579
        %v3804 = vpack.c.b16 %v3588, %v3584
        %v3805 = vpack.c.b16 %v3589, %v3585
        %v3806 = vpack.c.b16 %v3590, %v3586
        %v3807 = vpack.c.b16 %v3591, %v3587
        %v3808 = vpack.c.b16 %v3596, %v3592
        %v3809 = vpack.c.b16 %v3597, %v3593
        %v3810 = vpack.c.b16 %v3598, %v3594
        %v3811 = vpack.c.b16 %v3599, %v3595
        %v3812 = vpack.c.b16 %v3604, %v3600
        %v3813 = vpack.c.b16 %v3605, %v3601
        %v3814 = vpack.c.b16 %v3606, %v3602
        %v3815 = vpack.c.b16 %v3607, %v3603
        %v3816 = vpack.c.b16 %v3612, %v3608
        %v3817 = vpack.c.b16 %v3613, %v3609
        %v3818 = vpack.c.b16 %v3614, %v3610
        %v3819 = vpack.c.b16 %v3615, %v3611
        %v3820 = vpack.c.b16 %v3620, %v3616
        %v3821 = vpack.c.b16 %v3621, %v3617
        %v3822 = vpack.c.b16 %v3622, %v3618
        %v3823 = vpack.c.b16 %v3623, %v3619
        %v3824 = vpack.c.b16 %v3628, %v3624
        %v3825 = vpack.c.b16 %v3629, %v3625
        %v3826 = vpack.c.b16 %v3630, %v3626
        %v3827 = vpack.c.b16 %v3631, %v3627
        %v3828 = vpack.c.b16 %v3636, %v3632
        %v3829 = vpack.c.b16 %v3637, %v3633
        %v3830 = vpack.c.b16 %v3638, %v3634
        %v3831 = vpack.c.b16 %v3639, %v3635
        %v3832 = vpack.c.b16 %v3644, %v3640
        %v3833 = vpack.c.b16 %v3645, %v3641
        %v3834 = vpack.c.b16 %v3646, %v3642
        %v3835 = vpack.c.b16 %v3647, %v3643
        %v3836 = vpack.c.b16 %v3652, %v3648
        %v3837 = vpack.c.b16 %v3653, %v3649
        %v3838 = vpack.c.b16 %v3654, %v3650
        %v3839 = vpack.c.b16 %v3655, %v3651
        %v3840 = vpack.c.b16 %v3660, %v3656
        %v3841 = vpack.c.b16 %v3661, %v3657
        %v3842 = vpack.c.b16 %v3662, %v3658
        %v3843 = vpack.c.b16 %v3663, %v3659
        %v3844 = vpack.c.b16 %v3668, %v3664
        %v3845 = vpack.c.b16 %v3669, %v3665
        %v3846 = vpack.c.b16 %v3670, %v3666
        %v3847 = vpack.c.b16 %v3671, %v3667
        %v3848 = vpack.c.b16 %v3676, %v3672
        %v3849 = vpack.c.b16 %v3677, %v3673
        %v3850 = vpack.c.b16 %v3678, %v3674
        %v3851 = vpack.c.b16 %v3679, %v3675
        %v3852 = vpack.c.b16 %v3684, %v3680
        %v3853 = vpack.c.b16 %v3685, %v3681
        %v3854 = vpack.c.b16 %v3686, %v3682
        %v3855 = vpack.c.b16 %v3687, %v3683
        %v3856 = vpack.c.b16 %v3692, %v3688
        %v3857 = vpack.c.b16 %v3693, %v3689
        %v3858 = vpack.c.b16 %v3694, %v3690
        %v3859 = vpack.c.b16 %v3695, %v3691
        %v3860 = vpack.c.b16 %v3700, %v3696
        %v3861 = vpack.c.b16 %v3701, %v3697
        %v3862 = vpack.c.b16 %v3702, %v3698
        %v3863 = vpack.c.b16 %v3703, %v3699
        %v3864 = vpack.c.b16 %v3708, %v3704
        %v3865 = vpack.c.b16 %v3709, %v3705
        %v3866 = vpack.c.b16 %v3710, %v3706
        %v3867 = vpack.c.b16 %v3711, %v3707
        %v3868 = vpack.c.b16 %v3716, %v3712
        %v3869 = vpack.c.b16 %v3717, %v3713
        %v3870 = vpack.c.b16 %v3718, %v3714
        %v3871 = vpack.c.b16 %v3719, %v3715
        %v3872 = vpack.c.b16 %v3724, %v3720
        %v3873 = vpack.c.b16 %v3725, %v3721
        %v3874 = vpack.c.b16 %v3726, %v3722
        %v3875 = vpack.c.b16 %v3727, %v3723
        %v3876 = vpack.c.b16 %v3732, %v3728
        %v3877 = vpack.c.b16 %v3733, %v3729
        %v3878 = vpack.c.b16 %v3734, %v3730
        %v3879 = vpack.c.b16 %v3735, %v3731
        %v3880 = vpack.c.b16 %v3740, %v3736
        %v3881 = vpack.c.b16 %v3741, %v3737
        %v3882 = vpack.c.b16 %v3742, %v3738
        %v3883 = vpack.c.b16 %v3743, %v3739
        %v3884 = vpack.c.b16 %v3748, %v3744
        %v3885 = vpack.c.b16 %v3749, %v3745
        %v3886 = vpack.c.b16 %v3750, %v3746
        %v3887 = vpack.c.b16 %v3751, %v3747
        %v3888 = vpack.c.b16 %v3756, %v3752
        %v3889 = vpack.c.b16 %v3757, %v3753
        %v3890 = vpack.c.b16 %v3758, %v3754
        %v3891 = vpack.c.b16 %v3759, %v3755
        %v3892 = vpack.c.b16 %v3764, %v3760
        %v3893 = vpack.c.b16 %v3765, %v3761
        %v3894 = vpack.c.b16 %v3766, %v3762
        %v3895 = vpack.c.b16 %v3767, %v3763
        %4024 = vmatpush.bf16.msra.mxu0 %v3796
        %4025 = vmatpush.bf16.msra.mxu0 %v3792
        %4026 = vmatpush.bf16.msra.mxu0 %v3788
        %4027 = vmatpush.bf16.msra.mxu0 %v3784
        %4028 = vmatpush.bf16.msra.mxu0 %v3780
        %4029 = vmatpush.bf16.msra.mxu0 %v3776
        %4030 = vmatpush.bf16.msra.mxu0 %v3772
        %4031 = vmatpush.bf16.msra.mxu0 %v3768
        %4032 = vmatmul.bf16.gmra.mxu0 %v3240
        %v4033 = vpop.f32.mrf.mxu0
        %v4034 = vadd.f32 %v3376, %v4033
        %v4035 = vpop.f32.mrf.mxu0
        %4036 = vdwg.mxu0
        %4037 = vmatpush.bf16.msra.mxu0 %v3828
        %4038 = vmatpush.bf16.msra.mxu0 %v3824
        %4039 = vmatpush.bf16.msra.mxu0 %v3820
        %4040 = vmatpush.bf16.msra.mxu0 %v3816
        %4041 = vmatpush.bf16.msra.mxu0 %v3812
        %4042 = vmatpush.bf16.msra.mxu0 %v3808
        %4043 = vmatpush.bf16.msra.mxu0 %v3804
        %4044 = vmatpush.bf16.msra.mxu0 %v3800
        %4045 = vmatmul.bf16.gmra.mxu0 %v3241
        %v4046 = vpop.f32.mrf.mxu0
        %v4047 = vadd.f32 %v4034, %v4046
        %v4048 = vpop.f32.mrf.mxu0
        %4049 = vdwg.mxu0
        %4050 = vmatpush.bf16.msra.mxu0 %v3860
        %4051 = vmatpush.bf16.msra.mxu0 %v3856
        %4052 = vmatpush.bf16.msra.mxu0 %v3852
        %4053 = vmatpush.bf16.msra.mxu0 %v3848
        %4054 = vmatpush.bf16.msra.mxu0 %v3844
        %4055 = vmatpush.bf16.msra.mxu0 %v3840
        %4056 = vmatpush.bf16.msra.mxu0 %v3836
        %4057 = vmatpush.bf16.msra.mxu0 %v3832
        %4058 = vmatmul.bf16.gmra.mxu0 %v3242
        %v4059 = vpop.f32.mrf.mxu0
        %v4060 = vadd.f32 %v4047, %v4059
        %v4061 = vpop.f32.mrf.mxu0
        %4062 = vdwg.mxu0
        %4063 = vmatpush.bf16.msra.mxu0 %v3892
        %4064 = vmatpush.bf16.msra.mxu0 %v3888
        %4065 = vmatpush.bf16.msra.mxu0 %v3884
        %4066 = vmatpush.bf16.msra.mxu0 %v3880
        %4067 = vmatpush.bf16.msra.mxu0 %v3876
        %4068 = vmatpush.bf16.msra.mxu0 %v3872
        %4069 = vmatpush.bf16.msra.mxu0 %v3868
        %4070 = vmatpush.bf16.msra.mxu0 %v3864
        %4071 = vmatmul.bf16.gmra.mxu0 %v3243
        %v4072 = vpop.f32.mrf.mxu0
        %v4073 = vadd.f32 %v4060, %v4072
        %v4074 = vpop.f32.mrf.mxu0
        %4075 = vdwg.mxu0
        %4076 = vmatpush.bf16.msra.mxu0 %v3797
        %4077 = vmatpush.bf16.msra.mxu0 %v3793
        %4078 = vmatpush.bf16.msra.mxu0 %v3789
        %4079 = vmatpush.bf16.msra.mxu0 %v3785
        %4080 = vmatpush.bf16.msra.mxu0 %v3781
        %4081 = vmatpush.bf16.msra.mxu0 %v3777
        %4082 = vmatpush.bf16.msra.mxu0 %v3773
        %4083 = vmatpush.bf16.msra.mxu0 %v3769
        %4084 = vmatmul.bf16.gmra.mxu0 %v3240
        %v4085 = vpop.f32.mrf.mxu0
        %v4086 = vadd.f32 %v3377, %v4085
        %v4087 = vpop.f32.mrf.mxu0
        %4088 = vdwg.mxu0
        %4089 = vmatpush.bf16.msra.mxu0 %v3829
        %4090 = vmatpush.bf16.msra.mxu0 %v3825
        %4091 = vmatpush.bf16.msra.mxu0 %v3821
        %4092 = vmatpush.bf16.msra.mxu0 %v3817
        %4093 = vmatpush.bf16.msra.mxu0 %v3813
        %4094 = vmatpush.bf16.msra.mxu0 %v3809
        %4095 = vmatpush.bf16.msra.mxu0 %v3805
        %4096 = vmatpush.bf16.msra.mxu0 %v3801
        %4097 = vmatmul.bf16.gmra.mxu0 %v3241
        %v4098 = vpop.f32.mrf.mxu0
        %v4099 = vadd.f32 %v4086, %v4098
        %v4100 = vpop.f32.mrf.mxu0
        %4101 = vdwg.mxu0
        %4102 = vmatpush.bf16.msra.mxu0 %v3861
        %4103 = vmatpush.bf16.msra.mxu0 %v3857
        %4104 = vmatpush.bf16.msra.mxu0 %v3853
        %4105 = vmatpush.bf16.msra.mxu0 %v3849
        %4106 = vmatpush.bf16.msra.mxu0 %v3845
        %4107 = vmatpush.bf16.msra.mxu0 %v3841
        %4108 = vmatpush.bf16.msra.mxu0 %v3837
        %4109 = vmatpush.bf16.msra.mxu0 %v3833
        %4110 = vmatmul.bf16.gmra.mxu0 %v3242
        %v4111 = vpop.f32.mrf.mxu0
        %v4112 = vadd.f32 %v4099, %v4111
        %v4113 = vpop.f32.mrf.mxu0
        %4114 = vdwg.mxu0
        %4115 = vmatpush.bf16.msra.mxu0 %v3893
        %4116 = vmatpush.bf16.msra.mxu0 %v3889
        %4117 = vmatpush.bf16.msra.mxu0 %v3885
        %4118 = vmatpush.bf16.msra.mxu0 %v3881
        %4119 = vmatpush.bf16.msra.mxu0 %v3877
        %4120 = vmatpush.bf16.msra.mxu0 %v3873
        %4121 = vmatpush.bf16.msra.mxu0 %v3869
        %4122 = vmatpush.bf16.msra.mxu0 %v3865
        %4123 = vmatmul.bf16.gmra.mxu0 %v3243
        %v4124 = vpop.f32.mrf.mxu0
        %v4125 = vadd.f32 %v4112, %v4124
        %v4126 = vpop.f32.mrf.mxu0
        %4127 = vdwg.mxu0
        %4128 = vmatpush.bf16.msra.mxu0 %v3798
        %4129 = vmatpush.bf16.msra.mxu0 %v3794
        %4130 = vmatpush.bf16.msra.mxu0 %v3790
        %4131 = vmatpush.bf16.msra.mxu0 %v3786
        %4132 = vmatpush.bf16.msra.mxu0 %v3782
        %4133 = vmatpush.bf16.msra.mxu0 %v3778
        %4134 = vmatpush.bf16.msra.mxu0 %v3774
        %4135 = vmatpush.bf16.msra.mxu0 %v3770
        %4136 = vmatmul.bf16.gmra.mxu0 %v3240
        %v4137 = vpop.f32.mrf.mxu0
        %v4138 = vadd.f32 %v3378, %v4137
        %v4139 = vpop.f32.mrf.mxu0
        %4140 = vdwg.mxu0
        %4141 = vmatpush.bf16.msra.mxu0 %v3830
        %4142 = vmatpush.bf16.msra.mxu0 %v3826
        %4143 = vmatpush.bf16.msra.mxu0 %v3822
        %4144 = vmatpush.bf16.msra.mxu0 %v3818
        %4145 = vmatpush.bf16.msra.mxu0 %v3814
        %4146 = vmatpush.bf16.msra.mxu0 %v3810
        %4147 = vmatpush.bf16.msra.mxu0 %v3806
        %4148 = vmatpush.bf16.msra.mxu0 %v3802
        %4149 = vmatmul.bf16.gmra.mxu0 %v3241
        %v4150 = vpop.f32.mrf.mxu0
        %v4151 = vadd.f32 %v4138, %v4150
        %v4152 = vpop.f32.mrf.mxu0
        %4153 = vdwg.mxu0
        %4154 = vmatpush.bf16.msra.mxu0 %v3862
        %4155 = vmatpush.bf16.msra.mxu0 %v3858
        %4156 = vmatpush.bf16.msra.mxu0 %v3854
        %4157 = vmatpush.bf16.msra.mxu0 %v3850
        %4158 = vmatpush.bf16.msra.mxu0 %v3846
        %4159 = vmatpush.bf16.msra.mxu0 %v3842
        %4160 = vmatpush.bf16.msra.mxu0 %v3838
        %4161 = vmatpush.bf16.msra.mxu0 %v3834
        %4162 = vmatmul.bf16.gmra.mxu0 %v3242
        %v4163 = vpop.f32.mrf.mxu0
        %v4164 = vadd.f32 %v4151, %v4163
        %v4165 = vpop.f32.mrf.mxu0
        %4166 = vdwg.mxu0
        %4167 = vmatpush.bf16.msra.mxu0 %v3894
        %4168 = vmatpush.bf16.msra.mxu0 %v3890
        %4169 = vmatpush.bf16.msra.mxu0 %v3886
        %4170 = vmatpush.bf16.msra.mxu0 %v3882
        %4171 = vmatpush.bf16.msra.mxu0 %v3878
        %4172 = vmatpush.bf16.msra.mxu0 %v3874
        %4173 = vmatpush.bf16.msra.mxu0 %v3870
        %4174 = vmatpush.bf16.msra.mxu0 %v3866
        %4175 = vmatmul.bf16.gmra.mxu0 %v3243
        %v4176 = vpop.f32.mrf.mxu0
        %v4177 = vadd.f32 %v4164, %v4176
        %v4178 = vpop.f32.mrf.mxu0
        %4179 = vdwg.mxu0
        %4180 = vmatpush.bf16.msra.mxu0 %v3799
        %4181 = vmatpush.bf16.msra.mxu0 %v3795
        %4182 = vmatpush.bf16.msra.mxu0 %v3791
        %4183 = vmatpush.bf16.msra.mxu0 %v3787
        %4184 = vmatpush.bf16.msra.mxu0 %v3783
        %4185 = vmatpush.bf16.msra.mxu0 %v3779
        %4186 = vmatpush.bf16.msra.mxu0 %v3775
        %4187 = vmatpush.bf16.msra.mxu0 %v3771
        %4188 = vmatmul.bf16.gmra.mxu0 %v3240
        %v4189 = vpop.f32.mrf.mxu0
        %v4190 = vadd.f32 %v3379, %v4189
        %v4191 = vpop.f32.mrf.mxu0
        %4192 = vdwg.mxu0
        %4193 = vmatpush.bf16.msra.mxu0 %v3831
        %4194 = vmatpush.bf16.msra.mxu0 %v3827
        %4195 = vmatpush.bf16.msra.mxu0 %v3823
        %4196 = vmatpush.bf16.msra.mxu0 %v3819
        %4197 = vmatpush.bf16.msra.mxu0 %v3815
        %4198 = vmatpush.bf16.msra.mxu0 %v3811
        %4199 = vmatpush.bf16.msra.mxu0 %v3807
        %4200 = vmatpush.bf16.msra.mxu0 %v3803
        %4201 = vmatmul.bf16.gmra.mxu0 %v3241
        %v4202 = vpop.f32.mrf.mxu0
        %v4203 = vadd.f32 %v4190, %v4202
        %v4204 = vpop.f32.mrf.mxu0
        %4205 = vdwg.mxu0
        %4206 = vmatpush.bf16.msra.mxu0 %v3863
        %4207 = vmatpush.bf16.msra.mxu0 %v3859
        %4208 = vmatpush.bf16.msra.mxu0 %v3855
        %4209 = vmatpush.bf16.msra.mxu0 %v3851
        %4210 = vmatpush.bf16.msra.mxu0 %v3847
        %4211 = vmatpush.bf16.msra.mxu0 %v3843
        %4212 = vmatpush.bf16.msra.mxu0 %v3839
        %4213 = vmatpush.bf16.msra.mxu0 %v3835
        %4214 = vmatmul.bf16.gmra.mxu0 %v3242
        %v4215 = vpop.f32.mrf.mxu0
        %v4216 = vadd.f32 %v4203, %v4215
        %v4217 = vpop.f32.mrf.mxu0
        %4218 = vdwg.mxu0
        %4219 = vmatpush.bf16.msra.mxu0 %v3895
        %4220 = vmatpush.bf16.msra.mxu0 %v3891
        %4221 = vmatpush.bf16.msra.mxu0 %v3887
        %4222 = vmatpush.bf16.msra.mxu0 %v3883
        %4223 = vmatpush.bf16.msra.mxu0 %v3879
        %4224 = vmatpush.bf16.msra.mxu0 %v3875
        %4225 = vmatpush.bf16.msra.mxu0 %v3871
        %4226 = vmatpush.bf16.msra.mxu0 %v3867
        %4227 = vmatmul.bf16.gmra.mxu0 %v3243
        %v4228 = vpop.f32.mrf.mxu0
        %v4229 = vadd.f32 %v4216, %v4228
        %v4230 = vpop.f32.mrf.mxu0
        %4231 = vdwg.mxu0
        %v4232 = vmax.f32 %v4073, 0.0
        %v4233 = vmax.f32 %v4125, 0.0
        %v4234 = vmax.f32 %v4177, 0.0
        %v4235 = vmax.f32 %v4229, 0.0
        %v4236 = vadd.f32 %v3236, %v4232
        %v4237 = vadd.f32 %v3237, %v4233
        %v4238 = vadd.f32 %v3238, %v4234
        %v4239 = vadd.f32 %v3239, %v4235
        %v4240 = vpack.c.bf16 %v4236, %v4236
        %v4241 = vpack.c.bf16 %v4237, %v4237
        %v4242 = vpack.c.bf16 %v4238, %v4238
        %v4243 = vpack.c.bf16 %v4239, %v4239
        %s4244 = scalar_lea.vmem [#allocation16], 2048
        %v4245 = vld [vmem:[%s4244] sm:$0xff]
        %v4246 = vld [vmem:[%s4244 + $0x8] sm:$0xff]
        %v4247 = vld [vmem:[%s4244 + $0x10] sm:$0xff]
        %v4248 = vld [vmem:[%s4244 + $0x18] sm:$0xff]
        %v4249 = vld [vmem:[%s4244 + $0x20] sm:$0xff]
        %v4250 = vld [vmem:[%s4244 + $0x28] sm:$0xff]
        %v4251 = vld [vmem:[%s4244 + $0x30] sm:$0xff]
        %v4252 = vld [vmem:[%s4244 + $0x38] sm:$0xff]
        %v4253 = vld [vmem:[%s4244 + $0x40] sm:$0xff]
        %v4254 = vld [vmem:[%s4244 + $0x48] sm:$0xff]
        %v4255 = vld [vmem:[%s4244 + $0x50] sm:$0xff]
        %v4256 = vld [vmem:[%s4244 + $0x58] sm:$0xff]
        %v4257 = vld [vmem:[%s4244 + $0x60] sm:$0xff]
        %v4258 = vld [vmem:[%s4244 + $0x68] sm:$0xff]
        %v4259 = vld [vmem:[%s4244 + $0x70] sm:$0xff]
        %v4260 = vld [vmem:[%s4244 + $0x78] sm:$0xff]
        %v4261 = vld [vmem:[%s4244 + $0x80] sm:$0xff]
        %v4262 = vld [vmem:[%s4244 + $0x88] sm:$0xff]
        %v4263 = vld [vmem:[%s4244 + $0x90] sm:$0xff]
        %v4264 = vld [vmem:[%s4244 + $0x98] sm:$0xff]
        %v4265 = vld [vmem:[%s4244 + $0xa0] sm:$0xff]
        %v4266 = vld [vmem:[%s4244 + $0xa8] sm:$0xff]
        %v4267 = vld [vmem:[%s4244 + $0xb0] sm:$0xff]
        %v4268 = vld [vmem:[%s4244 + $0xb8] sm:$0xff]
        %v4269 = vld [vmem:[%s4244 + $0xc0] sm:$0xff]
        %v4270 = vld [vmem:[%s4244 + $0xc8] sm:$0xff]
        %v4271 = vld [vmem:[%s4244 + $0xd0] sm:$0xff]
        %v4272 = vld [vmem:[%s4244 + $0xd8] sm:$0xff]
        %v4273 = vld [vmem:[%s4244 + $0xe0] sm:$0xff]
        %v4274 = vld [vmem:[%s4244 + $0xe8] sm:$0xff]
        %v4275 = vld [vmem:[%s4244 + $0xf0] sm:$0xff]
        %v4276 = vld [vmem:[%s4244 + $0xf8] sm:$0xff]
        %v4277 = vld [vmem:[%s4244 + $0x100] sm:$0xff]
        %v4278 = vld [vmem:[%s4244 + $0x108] sm:$0xff]
        %v4279 = vld [vmem:[%s4244 + $0x110] sm:$0xff]
        %v4280 = vld [vmem:[%s4244 + $0x118] sm:$0xff]
        %v4281 = vld [vmem:[%s4244 + $0x120] sm:$0xff]
        %v4282 = vld [vmem:[%s4244 + $0x128] sm:$0xff]
        %v4283 = vld [vmem:[%s4244 + $0x130] sm:$0xff]
        %v4284 = vld [vmem:[%s4244 + $0x138] sm:$0xff]
        %v4285 = vld [vmem:[%s4244 + $0x140] sm:$0xff]
        %v4286 = vld [vmem:[%s4244 + $0x148] sm:$0xff]
        %v4287 = vld [vmem:[%s4244 + $0x150] sm:$0xff]
        %v4288 = vld [vmem:[%s4244 + $0x158] sm:$0xff]
        %v4289 = vld [vmem:[%s4244 + $0x160] sm:$0xff]
        %v4290 = vld [vmem:[%s4244 + $0x168] sm:$0xff]
        %v4291 = vld [vmem:[%s4244 + $0x170] sm:$0xff]
        %v4292 = vld [vmem:[%s4244 + $0x178] sm:$0xff]
        %v4293 = vld [vmem:[%s4244 + $0x180] sm:$0xff]
        %v4294 = vld [vmem:[%s4244 + $0x188] sm:$0xff]
        %v4295 = vld [vmem:[%s4244 + $0x190] sm:$0xff]
        %v4296 = vld [vmem:[%s4244 + $0x198] sm:$0xff]
        %v4297 = vld [vmem:[%s4244 + $0x1a0] sm:$0xff]
        %v4298 = vld [vmem:[%s4244 + $0x1a8] sm:$0xff]
        %v4299 = vld [vmem:[%s4244 + $0x1b0] sm:$0xff]
        %v4300 = vld [vmem:[%s4244 + $0x1b8] sm:$0xff]
        %v4301 = vld [vmem:[%s4244 + $0x1c0] sm:$0xff]
        %v4302 = vld [vmem:[%s4244 + $0x1c8] sm:$0xff]
        %v4303 = vld [vmem:[%s4244 + $0x1d0] sm:$0xff]
        %v4304 = vld [vmem:[%s4244 + $0x1d8] sm:$0xff]
        %v4305 = vld [vmem:[%s4244 + $0x1e0] sm:$0xff]
        %v4306 = vld [vmem:[%s4244 + $0x1e8] sm:$0xff]
        %v4307 = vld [vmem:[%s4244 + $0x1f0] sm:$0xff]
        %v4308 = vld [vmem:[%s4244 + $0x1f8] sm:$0xff]
        %v4309 = vld [vmem:[%s4244 + $0x200] sm:$0xff]
        %v4310 = vld [vmem:[%s4244 + $0x208] sm:$0xff]
        %v4311 = vld [vmem:[%s4244 + $0x210] sm:$0xff]
        %v4312 = vld [vmem:[%s4244 + $0x218] sm:$0xff]
        %v4313 = vld [vmem:[%s4244 + $0x220] sm:$0xff]
        %v4314 = vld [vmem:[%s4244 + $0x228] sm:$0xff]
        %v4315 = vld [vmem:[%s4244 + $0x230] sm:$0xff]
        %v4316 = vld [vmem:[%s4244 + $0x238] sm:$0xff]
        %v4317 = vld [vmem:[%s4244 + $0x240] sm:$0xff]
        %v4318 = vld [vmem:[%s4244 + $0x248] sm:$0xff]
        %v4319 = vld [vmem:[%s4244 + $0x250] sm:$0xff]
        %v4320 = vld [vmem:[%s4244 + $0x258] sm:$0xff]
        %v4321 = vld [vmem:[%s4244 + $0x260] sm:$0xff]
        %v4322 = vld [vmem:[%s4244 + $0x268] sm:$0xff]
        %v4323 = vld [vmem:[%s4244 + $0x270] sm:$0xff]
        %v4324 = vld [vmem:[%s4244 + $0x278] sm:$0xff]
        %v4325 = vld [vmem:[%s4244 + $0x280] sm:$0xff]
        %v4326 = vld [vmem:[%s4244 + $0x288] sm:$0xff]
        %v4327 = vld [vmem:[%s4244 + $0x290] sm:$0xff]
        %v4328 = vld [vmem:[%s4244 + $0x298] sm:$0xff]
        %v4329 = vld [vmem:[%s4244 + $0x2a0] sm:$0xff]
        %v4330 = vld [vmem:[%s4244 + $0x2a8] sm:$0xff]
        %v4331 = vld [vmem:[%s4244 + $0x2b0] sm:$0xff]
        %v4332 = vld [vmem:[%s4244 + $0x2b8] sm:$0xff]
        %v4333 = vld [vmem:[%s4244 + $0x2c0] sm:$0xff]
        %v4334 = vld [vmem:[%s4244 + $0x2c8] sm:$0xff]
        %v4335 = vld [vmem:[%s4244 + $0x2d0] sm:$0xff]
        %v4336 = vld [vmem:[%s4244 + $0x2d8] sm:$0xff]
        %v4337 = vld [vmem:[%s4244 + $0x2e0] sm:$0xff]
        %v4338 = vld [vmem:[%s4244 + $0x2e8] sm:$0xff]
        %v4339 = vld [vmem:[%s4244 + $0x2f0] sm:$0xff]
        %v4340 = vld [vmem:[%s4244 + $0x2f8] sm:$0xff]
        %v4341 = vld [vmem:[%s4244 + $0x300] sm:$0xff]
        %v4342 = vld [vmem:[%s4244 + $0x308] sm:$0xff]
        %v4343 = vld [vmem:[%s4244 + $0x310] sm:$0xff]
        %v4344 = vld [vmem:[%s4244 + $0x318] sm:$0xff]
        %v4345 = vld [vmem:[%s4244 + $0x320] sm:$0xff]
        %v4346 = vld [vmem:[%s4244 + $0x328] sm:$0xff]
        %v4347 = vld [vmem:[%s4244 + $0x330] sm:$0xff]
        %v4348 = vld [vmem:[%s4244 + $0x338] sm:$0xff]
        %v4349 = vld [vmem:[%s4244 + $0x340] sm:$0xff]
        %v4350 = vld [vmem:[%s4244 + $0x348] sm:$0xff]
        %v4351 = vld [vmem:[%s4244 + $0x350] sm:$0xff]
        %v4352 = vld [vmem:[%s4244 + $0x358] sm:$0xff]
        %v4353 = vld [vmem:[%s4244 + $0x360] sm:$0xff]
        %v4354 = vld [vmem:[%s4244 + $0x368] sm:$0xff]
        %v4355 = vld [vmem:[%s4244 + $0x370] sm:$0xff]
        %v4356 = vld [vmem:[%s4244 + $0x378] sm:$0xff]
        %v4357 = vld [vmem:[%s4244 + $0x380] sm:$0xff]
        %v4358 = vld [vmem:[%s4244 + $0x388] sm:$0xff]
        %v4359 = vld [vmem:[%s4244 + $0x390] sm:$0xff]
        %v4360 = vld [vmem:[%s4244 + $0x398] sm:$0xff]
        %v4361 = vld [vmem:[%s4244 + $0x3a0] sm:$0xff]
        %v4362 = vld [vmem:[%s4244 + $0x3a8] sm:$0xff]
        %v4363 = vld [vmem:[%s4244 + $0x3b0] sm:$0xff]
        %v4364 = vld [vmem:[%s4244 + $0x3b8] sm:$0xff]
        %v4365 = vld [vmem:[%s4244 + $0x3c0] sm:$0xff]
        %v4366 = vld [vmem:[%s4244 + $0x3c8] sm:$0xff]
        %v4367 = vld [vmem:[%s4244 + $0x3d0] sm:$0xff]
        %v4368 = vld [vmem:[%s4244 + $0x3d8] sm:$0xff]
        %v4369 = vld [vmem:[%s4244 + $0x3e0] sm:$0xff]
        %v4370 = vld [vmem:[%s4244 + $0x3e8] sm:$0xff]
        %v4371 = vld [vmem:[%s4244 + $0x3f0] sm:$0xff]
        %v4372 = vld [vmem:[%s4244 + $0x3f8] sm:$0xff]
        %s4373 = scalar_lea.vmem [#allocation18], 8
        %v4374 = vld [vmem:[%s4373] sm:$0xf]
        %v4376 = vperm.slane %v4374, 0
        %v4377 = vperm.slane %v4374, 1
        %v4378 = vperm.slane %v4374, 2
        %v4379 = vperm.slane %v4374, 3
        %v4512 = vunpack.c.l.b16 %v4245
        %v4513 = vunpack.c.h.b16 %v4245
        %v4514 = vunpack.c.l.b16 %v4246
        %v4515 = vunpack.c.h.b16 %v4246
        %v4516 = vunpack.c.l.b16 %v4247
        %v4517 = vunpack.c.h.b16 %v4247
        %v4518 = vunpack.c.l.b16 %v4248
        %v4519 = vunpack.c.h.b16 %v4248
        %v4520 = vunpack.c.l.b16 %v4249
        %v4521 = vunpack.c.h.b16 %v4249
        %v4522 = vunpack.c.l.b16 %v4250
        %v4523 = vunpack.c.h.b16 %v4250
        %v4524 = vunpack.c.l.b16 %v4251
        %v4525 = vunpack.c.h.b16 %v4251
        %v4526 = vunpack.c.l.b16 %v4252
        %v4527 = vunpack.c.h.b16 %v4252
        %v4528 = vunpack.c.l.b16 %v4253
        %v4529 = vunpack.c.h.b16 %v4253
        %v4530 = vunpack.c.l.b16 %v4254
        %v4531 = vunpack.c.h.b16 %v4254
        %v4532 = vunpack.c.l.b16 %v4255
        %v4533 = vunpack.c.h.b16 %v4255
        %v4534 = vunpack.c.l.b16 %v4256
        %v4535 = vunpack.c.h.b16 %v4256
        %v4536 = vunpack.c.l.b16 %v4257
        %v4537 = vunpack.c.h.b16 %v4257
        %v4538 = vunpack.c.l.b16 %v4258
        %v4539 = vunpack.c.h.b16 %v4258
        %v4540 = vunpack.c.l.b16 %v4259
        %v4541 = vunpack.c.h.b16 %v4259
        %v4542 = vunpack.c.l.b16 %v4260
        %v4543 = vunpack.c.h.b16 %v4260
        %v4544 = vunpack.c.l.b16 %v4261
        %v4545 = vunpack.c.h.b16 %v4261
        %v4546 = vunpack.c.l.b16 %v4262
        %v4547 = vunpack.c.h.b16 %v4262
        %v4548 = vunpack.c.l.b16 %v4263
        %v4549 = vunpack.c.h.b16 %v4263
        %v4550 = vunpack.c.l.b16 %v4264
        %v4551 = vunpack.c.h.b16 %v4264
        %v4552 = vunpack.c.l.b16 %v4265
        %v4553 = vunpack.c.h.b16 %v4265
        %v4554 = vunpack.c.l.b16 %v4266
        %v4555 = vunpack.c.h.b16 %v4266
        %v4556 = vunpack.c.l.b16 %v4267
        %v4557 = vunpack.c.h.b16 %v4267
        %v4558 = vunpack.c.l.b16 %v4268
        %v4559 = vunpack.c.h.b16 %v4268
        %v4560 = vunpack.c.l.b16 %v4269
        %v4561 = vunpack.c.h.b16 %v4269
        %v4562 = vunpack.c.l.b16 %v4270
        %v4563 = vunpack.c.h.b16 %v4270
        %v4564 = vunpack.c.l.b16 %v4271
        %v4565 = vunpack.c.h.b16 %v4271
        %v4566 = vunpack.c.l.b16 %v4272
        %v4567 = vunpack.c.h.b16 %v4272
        %v4568 = vunpack.c.l.b16 %v4273
        %v4569 = vunpack.c.h.b16 %v4273
        %v4570 = vunpack.c.l.b16 %v4274
        %v4571 = vunpack.c.h.b16 %v4274
        %v4572 = vunpack.c.l.b16 %v4275
        %v4573 = vunpack.c.h.b16 %v4275
        %v4574 = vunpack.c.l.b16 %v4276
        %v4575 = vunpack.c.h.b16 %v4276
        %v4576 = vunpack.c.l.b16 %v4277
        %v4577 = vunpack.c.h.b16 %v4277
        %v4578 = vunpack.c.l.b16 %v4278
        %v4579 = vunpack.c.h.b16 %v4278
        %v4580 = vunpack.c.l.b16 %v4279
        %v4581 = vunpack.c.h.b16 %v4279
        %v4582 = vunpack.c.l.b16 %v4280
        %v4583 = vunpack.c.h.b16 %v4280
        %v4584 = vunpack.c.l.b16 %v4281
        %v4585 = vunpack.c.h.b16 %v4281
        %v4586 = vunpack.c.l.b16 %v4282
        %v4587 = vunpack.c.h.b16 %v4282
        %v4588 = vunpack.c.l.b16 %v4283
        %v4589 = vunpack.c.h.b16 %v4283
        %v4590 = vunpack.c.l.b16 %v4284
        %v4591 = vunpack.c.h.b16 %v4284
        %v4592 = vunpack.c.l.b16 %v4285
        %v4593 = vunpack.c.h.b16 %v4285
        %v4594 = vunpack.c.l.b16 %v4286
        %v4595 = vunpack.c.h.b16 %v4286
        %v4596 = vunpack.c.l.b16 %v4287
        %v4597 = vunpack.c.h.b16 %v4287
        %v4598 = vunpack.c.l.b16 %v4288
        %v4599 = vunpack.c.h.b16 %v4288
        %v4600 = vunpack.c.l.b16 %v4289
        %v4601 = vunpack.c.h.b16 %v4289
        %v4602 = vunpack.c.l.b16 %v4290
        %v4603 = vunpack.c.h.b16 %v4290
        %v4604 = vunpack.c.l.b16 %v4291
        %v4605 = vunpack.c.h.b16 %v4291
        %v4606 = vunpack.c.l.b16 %v4292
        %v4607 = vunpack.c.h.b16 %v4292
        %v4608 = vunpack.c.l.b16 %v4293
        %v4609 = vunpack.c.h.b16 %v4293
        %v4610 = vunpack.c.l.b16 %v4294
        %v4611 = vunpack.c.h.b16 %v4294
        %v4612 = vunpack.c.l.b16 %v4295
        %v4613 = vunpack.c.h.b16 %v4295
        %v4614 = vunpack.c.l.b16 %v4296
        %v4615 = vunpack.c.h.b16 %v4296
        %v4616 = vunpack.c.l.b16 %v4297
        %v4617 = vunpack.c.h.b16 %v4297
        %v4618 = vunpack.c.l.b16 %v4298
        %v4619 = vunpack.c.h.b16 %v4298
        %v4620 = vunpack.c.l.b16 %v4299
        %v4621 = vunpack.c.h.b16 %v4299
        %v4622 = vunpack.c.l.b16 %v4300
        %v4623 = vunpack.c.h.b16 %v4300
        %v4624 = vunpack.c.l.b16 %v4301
        %v4625 = vunpack.c.h.b16 %v4301
        %v4626 = vunpack.c.l.b16 %v4302
        %v4627 = vunpack.c.h.b16 %v4302
        %v4628 = vunpack.c.l.b16 %v4303
        %v4629 = vunpack.c.h.b16 %v4303
        %v4630 = vunpack.c.l.b16 %v4304
        %v4631 = vunpack.c.h.b16 %v4304
        %v4632 = vunpack.c.l.b16 %v4305
        %v4633 = vunpack.c.h.b16 %v4305
        %v4634 = vunpack.c.l.b16 %v4306
        %v4635 = vunpack.c.h.b16 %v4306
        %v4636 = vunpack.c.l.b16 %v4307
        %v4637 = vunpack.c.h.b16 %v4307
        %v4638 = vunpack.c.l.b16 %v4308
        %v4639 = vunpack.c.h.b16 %v4308
        %v4640 = vunpack.c.l.b16 %v4309
        %v4641 = vunpack.c.h.b16 %v4309
        %v4642 = vunpack.c.l.b16 %v4310
        %v4643 = vunpack.c.h.b16 %v4310
        %v4644 = vunpack.c.l.b16 %v4311
        %v4645 = vunpack.c.h.b16 %v4311
        %v4646 = vunpack.c.l.b16 %v4312
        %v4647 = vunpack.c.h.b16 %v4312
        %v4648 = vunpack.c.l.b16 %v4313
        %v4649 = vunpack.c.h.b16 %v4313
        %v4650 = vunpack.c.l.b16 %v4314
        %v4651 = vunpack.c.h.b16 %v4314
        %v4652 = vunpack.c.l.b16 %v4315
        %v4653 = vunpack.c.h.b16 %v4315
        %v4654 = vunpack.c.l.b16 %v4316
        %v4655 = vunpack.c.h.b16 %v4316
        %v4656 = vunpack.c.l.b16 %v4317
        %v4657 = vunpack.c.h.b16 %v4317
        %v4658 = vunpack.c.l.b16 %v4318
        %v4659 = vunpack.c.h.b16 %v4318
        %v4660 = vunpack.c.l.b16 %v4319
        %v4661 = vunpack.c.h.b16 %v4319
        %v4662 = vunpack.c.l.b16 %v4320
        %v4663 = vunpack.c.h.b16 %v4320
        %v4664 = vunpack.c.l.b16 %v4321
        %v4665 = vunpack.c.h.b16 %v4321
        %v4666 = vunpack.c.l.b16 %v4322
        %v4667 = vunpack.c.h.b16 %v4322
        %v4668 = vunpack.c.l.b16 %v4323
        %v4669 = vunpack.c.h.b16 %v4323
        %v4670 = vunpack.c.l.b16 %v4324
        %v4671 = vunpack.c.h.b16 %v4324
        %v4672 = vunpack.c.l.b16 %v4325
        %v4673 = vunpack.c.h.b16 %v4325
        %v4674 = vunpack.c.l.b16 %v4326
        %v4675 = vunpack.c.h.b16 %v4326
        %v4676 = vunpack.c.l.b16 %v4327
        %v4677 = vunpack.c.h.b16 %v4327
        %v4678 = vunpack.c.l.b16 %v4328
        %v4679 = vunpack.c.h.b16 %v4328
        %v4680 = vunpack.c.l.b16 %v4329
        %v4681 = vunpack.c.h.b16 %v4329
        %v4682 = vunpack.c.l.b16 %v4330
        %v4683 = vunpack.c.h.b16 %v4330
        %v4684 = vunpack.c.l.b16 %v4331
        %v4685 = vunpack.c.h.b16 %v4331
        %v4686 = vunpack.c.l.b16 %v4332
        %v4687 = vunpack.c.h.b16 %v4332
        %v4688 = vunpack.c.l.b16 %v4333
        %v4689 = vunpack.c.h.b16 %v4333
        %v4690 = vunpack.c.l.b16 %v4334
        %v4691 = vunpack.c.h.b16 %v4334
        %v4692 = vunpack.c.l.b16 %v4335
        %v4693 = vunpack.c.h.b16 %v4335
        %v4694 = vunpack.c.l.b16 %v4336
        %v4695 = vunpack.c.h.b16 %v4336
        %v4696 = vunpack.c.l.b16 %v4337
        %v4697 = vunpack.c.h.b16 %v4337
        %v4698 = vunpack.c.l.b16 %v4338
        %v4699 = vunpack.c.h.b16 %v4338
        %v4700 = vunpack.c.l.b16 %v4339
        %v4701 = vunpack.c.h.b16 %v4339
        %v4702 = vunpack.c.l.b16 %v4340
        %v4703 = vunpack.c.h.b16 %v4340
        %v4704 = vunpack.c.l.b16 %v4341
        %v4705 = vunpack.c.h.b16 %v4341
        %v4706 = vunpack.c.l.b16 %v4342
        %v4707 = vunpack.c.h.b16 %v4342
        %v4708 = vunpack.c.l.b16 %v4343
        %v4709 = vunpack.c.h.b16 %v4343
        %v4710 = vunpack.c.l.b16 %v4344
        %v4711 = vunpack.c.h.b16 %v4344
        %v4712 = vunpack.c.l.b16 %v4345
        %v4713 = vunpack.c.h.b16 %v4345
        %v4714 = vunpack.c.l.b16 %v4346
        %v4715 = vunpack.c.h.b16 %v4346
        %v4716 = vunpack.c.l.b16 %v4347
        %v4717 = vunpack.c.h.b16 %v4347
        %v4718 = vunpack.c.l.b16 %v4348
        %v4719 = vunpack.c.h.b16 %v4348
        %v4720 = vunpack.c.l.b16 %v4349
        %v4721 = vunpack.c.h.b16 %v4349
        %v4722 = vunpack.c.l.b16 %v4350
        %v4723 = vunpack.c.h.b16 %v4350
        %v4724 = vunpack.c.l.b16 %v4351
        %v4725 = vunpack.c.h.b16 %v4351
        %v4726 = vunpack.c.l.b16 %v4352
        %v4727 = vunpack.c.h.b16 %v4352
        %v4728 = vunpack.c.l.b16 %v4353
        %v4729 = vunpack.c.h.b16 %v4353
        %v4730 = vunpack.c.l.b16 %v4354
        %v4731 = vunpack.c.h.b16 %v4354
        %v4732 = vunpack.c.l.b16 %v4355
        %v4733 = vunpack.c.h.b16 %v4355
        %v4734 = vunpack.c.l.b16 %v4356
        %v4735 = vunpack.c.h.b16 %v4356
        %v4736 = vunpack.c.l.b16 %v4357
        %v4737 = vunpack.c.h.b16 %v4357
        %v4738 = vunpack.c.l.b16 %v4358
        %v4739 = vunpack.c.h.b16 %v4358
        %v4740 = vunpack.c.l.b16 %v4359
        %v4741 = vunpack.c.h.b16 %v4359
        %v4742 = vunpack.c.l.b16 %v4360
        %v4743 = vunpack.c.h.b16 %v4360
        %v4744 = vunpack.c.l.b16 %v4361
        %v4745 = vunpack.c.h.b16 %v4361
        %v4746 = vunpack.c.l.b16 %v4362
        %v4747 = vunpack.c.h.b16 %v4362
        %v4748 = vunpack.c.l.b16 %v4363
        %v4749 = vunpack.c.h.b16 %v4363
        %v4750 = vunpack.c.l.b16 %v4364
        %v4751 = vunpack.c.h.b16 %v4364
        %v4752 = vunpack.c.l.b16 %v4365
        %v4753 = vunpack.c.h.b16 %v4365
        %v4754 = vunpack.c.l.b16 %v4366
        %v4755 = vunpack.c.h.b16 %v4366
        %v4756 = vunpack.c.l.b16 %v4367
        %v4757 = vunpack.c.h.b16 %v4367
        %v4758 = vunpack.c.l.b16 %v4368
        %v4759 = vunpack.c.h.b16 %v4368
        %v4760 = vunpack.c.l.b16 %v4369
        %v4761 = vunpack.c.h.b16 %v4369
        %v4762 = vunpack.c.l.b16 %v4370
        %v4763 = vunpack.c.h.b16 %v4370
        %v4764 = vunpack.c.l.b16 %v4371
        %v4765 = vunpack.c.h.b16 %v4371
        %v4766 = vunpack.c.l.b16 %v4372
        %v4767 = vunpack.c.h.b16 %v4372
        %v4768 = vpack.c.b16 %v4516, %v4512
        %v4769 = vpack.c.b16 %v4517, %v4513
        %v4770 = vpack.c.b16 %v4518, %v4514
        %v4771 = vpack.c.b16 %v4519, %v4515
        %v4772 = vpack.c.b16 %v4524, %v4520
        %v4773 = vpack.c.b16 %v4525, %v4521
        %v4774 = vpack.c.b16 %v4526, %v4522
        %v4775 = vpack.c.b16 %v4527, %v4523
        %v4776 = vpack.c.b16 %v4532, %v4528
        %v4777 = vpack.c.b16 %v4533, %v4529
        %v4778 = vpack.c.b16 %v4534, %v4530
        %v4779 = vpack.c.b16 %v4535, %v4531
        %v4780 = vpack.c.b16 %v4540, %v4536
        %v4781 = vpack.c.b16 %v4541, %v4537
        %v4782 = vpack.c.b16 %v4542, %v4538
        %v4783 = vpack.c.b16 %v4543, %v4539
        %v4784 = vpack.c.b16 %v4548, %v4544
        %v4785 = vpack.c.b16 %v4549, %v4545
        %v4786 = vpack.c.b16 %v4550, %v4546
        %v4787 = vpack.c.b16 %v4551, %v4547
        %v4788 = vpack.c.b16 %v4556, %v4552
        %v4789 = vpack.c.b16 %v4557, %v4553
        %v4790 = vpack.c.b16 %v4558, %v4554
        %v4791 = vpack.c.b16 %v4559, %v4555
        %v4792 = vpack.c.b16 %v4564, %v4560
        %v4793 = vpack.c.b16 %v4565, %v4561
        %v4794 = vpack.c.b16 %v4566, %v4562
        %v4795 = vpack.c.b16 %v4567, %v4563
        %v4796 = vpack.c.b16 %v4572, %v4568
        %v4797 = vpack.c.b16 %v4573, %v4569
        %v4798 = vpack.c.b16 %v4574, %v4570
        %v4799 = vpack.c.b16 %v4575, %v4571
        %v4800 = vpack.c.b16 %v4580, %v4576
        %v4801 = vpack.c.b16 %v4581, %v4577
        %v4802 = vpack.c.b16 %v4582, %v4578
        %v4803 = vpack.c.b16 %v4583, %v4579
        %v4804 = vpack.c.b16 %v4588, %v4584
        %v4805 = vpack.c.b16 %v4589, %v4585
        %v4806 = vpack.c.b16 %v4590, %v4586
        %v4807 = vpack.c.b16 %v4591, %v4587
        %v4808 = vpack.c.b16 %v4596, %v4592
        %v4809 = vpack.c.b16 %v4597, %v4593
        %v4810 = vpack.c.b16 %v4598, %v4594
        %v4811 = vpack.c.b16 %v4599, %v4595
        %v4812 = vpack.c.b16 %v4604, %v4600
        %v4813 = vpack.c.b16 %v4605, %v4601
        %v4814 = vpack.c.b16 %v4606, %v4602
        %v4815 = vpack.c.b16 %v4607, %v4603
        %v4816 = vpack.c.b16 %v4612, %v4608
        %v4817 = vpack.c.b16 %v4613, %v4609
        %v4818 = vpack.c.b16 %v4614, %v4610
        %v4819 = vpack.c.b16 %v4615, %v4611
        %v4820 = vpack.c.b16 %v4620, %v4616
        %v4821 = vpack.c.b16 %v4621, %v4617
        %v4822 = vpack.c.b16 %v4622, %v4618
        %v4823 = vpack.c.b16 %v4623, %v4619
        %v4824 = vpack.c.b16 %v4628, %v4624
        %v4825 = vpack.c.b16 %v4629, %v4625
        %v4826 = vpack.c.b16 %v4630, %v4626
        %v4827 = vpack.c.b16 %v4631, %v4627
        %v4828 = vpack.c.b16 %v4636, %v4632
        %v4829 = vpack.c.b16 %v4637, %v4633
        %v4830 = vpack.c.b16 %v4638, %v4634
        %v4831 = vpack.c.b16 %v4639, %v4635
        %v4832 = vpack.c.b16 %v4644, %v4640
        %v4833 = vpack.c.b16 %v4645, %v4641
        %v4834 = vpack.c.b16 %v4646, %v4642
        %v4835 = vpack.c.b16 %v4647, %v4643
        %v4836 = vpack.c.b16 %v4652, %v4648
        %v4837 = vpack.c.b16 %v4653, %v4649
        %v4838 = vpack.c.b16 %v4654, %v4650
        %v4839 = vpack.c.b16 %v4655, %v4651
        %v4840 = vpack.c.b16 %v4660, %v4656
        %v4841 = vpack.c.b16 %v4661, %v4657
        %v4842 = vpack.c.b16 %v4662, %v4658
        %v4843 = vpack.c.b16 %v4663, %v4659
        %v4844 = vpack.c.b16 %v4668, %v4664
        %v4845 = vpack.c.b16 %v4669, %v4665
        %v4846 = vpack.c.b16 %v4670, %v4666
        %v4847 = vpack.c.b16 %v4671, %v4667
        %v4848 = vpack.c.b16 %v4676, %v4672
        %v4849 = vpack.c.b16 %v4677, %v4673
        %v4850 = vpack.c.b16 %v4678, %v4674
        %v4851 = vpack.c.b16 %v4679, %v4675
        %v4852 = vpack.c.b16 %v4684, %v4680
        %v4853 = vpack.c.b16 %v4685, %v4681
        %v4854 = vpack.c.b16 %v4686, %v4682
        %v4855 = vpack.c.b16 %v4687, %v4683
        %v4856 = vpack.c.b16 %v4692, %v4688
        %v4857 = vpack.c.b16 %v4693, %v4689
        %v4858 = vpack.c.b16 %v4694, %v4690
        %v4859 = vpack.c.b16 %v4695, %v4691
        %v4860 = vpack.c.b16 %v4700, %v4696
        %v4861 = vpack.c.b16 %v4701, %v4697
        %v4862 = vpack.c.b16 %v4702, %v4698
        %v4863 = vpack.c.b16 %v4703, %v4699
        %v4864 = vpack.c.b16 %v4708, %v4704
        %v4865 = vpack.c.b16 %v4709, %v4705
        %v4866 = vpack.c.b16 %v4710, %v4706
        %v4867 = vpack.c.b16 %v4711, %v4707
        %v4868 = vpack.c.b16 %v4716, %v4712
        %v4869 = vpack.c.b16 %v4717, %v4713
        %v4870 = vpack.c.b16 %v4718, %v4714
        %v4871 = vpack.c.b16 %v4719, %v4715
        %v4872 = vpack.c.b16 %v4724, %v4720
        %v4873 = vpack.c.b16 %v4725, %v4721
        %v4874 = vpack.c.b16 %v4726, %v4722
        %v4875 = vpack.c.b16 %v4727, %v4723
        %v4876 = vpack.c.b16 %v4732, %v4728
        %v4877 = vpack.c.b16 %v4733, %v4729
        %v4878 = vpack.c.b16 %v4734, %v4730
        %v4879 = vpack.c.b16 %v4735, %v4731
        %v4880 = vpack.c.b16 %v4740, %v4736
        %v4881 = vpack.c.b16 %v4741, %v4737
        %v4882 = vpack.c.b16 %v4742, %v4738
        %v4883 = vpack.c.b16 %v4743, %v4739
        %v4884 = vpack.c.b16 %v4748, %v4744
        %v4885 = vpack.c.b16 %v4749, %v4745
        %v4886 = vpack.c.b16 %v4750, %v4746
        %v4887 = vpack.c.b16 %v4751, %v4747
        %v4888 = vpack.c.b16 %v4756, %v4752
        %v4889 = vpack.c.b16 %v4757, %v4753
        %v4890 = vpack.c.b16 %v4758, %v4754
        %v4891 = vpack.c.b16 %v4759, %v4755
        %v4892 = vpack.c.b16 %v4764, %v4760
        %v4893 = vpack.c.b16 %v4765, %v4761
        %v4894 = vpack.c.b16 %v4766, %v4762
        %v4895 = vpack.c.b16 %v4767, %v4763
        %5024 = vmatpush.bf16.msra.mxu0 %v4796
        %5025 = vmatpush.bf16.msra.mxu0 %v4792
        %5026 = vmatpush.bf16.msra.mxu0 %v4788
        %5027 = vmatpush.bf16.msra.mxu0 %v4784
        %5028 = vmatpush.bf16.msra.mxu0 %v4780
        %5029 = vmatpush.bf16.msra.mxu0 %v4776
        %5030 = vmatpush.bf16.msra.mxu0 %v4772
        %5031 = vmatpush.bf16.msra.mxu0 %v4768
        %5032 = vmatmul.bf16.gmra.mxu0 %v4240
        %v5033 = vpop.f32.mrf.mxu0
        %v5034 = vadd.f32 %v4376, %v5033
        %v5035 = vpop.f32.mrf.mxu0
        %5036 = vdwg.mxu0
        %5037 = vmatpush.bf16.msra.mxu0 %v4828
        %5038 = vmatpush.bf16.msra.mxu0 %v4824
        %5039 = vmatpush.bf16.msra.mxu0 %v4820
        %5040 = vmatpush.bf16.msra.mxu0 %v4816
        %5041 = vmatpush.bf16.msra.mxu0 %v4812
        %5042 = vmatpush.bf16.msra.mxu0 %v4808
        %5043 = vmatpush.bf16.msra.mxu0 %v4804
        %5044 = vmatpush.bf16.msra.mxu0 %v4800
        %5045 = vmatmul.bf16.gmra.mxu0 %v4241
        %v5046 = vpop.f32.mrf.mxu0
        %v5047 = vadd.f32 %v5034, %v5046
        %v5048 = vpop.f32.mrf.mxu0
        %5049 = vdwg.mxu0
        %5050 = vmatpush.bf16.msra.mxu0 %v4860
        %5051 = vmatpush.bf16.msra.mxu0 %v4856
        %5052 = vmatpush.bf16.msra.mxu0 %v4852
        %5053 = vmatpush.bf16.msra.mxu0 %v4848
        %5054 = vmatpush.bf16.msra.mxu0 %v4844
        %5055 = vmatpush.bf16.msra.mxu0 %v4840
        %5056 = vmatpush.bf16.msra.mxu0 %v4836
        %5057 = vmatpush.bf16.msra.mxu0 %v4832
        %5058 = vmatmul.bf16.gmra.mxu0 %v4242
        %v5059 = vpop.f32.mrf.mxu0
        %v5060 = vadd.f32 %v5047, %v5059
        %v5061 = vpop.f32.mrf.mxu0
        %5062 = vdwg.mxu0
        %5063 = vmatpush.bf16.msra.mxu0 %v4892
        %5064 = vmatpush.bf16.msra.mxu0 %v4888
        %5065 = vmatpush.bf16.msra.mxu0 %v4884
        %5066 = vmatpush.bf16.msra.mxu0 %v4880
        %5067 = vmatpush.bf16.msra.mxu0 %v4876
        %5068 = vmatpush.bf16.msra.mxu0 %v4872
        %5069 = vmatpush.bf16.msra.mxu0 %v4868
        %5070 = vmatpush.bf16.msra.mxu0 %v4864
        %5071 = vmatmul.bf16.gmra.mxu0 %v4243
        %v5072 = vpop.f32.mrf.mxu0
        %v5073 = vadd.f32 %v5060, %v5072
        %v5074 = vpop.f32.mrf.mxu0
        %5075 = vdwg.mxu0
        %5076 = vmatpush.bf16.msra.mxu0 %v4797
        %5077 = vmatpush.bf16.msra.mxu0 %v4793
        %5078 = vmatpush.bf16.msra.mxu0 %v4789
        %5079 = vmatpush.bf16.msra.mxu0 %v4785
        %5080 = vmatpush.bf16.msra.mxu0 %v4781
        %5081 = vmatpush.bf16.msra.mxu0 %v4777
        %5082 = vmatpush.bf16.msra.mxu0 %v4773
        %5083 = vmatpush.bf16.msra.mxu0 %v4769
        %5084 = vmatmul.bf16.gmra.mxu0 %v4240
        %v5085 = vpop.f32.mrf.mxu0
        %v5086 = vadd.f32 %v4377, %v5085
        %v5087 = vpop.f32.mrf.mxu0
        %5088 = vdwg.mxu0
        %5089 = vmatpush.bf16.msra.mxu0 %v4829
        %5090 = vmatpush.bf16.msra.mxu0 %v4825
        %5091 = vmatpush.bf16.msra.mxu0 %v4821
        %5092 = vmatpush.bf16.msra.mxu0 %v4817
        %5093 = vmatpush.bf16.msra.mxu0 %v4813
        %5094 = vmatpush.bf16.msra.mxu0 %v4809
        %5095 = vmatpush.bf16.msra.mxu0 %v4805
        %5096 = vmatpush.bf16.msra.mxu0 %v4801
        %5097 = vmatmul.bf16.gmra.mxu0 %v4241
        %v5098 = vpop.f32.mrf.mxu0
        %v5099 = vadd.f32 %v5086, %v5098
        %v5100 = vpop.f32.mrf.mxu0
        %5101 = vdwg.mxu0
        %5102 = vmatpush.bf16.msra.mxu0 %v4861
        %5103 = vmatpush.bf16.msra.mxu0 %v4857
        %5104 = vmatpush.bf16.msra.mxu0 %v4853
        %5105 = vmatpush.bf16.msra.mxu0 %v4849
        %5106 = vmatpush.bf16.msra.mxu0 %v4845
        %5107 = vmatpush.bf16.msra.mxu0 %v4841
        %5108 = vmatpush.bf16.msra.mxu0 %v4837
        %5109 = vmatpush.bf16.msra.mxu0 %v4833
        %5110 = vmatmul.bf16.gmra.mxu0 %v4242
        %v5111 = vpop.f32.mrf.mxu0
        %v5112 = vadd.f32 %v5099, %v5111
        %v5113 = vpop.f32.mrf.mxu0
        %5114 = vdwg.mxu0
        %5115 = vmatpush.bf16.msra.mxu0 %v4893
        %5116 = vmatpush.bf16.msra.mxu0 %v4889
        %5117 = vmatpush.bf16.msra.mxu0 %v4885
        %5118 = vmatpush.bf16.msra.mxu0 %v4881
        %5119 = vmatpush.bf16.msra.mxu0 %v4877
        %5120 = vmatpush.bf16.msra.mxu0 %v4873
        %5121 = vmatpush.bf16.msra.mxu0 %v4869
        %5122 = vmatpush.bf16.msra.mxu0 %v4865
        %5123 = vmatmul.bf16.gmra.mxu0 %v4243
        %v5124 = vpop.f32.mrf.mxu0
        %v5125 = vadd.f32 %v5112, %v5124
        %v5126 = vpop.f32.mrf.mxu0
        %5127 = vdwg.mxu0
        %5128 = vmatpush.bf16.msra.mxu0 %v4798
        %5129 = vmatpush.bf16.msra.mxu0 %v4794
        %5130 = vmatpush.bf16.msra.mxu0 %v4790
        %5131 = vmatpush.bf16.msra.mxu0 %v4786
        %5132 = vmatpush.bf16.msra.mxu0 %v4782
        %5133 = vmatpush.bf16.msra.mxu0 %v4778
        %5134 = vmatpush.bf16.msra.mxu0 %v4774
        %5135 = vmatpush.bf16.msra.mxu0 %v4770
        %5136 = vmatmul.bf16.gmra.mxu0 %v4240
        %v5137 = vpop.f32.mrf.mxu0
        %v5138 = vadd.f32 %v4378, %v5137
        %v5139 = vpop.f32.mrf.mxu0
        %5140 = vdwg.mxu0
        %5141 = vmatpush.bf16.msra.mxu0 %v4830
        %5142 = vmatpush.bf16.msra.mxu0 %v4826
        %5143 = vmatpush.bf16.msra.mxu0 %v4822
        %5144 = vmatpush.bf16.msra.mxu0 %v4818
        %5145 = vmatpush.bf16.msra.mxu0 %v4814
        %5146 = vmatpush.bf16.msra.mxu0 %v4810
        %5147 = vmatpush.bf16.msra.mxu0 %v4806
        %5148 = vmatpush.bf16.msra.mxu0 %v4802
        %5149 = vmatmul.bf16.gmra.mxu0 %v4241
        %v5150 = vpop.f32.mrf.mxu0
        %v5151 = vadd.f32 %v5138, %v5150
        %v5152 = vpop.f32.mrf.mxu0
        %5153 = vdwg.mxu0
        %5154 = vmatpush.bf16.msra.mxu0 %v4862
        %5155 = vmatpush.bf16.msra.mxu0 %v4858
        %5156 = vmatpush.bf16.msra.mxu0 %v4854
        %5157 = vmatpush.bf16.msra.mxu0 %v4850
        %5158 = vmatpush.bf16.msra.mxu0 %v4846
        %5159 = vmatpush.bf16.msra.mxu0 %v4842
        %5160 = vmatpush.bf16.msra.mxu0 %v4838
        %5161 = vmatpush.bf16.msra.mxu0 %v4834
        %5162 = vmatmul.bf16.gmra.mxu0 %v4242
        %v5163 = vpop.f32.mrf.mxu0
        %v5164 = vadd.f32 %v5151, %v5163
        %v5165 = vpop.f32.mrf.mxu0
        %5166 = vdwg.mxu0
        %5167 = vmatpush.bf16.msra.mxu0 %v4894
        %5168 = vmatpush.bf16.msra.mxu0 %v4890
        %5169 = vmatpush.bf16.msra.mxu0 %v4886
        %5170 = vmatpush.bf16.msra.mxu0 %v4882
        %5171 = vmatpush.bf16.msra.mxu0 %v4878
        %5172 = vmatpush.bf16.msra.mxu0 %v4874
        %5173 = vmatpush.bf16.msra.mxu0 %v4870
        %5174 = vmatpush.bf16.msra.mxu0 %v4866
        %5175 = vmatmul.bf16.gmra.mxu0 %v4243
        %v5176 = vpop.f32.mrf.mxu0
        %v5177 = vadd.f32 %v5164, %v5176
        %v5178 = vpop.f32.mrf.mxu0
        %5179 = vdwg.mxu0
        %5180 = vmatpush.bf16.msra.mxu0 %v4799
        %5181 = vmatpush.bf16.msra.mxu0 %v4795
        %5182 = vmatpush.bf16.msra.mxu0 %v4791
        %5183 = vmatpush.bf16.msra.mxu0 %v4787
        %5184 = vmatpush.bf16.msra.mxu0 %v4783
        %5185 = vmatpush.bf16.msra.mxu0 %v4779
        %5186 = vmatpush.bf16.msra.mxu0 %v4775
        %5187 = vmatpush.bf16.msra.mxu0 %v4771
        %5188 = vmatmul.bf16.gmra.mxu0 %v4240
        %v5189 = vpop.f32.mrf.mxu0
        %v5190 = vadd.f32 %v4379, %v5189
        %v5191 = vpop.f32.mrf.mxu0
        %5192 = vdwg.mxu0
        %5193 = vmatpush.bf16.msra.mxu0 %v4831
        %5194 = vmatpush.bf16.msra.mxu0 %v4827
        %5195 = vmatpush.bf16.msra.mxu0 %v4823
        %5196 = vmatpush.bf16.msra.mxu0 %v4819
        %5197 = vmatpush.bf16.msra.mxu0 %v4815
        %5198 = vmatpush.bf16.msra.mxu0 %v4811
        %5199 = vmatpush.bf16.msra.mxu0 %v4807
        %5200 = vmatpush.bf16.msra.mxu0 %v4803
        %5201 = vmatmul.bf16.gmra.mxu0 %v4241
        %v5202 = vpop.f32.mrf.mxu0
        %v5203 = vadd.f32 %v5190, %v5202
        %v5204 = vpop.f32.mrf.mxu0
        %5205 = vdwg.mxu0
        %5206 = vmatpush.bf16.msra.mxu0 %v4863
        %5207 = vmatpush.bf16.msra.mxu0 %v4859
        %5208 = vmatpush.bf16.msra.mxu0 %v4855
        %5209 = vmatpush.bf16.msra.mxu0 %v4851
        %5210 = vmatpush.bf16.msra.mxu0 %v4847
        %5211 = vmatpush.bf16.msra.mxu0 %v4843
        %5212 = vmatpush.bf16.msra.mxu0 %v4839
        %5213 = vmatpush.bf16.msra.mxu0 %v4835
        %5214 = vmatmul.bf16.gmra.mxu0 %v4242
        %v5215 = vpop.f32.mrf.mxu0
        %v5216 = vadd.f32 %v5203, %v5215
        %v5217 = vpop.f32.mrf.mxu0
        %5218 = vdwg.mxu0
        %5219 = vmatpush.bf16.msra.mxu0 %v4895
        %5220 = vmatpush.bf16.msra.mxu0 %v4891
        %5221 = vmatpush.bf16.msra.mxu0 %v4887
        %5222 = vmatpush.bf16.msra.mxu0 %v4883
        %5223 = vmatpush.bf16.msra.mxu0 %v4879
        %5224 = vmatpush.bf16.msra.mxu0 %v4875
        %5225 = vmatpush.bf16.msra.mxu0 %v4871
        %5226 = vmatpush.bf16.msra.mxu0 %v4867
        %5227 = vmatmul.bf16.gmra.mxu0 %v4243
        %v5228 = vpop.f32.mrf.mxu0
        %v5229 = vadd.f32 %v5216, %v5228
        %v5230 = vpop.f32.mrf.mxu0
        %5231 = vdwg.mxu0
        %v5232 = vmax.f32 %v5073, 0.0
        %v5233 = vmax.f32 %v5125, 0.0
        %v5234 = vmax.f32 %v5177, 0.0
        %v5235 = vmax.f32 %v5229, 0.0
        %v5236 = vadd.f32 %v4236, %v5232
        %v5237 = vadd.f32 %v4237, %v5233
        %v5238 = vadd.f32 %v4238, %v5234
        %v5239 = vadd.f32 %v4239, %v5235
        %v5240 = vpack.c.bf16 %v5236, %v5236
        %v5241 = vpack.c.bf16 %v5237, %v5237
        %v5242 = vpack.c.bf16 %v5238, %v5238
        %v5243 = vpack.c.bf16 %v5239, %v5239
        %v5244 = vld [vmem:[#allocation19] sm:$0xff]
        %v5245 = vld [vmem:[#allocation19 + $0x8] sm:$0xff]
        %v5246 = vld [vmem:[#allocation19 + $0x10] sm:$0xff]
        %v5247 = vld [vmem:[#allocation19 + $0x18] sm:$0xf]
        %v5248 = vld [vmem:[#allocation19 + $0x1c] sm:$0xff]
        %v5249 = vld [vmem:[#allocation19 + $0x24] sm:$0xff]
        %v5250 = vld [vmem:[#allocation19 + $0x2c] sm:$0xff]
        %v5251 = vld [vmem:[#allocation19 + $0x34] sm:$0xf]
        %v5252 = vld [vmem:[#allocation19 + $0x38] sm:$0xff]
        %v5253 = vld [vmem:[#allocation19 + $0x40] sm:$0xff]
        %v5254 = vld [vmem:[#allocation19 + $0x48] sm:$0xff]
        %v5255 = vld [vmem:[#allocation19 + $0x50] sm:$0xf]
        %v5256 = vld [vmem:[#allocation19 + $0x54] sm:$0xff]
        %v5257 = vld [vmem:[#allocation19 + $0x5c] sm:$0xff]
        %v5258 = vld [vmem:[#allocation19 + $0x64] sm:$0xff]
        %v5259 = vld [vmem:[#allocation19 + $0x6c] sm:$0xf]
        %v5260 = vld [vmem:[#allocation19 + $0x70] sm:$0xff]
        %v5261 = vld [vmem:[#allocation19 + $0x78] sm:$0xff]
        %v5262 = vld [vmem:[#allocation19 + $0x80] sm:$0xff]
        %v5263 = vld [vmem:[#allocation19 + $0x88] sm:$0xf]
        %v5264 = vld [vmem:[#allocation19 + $0x8c] sm:$0xff]
        %v5265 = vld [vmem:[#allocation19 + $0x94] sm:$0xff]
        %v5266 = vld [vmem:[#allocation19 + $0x9c] sm:$0xff]
        %v5267 = vld [vmem:[#allocation19 + $0xa4] sm:$0xf]
        %v5268 = vld [vmem:[#allocation19 + $0xa8] sm:$0xff]
        %v5269 = vld [vmem:[#allocation19 + $0xb0] sm:$0xff]
        %v5270 = vld [vmem:[#allocation19 + $0xb8] sm:$0xff]
        %v5271 = vld [vmem:[#allocation19 + $0xc0] sm:$0xf]
        %v5272 = vld [vmem:[#allocation19 + $0xc4] sm:$0xff]
        %v5273 = vld [vmem:[#allocation19 + $0xcc] sm:$0xff]
        %v5274 = vld [vmem:[#allocation19 + $0xd4] sm:$0xff]
        %v5275 = vld [vmem:[#allocation19 + $0xdc] sm:$0xf]
        %v5276 = vld [vmem:[#allocation19 + $0xe0] sm:$0xff]
        %v5277 = vld [vmem:[#allocation19 + $0xe8] sm:$0xff]
        %v5278 = vld [vmem:[#allocation19 + $0xf0] sm:$0xff]
        %v5279 = vld [vmem:[#allocation19 + $0xf8] sm:$0xf]
        %v5280 = vld [vmem:[#allocation19 + $0xfc] sm:$0xff]
        %v5281 = vld [vmem:[#allocation19 + $0x104] sm:$0xff]
        %v5282 = vld [vmem:[#allocation19 + $0x10c] sm:$0xff]
        %v5283 = vld [vmem:[#allocation19 + $0x114] sm:$0xf]
        %v5284 = vld [vmem:[#allocation19 + $0x118] sm:$0xff]
        %v5285 = vld [vmem:[#allocation19 + $0x120] sm:$0xff]
        %v5286 = vld [vmem:[#allocation19 + $0x128] sm:$0xff]
        %v5287 = vld [vmem:[#allocation19 + $0x130] sm:$0xf]
        %v5288 = vld [vmem:[#allocation19 + $0x134] sm:$0xff]
        %v5289 = vld [vmem:[#allocation19 + $0x13c] sm:$0xff]
        %v5290 = vld [vmem:[#allocation19 + $0x144] sm:$0xff]
        %v5291 = vld [vmem:[#allocation19 + $0x14c] sm:$0xf]
        %v5292 = vld [vmem:[#allocation19 + $0x150] sm:$0xff]
        %v5293 = vld [vmem:[#allocation19 + $0x158] sm:$0xff]
        %v5294 = vld [vmem:[#allocation19 + $0x160] sm:$0xff]
        %v5295 = vld [vmem:[#allocation19 + $0x168] sm:$0xf]
        %v5296 = vld [vmem:[#allocation19 + $0x16c] sm:$0xff]
        %v5297 = vld [vmem:[#allocation19 + $0x174] sm:$0xff]
        %v5298 = vld [vmem:[#allocation19 + $0x17c] sm:$0xff]
        %v5299 = vld [vmem:[#allocation19 + $0x184] sm:$0xf]
        %v5300 = vld [vmem:[#allocation19 + $0x188] sm:$0xff]
        %v5301 = vld [vmem:[#allocation19 + $0x190] sm:$0xff]
        %v5302 = vld [vmem:[#allocation19 + $0x198] sm:$0xff]
        %v5303 = vld [vmem:[#allocation19 + $0x1a0] sm:$0xf]
        %v5304 = vld [vmem:[#allocation19 + $0x1a4] sm:$0xff]
        %v5305 = vld [vmem:[#allocation19 + $0x1ac] sm:$0xff]
        %v5306 = vld [vmem:[#allocation19 + $0x1b4] sm:$0xff]
        %v5307 = vld [vmem:[#allocation19 + $0x1bc] sm:$0xf]
        %v5308 = vld [vmem:[#allocation19 + $0x1c0] sm:$0xff]
        %v5309 = vld [vmem:[#allocation19 + $0x1c8] sm:$0xff]
        %v5310 = vld [vmem:[#allocation19 + $0x1d0] sm:$0xff]
        %v5311 = vld [vmem:[#allocation19 + $0x1d8] sm:$0xf]
        %v5312 = vld [vmem:[#allocation19 + $0x1dc] sm:$0xff]
        %v5313 = vld [vmem:[#allocation19 + $0x1e4] sm:$0xff]
        %v5314 = vld [vmem:[#allocation19 + $0x1ec] sm:$0xff]
        %v5315 = vld [vmem:[#allocation19 + $0x1f4] sm:$0xf]
        %v5316 = vld [vmem:[#allocation19 + $0x1f8] sm:$0xff]
        %v5317 = vld [vmem:[#allocation19 + $0x200] sm:$0xff]
        %v5318 = vld [vmem:[#allocation19 + $0x208] sm:$0xff]
        %v5319 = vld [vmem:[#allocation19 + $0x210] sm:$0xf]
        %v5320 = vld [vmem:[#allocation19 + $0x214] sm:$0xff]
        %v5321 = vld [vmem:[#allocation19 + $0x21c] sm:$0xff]
        %v5322 = vld [vmem:[#allocation19 + $0x224] sm:$0xff]
        %v5323 = vld [vmem:[#allocation19 + $0x22c] sm:$0xf]
        %v5324 = vld [vmem:[#allocation19 + $0x230] sm:$0xff]
        %v5325 = vld [vmem:[#allocation19 + $0x238] sm:$0xff]
        %v5326 = vld [vmem:[#allocation19 + $0x240] sm:$0xff]
        %v5327 = vld [vmem:[#allocation19 + $0x248] sm:$0xf]
        %v5328 = vld [vmem:[#allocation19 + $0x24c] sm:$0xff]
        %v5329 = vld [vmem:[#allocation19 + $0x254] sm:$0xff]
        %v5330 = vld [vmem:[#allocation19 + $0x25c] sm:$0xff]
        %v5331 = vld [vmem:[#allocation19 + $0x264] sm:$0xf]
        %v5332 = vld [vmem:[#allocation19 + $0x268] sm:$0xff]
        %v5333 = vld [vmem:[#allocation19 + $0x270] sm:$0xff]
        %v5334 = vld [vmem:[#allocation19 + $0x278] sm:$0xff]
        %v5335 = vld [vmem:[#allocation19 + $0x280] sm:$0xf]
        %v5336 = vld [vmem:[#allocation19 + $0x284] sm:$0xff]
        %v5337 = vld [vmem:[#allocation19 + $0x28c] sm:$0xff]
        %v5338 = vld [vmem:[#allocation19 + $0x294] sm:$0xff]
        %v5339 = vld [vmem:[#allocation19 + $0x29c] sm:$0xf]
        %v5340 = vld [vmem:[#allocation19 + $0x2a0] sm:$0xff]
        %v5341 = vld [vmem:[#allocation19 + $0x2a8] sm:$0xff]
        %v5342 = vld [vmem:[#allocation19 + $0x2b0] sm:$0xff]
        %v5343 = vld [vmem:[#allocation19 + $0x2b8] sm:$0xf]
        %v5344 = vld [vmem:[#allocation19 + $0x2bc] sm:$0xff]
        %v5345 = vld [vmem:[#allocation19 + $0x2c4] sm:$0xff]
        %v5346 = vld [vmem:[#allocation19 + $0x2cc] sm:$0xff]
        %v5347 = vld [vmem:[#allocation19 + $0x2d4] sm:$0xf]
        %v5348 = vld [vmem:[#allocation19 + $0x2d8] sm:$0xff]
        %v5349 = vld [vmem:[#allocation19 + $0x2e0] sm:$0xff]
        %v5350 = vld [vmem:[#allocation19 + $0x2e8] sm:$0xff]
        %v5351 = vld [vmem:[#allocation19 + $0x2f0] sm:$0xf]
        %v5352 = vld [vmem:[#allocation19 + $0x2f4] sm:$0xff]
        %v5353 = vld [vmem:[#allocation19 + $0x2fc] sm:$0xff]
        %v5354 = vld [vmem:[#allocation19 + $0x304] sm:$0xff]
        %v5355 = vld [vmem:[#allocation19 + $0x30c] sm:$0xf]
        %v5356 = vld [vmem:[#allocation19 + $0x310] sm:$0xff]
        %v5357 = vld [vmem:[#allocation19 + $0x318] sm:$0xff]
        %v5358 = vld [vmem:[#allocation19 + $0x320] sm:$0xff]
        %v5359 = vld [vmem:[#allocation19 + $0x328] sm:$0xf]
        %v5360 = vld [vmem:[#allocation19 + $0x32c] sm:$0xff]
        %v5361 = vld [vmem:[#allocation19 + $0x334] sm:$0xff]
        %v5362 = vld [vmem:[#allocation19 + $0x33c] sm:$0xff]
        %v5363 = vld [vmem:[#allocation19 + $0x344] sm:$0xf]
        %v5364 = vld [vmem:[#allocation19 + $0x348] sm:$0xff]
        %v5365 = vld [vmem:[#allocation19 + $0x350] sm:$0xff]
        %v5366 = vld [vmem:[#allocation19 + $0x358] sm:$0xff]
        %v5367 = vld [vmem:[#allocation19 + $0x360] sm:$0xf]
        %v5368 = vld [vmem:[#allocation19 + $0x364] sm:$0xff]
        %v5369 = vld [vmem:[#allocation19 + $0x36c] sm:$0xff]
        %v5370 = vld [vmem:[#allocation19 + $0x374] sm:$0xff]
        %v5371 = vld [vmem:[#allocation19 + $0x37c] sm:$0xf]
        %v5372 = vld [vmem:[#allocation19 + $0x380] sm:$0xff]
        %v5373 = vld [vmem:[#allocation19 + $0x388] sm:$0xff]
        %v5374 = vld [vmem:[#allocation19 + $0x390] sm:$0xff]
        %v5375 = vld [vmem:[#allocation19 + $0x398] sm:$0xf]
        %v5376 = vld [vmem:[#allocation19 + $0x39c] sm:$0xff]
        %v5377 = vld [vmem:[#allocation19 + $0x3a4] sm:$0xff]
        %v5378 = vld [vmem:[#allocation19 + $0x3ac] sm:$0xff]
        %v5379 = vld [vmem:[#allocation19 + $0x3b4] sm:$0xf]
        %v5380 = vld [vmem:[#allocation19 + $0x3b8] sm:$0xff]
        %v5381 = vld [vmem:[#allocation19 + $0x3c0] sm:$0xff]
        %v5382 = vld [vmem:[#allocation19 + $0x3c8] sm:$0xff]
        %v5383 = vld [vmem:[#allocation19 + $0x3d0] sm:$0xf]
        %v5384 = vld [vmem:[#allocation19 + $0x3d4] sm:$0xff]
        %v5385 = vld [vmem:[#allocation19 + $0x3dc] sm:$0xff]
        %v5386 = vld [vmem:[#allocation19 + $0x3e4] sm:$0xff]
        %v5387 = vld [vmem:[#allocation19 + $0x3ec] sm:$0xf]
        %v5388 = vld [vmem:[#allocation19 + $0x3f0] sm:$0xff]
        %v5389 = vld [vmem:[#allocation19 + $0x3f8] sm:$0xff]
        %v5390 = vld [vmem:[#allocation19 + $0x400] sm:$0xff]
        %v5391 = vld [vmem:[#allocation19 + $0x408] sm:$0xf]
        %v5392 = vld [vmem:[#allocation19 + $0x40c] sm:$0xff]
        %v5393 = vld [vmem:[#allocation19 + $0x414] sm:$0xff]
        %v5394 = vld [vmem:[#allocation19 + $0x41c] sm:$0xff]
        %v5395 = vld [vmem:[#allocation19 + $0x424] sm:$0xf]
        %v5396 = vld [vmem:[#allocation19 + $0x428] sm:$0xff]
        %v5397 = vld [vmem:[#allocation19 + $0x430] sm:$0xff]
        %v5398 = vld [vmem:[#allocation19 + $0x438] sm:$0xff]
        %v5399 = vld [vmem:[#allocation19 + $0x440] sm:$0xf]
        %v5400 = vld [vmem:[#allocation19 + $0x444] sm:$0xff]
        %v5401 = vld [vmem:[#allocation19 + $0x44c] sm:$0xff]
        %v5402 = vld [vmem:[#allocation19 + $0x454] sm:$0xff]
        %v5403 = vld [vmem:[#allocation19 + $0x45c] sm:$0xf]
        %v5404 = vld [vmem:[#allocation19 + $0x460] sm:$0xff]
        %v5405 = vld [vmem:[#allocation19 + $0x468] sm:$0xff]
        %v5406 = vld [vmem:[#allocation19 + $0x470] sm:$0xff]
        %v5407 = vld [vmem:[#allocation19 + $0x478] sm:$0xf]
        %v5408 = vld [vmem:[#allocation19 + $0x47c] sm:$0xff]
        %v5409 = vld [vmem:[#allocation19 + $0x484] sm:$0xff]
        %v5410 = vld [vmem:[#allocation19 + $0x48c] sm:$0xff]
        %v5411 = vld [vmem:[#allocation19 + $0x494] sm:$0xf]
        %v5412 = vld [vmem:[#allocation19 + $0x498] sm:$0xff]
        %v5413 = vld [vmem:[#allocation19 + $0x4a0] sm:$0xff]
        %v5414 = vld [vmem:[#allocation19 + $0x4a8] sm:$0xff]
        %v5415 = vld [vmem:[#allocation19 + $0x4b0] sm:$0xf]
        %v5416 = vld [vmem:[#allocation19 + $0x4b4] sm:$0xff]
        %v5417 = vld [vmem:[#allocation19 + $0x4bc] sm:$0xff]
        %v5418 = vld [vmem:[#allocation19 + $0x4c4] sm:$0xff]
        %v5419 = vld [vmem:[#allocation19 + $0x4cc] sm:$0xf]
        %v5420 = vld [vmem:[#allocation19 + $0x4d0] sm:$0xff]
        %v5421 = vld [vmem:[#allocation19 + $0x4d8] sm:$0xff]
        %v5422 = vld [vmem:[#allocation19 + $0x4e0] sm:$0xff]
        %v5423 = vld [vmem:[#allocation19 + $0x4e8] sm:$0xf]
        %v5424 = vld [vmem:[#allocation19 + $0x4ec] sm:$0xff]
        %v5425 = vld [vmem:[#allocation19 + $0x4f4] sm:$0xff]
        %v5426 = vld [vmem:[#allocation19 + $0x4fc] sm:$0xff]
        %v5427 = vld [vmem:[#allocation19 + $0x504] sm:$0xf]
        %v5428 = vld [vmem:[#allocation19 + $0x508] sm:$0xff]
        %v5429 = vld [vmem:[#allocation19 + $0x510] sm:$0xff]
        %v5430 = vld [vmem:[#allocation19 + $0x518] sm:$0xff]
        %v5431 = vld [vmem:[#allocation19 + $0x520] sm:$0xf]
        %v5432 = vld [vmem:[#allocation19 + $0x524] sm:$0xff]
        %v5433 = vld [vmem:[#allocation19 + $0x52c] sm:$0xff]
        %v5434 = vld [vmem:[#allocation19 + $0x534] sm:$0xff]
        %v5435 = vld [vmem:[#allocation19 + $0x53c] sm:$0xf]
        %v5436 = vld [vmem:[#allocation19 + $0x540] sm:$0xff]
        %v5437 = vld [vmem:[#allocation19 + $0x548] sm:$0xff]
        %v5438 = vld [vmem:[#allocation19 + $0x550] sm:$0xff]
        %v5439 = vld [vmem:[#allocation19 + $0x558] sm:$0xf]
        %v5440 = vld [vmem:[#allocation19 + $0x55c] sm:$0xff]
        %v5441 = vld [vmem:[#allocation19 + $0x564] sm:$0xff]
        %v5442 = vld [vmem:[#allocation19 + $0x56c] sm:$0xff]
        %v5443 = vld [vmem:[#allocation19 + $0x574] sm:$0xf]
        %v5444 = vld [vmem:[#allocation19 + $0x578] sm:$0xff]
        %v5445 = vld [vmem:[#allocation19 + $0x580] sm:$0xff]
        %v5446 = vld [vmem:[#allocation19 + $0x588] sm:$0xff]
        %v5447 = vld [vmem:[#allocation19 + $0x590] sm:$0xf]
        %v5448 = vld [vmem:[#allocation19 + $0x594] sm:$0xff]
        %v5449 = vld [vmem:[#allocation19 + $0x59c] sm:$0xff]
        %v5450 = vld [vmem:[#allocation19 + $0x5a4] sm:$0xff]
        %v5451 = vld [vmem:[#allocation19 + $0x5ac] sm:$0xf]
        %v5452 = vld [vmem:[#allocation19 + $0x5b0] sm:$0xff]
        %v5453 = vld [vmem:[#allocation19 + $0x5b8] sm:$0xff]
        %v5454 = vld [vmem:[#allocation19 + $0x5c0] sm:$0xff]
        %v5455 = vld [vmem:[#allocation19 + $0x5c8] sm:$0xf]
        %v5456 = vld [vmem:[#allocation19 + $0x5cc] sm:$0xff]
        %v5457 = vld [vmem:[#allocation19 + $0x5d4] sm:$0xff]
        %v5458 = vld [vmem:[#allocation19 + $0x5dc] sm:$0xff]
        %v5459 = vld [vmem:[#allocation19 + $0x5e4] sm:$0xf]
        %v5460 = vld [vmem:[#allocation19 + $0x5e8] sm:$0xff]
        %v5461 = vld [vmem:[#allocation19 + $0x5f0] sm:$0xff]
        %v5462 = vld [vmem:[#allocation19 + $0x5f8] sm:$0xff]
        %v5463 = vld [vmem:[#allocation19 + $0x600] sm:$0xf]
        %v5464 = vld [vmem:[#allocation19 + $0x604] sm:$0xff]
        %v5465 = vld [vmem:[#allocation19 + $0x60c] sm:$0xff]
        %v5466 = vld [vmem:[#allocation19 + $0x614] sm:$0xff]
        %v5467 = vld [vmem:[#allocation19 + $0x61c] sm:$0xf]
        %v5468 = vld [vmem:[#allocation19 + $0x620] sm:$0xff]
        %v5469 = vld [vmem:[#allocation19 + $0x628] sm:$0xff]
        %v5470 = vld [vmem:[#allocation19 + $0x630] sm:$0xff]
        %v5471 = vld [vmem:[#allocation19 + $0x638] sm:$0xf]
        %v5472 = vld [vmem:[#allocation19 + $0x63c] sm:$0xff]
        %v5473 = vld [vmem:[#allocation19 + $0x644] sm:$0xff]
        %v5474 = vld [vmem:[#allocation19 + $0x64c] sm:$0xff]
        %v5475 = vld [vmem:[#allocation19 + $0x654] sm:$0xf]
        %v5476 = vld [vmem:[#allocation19 + $0x658] sm:$0xff]
        %v5477 = vld [vmem:[#allocation19 + $0x660] sm:$0xff]
        %v5478 = vld [vmem:[#allocation19 + $0x668] sm:$0xff]
        %v5479 = vld [vmem:[#allocation19 + $0x670] sm:$0xf]
        %v5480 = vld [vmem:[#allocation19 + $0x674] sm:$0xff]
        %v5481 = vld [vmem:[#allocation19 + $0x67c] sm:$0xff]
        %v5482 = vld [vmem:[#allocation19 + $0x684] sm:$0xff]
        %v5483 = vld [vmem:[#allocation19 + $0x68c] sm:$0xf]
        %v5484 = vld [vmem:[#allocation19 + $0x690] sm:$0xff]
        %v5485 = vld [vmem:[#allocation19 + $0x698] sm:$0xff]
        %v5486 = vld [vmem:[#allocation19 + $0x6a0] sm:$0xff]
        %v5487 = vld [vmem:[#allocation19 + $0x6a8] sm:$0xf]
        %v5488 = vld [vmem:[#allocation19 + $0x6ac] sm:$0xff]
        %v5489 = vld [vmem:[#allocation19 + $0x6b4] sm:$0xff]
        %v5490 = vld [vmem:[#allocation19 + $0x6bc] sm:$0xff]
        %v5491 = vld [vmem:[#allocation19 + $0x6c4] sm:$0xf]
        %v5492 = vld [vmem:[#allocation19 + $0x6c8] sm:$0xff]
        %v5493 = vld [vmem:[#allocation19 + $0x6d0] sm:$0xff]
        %v5494 = vld [vmem:[#allocation19 + $0x6d8] sm:$0xff]
        %v5495 = vld [vmem:[#allocation19 + $0x6e0] sm:$0xf]
        %v5496 = vld [vmem:[#allocation19 + $0x6e4] sm:$0xff]
        %v5497 = vld [vmem:[#allocation19 + $0x6ec] sm:$0xff]
        %v5498 = vld [vmem:[#allocation19 + $0x6f4] sm:$0xff]
        %v5499 = vld [vmem:[#allocation19 + $0x6fc] sm:$0xf]
        %v5500 = vld [vmem:[#allocation21] sm:$0xff]
        %v5505 = vrot.slane %v5240, 2
        %v5506 = vrot.slane %v5241, 2
        %v5507 = vrot.slane %v5242, 2
        %v5508 = vrot.slane %v5243, 2
        %v5769 = vunpack.c.l.b16 %v5244
        %v5770 = vunpack.c.h.b16 %v5244
        %v5771 = vunpack.c.l.b16 %v5245
        %v5772 = vunpack.c.h.b16 %v5245
        %v5773 = vunpack.c.l.b16 %v5246
        %v5774 = vunpack.c.h.b16 %v5246
        %v5775 = vunpack.c.l.b16 %v5247
        %v5776 = vunpack.c.l.b16 %v5248
        %v5777 = vunpack.c.h.b16 %v5248
        %v5778 = vunpack.c.l.b16 %v5249
        %v5779 = vunpack.c.h.b16 %v5249
        %v5780 = vunpack.c.l.b16 %v5250
        %v5781 = vunpack.c.h.b16 %v5250
        %v5782 = vunpack.c.l.b16 %v5251
        %v5783 = vunpack.c.l.b16 %v5252
        %v5784 = vunpack.c.h.b16 %v5252
        %v5785 = vunpack.c.l.b16 %v5253
        %v5786 = vunpack.c.h.b16 %v5253
        %v5787 = vunpack.c.l.b16 %v5254
        %v5788 = vunpack.c.h.b16 %v5254
        %v5789 = vunpack.c.l.b16 %v5255
        %v5790 = vunpack.c.l.b16 %v5256
        %v5791 = vunpack.c.h.b16 %v5256
        %v5792 = vunpack.c.l.b16 %v5257
        %v5793 = vunpack.c.h.b16 %v5257
        %v5794 = vunpack.c.l.b16 %v5258
        %v5795 = vunpack.c.h.b16 %v5258
        %v5796 = vunpack.c.l.b16 %v5259
        %v5797 = vunpack.c.l.b16 %v5260
        %v5798 = vunpack.c.h.b16 %v5260
        %v5799 = vunpack.c.l.b16 %v5261
        %v5800 = vunpack.c.h.b16 %v5261
        %v5801 = vunpack.c.l.b16 %v5262
        %v5802 = vunpack.c.h.b16 %v5262
        %v5803 = vunpack.c.l.b16 %v5263
        %v5804 = vunpack.c.l.b16 %v5264
        %v5805 = vunpack.c.h.b16 %v5264
        %v5806 = vunpack.c.l.b16 %v5265
        %v5807 = vunpack.c.h.b16 %v5265
        %v5808 = vunpack.c.l.b16 %v5266
        %v5809 = vunpack.c.h.b16 %v5266
        %v5810 = vunpack.c.l.b16 %v5267
        %v5811 = vunpack.c.l.b16 %v5268
        %v5812 = vunpack.c.h.b16 %v5268
        %v5813 = vunpack.c.l.b16 %v5269
        %v5814 = vunpack.c.h.b16 %v5269
        %v5815 = vunpack.c.l.b16 %v5270
        %v5816 = vunpack.c.h.b16 %v5270
        %v5817 = vunpack.c.l.b16 %v5271
        %v5818 = vunpack.c.l.b16 %v5272
        %v5819 = vunpack.c.h.b16 %v5272
        %v5820 = vunpack.c.l.b16 %v5273
        %v5821 = vunpack.c.h.b16 %v5273
        %v5822 = vunpack.c.l.b16 %v5274
        %v5823 = vunpack.c.h.b16 %v5274
        %v5824 = vunpack.c.l.b16 %v5275
        %v5825 = vunpack.c.l.b16 %v5276
        %v5826 = vunpack.c.h.b16 %v5276
        %v5827 = vunpack.c.l.b16 %v5277
        %v5828 = vunpack.c.h.b16 %v5277
        %v5829 = vunpack.c.l.b16 %v5278
        %v5830 = vunpack.c.h.b16 %v5278
        %v5831 = vunpack.c.l.b16 %v5279
        %v5832 = vunpack.c.l.b16 %v5280
        %v5833 = vunpack.c.h.b16 %v5280
        %v5834 = vunpack.c.l.b16 %v5281
        %v5835 = vunpack.c.h.b16 %v5281
        %v5836 = vunpack.c.l.b16 %v5282
        %v5837 = vunpack.c.h.b16 %v5282
        %v5838 = vunpack.c.l.b16 %v5283
        %v5839 = vunpack.c.l.b16 %v5284
        %v5840 = vunpack.c.h.b16 %v5284
        %v5841 = vunpack.c.l.b16 %v5285
        %v5842 = vunpack.c.h.b16 %v5285
        %v5843 = vunpack.c.l.b16 %v5286
        %v5844 = vunpack.c.h.b16 %v5286
        %v5845 = vunpack.c.l.b16 %v5287
        %v5846 = vunpack.c.l.b16 %v5288
        %v5847 = vunpack.c.h.b16 %v5288
        %v5848 = vunpack.c.l.b16 %v5289
        %v5849 = vunpack.c.h.b16 %v5289
        %v5850 = vunpack.c.l.b16 %v5290
        %v5851 = vunpack.c.h.b16 %v5290
        %v5852 = vunpack.c.l.b16 %v5291
        %v5853 = vunpack.c.l.b16 %v5292
        %v5854 = vunpack.c.h.b16 %v5292
        %v5855 = vunpack.c.l.b16 %v5293
        %v5856 = vunpack.c.h.b16 %v5293
        %v5857 = vunpack.c.l.b16 %v5294
        %v5858 = vunpack.c.h.b16 %v5294
        %v5859 = vunpack.c.l.b16 %v5295
        %v5860 = vunpack.c.l.b16 %v5296
        %v5861 = vunpack.c.h.b16 %v5296
        %v5862 = vunpack.c.l.b16 %v5297
        %v5863 = vunpack.c.h.b16 %v5297
        %v5864 = vunpack.c.l.b16 %v5298
        %v5865 = vunpack.c.h.b16 %v5298
        %v5866 = vunpack.c.l.b16 %v5299
        %v5867 = vunpack.c.l.b16 %v5300
        %v5868 = vunpack.c.h.b16 %v5300
        %v5869 = vunpack.c.l.b16 %v5301
        %v5870 = vunpack.c.h.b16 %v5301
        %v5871 = vunpack.c.l.b16 %v5302
        %v5872 = vunpack.c.h.b16 %v5302
        %v5873 = vunpack.c.l.b16 %v5303
        %v5874 = vunpack.c.l.b16 %v5304
        %v5875 = vunpack.c.h.b16 %v5304
        %v5876 = vunpack.c.l.b16 %v5305
        %v5877 = vunpack.c.h.b16 %v5305
        %v5878 = vunpack.c.l.b16 %v5306
        %v5879 = vunpack.c.h.b16 %v5306
        %v5880 = vunpack.c.l.b16 %v5307
        %v5881 = vunpack.c.l.b16 %v5308
        %v5882 = vunpack.c.h.b16 %v5308
        %v5883 = vunpack.c.l.b16 %v5309
        %v5884 = vunpack.c.h.b16 %v5309
        %v5885 = vunpack.c.l.b16 %v5310
        %v5886 = vunpack.c.h.b16 %v5310
        %v5887 = vunpack.c.l.b16 %v5311
        %v5888 = vunpack.c.l.b16 %v5312
        %v5889 = vunpack.c.h.b16 %v5312
        %v5890 = vunpack.c.l.b16 %v5313
        %v5891 = vunpack.c.h.b16 %v5313
        %v5892 = vunpack.c.l.b16 %v5314
        %v5893 = vunpack.c.h.b16 %v5314
        %v5894 = vunpack.c.l.b16 %v5315
        %v5895 = vunpack.c.l.b16 %v5316
        %v5896 = vunpack.c.h.b16 %v5316
        %v5897 = vunpack.c.l.b16 %v5317
        %v5898 = vunpack.c.h.b16 %v5317
        %v5899 = vunpack.c.l.b16 %v5318
        %v5900 = vunpack.c.h.b16 %v5318
        %v5901 = vunpack.c.l.b16 %v5319
        %v5902 = vunpack.c.l.b16 %v5320
        %v5903 = vunpack.c.h.b16 %v5320
        %v5904 = vunpack.c.l.b16 %v5321
        %v5905 = vunpack.c.h.b16 %v5321
        %v5906 = vunpack.c.l.b16 %v5322
        %v5907 = vunpack.c.h.b16 %v5322
        %v5908 = vunpack.c.l.b16 %v5323
        %v5909 = vunpack.c.l.b16 %v5324
        %v5910 = vunpack.c.h.b16 %v5324
        %v5911 = vunpack.c.l.b16 %v5325
        %v5912 = vunpack.c.h.b16 %v5325
        %v5913 = vunpack.c.l.b16 %v5326
        %v5914 = vunpack.c.h.b16 %v5326
        %v5915 = vunpack.c.l.b16 %v5327
        %v5916 = vunpack.c.l.b16 %v5328
        %v5917 = vunpack.c.h.b16 %v5328
        %v5918 = vunpack.c.l.b16 %v5329
        %v5919 = vunpack.c.h.b16 %v5329
        %v5920 = vunpack.c.l.b16 %v5330
        %v5921 = vunpack.c.h.b16 %v5330
        %v5922 = vunpack.c.l.b16 %v5331
        %v5923 = vunpack.c.l.b16 %v5332
        %v5924 = vunpack.c.h.b16 %v5332
        %v5925 = vunpack.c.l.b16 %v5333
        %v5926 = vunpack.c.h.b16 %v5333
        %v5927 = vunpack.c.l.b16 %v5334
        %v5928 = vunpack.c.h.b16 %v5334
        %v5929 = vunpack.c.l.b16 %v5335
        %v5930 = vunpack.c.l.b16 %v5336
        %v5931 = vunpack.c.h.b16 %v5336
        %v5932 = vunpack.c.l.b16 %v5337
        %v5933 = vunpack.c.h.b16 %v5337
        %v5934 = vunpack.c.l.b16 %v5338
        %v5935 = vunpack.c.h.b16 %v5338
        %v5936 = vunpack.c.l.b16 %v5339
        %v5937 = vunpack.c.l.b16 %v5340
        %v5938 = vunpack.c.h.b16 %v5340
        %v5939 = vunpack.c.l.b16 %v5341
        %v5940 = vunpack.c.h.b16 %v5341
        %v5941 = vunpack.c.l.b16 %v5342
        %v5942 = vunpack.c.h.b16 %v5342
        %v5943 = vunpack.c.l.b16 %v5343
        %v5944 = vunpack.c.l.b16 %v5344
        %v5945 = vunpack.c.h.b16 %v5344
        %v5946 = vunpack.c.l.b16 %v5345
        %v5947 = vunpack.c.h.b16 %v5345
        %v5948 = vunpack.c.l.b16 %v5346
        %v5949 = vunpack.c.h.b16 %v5346
        %v5950 = vunpack.c.l.b16 %v5347
        %v5951 = vunpack.c.l.b16 %v5348
        %v5952 = vunpack.c.h.b16 %v5348
        %v5953 = vunpack.c.l.b16 %v5349
        %v5954 = vunpack.c.h.b16 %v5349
        %v5955 = vunpack.c.l.b16 %v5350
        %v5956 = vunpack.c.h.b16 %v5350
        %v5957 = vunpack.c.l.b16 %v5351
        %v5958 = vunpack.c.l.b16 %v5352
        %v5959 = vunpack.c.h.b16 %v5352
        %v5960 = vunpack.c.l.b16 %v5353
        %v5961 = vunpack.c.h.b16 %v5353
        %v5962 = vunpack.c.l.b16 %v5354
        %v5963 = vunpack.c.h.b16 %v5354
        %v5964 = vunpack.c.l.b16 %v5355
        %v5965 = vunpack.c.l.b16 %v5356
        %v5966 = vunpack.c.h.b16 %v5356
        %v5967 = vunpack.c.l.b16 %v5357
        %v5968 = vunpack.c.h.b16 %v5357
        %v5969 = vunpack.c.l.b16 %v5358
        %v5970 = vunpack.c.h.b16 %v5358
        %v5971 = vunpack.c.l.b16 %v5359
        %v5972 = vunpack.c.l.b16 %v5360
        %v5973 = vunpack.c.h.b16 %v5360
        %v5974 = vunpack.c.l.b16 %v5361
        %v5975 = vunpack.c.h.b16 %v5361
        %v5976 = vunpack.c.l.b16 %v5362
        %v5977 = vunpack.c.h.b16 %v5362
        %v5978 = vunpack.c.l.b16 %v5363
        %v5979 = vunpack.c.l.b16 %v5364
        %v5980 = vunpack.c.h.b16 %v5364
        %v5981 = vunpack.c.l.b16 %v5365
        %v5982 = vunpack.c.h.b16 %v5365
        %v5983 = vunpack.c.l.b16 %v5366
        %v5984 = vunpack.c.h.b16 %v5366
        %v5985 = vunpack.c.l.b16 %v5367
        %v5986 = vunpack.c.l.b16 %v5368
        %v5987 = vunpack.c.h.b16 %v5368
        %v5988 = vunpack.c.l.b16 %v5369
        %v5989 = vunpack.c.h.b16 %v5369
        %v5990 = vunpack.c.l.b16 %v5370
        %v5991 = vunpack.c.h.b16 %v5370
        %v5992 = vunpack.c.l.b16 %v5371
        %v5993 = vunpack.c.l.b16 %v5372
        %v5994 = vunpack.c.h.b16 %v5372
        %v5995 = vunpack.c.l.b16 %v5373
        %v5996 = vunpack.c.h.b16 %v5373
        %v5997 = vunpack.c.l.b16 %v5374
        %v5998 = vunpack.c.h.b16 %v5374
        %v5999 = vunpack.c.l.b16 %v5375
        %v6000 = vunpack.c.l.b16 %v5376
        %v6001 = vunpack.c.h.b16 %v5376
        %v6002 = vunpack.c.l.b16 %v5377
        %v6003 = vunpack.c.h.b16 %v5377
        %v6004 = vunpack.c.l.b16 %v5378
        %v6005 = vunpack.c.h.b16 %v5378
        %v6006 = vunpack.c.l.b16 %v5379
        %v6007 = vunpack.c.l.b16 %v5380
        %v6008 = vunpack.c.h.b16 %v5380
        %v6009 = vunpack.c.l.b16 %v5381
        %v6010 = vunpack.c.h.b16 %v5381
        %v6011 = vunpack.c.l.b16 %v5382
        %v6012 = vunpack.c.h.b16 %v5382
        %v6013 = vunpack.c.l.b16 %v5383
        %v6014 = vunpack.c.l.b16 %v5384
        %v6015 = vunpack.c.h.b16 %v5384
        %v6016 = vunpack.c.l.b16 %v5385
        %v6017 = vunpack.c.h.b16 %v5385
        %v6018 = vunpack.c.l.b16 %v5386
        %v6019 = vunpack.c.h.b16 %v5386
        %v6020 = vunpack.c.l.b16 %v5387
        %v6021 = vunpack.c.l.b16 %v5388
        %v6022 = vunpack.c.h.b16 %v5388
        %v6023 = vunpack.c.l.b16 %v5389
        %v6024 = vunpack.c.h.b16 %v5389
        %v6025 = vunpack.c.l.b16 %v5390
        %v6026 = vunpack.c.h.b16 %v5390
        %v6027 = vunpack.c.l.b16 %v5391
        %v6028 = vunpack.c.l.b16 %v5392
        %v6029 = vunpack.c.h.b16 %v5392
        %v6030 = vunpack.c.l.b16 %v5393
        %v6031 = vunpack.c.h.b16 %v5393
        %v6032 = vunpack.c.l.b16 %v5394
        %v6033 = vunpack.c.h.b16 %v5394
        %v6034 = vunpack.c.l.b16 %v5395
        %v6035 = vunpack.c.l.b16 %v5396
        %v6036 = vunpack.c.h.b16 %v5396
        %v6037 = vunpack.c.l.b16 %v5397
        %v6038 = vunpack.c.h.b16 %v5397
        %v6039 = vunpack.c.l.b16 %v5398
        %v6040 = vunpack.c.h.b16 %v5398
        %v6041 = vunpack.c.l.b16 %v5399
        %v6042 = vunpack.c.l.b16 %v5400
        %v6043 = vunpack.c.h.b16 %v5400
        %v6044 = vunpack.c.l.b16 %v5401
        %v6045 = vunpack.c.h.b16 %v5401
        %v6046 = vunpack.c.l.b16 %v5402
        %v6047 = vunpack.c.h.b16 %v5402
        %v6048 = vunpack.c.l.b16 %v5403
        %v6049 = vunpack.c.l.b16 %v5404
        %v6050 = vunpack.c.h.b16 %v5404
        %v6051 = vunpack.c.l.b16 %v5405
        %v6052 = vunpack.c.h.b16 %v5405
        %v6053 = vunpack.c.l.b16 %v5406
        %v6054 = vunpack.c.h.b16 %v5406
        %v6055 = vunpack.c.l.b16 %v5407
        %v6056 = vunpack.c.l.b16 %v5408
        %v6057 = vunpack.c.h.b16 %v5408
        %v6058 = vunpack.c.l.b16 %v5409
        %v6059 = vunpack.c.h.b16 %v5409
        %v6060 = vunpack.c.l.b16 %v5410
        %v6061 = vunpack.c.h.b16 %v5410
        %v6062 = vunpack.c.l.b16 %v5411
        %v6063 = vunpack.c.l.b16 %v5412
        %v6064 = vunpack.c.h.b16 %v5412
        %v6065 = vunpack.c.l.b16 %v5413
        %v6066 = vunpack.c.h.b16 %v5413
        %v6067 = vunpack.c.l.b16 %v5414
        %v6068 = vunpack.c.h.b16 %v5414
        %v6069 = vunpack.c.l.b16 %v5415
        %v6070 = vunpack.c.l.b16 %v5416
        %v6071 = vunpack.c.h.b16 %v5416
        %v6072 = vunpack.c.l.b16 %v5417
        %v6073 = vunpack.c.h.b16 %v5417
        %v6074 = vunpack.c.l.b16 %v5418
        %v6075 = vunpack.c.h.b16 %v5418
        %v6076 = vunpack.c.l.b16 %v5419
        %v6077 = vunpack.c.l.b16 %v5420
        %v6078 = vunpack.c.h.b16 %v5420
        %v6079 = vunpack.c.l.b16 %v5421
        %v6080 = vunpack.c.h.b16 %v5421
        %v6081 = vunpack.c.l.b16 %v5422
        %v6082 = vunpack.c.h.b16 %v5422
        %v6083 = vunpack.c.l.b16 %v5423
        %v6084 = vunpack.c.l.b16 %v5424
        %v6085 = vunpack.c.h.b16 %v5424
        %v6086 = vunpack.c.l.b16 %v5425
        %v6087 = vunpack.c.h.b16 %v5425
        %v6088 = vunpack.c.l.b16 %v5426
        %v6089 = vunpack.c.h.b16 %v5426
        %v6090 = vunpack.c.l.b16 %v5427
        %v6091 = vunpack.c.l.b16 %v5428
        %v6092 = vunpack.c.h.b16 %v5428
        %v6093 = vunpack.c.l.b16 %v5429
        %v6094 = vunpack.c.h.b16 %v5429
        %v6095 = vunpack.c.l.b16 %v5430
        %v6096 = vunpack.c.h.b16 %v5430
        %v6097 = vunpack.c.l.b16 %v5431
        %v6098 = vunpack.c.l.b16 %v5432
        %v6099 = vunpack.c.h.b16 %v5432
        %v6100 = vunpack.c.l.b16 %v5433
        %v6101 = vunpack.c.h.b16 %v5433
        %v6102 = vunpack.c.l.b16 %v5434
        %v6103 = vunpack.c.h.b16 %v5434
        %v6104 = vunpack.c.l.b16 %v5435
        %v6105 = vunpack.c.l.b16 %v5436
        %v6106 = vunpack.c.h.b16 %v5436
        %v6107 = vunpack.c.l.b16 %v5437
        %v6108 = vunpack.c.h.b16 %v5437
        %v6109 = vunpack.c.l.b16 %v5438
        %v6110 = vunpack.c.h.b16 %v5438
        %v6111 = vunpack.c.l.b16 %v5439
        %v6112 = vunpack.c.l.b16 %v5440
        %v6113 = vunpack.c.h.b16 %v5440
        %v6114 = vunpack.c.l.b16 %v5441
        %v6115 = vunpack.c.h.b16 %v5441
        %v6116 = vunpack.c.l.b16 %v5442
        %v6117 = vunpack.c.h.b16 %v5442
        %v6118 = vunpack.c.l.b16 %v5443
        %v6119 = vunpack.c.l.b16 %v5444
        %v6120 = vunpack.c.h.b16 %v5444
        %v6121 = vunpack.c.l.b16 %v5445
        %v6122 = vunpack.c.h.b16 %v5445
        %v6123 = vunpack.c.l.b16 %v5446
        %v6124 = vunpack.c.h.b16 %v5446
        %v6125 = vunpack.c.l.b16 %v5447
        %v6126 = vunpack.c.l.b16 %v5448
        %v6127 = vunpack.c.h.b16 %v5448
        %v6128 = vunpack.c.l.b16 %v5449
        %v6129 = vunpack.c.h.b16 %v5449
        %v6130 = vunpack.c.l.b16 %v5450
        %v6131 = vunpack.c.h.b16 %v5450
        %v6132 = vunpack.c.l.b16 %v5451
        %v6133 = vunpack.c.l.b16 %v5452
        %v6134 = vunpack.c.h.b16 %v5452
        %v6135 = vunpack.c.l.b16 %v5453
        %v6136 = vunpack.c.h.b16 %v5453
        %v6137 = vunpack.c.l.b16 %v5454
        %v6138 = vunpack.c.h.b16 %v5454
        %v6139 = vunpack.c.l.b16 %v5455
        %v6140 = vunpack.c.l.b16 %v5456
        %v6141 = vunpack.c.h.b16 %v5456
        %v6142 = vunpack.c.l.b16 %v5457
        %v6143 = vunpack.c.h.b16 %v5457
        %v6144 = vunpack.c.l.b16 %v5458
        %v6145 = vunpack.c.h.b16 %v5458
        %v6146 = vunpack.c.l.b16 %v5459
        %v6147 = vunpack.c.l.b16 %v5460
        %v6148 = vunpack.c.h.b16 %v5460
        %v6149 = vunpack.c.l.b16 %v5461
        %v6150 = vunpack.c.h.b16 %v5461
        %v6151 = vunpack.c.l.b16 %v5462
        %v6152 = vunpack.c.h.b16 %v5462
        %v6153 = vunpack.c.l.b16 %v5463
        %v6154 = vunpack.c.l.b16 %v5464
        %v6155 = vunpack.c.h.b16 %v5464
        %v6156 = vunpack.c.l.b16 %v5465
        %v6157 = vunpack.c.h.b16 %v5465
        %v6158 = vunpack.c.l.b16 %v5466
        %v6159 = vunpack.c.h.b16 %v5466
        %v6160 = vunpack.c.l.b16 %v5467
        %v6161 = vunpack.c.l.b16 %v5468
        %v6162 = vunpack.c.h.b16 %v5468
        %v6163 = vunpack.c.l.b16 %v5469
        %v6164 = vunpack.c.h.b16 %v5469
        %v6165 = vunpack.c.l.b16 %v5470
        %v6166 = vunpack.c.h.b16 %v5470
        %v6167 = vunpack.c.l.b16 %v5471
        %v6168 = vunpack.c.l.b16 %v5472
        %v6169 = vunpack.c.h.b16 %v5472
        %v6170 = vunpack.c.l.b16 %v5473
        %v6171 = vunpack.c.h.b16 %v5473
        %v6172 = vunpack.c.l.b16 %v5474
        %v6173 = vunpack.c.h.b16 %v5474
        %v6174 = vunpack.c.l.b16 %v5475
        %v6175 = vunpack.c.l.b16 %v5476
        %v6176 = vunpack.c.h.b16 %v5476
        %v6177 = vunpack.c.l.b16 %v5477
        %v6178 = vunpack.c.h.b16 %v5477
        %v6179 = vunpack.c.l.b16 %v5478
        %v6180 = vunpack.c.h.b16 %v5478
        %v6181 = vunpack.c.l.b16 %v5479
        %v6182 = vunpack.c.l.b16 %v5480
        %v6183 = vunpack.c.h.b16 %v5480
        %v6184 = vunpack.c.l.b16 %v5481
        %v6185 = vunpack.c.h.b16 %v5481
        %v6186 = vunpack.c.l.b16 %v5482
        %v6187 = vunpack.c.h.b16 %v5482
        %v6188 = vunpack.c.l.b16 %v5483
        %v6189 = vunpack.c.l.b16 %v5484
        %v6190 = vunpack.c.h.b16 %v5484
        %v6191 = vunpack.c.l.b16 %v5485
        %v6192 = vunpack.c.h.b16 %v5485
        %v6193 = vunpack.c.l.b16 %v5486
        %v6194 = vunpack.c.h.b16 %v5486
        %v6195 = vunpack.c.l.b16 %v5487
        %v6196 = vunpack.c.l.b16 %v5488
        %v6197 = vunpack.c.h.b16 %v5488
        %v6198 = vunpack.c.l.b16 %v5489
        %v6199 = vunpack.c.h.b16 %v5489
        %v6200 = vunpack.c.l.b16 %v5490
        %v6201 = vunpack.c.h.b16 %v5490
        %v6202 = vunpack.c.l.b16 %v5491
        %v6203 = vunpack.c.l.b16 %v5492
        %v6204 = vunpack.c.h.b16 %v5492
        %v6205 = vunpack.c.l.b16 %v5493
        %v6206 = vunpack.c.h.b16 %v5493
        %v6207 = vunpack.c.l.b16 %v5494
        %v6208 = vunpack.c.h.b16 %v5494
        %v6209 = vunpack.c.l.b16 %v5495
        %v6210 = vunpack.c.l.b16 %v5496
        %v6211 = vunpack.c.h.b16 %v5496
        %v6212 = vunpack.c.l.b16 %v5497
        %v6213 = vunpack.c.h.b16 %v5497
        %v6214 = vunpack.c.l.b16 %v5498
        %v6215 = vunpack.c.h.b16 %v5498
        %v6216 = vunpack.c.l.b16 %v5499
        %v6217 = vpack.c.b16 %v5776, %v5769
        %v6218 = vpack.c.b16 %v5777, %v5770
        %v6219 = vpack.c.b16 %v5778, %v5771
        %v6220 = vpack.c.b16 %v5779, %v5772
        %v6221 = vpack.c.b16 %v5780, %v5773
        %v6222 = vpack.c.b16 %v5781, %v5774
        %v6223 = vpack.c.b16 %v5782, %v5775
        %v6224 = vpack.c.b16 %v5790, %v5783
        %v6225 = vpack.c.b16 %v5791, %v5784
        %v6226 = vpack.c.b16 %v5792, %v5785
        %v6227 = vpack.c.b16 %v5793, %v5786
        %v6228 = vpack.c.b16 %v5794, %v5787
        %v6229 = vpack.c.b16 %v5795, %v5788
        %v6230 = vpack.c.b16 %v5796, %v5789
        %v6231 = vpack.c.b16 %v5804, %v5797
        %v6232 = vpack.c.b16 %v5805, %v5798
        %v6233 = vpack.c.b16 %v5806, %v5799
        %v6234 = vpack.c.b16 %v5807, %v5800
        %v6235 = vpack.c.b16 %v5808, %v5801
        %v6236 = vpack.c.b16 %v5809, %v5802
        %v6237 = vpack.c.b16 %v5810, %v5803
        %v6238 = vpack.c.b16 %v5818, %v5811
        %v6239 = vpack.c.b16 %v5819, %v5812
        %v6240 = vpack.c.b16 %v5820, %v5813
        %v6241 = vpack.c.b16 %v5821, %v5814
        %v6242 = vpack.c.b16 %v5822, %v5815
        %v6243 = vpack.c.b16 %v5823, %v5816
        %v6244 = vpack.c.b16 %v5824, %v5817
        %v6245 = vpack.c.b16 %v5832, %v5825
        %v6246 = vpack.c.b16 %v5833, %v5826
        %v6247 = vpack.c.b16 %v5834, %v5827
        %v6248 = vpack.c.b16 %v5835, %v5828
        %v6249 = vpack.c.b16 %v5836, %v5829
        %v6250 = vpack.c.b16 %v5837, %v5830
        %v6251 = vpack.c.b16 %v5838, %v5831
        %v6252 = vpack.c.b16 %v5846, %v5839
        %v6253 = vpack.c.b16 %v5847, %v5840
        %v6254 = vpack.c.b16 %v5848, %v5841
        %v6255 = vpack.c.b16 %v5849, %v5842
        %v6256 = vpack.c.b16 %v5850, %v5843
        %v6257 = vpack.c.b16 %v5851, %v5844
        %v6258 = vpack.c.b16 %v5852, %v5845
        %v6259 = vpack.c.b16 %v5860, %v5853
        %v6260 = vpack.c.b16 %v5861, %v5854
        %v6261 = vpack.c.b16 %v5862, %v5855
        %v6262 = vpack.c.b16 %v5863, %v5856
        %v6263 = vpack.c.b16 %v5864, %v5857
        %v6264 = vpack.c.b16 %v5865, %v5858
        %v6265 = vpack.c.b16 %v5866, %v5859
        %v6266 = vpack.c.b16 %v5874, %v5867
        %v6267 = vpack.c.b16 %v5875, %v5868
        %v6268 = vpack.c.b16 %v5876, %v5869
        %v6269 = vpack.c.b16 %v5877, %v5870
        %v6270 = vpack.c.b16 %v5878, %v5871
        %v6271 = vpack.c.b16 %v5879, %v5872
        %v6272 = vpack.c.b16 %v5880, %v5873
        %v6273 = vpack.c.b16 %v5888, %v5881
        %v6274 = vpack.c.b16 %v5889, %v5882
        %v6275 = vpack.c.b16 %v5890, %v5883
        %v6276 = vpack.c.b16 %v5891, %v5884
        %v6277 = vpack.c.b16 %v5892, %v5885
        %v6278 = vpack.c.b16 %v5893, %v5886
        %v6279 = vpack.c.b16 %v5894, %v5887
        %v6280 = vpack.c.b16 %v5902, %v5895
        %v6281 = vpack.c.b16 %v5903, %v5896
        %v6282 = vpack.c.b16 %v5904, %v5897
        %v6283 = vpack.c.b16 %v5905, %v5898
        %v6284 = vpack.c.b16 %v5906, %v5899
        %v6285 = vpack.c.b16 %v5907, %v5900
        %v6286 = vpack.c.b16 %v5908, %v5901
        %v6287 = vpack.c.b16 %v5916, %v5909
        %v6288 = vpack.c.b16 %v5917, %v5910
        %v6289 = vpack.c.b16 %v5918, %v5911
        %v6290 = vpack.c.b16 %v5919, %v5912
        %v6291 = vpack.c.b16 %v5920, %v5913
        %v6292 = vpack.c.b16 %v5921, %v5914
        %v6293 = vpack.c.b16 %v5922, %v5915
        %v6294 = vpack.c.b16 %v5930, %v5923
        %v6295 = vpack.c.b16 %v5931, %v5924
        %v6296 = vpack.c.b16 %v5932, %v5925
        %v6297 = vpack.c.b16 %v5933, %v5926
        %v6298 = vpack.c.b16 %v5934, %v5927
        %v6299 = vpack.c.b16 %v5935, %v5928
        %v6300 = vpack.c.b16 %v5936, %v5929
        %v6301 = vpack.c.b16 %v5944, %v5937
        %v6302 = vpack.c.b16 %v5945, %v5938
        %v6303 = vpack.c.b16 %v5946, %v5939
        %v6304 = vpack.c.b16 %v5947, %v5940
        %v6305 = vpack.c.b16 %v5948, %v5941
        %v6306 = vpack.c.b16 %v5949, %v5942
        %v6307 = vpack.c.b16 %v5950, %v5943
        %v6308 = vpack.c.b16 %v5958, %v5951
        %v6309 = vpack.c.b16 %v5959, %v5952
        %v6310 = vpack.c.b16 %v5960, %v5953
        %v6311 = vpack.c.b16 %v5961, %v5954
        %v6312 = vpack.c.b16 %v5962, %v5955
        %v6313 = vpack.c.b16 %v5963, %v5956
        %v6314 = vpack.c.b16 %v5964, %v5957
        %v6315 = vpack.c.b16 %v5972, %v5965
        %v6316 = vpack.c.b16 %v5973, %v5966
        %v6317 = vpack.c.b16 %v5974, %v5967
        %v6318 = vpack.c.b16 %v5975, %v5968
        %v6319 = vpack.c.b16 %v5976, %v5969
        %v6320 = vpack.c.b16 %v5977, %v5970
        %v6321 = vpack.c.b16 %v5978, %v5971
        %v6322 = vpack.c.b16 %v5986, %v5979
        %v6323 = vpack.c.b16 %v5987, %v5980
        %v6324 = vpack.c.b16 %v5988, %v5981
        %v6325 = vpack.c.b16 %v5989, %v5982
        %v6326 = vpack.c.b16 %v5990, %v5983
        %v6327 = vpack.c.b16 %v5991, %v5984
        %v6328 = vpack.c.b16 %v5992, %v5985
        %v6329 = vpack.c.b16 %v6000, %v5993
        %v6330 = vpack.c.b16 %v6001, %v5994
        %v6331 = vpack.c.b16 %v6002, %v5995
        %v6332 = vpack.c.b16 %v6003, %v5996
        %v6333 = vpack.c.b16 %v6004, %v5997
        %v6334 = vpack.c.b16 %v6005, %v5998
        %v6335 = vpack.c.b16 %v6006, %v5999
        %v6336 = vpack.c.b16 %v6014, %v6007
        %v6337 = vpack.c.b16 %v6015, %v6008
        %v6338 = vpack.c.b16 %v6016, %v6009
        %v6339 = vpack.c.b16 %v6017, %v6010
        %v6340 = vpack.c.b16 %v6018, %v6011
        %v6341 = vpack.c.b16 %v6019, %v6012
        %v6342 = vpack.c.b16 %v6020, %v6013
        %v6343 = vpack.c.b16 %v6028, %v6021
        %v6344 = vpack.c.b16 %v6029, %v6022
        %v6345 = vpack.c.b16 %v6030, %v6023
        %v6346 = vpack.c.b16 %v6031, %v6024
        %v6347 = vpack.c.b16 %v6032, %v6025
        %v6348 = vpack.c.b16 %v6033, %v6026
        %v6349 = vpack.c.b16 %v6034, %v6027
        %v6350 = vpack.c.b16 %v6042, %v6035
        %v6351 = vpack.c.b16 %v6043, %v6036
        %v6352 = vpack.c.b16 %v6044, %v6037
        %v6353 = vpack.c.b16 %v6045, %v6038
        %v6354 = vpack.c.b16 %v6046, %v6039
        %v6355 = vpack.c.b16 %v6047, %v6040
        %v6356 = vpack.c.b16 %v6048, %v6041
        %v6357 = vpack.c.b16 %v6056, %v6049
        %v6358 = vpack.c.b16 %v6057, %v6050
        %v6359 = vpack.c.b16 %v6058, %v6051
        %v6360 = vpack.c.b16 %v6059, %v6052
        %v6361 = vpack.c.b16 %v6060, %v6053
        %v6362 = vpack.c.b16 %v6061, %v6054
        %v6363 = vpack.c.b16 %v6062, %v6055
        %v6364 = vpack.c.b16 %v6070, %v6063
        %v6365 = vpack.c.b16 %v6071, %v6064
        %v6366 = vpack.c.b16 %v6072, %v6065
        %v6367 = vpack.c.b16 %v6073, %v6066
        %v6368 = vpack.c.b16 %v6074, %v6067
        %v6369 = vpack.c.b16 %v6075, %v6068
        %v6370 = vpack.c.b16 %v6076, %v6069
        %v6371 = vpack.c.b16 %v6084, %v6077
        %v6372 = vpack.c.b16 %v6085, %v6078
        %v6373 = vpack.c.b16 %v6086, %v6079
        %v6374 = vpack.c.b16 %v6087, %v6080
        %v6375 = vpack.c.b16 %v6088, %v6081
        %v6376 = vpack.c.b16 %v6089, %v6082
        %v6377 = vpack.c.b16 %v6090, %v6083
        %v6378 = vpack.c.b16 %v6098, %v6091
        %v6379 = vpack.c.b16 %v6099, %v6092
        %v6380 = vpack.c.b16 %v6100, %v6093
        %v6381 = vpack.c.b16 %v6101, %v6094
        %v6382 = vpack.c.b16 %v6102, %v6095
        %v6383 = vpack.c.b16 %v6103, %v6096
        %v6384 = vpack.c.b16 %v6104, %v6097
        %v6385 = vpack.c.b16 %v6112, %v6105
        %v6386 = vpack.c.b16 %v6113, %v6106
        %v6387 = vpack.c.b16 %v6114, %v6107
        %v6388 = vpack.c.b16 %v6115, %v6108
        %v6389 = vpack.c.b16 %v6116, %v6109
        %v6390 = vpack.c.b16 %v6117, %v6110
        %v6391 = vpack.c.b16 %v6118, %v6111
        %v6392 = vpack.c.b16 %v6126, %v6119
        %v6393 = vpack.c.b16 %v6127, %v6120
        %v6394 = vpack.c.b16 %v6128, %v6121
        %v6395 = vpack.c.b16 %v6129, %v6122
        %v6396 = vpack.c.b16 %v6130, %v6123
        %v6397 = vpack.c.b16 %v6131, %v6124
        %v6398 = vpack.c.b16 %v6132, %v6125
        %v6399 = vpack.c.b16 %v6140, %v6133
        %v6400 = vpack.c.b16 %v6141, %v6134
        %v6401 = vpack.c.b16 %v6142, %v6135
        %v6402 = vpack.c.b16 %v6143, %v6136
        %v6403 = vpack.c.b16 %v6144, %v6137
        %v6404 = vpack.c.b16 %v6145, %v6138
        %v6405 = vpack.c.b16 %v6146, %v6139
        %v6406 = vpack.c.b16 %v6154, %v6147
        %v6407 = vpack.c.b16 %v6155, %v6148
        %v6408 = vpack.c.b16 %v6156, %v6149
        %v6409 = vpack.c.b16 %v6157, %v6150
        %v6410 = vpack.c.b16 %v6158, %v6151
        %v6411 = vpack.c.b16 %v6159, %v6152
        %v6412 = vpack.c.b16 %v6160, %v6153
        %v6413 = vpack.c.b16 %v6168, %v6161
        %v6414 = vpack.c.b16 %v6169, %v6162
        %v6415 = vpack.c.b16 %v6170, %v6163
        %v6416 = vpack.c.b16 %v6171, %v6164
        %v6417 = vpack.c.b16 %v6172, %v6165
        %v6418 = vpack.c.b16 %v6173, %v6166
        %v6419 = vpack.c.b16 %v6174, %v6167
        %v6420 = vpack.c.b16 %v6182, %v6175
        %v6421 = vpack.c.b16 %v6183, %v6176
        %v6422 = vpack.c.b16 %v6184, %v6177
        %v6423 = vpack.c.b16 %v6185, %v6178
        %v6424 = vpack.c.b16 %v6186, %v6179
        %v6425 = vpack.c.b16 %v6187, %v6180
        %v6426 = vpack.c.b16 %v6188, %v6181
        %v6427 = vpack.c.b16 %v6196, %v6189
        %v6428 = vpack.c.b16 %v6197, %v6190
        %v6429 = vpack.c.b16 %v6198, %v6191
        %v6430 = vpack.c.b16 %v6199, %v6192
        %v6431 = vpack.c.b16 %v6200, %v6193
        %v6432 = vpack.c.b16 %v6201, %v6194
        %v6433 = vpack.c.b16 %v6202, %v6195
        %v6434 = vpack.c.b16 %v6210, %v6203
        %v6435 = vpack.c.b16 %v6211, %v6204
        %v6436 = vpack.c.b16 %v6212, %v6205
        %v6437 = vpack.c.b16 %v6213, %v6206
        %v6438 = vpack.c.b16 %v6214, %v6207
        %v6439 = vpack.c.b16 %v6215, %v6208
        %v6440 = vpack.c.b16 %v6216, %v6209
        %v6666 = vperm.slane %v5500, 0
        %v6667 = vperm.slane %v5500, 1
        %v6668 = vperm.slane %v5500, 2
        %v6669 = vperm.slane %v5500, 3
        %v6670 = vperm.slane %v5500, 4
        %v6671 = vperm.slane %v5500, 5
        %v6672 = vperm.slane %v5500, 6
        %6680 = vmatpush.bf16.msra.mxu0 %v6266
        %6681 = vmatpush.bf16.msra.mxu0 %v6259
        %6682 = vmatpush.bf16.msra.mxu0 %v6252
        %6683 = vmatpush.bf16.msra.mxu0 %v6245
        %6684 = vmatpush.bf16.msra.mxu0 %v6238
        %6685 = vmatpush.bf16.msra.mxu0 %v6231
        %6686 = vmatpush.bf16.msra.mxu0 %v6224
        %6687 = vmatpush.bf16.msra.mxu0 %v6217
        %6688 = vmatmul.bf16.gmra.mxu0 %v5505
        %v6689 = vpop.f32.mrf.mxu0
        %v6690 = vadd.f32 %v6666, %v6689
        %v6691 = vpop.f32.mrf.mxu0
        %6692 = vdwg.mxu0
        %6693 = vmatpush.bf16.msra.mxu0 %v6322
        %6694 = vmatpush.bf16.msra.mxu0 %v6315
        %6695 = vmatpush.bf16.msra.mxu0 %v6308
        %6696 = vmatpush.bf16.msra.mxu0 %v6301
        %6697 = vmatpush.bf16.msra.mxu0 %v6294
        %6698 = vmatpush.bf16.msra.mxu0 %v6287
        %6699 = vmatpush.bf16.msra.mxu0 %v6280
        %6700 = vmatpush.bf16.msra.mxu0 %v6273
        %6701 = vmatmul.bf16.gmra.mxu0 %v5506
        %v6702 = vpop.f32.mrf.mxu0
        %v6703 = vadd.f32 %v6690, %v6702
        %v6704 = vpop.f32.mrf.mxu0
        %6705 = vdwg.mxu0
        %6706 = vmatpush.bf16.msra.mxu0 %v6378
        %6707 = vmatpush.bf16.msra.mxu0 %v6371
        %6708 = vmatpush.bf16.msra.mxu0 %v6364
        %6709 = vmatpush.bf16.msra.mxu0 %v6357
        %6710 = vmatpush.bf16.msra.mxu0 %v6350
        %6711 = vmatpush.bf16.msra.mxu0 %v6343
        %6712 = vmatpush.bf16.msra.mxu0 %v6336
        %6713 = vmatpush.bf16.msra.mxu0 %v6329
        %6714 = vmatmul.bf16.gmra.mxu0 %v5507
        %v6715 = vpop.f32.mrf.mxu0
        %v6716 = vadd.f32 %v6703, %v6715
        %v6717 = vpop.f32.mrf.mxu0
        %6718 = vdwg.mxu0
        %6719 = vmatpush.bf16.msra.mxu0 %v6434
        %6720 = vmatpush.bf16.msra.mxu0 %v6427
        %6721 = vmatpush.bf16.msra.mxu0 %v6420
        %6722 = vmatpush.bf16.msra.mxu0 %v6413
        %6723 = vmatpush.bf16.msra.mxu0 %v6406
        %6724 = vmatpush.bf16.msra.mxu0 %v6399
        %6725 = vmatpush.bf16.msra.mxu0 %v6392
        %6726 = vmatpush.bf16.msra.mxu0 %v6385
        %6727 = vmatmul.bf16.gmra.mxu0 %v5508
        %v6728 = vpop.f32.mrf.mxu0
        %v6729 = vadd.f32 %v6716, %v6728
        %v6730 = vpop.f32.mrf.mxu0
        %6731 = vdwg.mxu0
        %6732 = vmatpush.bf16.msra.mxu0 %v6267
        %6733 = vmatpush.bf16.msra.mxu0 %v6260
        %6734 = vmatpush.bf16.msra.mxu0 %v6253
        %6735 = vmatpush.bf16.msra.mxu0 %v6246
        %6736 = vmatpush.bf16.msra.mxu0 %v6239
        %6737 = vmatpush.bf16.msra.mxu0 %v6232
        %6738 = vmatpush.bf16.msra.mxu0 %v6225
        %6739 = vmatpush.bf16.msra.mxu0 %v6218
        %6740 = vmatmul.bf16.gmra.mxu0 %v5505
        %v6741 = vpop.f32.mrf.mxu0
        %v6742 = vadd.f32 %v6667, %v6741
        %v6743 = vpop.f32.mrf.mxu0
        %6744 = vdwg.mxu0
        %6745 = vmatpush.bf16.msra.mxu0 %v6323
        %6746 = vmatpush.bf16.msra.mxu0 %v6316
        %6747 = vmatpush.bf16.msra.mxu0 %v6309
        %6748 = vmatpush.bf16.msra.mxu0 %v6302
        %6749 = vmatpush.bf16.msra.mxu0 %v6295
        %6750 = vmatpush.bf16.msra.mxu0 %v6288
        %6751 = vmatpush.bf16.msra.mxu0 %v6281
        %6752 = vmatpush.bf16.msra.mxu0 %v6274
        %6753 = vmatmul.bf16.gmra.mxu0 %v5506
        %v6754 = vpop.f32.mrf.mxu0
        %v6755 = vadd.f32 %v6742, %v6754
        %v6756 = vpop.f32.mrf.mxu0
        %6757 = vdwg.mxu0
        %6758 = vmatpush.bf16.msra.mxu0 %v6379
        %6759 = vmatpush.bf16.msra.mxu0 %v6372
        %6760 = vmatpush.bf16.msra.mxu0 %v6365
        %6761 = vmatpush.bf16.msra.mxu0 %v6358
        %6762 = vmatpush.bf16.msra.mxu0 %v6351
        %6763 = vmatpush.bf16.msra.mxu0 %v6344
        %6764 = vmatpush.bf16.msra.mxu0 %v6337
        %6765 = vmatpush.bf16.msra.mxu0 %v6330
        %6766 = vmatmul.bf16.gmra.mxu0 %v5507
        %v6767 = vpop.f32.mrf.mxu0
        %v6768 = vadd.f32 %v6755, %v6767
        %v6769 = vpop.f32.mrf.mxu0
        %6770 = vdwg.mxu0
        %6771 = vmatpush.bf16.msra.mxu0 %v6435
        %6772 = vmatpush.bf16.msra.mxu0 %v6428
        %6773 = vmatpush.bf16.msra.mxu0 %v6421
        %6774 = vmatpush.bf16.msra.mxu0 %v6414
        %6775 = vmatpush.bf16.msra.mxu0 %v6407
        %6776 = vmatpush.bf16.msra.mxu0 %v6400
        %6777 = vmatpush.bf16.msra.mxu0 %v6393
        %6778 = vmatpush.bf16.msra.mxu0 %v6386
        %6779 = vmatmul.bf16.gmra.mxu0 %v5508
        %v6780 = vpop.f32.mrf.mxu0
        %v6781 = vadd.f32 %v6768, %v6780
        %v6782 = vpop.f32.mrf.mxu0
        %6783 = vdwg.mxu0
        %6784 = vmatpush.bf16.msra.mxu0 %v6268
        %6785 = vmatpush.bf16.msra.mxu0 %v6261
        %6786 = vmatpush.bf16.msra.mxu0 %v6254
        %6787 = vmatpush.bf16.msra.mxu0 %v6247
        %6788 = vmatpush.bf16.msra.mxu0 %v6240
        %6789 = vmatpush.bf16.msra.mxu0 %v6233
        %6790 = vmatpush.bf16.msra.mxu0 %v6226
        %6791 = vmatpush.bf16.msra.mxu0 %v6219
        %6792 = vmatmul.bf16.gmra.mxu0 %v5505
        %v6793 = vpop.f32.mrf.mxu0
        %v6794 = vadd.f32 %v6668, %v6793
        %v6795 = vpop.f32.mrf.mxu0
        %6796 = vdwg.mxu0
        %6797 = vmatpush.bf16.msra.mxu0 %v6324
        %6798 = vmatpush.bf16.msra.mxu0 %v6317
        %6799 = vmatpush.bf16.msra.mxu0 %v6310
        %6800 = vmatpush.bf16.msra.mxu0 %v6303
        %6801 = vmatpush.bf16.msra.mxu0 %v6296
        %6802 = vmatpush.bf16.msra.mxu0 %v6289
        %6803 = vmatpush.bf16.msra.mxu0 %v6282
        %6804 = vmatpush.bf16.msra.mxu0 %v6275
        %6805 = vmatmul.bf16.gmra.mxu0 %v5506
        %v6806 = vpop.f32.mrf.mxu0
        %v6807 = vadd.f32 %v6794, %v6806
        %v6808 = vpop.f32.mrf.mxu0
        %6809 = vdwg.mxu0
        %6810 = vmatpush.bf16.msra.mxu0 %v6380
        %6811 = vmatpush.bf16.msra.mxu0 %v6373
        %6812 = vmatpush.bf16.msra.mxu0 %v6366
        %6813 = vmatpush.bf16.msra.mxu0 %v6359
        %6814 = vmatpush.bf16.msra.mxu0 %v6352
        %6815 = vmatpush.bf16.msra.mxu0 %v6345
        %6816 = vmatpush.bf16.msra.mxu0 %v6338
        %6817 = vmatpush.bf16.msra.mxu0 %v6331
        %6818 = vmatmul.bf16.gmra.mxu0 %v5507
        %v6819 = vpop.f32.mrf.mxu0
        %v6820 = vadd.f32 %v6807, %v6819
        %v6821 = vpop.f32.mrf.mxu0
        %6822 = vdwg.mxu0
        %6823 = vmatpush.bf16.msra.mxu0 %v6436
        %6824 = vmatpush.bf16.msra.mxu0 %v6429
        %6825 = vmatpush.bf16.msra.mxu0 %v6422
        %6826 = vmatpush.bf16.msra.mxu0 %v6415
        %6827 = vmatpush.bf16.msra.mxu0 %v6408
        %6828 = vmatpush.bf16.msra.mxu0 %v6401
        %6829 = vmatpush.bf16.msra.mxu0 %v6394
        %6830 = vmatpush.bf16.msra.mxu0 %v6387
        %6831 = vmatmul.bf16.gmra.mxu0 %v5508
        %v6832 = vpop.f32.mrf.mxu0
        %v6833 = vadd.f32 %v6820, %v6832
        %v6834 = vpop.f32.mrf.mxu0
        %6835 = vdwg.mxu0
        %6836 = vmatpush.bf16.msra.mxu0 %v6269
        %6837 = vmatpush.bf16.msra.mxu0 %v6262
        %6838 = vmatpush.bf16.msra.mxu0 %v6255
        %6839 = vmatpush.bf16.msra.mxu0 %v6248
        %6840 = vmatpush.bf16.msra.mxu0 %v6241
        %6841 = vmatpush.bf16.msra.mxu0 %v6234
        %6842 = vmatpush.bf16.msra.mxu0 %v6227
        %6843 = vmatpush.bf16.msra.mxu0 %v6220
        %6844 = vmatmul.bf16.gmra.mxu0 %v5505
        %v6845 = vpop.f32.mrf.mxu0
        %v6846 = vadd.f32 %v6669, %v6845
        %v6847 = vpop.f32.mrf.mxu0
        %6848 = vdwg.mxu0
        %6849 = vmatpush.bf16.msra.mxu0 %v6325
        %6850 = vmatpush.bf16.msra.mxu0 %v6318
        %6851 = vmatpush.bf16.msra.mxu0 %v6311
        %6852 = vmatpush.bf16.msra.mxu0 %v6304
        %6853 = vmatpush.bf16.msra.mxu0 %v6297
        %6854 = vmatpush.bf16.msra.mxu0 %v6290
        %6855 = vmatpush.bf16.msra.mxu0 %v6283
        %6856 = vmatpush.bf16.msra.mxu0 %v6276
        %6857 = vmatmul.bf16.gmra.mxu0 %v5506
        %v6858 = vpop.f32.mrf.mxu0
        %v6859 = vadd.f32 %v6846, %v6858
        %v6860 = vpop.f32.mrf.mxu0
        %6861 = vdwg.mxu0
        %6862 = vmatpush.bf16.msra.mxu0 %v6381
        %6863 = vmatpush.bf16.msra.mxu0 %v6374
        %6864 = vmatpush.bf16.msra.mxu0 %v6367
        %6865 = vmatpush.bf16.msra.mxu0 %v6360
        %6866 = vmatpush.bf16.msra.mxu0 %v6353
        %6867 = vmatpush.bf16.msra.mxu0 %v6346
        %6868 = vmatpush.bf16.msra.mxu0 %v6339
        %6869 = vmatpush.bf16.msra.mxu0 %v6332
        %6870 = vmatmul.bf16.gmra.mxu0 %v5507
        %v6871 = vpop.f32.mrf.mxu0
        %v6872 = vadd.f32 %v6859, %v6871
        %v6873 = vpop.f32.mrf.mxu0
        %6874 = vdwg.mxu0
        %6875 = vmatpush.bf16.msra.mxu0 %v6437
        %6876 = vmatpush.bf16.msra.mxu0 %v6430
        %6877 = vmatpush.bf16.msra.mxu0 %v6423
        %6878 = vmatpush.bf16.msra.mxu0 %v6416
        %6879 = vmatpush.bf16.msra.mxu0 %v6409
        %6880 = vmatpush.bf16.msra.mxu0 %v6402
        %6881 = vmatpush.bf16.msra.mxu0 %v6395
        %6882 = vmatpush.bf16.msra.mxu0 %v6388
        %6883 = vmatmul.bf16.gmra.mxu0 %v5508
        %v6884 = vpop.f32.mrf.mxu0
        %v6885 = vadd.f32 %v6872, %v6884
        %v6886 = vpop.f32.mrf.mxu0
        %6887 = vdwg.mxu0
        %6888 = vmatpush.bf16.msra.mxu0 %v6270
        %6889 = vmatpush.bf16.msra.mxu0 %v6263
        %6890 = vmatpush.bf16.msra.mxu0 %v6256
        %6891 = vmatpush.bf16.msra.mxu0 %v6249
        %6892 = vmatpush.bf16.msra.mxu0 %v6242
        %6893 = vmatpush.bf16.msra.mxu0 %v6235
        %6894 = vmatpush.bf16.msra.mxu0 %v6228
        %6895 = vmatpush.bf16.msra.mxu0 %v6221
        %6896 = vmatmul.bf16.gmra.mxu0 %v5505
        %v6897 = vpop.f32.mrf.mxu0
        %v6898 = vadd.f32 %v6670, %v6897
        %v6899 = vpop.f32.mrf.mxu0
        %6900 = vdwg.mxu0
        %6901 = vmatpush.bf16.msra.mxu0 %v6326
        %6902 = vmatpush.bf16.msra.mxu0 %v6319
        %6903 = vmatpush.bf16.msra.mxu0 %v6312
        %6904 = vmatpush.bf16.msra.mxu0 %v6305
        %6905 = vmatpush.bf16.msra.mxu0 %v6298
        %6906 = vmatpush.bf16.msra.mxu0 %v6291
        %6907 = vmatpush.bf16.msra.mxu0 %v6284
        %6908 = vmatpush.bf16.msra.mxu0 %v6277
        %6909 = vmatmul.bf16.gmra.mxu0 %v5506
        %v6910 = vpop.f32.mrf.mxu0
        %v6911 = vadd.f32 %v6898, %v6910
        %v6912 = vpop.f32.mrf.mxu0
        %6913 = vdwg.mxu0
        %6914 = vmatpush.bf16.msra.mxu0 %v6382
        %6915 = vmatpush.bf16.msra.mxu0 %v6375
        %6916 = vmatpush.bf16.msra.mxu0 %v6368
        %6917 = vmatpush.bf16.msra.mxu0 %v6361
        %6918 = vmatpush.bf16.msra.mxu0 %v6354
        %6919 = vmatpush.bf16.msra.mxu0 %v6347
        %6920 = vmatpush.bf16.msra.mxu0 %v6340
        %6921 = vmatpush.bf16.msra.mxu0 %v6333
        %6922 = vmatmul.bf16.gmra.mxu0 %v5507
        %v6923 = vpop.f32.mrf.mxu0
        %v6924 = vadd.f32 %v6911, %v6923
        %v6925 = vpop.f32.mrf.mxu0
        %6926 = vdwg.mxu0
        %6927 = vmatpush.bf16.msra.mxu0 %v6438
        %6928 = vmatpush.bf16.msra.mxu0 %v6431
        %6929 = vmatpush.bf16.msra.mxu0 %v6424
        %6930 = vmatpush.bf16.msra.mxu0 %v6417
        %6931 = vmatpush.bf16.msra.mxu0 %v6410
        %6932 = vmatpush.bf16.msra.mxu0 %v6403
        %6933 = vmatpush.bf16.msra.mxu0 %v6396
        %6934 = vmatpush.bf16.msra.mxu0 %v6389
        %6935 = vmatmul.bf16.gmra.mxu0 %v5508
        %v6936 = vpop.f32.mrf.mxu0
        %v6937 = vadd.f32 %v6924, %v6936
        %v6938 = vpop.f32.mrf.mxu0
        %6939 = vdwg.mxu0
        %6940 = vmatpush.bf16.msra.mxu0 %v6271
        %6941 = vmatpush.bf16.msra.mxu0 %v6264
        %6942 = vmatpush.bf16.msra.mxu0 %v6257
        %6943 = vmatpush.bf16.msra.mxu0 %v6250
        %6944 = vmatpush.bf16.msra.mxu0 %v6243
        %6945 = vmatpush.bf16.msra.mxu0 %v6236
        %6946 = vmatpush.bf16.msra.mxu0 %v6229
        %6947 = vmatpush.bf16.msra.mxu0 %v6222
        %6948 = vmatmul.bf16.gmra.mxu0 %v5505
        %v6949 = vpop.f32.mrf.mxu0
        %v6950 = vadd.f32 %v6671, %v6949
        %v6951 = vpop.f32.mrf.mxu0
        %6952 = vdwg.mxu0
        %6953 = vmatpush.bf16.msra.mxu0 %v6327
        %6954 = vmatpush.bf16.msra.mxu0 %v6320
        %6955 = vmatpush.bf16.msra.mxu0 %v6313
        %6956 = vmatpush.bf16.msra.mxu0 %v6306
        %6957 = vmatpush.bf16.msra.mxu0 %v6299
        %6958 = vmatpush.bf16.msra.mxu0 %v6292
        %6959 = vmatpush.bf16.msra.mxu0 %v6285
        %6960 = vmatpush.bf16.msra.mxu0 %v6278
        %6961 = vmatmul.bf16.gmra.mxu0 %v5506
        %v6962 = vpop.f32.mrf.mxu0
        %v6963 = vadd.f32 %v6950, %v6962
        %v6964 = vpop.f32.mrf.mxu0
        %6965 = vdwg.mxu0
        %6966 = vmatpush.bf16.msra.mxu0 %v6383
        %6967 = vmatpush.bf16.msra.mxu0 %v6376
        %6968 = vmatpush.bf16.msra.mxu0 %v6369
        %6969 = vmatpush.bf16.msra.mxu0 %v6362
        %6970 = vmatpush.bf16.msra.mxu0 %v6355
        %6971 = vmatpush.bf16.msra.mxu0 %v6348
        %6972 = vmatpush.bf16.msra.mxu0 %v6341
        %6973 = vmatpush.bf16.msra.mxu0 %v6334
        %6974 = vmatmul.bf16.gmra.mxu0 %v5507
        %v6975 = vpop.f32.mrf.mxu0
        %v6976 = vadd.f32 %v6963, %v6975
        %v6977 = vpop.f32.mrf.mxu0
        %6978 = vdwg.mxu0
        %6979 = vmatpush.bf16.msra.mxu0 %v6439
        %6980 = vmatpush.bf16.msra.mxu0 %v6432
        %6981 = vmatpush.bf16.msra.mxu0 %v6425
        %6982 = vmatpush.bf16.msra.mxu0 %v6418
        %6983 = vmatpush.bf16.msra.mxu0 %v6411
        %6984 = vmatpush.bf16.msra.mxu0 %v6404
        %6985 = vmatpush.bf16.msra.mxu0 %v6397
        %6986 = vmatpush.bf16.msra.mxu0 %v6390
        %6987 = vmatmul.bf16.gmra.mxu0 %v5508
        %v6988 = vpop.f32.mrf.mxu0
        %v6989 = vadd.f32 %v6976, %v6988
        %v6990 = vpop.f32.mrf.mxu0
        %6991 = vdwg.mxu0
        %6992 = vmatpush.bf16.msra.mxu0 %v6272
        %6993 = vmatpush.bf16.msra.mxu0 %v6265
        %6994 = vmatpush.bf16.msra.mxu0 %v6258
        %6995 = vmatpush.bf16.msra.mxu0 %v6251
        %6996 = vmatpush.bf16.msra.mxu0 %v6244
        %6997 = vmatpush.bf16.msra.mxu0 %v6237
        %6998 = vmatpush.bf16.msra.mxu0 %v6230
        %6999 = vmatpush.bf16.msra.mxu0 %v6223
        %7000 = vmatmul.bf16.gmra.mxu0 %v5505
        %v7001 = vpop.f32.mrf.mxu0
        %v7002 = vadd.f32 %v6672, %v7001
        %v7003 = vpop.f32.mrf.mxu0
        %7004 = vdwg.mxu0
        %7005 = vmatpush.bf16.msra.mxu0 %v6328
        %7006 = vmatpush.bf16.msra.mxu0 %v6321
        %7007 = vmatpush.bf16.msra.mxu0 %v6314
        %7008 = vmatpush.bf16.msra.mxu0 %v6307
        %7009 = vmatpush.bf16.msra.mxu0 %v6300
        %7010 = vmatpush.bf16.msra.mxu0 %v6293
        %7011 = vmatpush.bf16.msra.mxu0 %v6286
        %7012 = vmatpush.bf16.msra.mxu0 %v6279
        %7013 = vmatmul.bf16.gmra.mxu0 %v5506
        %v7014 = vpop.f32.mrf.mxu0
        %v7015 = vadd.f32 %v7002, %v7014
        %v7016 = vpop.f32.mrf.mxu0
        %7017 = vdwg.mxu0
        %7018 = vmatpush.bf16.msra.mxu0 %v6384
        %7019 = vmatpush.bf16.msra.mxu0 %v6377
        %7020 = vmatpush.bf16.msra.mxu0 %v6370
        %7021 = vmatpush.bf16.msra.mxu0 %v6363
        %7022 = vmatpush.bf16.msra.mxu0 %v6356
        %7023 = vmatpush.bf16.msra.mxu0 %v6349
        %7024 = vmatpush.bf16.msra.mxu0 %v6342
        %7025 = vmatpush.bf16.msra.mxu0 %v6335
        %7026 = vmatmul.bf16.gmra.mxu0 %v5507
        %v7027 = vpop.f32.mrf.mxu0
        %v7028 = vadd.f32 %v7015, %v7027
        %v7029 = vpop.f32.mrf.mxu0
        %7030 = vdwg.mxu0
        %7031 = vmatpush.bf16.msra.mxu0 %v6440
        %7032 = vmatpush.bf16.msra.mxu0 %v6433
        %7033 = vmatpush.bf16.msra.mxu0 %v6426
        %7034 = vmatpush.bf16.msra.mxu0 %v6419
        %7035 = vmatpush.bf16.msra.mxu0 %v6412
        %7036 = vmatpush.bf16.msra.mxu0 %v6405
        %7037 = vmatpush.bf16.msra.mxu0 %v6398
        %7038 = vmatpush.bf16.msra.mxu0 %v6391
        %7039 = vmatmul.bf16.gmra.mxu0 %v5508
        %v7040 = vpop.f32.mrf.mxu0
        %v7041 = vadd.f32 %v7028, %v7040
        %v7042 = vpop.f32.mrf.mxu0
        %7043 = vdwg.mxu0
        %v7051 = vrot.slane %v6781, 7
        %v7052 = vrot.slane %v6833, 6
        %v7053 = vrot.slane %v6885, 5
        %v7054 = vrot.slane %v6937, 4
        %v7055 = vrot.slane %v6989, 3
        %v7056 = vrot.slane %v7041, 2
        %vm7057 = vcmask 1040384
        %v7058 = vsel %vm7057, %v6729, %v7051
        %vm7059 = vcmask 1042434
        %v7060 = vsel %vm7059, %v7052, %v7053
        %vm7061 = vcmask 1041408
        %v7062 = vsel %vm7061, %v7058, %v7060
        %vm7063 = vcmask 1044484
        %v7064 = vsel %vm7063, %v7054, %v7055
        %vm7065 = vcmask 1045508
        %v7066 = vsel %vm7065, %v7064, %v7056
        %vm7067 = vcmask 1043456
        %v7068 = vsel %vm7067, %v7062, %v7066
        %v7070 = vlaneseq
        %vm7071 = vcmp.ge.s32.totalorder %v7070, 0
        %vm7072 = vcmp.lt.s32.totalorder %v7070, 896
        %vm7073 = vmand %vm7071, %vm7072
        %7074 = vst.msk [vmem:[%s730] sm:$0x7f] %vm7073, %v7068
        %p7075 = scmp.lt.s32.totalorder %s36, 1
        %s7076 = scalar_select %p7075, %s36, 1
        %s7077 = smul.addr %s7076, 8
        %s7078 = scalar_lea.vmem %s14, %s7077
        %p7079 = scmp.lt.s32.totalorder %s36, 1
        %s7080 = scalar_select %p7079, %s36, 1
        %s7081 = smul.addr %s7080, 7
        %s7082 = scalar_lea.vmem %s15, %s7081
        // Predicated region
        $region129: #{_forward_impl.2} parent=75 // pred_check
          %p7083 = pneg %p358
        $region130: #{_forward_impl.2} parent=75 // pred_check_branch
          %7085 = sbr.rel (%p7083) target = $region132
        $region131: #{_forward_impl.2} parent=75 // pred_region
          _
        $region132: #{_forward_impl.2} parent=75 // pred_fallthru
          _
        // Predicated region
        $region133: #{_forward_impl.2} parent=75 // pred_check
          %p7086 = pneg %p384
        $region134: #{_forward_impl.2} parent=75 // pred_check_branch
          %7088 = sbr.rel (%p7086) target = $region136
        $region135: #{_forward_impl.2} parent=75 // pred_region
          _
        $region136: #{_forward_impl.2} parent=75 // pred_fallthru
          _
      $region76: #{_forward_impl.2} parent=5 // pred_fallthru
        _
      %p7089 = scmp.le.s32.totalorder 2, %s31
      // Predicated region
      $region137: #{_forward_impl.2} parent=5 // pred_check
        %p7090 = pneg %p7089
      $region138: #{_forward_impl.2} parent=5 // pred_check_branch
        %7092 = sbr.rel (%p7090) target = $region140
      $region139: #{_forward_impl.2} parent=5 // pred_region
        %s7093 = ssub.s32 %s31, 2
        // Predicated region
        $region141: #{_forward_impl.2} parent=139 // pred_check
          %p7094 = pneg %p364
        $region142: #{_forward_impl.2} parent=139 // pred_check_branch
          %7096 = sbr.rel (%p7094) target = $region144
        $region143: #{_forward_impl.2} parent=139 // pred_region
          %p7097 = scmp.lt.s32.totalorder %s37, 1
          %s7098 = scalar_select %p7097, %s37, 1
          %s7099 = smul.addr %s7098, 8
          %s7100 = scalar_lea.vmem %s14, %s7099
        $region144: #{_forward_impl.2} parent=139 // pred_fallthru
          _
        // Predicated region
        $region145: #{_forward_impl.2} parent=139 // pred_check
          %p7101 = pneg %p390
        $region146: #{_forward_impl.2} parent=139 // pred_check_branch
          %7103 = sbr.rel (%p7101) target = $region148
        $region147: #{_forward_impl.2} parent=139 // pred_region
          %p7104 = scmp.lt.s32.totalorder %s37, 1
          %s7105 = scalar_select %p7104, %s37, 1
          %s7106 = smul.addr %s7105, 7
          %s7107 = scalar_lea.vmem %s15, %s7106
        $region148: #{_forward_impl.2} parent=139 // pred_fallthru
          _
      $region140: #{_forward_impl.2} parent=5 // pred_fallthru
        _
    $region6: #{_forward_impl.2} parent=1 // loop_footer
      %s35 = sadd.s32 1, %s31
    $region7: #{_forward_impl.2} parent=1 // loop_footer_branch
      %30 = sbr.rel target = $region3
    $region8: #{_forward_impl.2} parent=1 // loop_exit
      _
    %7108 = vsyncpa [#allocation3], 1
    %s7109 = scalar_lea.sflag [#allocation3], 1
    %7110 = vsyncpa %s7109, 1
    %7111 = vsyncpa [#allocation5], 1
    %7112 = vsyncpa [#allocation8], 1
    %7113 = vsyncpa [#allocation11], 1
    %7114 = vsyncpa [#allocation14], 1
    %7115 = vsyncpa [#allocation17], 1
    %7116 = vsyncpa [#allocation20], 1

</llo_original>
